<compile_context>
chip_gen: v7x
topology: tpu7x:2x2x1
jax: 0.10.0
libtpu: 0.0.40
codegen_flags: <defaults>
</compile_context>

<pallas_src>
import functools

import jax
import jax.numpy as jnp
from jax.experimental import pallas as pl
from jax.experimental.pallas import tpu as pltpu

_NF_GAMMA = 1.7015043497085571  # timm's GELU gamma for normalizer-free nets
NUM_CLASSES = 10
_VMEM_LIMIT = 48 * 1024 * 1024  # > 16/32 MiB scoped defaults, < v7x 64 MiB physical


# ----------------------------- kernel-side math helpers -----------------------------

def _gelu(x):
    # tanh-approximation GELU (EUP-friendly inside the kernel)
    # TODO(synk): timm uses exact erf GELU; tanh approximation drifts slightly.
    return 0.5 * x * (1.0 + jnp.tanh(0.7978845608028654 * (x + 0.044715 * x * x * x)))


def _apply_act(y, act, scale=1.0):
    if act == "gelu":          # NFNet activation: scale * gelu(x)
        return _gelu(y) * scale
    if act == "relu":
        return jnp.maximum(y, 0.0)
    return y                   # "none"


def _round_up(x, m):
    return (x + m - 1) // m * m


def _largest_multiple_divisor(total, step, cap):
    """Largest multiple of `step` that is <= cap and divides `total` (None if none)."""
    best, t = None, step
    while t <= cap:
        if total % t == 0:
            best = t
        t += step
    return best


# ----------------------------------- Pallas kernels ----------------------------------

def _mm_step(x_ref, w_ref, b_ref, o_ref, gap_ref, acc_ref, *, act, act_scale, pre_scale):
    # Fused (im2col-)matmul: bf16 MXU matmul with f32 VMEM accumulator over the K grid
    # axis, bias + activation epilogue, bf16 output.  Optional secondary output: per-tile
    # column sums of the result (used to fuse the SE global-average-pool into conv3).
    k = pl.program_id(2)

    @pl.when(k == 0)
    def _init():
        acc_ref[...] = jnp.zeros_like(acc_ref)

    x = x_ref[...]                                   # bf16 tile
    if pre_scale is not None:                        # fallback NF pre-activation path
        x = (_gelu(x.astype(jnp.float32)) * pre_scale).astype(jnp.bfloat16)
    acc_ref[...] += jnp.dot(x, w_ref[...], preferred_element_type=jnp.float32)

    @pl.when(k == pl.num_programs(2) - 1)
    def _finalize():
        y = _apply_act(acc_ref[...] + b_ref[...], act, act_scale)
        o_ref[...] = y.astype(o_ref.dtype)           # bf16 writeback (halves HBM traffic)
        if gap_ref is not None:                      # fused GAP partial sums (f32, tiny)
            col = jnp.sum(y, axis=0, keepdims=True)
            gap_ref[0] = jnp.broadcast_to(col, gap_ref.shape[1:])


def _matmul_kernel(x_ref, w_ref, b_ref, o_ref, acc_ref, *, act, act_scale, pre_scale):
    _mm_step(x_ref, w_ref, b_ref, o_ref, None, acc_ref,
             act=act, act_scale=act_scale, pre_scale=pre_scale)


def _matmul_gap_kernel(x_ref, w_ref, b_ref, o_ref, gap_ref, acc_ref, *,
                       act, act_scale, pre_scale):
    _mm_step(x_ref, w_ref, b_ref, o_ref, gap_ref, acc_ref,
             act=act, act_scale=act_scale, pre_scale=pre_scale)


def _tail_kernel(pooled_ref, w1_ref, b1_ref, w2_ref, b2_ref, short_ref, branch_ref,
                 hw_ref, hb_ref, o_ref, gate_sc, acc_sc, *, inv_hw, se_scale, act_scale):
    # Fused block tail + head: SE gates (FC/ReLU/FC/sigmoid from the conv3-epilogue GAP),
    # residual merge (shortcut + alpha*skip*2*sigmoid*branch), final activation
    # (gamma*gelu), global average pool and classifier matmul -- one pass over the slabs.
    h = pl.program_id(1)

    @pl.when(h == 0)
    def _init():
        pooled = jnp.broadcast_to(pooled_ref[0] * inv_hw, gate_sc.shape)      # (8, Cp)
        hid = jnp.dot(pooled, w1_ref[...], preferred_element_type=jnp.float32) + b1_ref[...]
        hid = jnp.maximum(hid, 0.0)
        lin = jnp.dot(hid, w2_ref[...], preferred_element_type=jnp.float32) + b2_ref[...]
        sig = pl.reciprocal(1.0 + jnp.exp(-lin), approx=True)                 # EUP sigmoid
        gate_sc[...] = se_scale * sig           # alpha*skip_gain*attn_gain folded once
        acc_sc[...] = jnp.zeros_like(acc_sc)

    merged = short_ref[0].astype(jnp.float32) + gate_sc[:1] * branch_ref[0].astype(jnp.float32)
    xa = _gelu(merged) * act_scale
    acc_sc[...] += jnp.sum(xa, axis=0, keepdims=True)

    @pl.when(h == pl.num_programs(1) - 1)
    def _finalize():
        pooled_out = acc_sc[...] * inv_hw
        logits = jnp.dot(pooled_out, hw_ref[...], preferred_element_type=jnp.float32) + hb_ref[...]
        o_ref[0] = logits[:1]


# ------------------------------------ wrappers ---------------------------------------

def _pick_tiles(M, K, N, *, gap_rows=None):
    Np = _round_up(N, 128)
    tn = 512 if Np % 512 == 0 else (256 if Np % 256 == 0 else 128)
    Kp = _round_up(K, 128)                                   # K lane-dense (padded if needed)
    tk = _largest_multiple_divisor(Kp, 128, 512) or 128
    if gap_rows is not None:                                 # M tiles must not cross images
        cap = min(512, gap_rows)
        tm = (_largest_multiple_divisor(gap_rows, 16, cap)
              or _largest_multiple_divisor(gap_rows, 8, cap))
        assert tm is not None and M % gap_rows == 0
        Mp = M
    else:
        cap = min(512, M // 2) if M >= 256 else 512          # >=2 M tiles for megacore
        tm = _largest_multiple_divisor(M, 16, cap)
        if tm is None:                                       # fallback: pad M (rare)
            tm = min(512, _round_up(M, 16))
        Mp = _round_up(M, tm)
    return tm, tk, tn, Mp, Kp, Np


def _pick_hw_tile(HW):
    thw = _largest_multiple_divisor(HW, 8, 512)
    if thw is None:
        thw = min(512, _round_up(HW, 8))
    return thw, _round_up(HW, thw)


def matmul_bias_act(x, w, b, act, *, act_scale=_NF_GAMMA, pre_scale=None,
                    out_dtype=jnp.bfloat16, gap_rows=None):
    """x: (M, K) bf16, w: (K, N), b: (N,) -> (M, Np) `out_dtype` (Np = 128-padded).

    bf16 MXU matmul, f32 accumulator over the K grid axis, fused bias+activation.
    If gap_rows is given (rows per image), also returns per-image column sums (f32).
    """
    M, K = x.shape
    N = w.shape[1]
    tm, tk, tn, Mp, Kp, Np = _pick_tiles(M, K, N, gap_rows=gap_rows)

    x = x.astype(jnp.bfloat16)
    if (Mp, Kp) != (M, K):          # fallback only: callers keep M/K tile-aligned already
        x = jnp.pad(x, ((0, Mp - M), (0, Kp - K)))
    wp = w
    if (Kp, Np) != w.shape:
        wp = jnp.pad(w, ((0, Kp - w.shape[0]), (0, Np - N)))
    wp = wp.astype(jnp.bfloat16)
    bp = jnp.pad(b, (0, Np - N)).reshape(1, Np).astype(jnp.float32)

    grid = (Mp // tm, Np // tn, Kp // tk)
    in_specs = [
        pl.BlockSpec((tm, tk), lambda i, j, k: (i, k)),
        pl.BlockSpec((tk, tn), lambda i, j, k: (k, j)),
        pl.BlockSpec((1, tn), lambda i, j, k: (0, j)),
    ]
    cparams = pltpu.CompilerParams(
        dimension_semantics=("parallel", "parallel", "arbitrary"),
        vmem_limit_bytes=_VMEM_LIMIT)
    scratch = [pltpu.VMEM((tm, tn), jnp.float32)]

    if gap_rows is None:
        out = pl.pallas_call(
            functools.partial(_matmul_kernel, act=act, act_scale=act_scale,
                              pre_scale=pre_scale),
            out_shape=jax.ShapeDtypeStruct((Mp, Np), out_dtype),
            grid=grid, in_specs=in_specs,
            out_specs=pl.BlockSpec((tm, tn), lambda i, j, k: (i, j)),
            scratch_shapes=scratch, compiler_params=cparams,
        )(x, wp, bp)
        if Mp != M:
            out = out[:M]
        return out

    assert Mp == M and gap_rows % tm == 0
    out, gap = pl.pallas_call(
        functools.partial(_matmul_gap_kernel, act=act, act_scale=act_scale,
                          pre_scale=pre_scale),
        out_shape=(jax.ShapeDtypeStruct((Mp, Np), out_dtype),
                   jax.ShapeDtypeStruct((Mp // tm, 8, Np), jnp.float32)),
        grid=grid, in_specs=in_specs,
        out_specs=[pl.BlockSpec((tm, tn), lambda i, j, k: (i, j)),
                   pl.BlockSpec((1, 8, tn), lambda i, j, k: (i, 0, j))],
        scratch_shapes=scratch, compiler_params=cparams,
    )(x, wp, bp)
    # reduce per-M-tile column sums to per-image sums (tiny glue op, KBs of data)
    n_img = M // gap_rows
    tiles_per_img = gap_rows // tm
    gap_sums = gap[:, 0, :].reshape(n_img, tiles_per_img, Np).sum(axis=1)   # (B, Np) f32
    return out, gap_sums


# ------------------------------ conv glue (im2col etc.) ------------------------------

def _same_pad(size, k, s):
    out = -(-size // s)
    total = max((out - 1) * s + k - size, 0)
    return total // 2, total - total // 2


def _im2col(x, k, s, k_pad_to=128):
    B, H, W, C = x.shape
    ph, pw = _same_pad(H, k, s), _same_pad(W, k, s)
    xp = jnp.pad(x, ((0, 0), ph, pw, (0, 0)))
    Ho, Wo = -(-H // s), -(-W // s)
    cols = []
    for di in range(k):
        for dj in range(k):
            cols.append(xp[:, di:di + Ho * s:s, dj:dj + Wo * s:s, :])
    K = k * k * C
    Kp = _round_up(K, k_pad_to)
    if Kp != K:   # fold the lane padding into the same concatenate (no extra HBM pass)
        cols.append(jnp.zeros((B, Ho, Wo, Kp - K), x.dtype))
    patches = jnp.concatenate(cols, axis=-1)           # (B, Ho, Wo, Kp)
    return patches.reshape(B * Ho * Wo, Kp), Ho, Wo


def _std_weight(w, gain, eps=1e-5):
    # ScaledStdConv2d: gain * (w - mean) / (sqrt(var + eps) * sqrt(fan_in)), per out channel
    fan_in = w.shape[0] * w.shape[1] * w.shape[2]
    mean = w.mean(axis=(0, 1, 2), keepdims=True)
    var = w.var(axis=(0, 1, 2), keepdims=True)
    return (w - mean) * (gain / (jnp.sqrt(var + eps) * jnp.sqrt(float(fan_in))))


def nf_conv(x, p, stride, act, *, act_scale=_NF_GAMMA, pre_scale=None, want_gap=False):
    """Weight-standardized SAME conv via bf16 im2col + fused Pallas matmul/bias/act.

    The input channel axis may be 128-padded (zeros); weight Cin rows are zero-padded to
    match so the result is exact, and the output channel axis stays 128-padded (bf16).
    """
    w = _std_weight(p["w"], p["gain"])                  # (k, k, Cin_true, Cout_true)
    k, _, cin_true, cout = w.shape
    B, H, W, C = x.shape
    if C != cin_true:                                   # activations carry 128-padded C
        w = jnp.pad(w, ((0, 0), (0, 0), (0, C - cin_true), (0, 0)))
    xb = x.astype(jnp.bfloat16)
    if k == 1 and stride == 1:
        cols, Ho, Wo = xb.reshape(B * H * W, C), H, W   # free reshape, K already lane-dense
    else:
        # TODO(synk): 3x3 path still materializes the 9x im2col slab (bf16) in HBM; a
        # direct-conv kernel with manual halo DMA (memory_space=pl.ANY) would remove it.
        cols, Ho, Wo = _im2col(xb, k, stride)
    wm = w.reshape(k * k * C, cout)
    if cols.shape[1] != wm.shape[0]:                    # stem0: K padded 27 -> 128
        wm = jnp.pad(wm, ((0, cols.shape[1] - wm.shape[0]), (0, 0)))
    res = matmul_bias_act(cols, wm, p["b"], act, act_scale=act_scale, pre_scale=pre_scale,
                          gap_rows=(Ho * Wo if want_gap else None))
    if want_gap:
        out, gap_sums = res
        return out.reshape(B, Ho, Wo, -1), gap_sums
    return res.reshape(B, Ho, Wo, -1)


# --------------------------------- NFNet-style model ---------------------------------

def nf_block_branch(x, p, *, stride=1):
    """NF block conv branch on an already pre-activated input (gamma*beta*gelu fused into
    the producing conv's epilogue).  Returns (shortcut, branch, per-image GAP sums)."""
    shortcut = nf_conv(x, p["downsample"], stride, "none")          # (B,Ho,Wo,Cp) bf16
    out = nf_conv(x, p["conv1"], 1, "gelu")
    # TODO(synk): nfnet_f0 uses grouped 3x3 convs (group width 128); plain convs here.
    out = nf_conv(out, p["conv2"], stride, "gelu")
    out = nf_conv(out, p["conv2b"], 1, "gelu")
    # SE GAP fused into conv3's epilogue -> no re-read of the branch slab for pooling.
    branch, gap_sums = nf_conv(out, p["conv3"], 1, "none", want_gap=True)
    return shortcut, branch, gap_sums


def block_tail_head(shortcut, branch, gap_sums, p, head_w, head_b, *,
                    alpha, skip_gain=1.0, attn_gain=2.0, act_scale=_NF_GAMMA,
                    num_classes=NUM_CLASSES):
    """Fused SE gates + residual merge + final activation + GAP + classifier head."""
    B, H, W, Cp = branch.shape
    HW = H * W
    short3d = shortcut.reshape(B, HW, Cp)
    branch3d = branch.reshape(B, HW, Cp)
    pooled = gap_sums.reshape(B, 1, Cp)                 # per-image column sums (f32, tiny)

    c_true, mid = p["se_w1"].shape
    Midp = _round_up(mid, 128)
    w1 = jnp.pad(p["se_w1"], ((0, Cp - c_true), (0, Midp - mid)))
    b1 = jnp.pad(p["se_b1"], (0, Midp - mid)).reshape(1, Midp)
    w2 = jnp.pad(p["se_w2"], ((0, Midp - mid), (0, Cp - p["se_w2"].shape[1])))
    b2 = jnp.pad(p["se_b2"], (0, Cp - p["se_w2"].shape[1])).reshape(1, Cp)

    Np = _round_up(num_classes, 128)
    hwp = jnp.pad(head_w, ((0, Cp - head_w.shape[0]), (0, Np - num_classes)))
    hbp = jnp.pad(head_b, (0, Np - num_classes)).reshape(1, Np)

    thw, HWp = _pick_hw_tile(HW)
    if HWp != HW:                                       # zero rows contribute 0 to the GAP
        pad = ((0, 0), (0, HWp - HW), (0, 0))
        short3d = jnp.pad(short3d, pad)
        branch3d = jnp.pad(branch3d, pad)

    out = pl.pallas_call(
        functools.partial(_tail_kernel, inv_hw=1.0 / HW,
                          se_scale=alpha * skip_gain * attn_gain, act_scale=act_scale),
        out_shape=jax.ShapeDtypeStruct((B, 1, Np), jnp.float32),
        grid=(B, HWp // thw),
        in_specs=[
            pl.BlockSpec((1, 1, Cp), lambda b, h: (b, 0, 0)),     # pooled sums
            pl.BlockSpec((Cp, Midp), lambda b, h: (0, 0)),        # SE FC1
            pl.BlockSpec((1, Midp), lambda b, h: (0, 0)),
            pl.BlockSpec((Midp, Cp), lambda b, h: (0, 0)),        # SE FC2
            pl.BlockSpec((1, Cp), lambda b, h: (0, 0)),
            pl.BlockSpec((1, thw, Cp), lambda b, h: (b, h, 0)),   # shortcut (bf16)
            pl.BlockSpec((1, thw, Cp), lambda b, h: (b, h, 0)),   # branch   (bf16)
            pl.BlockSpec((Cp, Np), lambda b, h: (0, 0)),          # head weights
            pl.BlockSpec((1, Np), lambda b, h: (0, 0)),
        ],
        out_specs=pl.BlockSpec((1, 1, Np), lambda b, h: (b, 0, 0)),
        scratch_shapes=[pltpu.VMEM((8, Cp), jnp.float32),         # SE gates
                        pltpu.VMEM((8, Cp), jnp.float32)],        # GAP accumulator
        compiler_params=pltpu.CompilerParams(
            dimension_semantics=("parallel", "arbitrary"),
            vmem_limit_bytes=_VMEM_LIMIT),
    )(pooled, w1, b1, w2, b2, short3d, branch3d, hwp, hbp)
    return out[:, 0, :num_classes]


def nfnet_forward(x_nchw, params):
    x = jnp.transpose(x_nchw, (0, 2, 3, 1)).astype(jnp.float32)   # NCHW -> NHWC
    alpha, beta = 0.2, 1.0
    # stem: conv(s2)+gelu, conv+gelu, conv+gelu, conv(s2).  The first block's NF
    # pre-activation (gamma*beta*gelu) is hoisted into stem3's epilogue (block0 has a
    # downsample, so the un-activated tensor is never needed again).
    x = nf_conv(x, params["stem0"], 2, "gelu")
    x = nf_conv(x, params["stem1"], 1, "gelu")
    x = nf_conv(x, params["stem2"], 1, "gelu")
    x = nf_conv(x, params["stem3"], 2, "gelu", act_scale=_NF_GAMMA * beta)
    # TODO(synk): full nfnet_f0 has 4 stages ([1,2,6,3] blocks, widths [256,512,1536,1536])
    # plus a final 1x1 conv to 3072 before the head; one reduced-width NF block stands in.
    shortcut, branch, gap_sums = nf_block_branch(x, params["block0"], stride=1)
    # TODO(synk): with multiple blocks the residual merge would feed the next block; here
    # it is fused into the head (SE + merge + act + GAP + classifier in one kernel).
    # skip_gain (skipinit) kept at 1.0 (timm default 0.0 would zero the branch).
    return block_tail_head(shortcut, branch, gap_sums, params["block0"],
                           params["head_w"], params["head_b"],
                           alpha=alpha, skip_gain=1.0, attn_gain=2.0,
                           act_scale=_NF_GAMMA)


# ------------------------------- deterministic params --------------------------------

def init_params(key, num_classes):
    keys = iter(jax.random.split(key, 32))

    def conv(k, cin, cout):
        return {"w": jax.random.normal(next(keys), (k, k, cin, cout), jnp.float32),
                "b": jnp.zeros((cout,), jnp.float32),
                "gain": jnp.ones((cout,), jnp.float32)}

    cin, mid, cout = 32, 32, 64
    params = {
        "stem0": conv(3, 3, 8),
        "stem1": conv(3, 8, 16),
        "stem2": conv(3, 16, 16),
        "stem3": conv(3, 16, 32),
        "block0": {
            "downsample": conv(1, cin, cout),
            "conv1": conv(1, cin, mid),
            "conv2": conv(3, mid, mid),
            "conv2b": conv(3, mid, mid),
            "conv3": conv(1, mid, cout),
            "se_w1": jax.random.normal(next(keys), (cout, mid), jnp.float32) / jnp.sqrt(float(cout)),
            "se_b1": jnp.zeros((mid,), jnp.float32),
            "se_w2": jax.random.normal(next(keys), (mid, cout), jnp.float32) / jnp.sqrt(float(mid)),
            "se_b2": jnp.zeros((cout,), jnp.float32),
        },
        "head_w": jax.random.normal(next(keys), (cout, num_classes), jnp.float32) * 0.01,
        "head_b": jnp.zeros((num_classes,), jnp.float32),
    }
    return params


if __name__ == "__main__":
    key = jax.random.PRNGKey(0)
    pkey, xkey = jax.random.split(key)
    params = init_params(pkey, NUM_CLASSES)
    x = jax.random.normal(xkey, (2, 3, 32, 32), jnp.float32)   # PyTorch-style NCHW input
    logits = jax.jit(nfnet_forward)(x, params)
    jax.block_until_ready(logits)
    assert logits.shape == (2, NUM_CLASSES)
    print("KERNEL_OK")
</pallas_src>

<mosaic_0001>
module attributes {stable_mosaic.version = 11 : i64} {
  func.func @_matmul_kernel(%arg0: i32, %arg1: i32, %arg2: i32, %arg3: memref<256x128xbf16, #tpu.memory_space<vmem>>, %arg4: memref<128x128xbf16, #tpu.memory_space<vmem>>, %arg5: memref<1x128xf32, #tpu.memory_space<vmem>>, %arg6: memref<256x128xbf16, #tpu.memory_space<vmem>>, %arg7: memref<256x128xf32, #tpu.memory_space<vmem>>) attributes {dimension_semantics = [#tpu.dimension_semantics<parallel>, #tpu.dimension_semantics<parallel>, #tpu.dimension_semantics<arbitrary>], iteration_bounds = array<i64: 2, 1, 1>, scalar_prefetch = 0 : i64, scratch_operands = 1 : i64, tpu.core_type = #tpu.core_type<tc>, window_params = [{transform_indices = @transform_0, window_bounds = array<i64: 256, 128>}, {transform_indices = @transform_1, window_bounds = array<i64: 128, 128>}, {transform_indices = @transform_2, window_bounds = array<i64: 1, 128>}, {transform_indices = @transform_3, window_bounds = array<i64: 256, 128>}]} {
    %c0_i32 = arith.constant 0 : i32
    %0 = arith.cmpi eq, %arg2, %c0_i32 : i32
    %1 = arith.extui %0 : i1 to i32
    %c0_i32_0 = arith.constant 0 : i32
    %2 = arith.cmpi ne, %1, %c0_i32_0 : i32
    scf.if %2 {
      %cst_10 = arith.constant 0.000000e+00 : f32
      %12 = vector.broadcast %cst_10 : f32 to vector<256x128xf32>
      %c0_11 = arith.constant 0 : index
      %c0_12 = arith.constant 0 : index
      %13 = vector.load %arg7[%c0_11, %c0_12] : memref<256x128xf32, #tpu.memory_space<vmem>>, vector<256x128xf32>
      tpu.vector_store %arg7[%c0_11, %c0_12], %12 {strides = array<i32>} : memref<256x128xf32, #tpu.memory_space<vmem>>, vector<256x128xf32>,
    } else {
    }
    %c0 = arith.constant 0 : index
    %c0_1 = arith.constant 0 : index
    %3 = vector.load %arg3[%c0, %c0_1] : memref<256x128xbf16, #tpu.memory_space<vmem>>, vector<256x128xbf16>
    %c0_2 = arith.constant 0 : index
    %c0_3 = arith.constant 0 : index
    %4 = vector.load %arg7[%c0_2, %c0_3] : memref<256x128xf32, #tpu.memory_space<vmem>>, vector<256x128xf32>
    %c0_4 = arith.constant 0 : index
    %c0_5 = arith.constant 0 : index
    %5 = vector.load %arg4[%c0_4, %c0_5] : memref<128x128xbf16, #tpu.memory_space<vmem>>, vector<128x128xbf16>
    %cst = arith.constant dense<0.000000e+00> : vector<256x128xf32>
    %6 = tpu.matmul %3, %5, %cst {dimension_numbers = #tpu.dot_dimension_numbers<[1], [0], [0], [1], [0, 0, 1, 1], [], []>} : vector<256x128xbf16>, vector<128x128xbf16>, vector<256x128xf32> -> vector<256x128xf32>
    %7 = arith.addf %4, %6 : vector<256x128xf32>
    %c0_6 = arith.constant 0 : index
    %c0_7 = arith.constant 0 : index
    %8 = vector.load %arg7[%c0_6, %c0_7] : memref<256x128xf32, #tpu.memory_space<vmem>>, vector<256x128xf32>
    tpu.vector_store %arg7[%c0_6, %c0_7], %7 {strides = array<i32>} : memref<256x128xf32, #tpu.memory_space<vmem>>, vector<256x128xf32>,
    %c0_i32_8 = arith.constant 0 : i32
    %9 = arith.cmpi eq, %arg2, %c0_i32_8 : i32
    %10 = arith.extui %9 : i1 to i32
    %c0_i32_9 = arith.constant 0 : i32
    %11 = arith.cmpi ne, %10, %c0_i32_9 : i32
    scf.if %11 {
      %c0_10 = arith.constant 0 : index
      %c0_11 = arith.constant 0 : index
      %12 = vector.load %arg7[%c0_10, %c0_11] : memref<256x128xf32, #tpu.memory_space<vmem>>, vector<256x128xf32>
      %c0_12 = arith.constant 0 : index
      %c0_13 = arith.constant 0 : index
      %13 = vector.load %arg5[%c0_12, %c0_13] : memref<1x128xf32, #tpu.memory_space<vmem>>, vector<1x128xf32>
      %14 = vector.broadcast %13 : vector<1x128xf32> to vector<256x128xf32>
      %15 = arith.addf %12, %14 : vector<256x128xf32>
      %cst_14 = arith.constant 5.000000e-01 : f32
      %16 = vector.broadcast %cst_14 : f32 to vector<256x128xf32>
      %17 = arith.mulf %16, %15 : vector<256x128xf32>
      %cst_15 = arith.constant 4.471500e-02 : f32
      %18 = vector.broadcast %cst_15 : f32 to vector<256x128xf32>
      %19 = arith.mulf %18, %15 : vector<256x128xf32>
      %20 = arith.mulf %19, %15 : vector<256x128xf32>
      %21 = arith.mulf %20, %15 : vector<256x128xf32>
      %22 = arith.addf %15, %21 : vector<256x128xf32>
      %cst_16 = arith.constant 0.797884583 : f32
      %23 = vector.broadcast %cst_16 : f32 to vector<256x128xf32>
      %24 = arith.mulf %23, %22 : vector<256x128xf32>
      %25 = math.tanh %24 : vector<256x128xf32>
      %cst_17 = arith.constant 1.000000e+00 : f32
      %26 = vector.broadcast %cst_17 : f32 to vector<256x128xf32>
      %27 = arith.addf %26, %25 : vector<256x128xf32>
      %28 = arith.mulf %17, %27 : vector<256x128xf32>
      %cst_18 = arith.constant 1.70150435 : f32
      %29 = vector.broadcast %cst_18 : f32 to vector<256x128xf32>
      %30 = arith.mulf %28, %29 : vector<256x128xf32>
      %31 = arith.truncf %30 : vector<256x128xf32> to vector<256x128xbf16>
      %c0_19 = arith.constant 0 : index
      %c0_20 = arith.constant 0 : index
      %32 = vector.load %arg6[%c0_19, %c0_20] : memref<256x128xbf16, #tpu.memory_space<vmem>>, vector<256x128xbf16>
      tpu.vector_store %arg6[%c0_19, %c0_20], %31 {strides = array<i32>} : memref<256x128xbf16, #tpu.memory_space<vmem>>, vector<256x128xbf16>,
    } else {
    }
    return
  }
  func.func @transform_0(%arg0: i32, %arg1: i32, %arg2: i32) -> (i32, i32) {
    %c0_i32 = arith.constant 0 : i32
    return %arg0, %arg2 : i32, i32
  }
  func.func @transform_1(%arg0: i32, %arg1: i32, %arg2: i32) -> (i32, i32) {
    %c0_i32 = arith.constant 0 : i32
    return %arg2, %arg1 : i32, i32
  }
  func.func @transform_2(%arg0: i32, %arg1: i32, %arg2: i32) -> (i32, i32) {
    %c0_i32 = arith.constant 0 : i32
    %c0_i32_0 = arith.constant 0 : i32
    return %c0_i32, %arg1 : i32, i32
  }
  func.func @transform_3(%arg0: i32, %arg1: i32, %arg2: i32) -> (i32, i32) {
    %c0_i32 = arith.constant 0 : i32
    return %arg0, %arg1 : i32, i32
  }
}

module attributes {stable_mosaic.version = 11 : i64} {
  func.func @_matmul_kernel(%arg0: i32, %arg1: i32, %arg2: i32, %arg3: memref<256x384xbf16, #tpu.memory_space<vmem>>, %arg4: memref<384x128xbf16, #tpu.memory_space<vmem>>, %arg5: memref<1x128xf32, #tpu.memory_space<vmem>>, %arg6: memref<256x128xbf16, #tpu.memory_space<vmem>>, %arg7: memref<256x128xf32, #tpu.memory_space<vmem>>) attributes {dimension_semantics = [#tpu.dimension_semantics<parallel>, #tpu.dimension_semantics<parallel>, #tpu.dimension_semantics<arbitrary>], iteration_bounds = array<i64: 2, 1, 3>, scalar_prefetch = 0 : i64, scratch_operands = 1 : i64, tpu.core_type = #tpu.core_type<tc>, window_params = [{transform_indices = @transform_0, window_bounds = array<i64: 256, 384>}, {transform_indices = @transform_1, window_bounds = array<i64: 384, 128>}, {transform_indices = @transform_2, window_bounds = array<i64: 1, 128>}, {transform_indices = @transform_3, window_bounds = array<i64: 256, 128>}]} {
    %c0_i32 = arith.constant 0 : i32
    %0 = arith.cmpi eq, %arg2, %c0_i32 : i32
    %1 = arith.extui %0 : i1 to i32
    %c0_i32_0 = arith.constant 0 : i32
    %2 = arith.cmpi ne, %1, %c0_i32_0 : i32
    scf.if %2 {
      %cst_9 = arith.constant 0.000000e+00 : f32
      %12 = vector.broadcast %cst_9 : f32 to vector<256x128xf32>
      %c0_10 = arith.constant 0 : index
      %c0_11 = arith.constant 0 : index
      %13 = vector.load %arg7[%c0_10, %c0_11] : memref<256x128xf32, #tpu.memory_space<vmem>>, vector<256x128xf32>
      tpu.vector_store %arg7[%c0_10, %c0_11], %12 {strides = array<i32>} : memref<256x128xf32, #tpu.memory_space<vmem>>, vector<256x128xf32>,
    } else {
    }
    %c0 = arith.constant 0 : index
    %c0_1 = arith.constant 0 : index
    %3 = vector.load %arg3[%c0, %c0_1] : memref<256x384xbf16, #tpu.memory_space<vmem>>, vector<256x384xbf16>
    %c0_2 = arith.constant 0 : index
    %c0_3 = arith.constant 0 : index
    %4 = vector.load %arg7[%c0_2, %c0_3] : memref<256x128xf32, #tpu.memory_space<vmem>>, vector<256x128xf32>
    %c0_4 = arith.constant 0 : index
    %c0_5 = arith.constant 0 : index
    %5 = vector.load %arg4[%c0_4, %c0_5] : memref<384x128xbf16, #tpu.memory_space<vmem>>, vector<384x128xbf16>
    %cst = arith.constant dense<0.000000e+00> : vector<256x128xf32>
    %6 = tpu.matmul %3, %5, %cst {dimension_numbers = #tpu.dot_dimension_numbers<[1], [0], [0], [1], [0, 0, 1, 1], [], []>} : vector<256x384xbf16>, vector<384x128xbf16>, vector<256x128xf32> -> vector<256x128xf32>
    %7 = arith.addf %4, %6 : vector<256x128xf32>
    %c0_6 = arith.constant 0 : index
    %c0_7 = arith.constant 0 : index
    %8 = vector.load %arg7[%c0_6, %c0_7] : memref<256x128xf32, #tpu.memory_space<vmem>>, vector<256x128xf32>
    tpu.vector_store %arg7[%c0_6, %c0_7], %7 {strides = array<i32>} : memref<256x128xf32, #tpu.memory_space<vmem>>, vector<256x128xf32>,
    %c2_i32 = arith.constant 2 : i32
    %9 = arith.cmpi eq, %arg2, %c2_i32 : i32
    %10 = arith.extui %9 : i1 to i32
    %c0_i32_8 = arith.constant 0 : i32
    %11 = arith.cmpi ne, %10, %c0_i32_8 : i32
    scf.if %11 {
      %c0_9 = arith.constant 0 : index
      %c0_10 = arith.constant 0 : index
      %12 = vector.load %arg7[%c0_9, %c0_10] : memref<256x128xf32, #tpu.memory_space<vmem>>, vector<256x128xf32>
      %c0_11 = arith.constant 0 : index
      %c0_12 = arith.constant 0 : index
      %13 = vector.load %arg5[%c0_11, %c0_12] : memref<1x128xf32, #tpu.memory_space<vmem>>, vector<1x128xf32>
      %14 = vector.broadcast %13 : vector<1x128xf32> to vector<256x128xf32>
      %15 = arith.addf %12, %14 : vector<256x128xf32>
      %cst_13 = arith.constant 5.000000e-01 : f32
      %16 = vector.broadcast %cst_13 : f32 to vector<256x128xf32>
      %17 = arith.mulf %16, %15 : vector<256x128xf32>
      %cst_14 = arith.constant 4.471500e-02 : f32
      %18 = vector.broadcast %cst_14 : f32 to vector<256x128xf32>
      %19 = arith.mulf %18, %15 : vector<256x128xf32>
      %20 = arith.mulf %19, %15 : vector<256x128xf32>
      %21 = arith.mulf %20, %15 : vector<256x128xf32>
      %22 = arith.addf %15, %21 : vector<256x128xf32>
      %cst_15 = arith.constant 0.797884583 : f32
      %23 = vector.broadcast %cst_15 : f32 to vector<256x128xf32>
      %24 = arith.mulf %23, %22 : vector<256x128xf32>
      %25 = math.tanh %24 : vector<256x128xf32>
      %cst_16 = arith.constant 1.000000e+00 : f32
      %26 = vector.broadcast %cst_16 : f32 to vector<256x128xf32>
      %27 = arith.addf %26, %25 : vector<256x128xf32>
      %28 = arith.mulf %17, %27 : vector<256x128xf32>
      %cst_17 = arith.constant 1.70150435 : f32
      %29 = vector.broadcast %cst_17 : f32 to vector<256x128xf32>
      %30 = arith.mulf %28, %29 : vector<256x128xf32>
      %31 = arith.truncf %30 : vector<256x128xf32> to vector<256x128xbf16>
      %c0_18 = arith.constant 0 : index
      %c0_19 = arith.constant 0 : index
      %32 = vector.load %arg6[%c0_18, %c0_19] : memref<256x128xbf16, #tpu.memory_space<vmem>>, vector<256x128xbf16>
      tpu.vector_store %arg6[%c0_18, %c0_19], %31 {strides = array<i32>} : memref<256x128xbf16, #tpu.memory_space<vmem>>, vector<256x128xbf16>,
    } else {
    }
    return
  }
  func.func @transform_0(%arg0: i32, %arg1: i32, %arg2: i32) -> (i32, i32) {
    %c0_i32 = arith.constant 0 : i32
    return %arg0, %arg2 : i32, i32
  }
  func.func @transform_1(%arg0: i32, %arg1: i32, %arg2: i32) -> (i32, i32) {
    %c0_i32 = arith.constant 0 : i32
    return %arg2, %arg1 : i32, i32
  }
  func.func @transform_2(%arg0: i32, %arg1: i32, %arg2: i32) -> (i32, i32) {
    %c0_i32 = arith.constant 0 : i32
    %c0_i32_0 = arith.constant 0 : i32
    return %c0_i32, %arg1 : i32, i32
  }
  func.func @transform_3(%arg0: i32, %arg1: i32, %arg2: i32) -> (i32, i32) {
    %c0_i32 = arith.constant 0 : i32
    return %arg0, %arg1 : i32, i32
  }
}

module attributes {stable_mosaic.version = 11 : i64} {
  func.func @_matmul_kernel(%arg0: i32, %arg1: i32, %arg2: i32, %arg3: memref<128x384xbf16, #tpu.memory_space<vmem>>, %arg4: memref<384x128xbf16, #tpu.memory_space<vmem>>, %arg5: memref<1x128xf32, #tpu.memory_space<vmem>>, %arg6: memref<128x128xbf16, #tpu.memory_space<vmem>>, %arg7: memref<128x128xf32, #tpu.memory_space<vmem>>) attributes {dimension_semantics = [#tpu.dimension_semantics<parallel>, #tpu.dimension_semantics<parallel>, #tpu.dimension_semantics<arbitrary>], iteration_bounds = array<i64: 1, 1, 3>, scalar_prefetch = 0 : i64, scratch_operands = 1 : i64, tpu.core_type = #tpu.core_type<tc>, window_params = [{transform_indices = @transform_0, window_bounds = array<i64: 128, 384>}, {transform_indices = @transform_1, window_bounds = array<i64: 384, 128>}, {transform_indices = @transform_2, window_bounds = array<i64: 1, 128>}, {transform_indices = @transform_3, window_bounds = array<i64: 128, 128>}]} {
    %c0_i32 = arith.constant 0 : i32
    %0 = arith.cmpi eq, %arg2, %c0_i32 : i32
    %1 = arith.extui %0 : i1 to i32
    %c0_i32_0 = arith.constant 0 : i32
    %2 = arith.cmpi ne, %1, %c0_i32_0 : i32
    scf.if %2 {
      %cst_9 = arith.constant 0.000000e+00 : f32
      %12 = vector.broadcast %cst_9 : f32 to vector<128x128xf32>
      %c0_10 = arith.constant 0 : index
      %c0_11 = arith.constant 0 : index
      %13 = vector.load %arg7[%c0_10, %c0_11] : memref<128x128xf32, #tpu.memory_space<vmem>>, vector<128x128xf32>
      tpu.vector_store %arg7[%c0_10, %c0_11], %12 {strides = array<i32>} : memref<128x128xf32, #tpu.memory_space<vmem>>, vector<128x128xf32>,
    } else {
    }
    %c0 = arith.constant 0 : index
    %c0_1 = arith.constant 0 : index
    %3 = vector.load %arg3[%c0, %c0_1] : memref<128x384xbf16, #tpu.memory_space<vmem>>, vector<128x384xbf16>
    %c0_2 = arith.constant 0 : index
    %c0_3 = arith.constant 0 : index
    %4 = vector.load %arg7[%c0_2, %c0_3] : memref<128x128xf32, #tpu.memory_space<vmem>>, vector<128x128xf32>
    %c0_4 = arith.constant 0 : index
    %c0_5 = arith.constant 0 : index
    %5 = vector.load %arg4[%c0_4, %c0_5] : memref<384x128xbf16, #tpu.memory_space<vmem>>, vector<384x128xbf16>
    %cst = arith.constant dense<0.000000e+00> : vector<128x128xf32>
    %6 = tpu.matmul %3, %5, %cst {dimension_numbers = #tpu.dot_dimension_numbers<[1], [0], [0], [1], [0, 0, 1, 1], [], []>} : vector<128x384xbf16>, vector<384x128xbf16>, vector<128x128xf32> -> vector<128x128xf32>
    %7 = arith.addf %4, %6 : vector<128x128xf32>
    %c0_6 = arith.constant 0 : index
    %c0_7 = arith.constant 0 : index
    %8 = vector.load %arg7[%c0_6, %c0_7] : memref<128x128xf32, #tpu.memory_space<vmem>>, vector<128x128xf32>
    tpu.vector_store %arg7[%c0_6, %c0_7], %7 {strides = array<i32>} : memref<128x128xf32, #tpu.memory_space<vmem>>, vector<128x128xf32>,
    %c2_i32 = arith.constant 2 : i32
    %9 = arith.cmpi eq, %arg2, %c2_i32 : i32
    %10 = arith.extui %9 : i1 to i32
    %c0_i32_8 = arith.constant 0 : i32
    %11 = arith.cmpi ne, %10, %c0_i32_8 : i32
    scf.if %11 {
      %c0_9 = arith.constant 0 : index
      %c0_10 = arith.constant 0 : index
      %12 = vector.load %arg7[%c0_9, %c0_10] : memref<128x128xf32, #tpu.memory_space<vmem>>, vector<128x128xf32>
      %c0_11 = arith.constant 0 : index
      %c0_12 = arith.constant 0 : index
      %13 = vector.load %arg5[%c0_11, %c0_12] : memref<1x128xf32, #tpu.memory_space<vmem>>, vector<1x128xf32>
      %14 = vector.broadcast %13 : vector<1x128xf32> to vector<128x128xf32>
      %15 = arith.addf %12, %14 : vector<128x128xf32>
      %cst_13 = arith.constant 5.000000e-01 : f32
      %16 = vector.broadcast %cst_13 : f32 to vector<128x128xf32>
      %17 = arith.mulf %16, %15 : vector<128x128xf32>
      %cst_14 = arith.constant 4.471500e-02 : f32
      %18 = vector.broadcast %cst_14 : f32 to vector<128x128xf32>
      %19 = arith.mulf %18, %15 : vector<128x128xf32>
      %20 = arith.mulf %19, %15 : vector<128x128xf32>
      %21 = arith.mulf %20, %15 : vector<128x128xf32>
      %22 = arith.addf %15, %21 : vector<128x128xf32>
      %cst_15 = arith.constant 0.797884583 : f32
      %23 = vector.broadcast %cst_15 : f32 to vector<128x128xf32>
      %24 = arith.mulf %23, %22 : vector<128x128xf32>
      %25 = math.tanh %24 : vector<128x128xf32>
      %cst_16 = arith.constant 1.000000e+00 : f32
      %26 = vector.broadcast %cst_16 : f32 to vector<128x128xf32>
      %27 = arith.addf %26, %25 : vector<128x128xf32>
      %28 = arith.mulf %17, %27 : vector<128x128xf32>
      %cst_17 = arith.constant 1.70150435 : f32
      %29 = vector.broadcast %cst_17 : f32 to vector<128x128xf32>
      %30 = arith.mulf %28, %29 : vector<128x128xf32>
      %31 = arith.truncf %30 : vector<128x128xf32> to vector<128x128xbf16>
      %c0_18 = arith.constant 0 : index
      %c0_19 = arith.constant 0 : index
      %32 = vector.load %arg6[%c0_18, %c0_19] : memref<128x128xbf16, #tpu.memory_space<vmem>>, vector<128x128xbf16>
      tpu.vector_store %arg6[%c0_18, %c0_19], %31 {strides = array<i32>} : memref<128x128xbf16, #tpu.memory_space<vmem>>, vector<128x128xbf16>,
    } else {
    }
    return
  }
  func.func @transform_0(%arg0: i32, %arg1: i32, %arg2: i32) -> (i32, i32) {
    %c0_i32 = arith.constant 0 : i32
    return %arg0, %arg2 : i32, i32
  }
  func.func @transform_1(%arg0: i32, %arg1: i32, %arg2: i32) -> (i32, i32) {
    %c0_i32 = arith.constant 0 : i32
    return %arg2, %arg1 : i32, i32
  }
  func.func @transform_2(%arg0: i32, %arg1: i32, %arg2: i32) -> (i32, i32) {
    %c0_i32 = arith.constant 0 : i32
    %c0_i32_0 = arith.constant 0 : i32
    return %c0_i32, %arg1 : i32, i32
  }
  func.func @transform_3(%arg0: i32, %arg1: i32, %arg2: i32) -> (i32, i32) {
    %c0_i32 = arith.constant 0 : i32
    return %arg0, %arg1 : i32, i32
  }
}

module attributes {stable_mosaic.version = 11 : i64} {
  func.func @_matmul_kernel(%arg0: i32, %arg1: i32, %arg2: i32, %arg3: memref<128x128xbf16, #tpu.memory_space<vmem>>, %arg4: memref<128x128xbf16, #tpu.memory_space<vmem>>, %arg5: memref<1x128xf32, #tpu.memory_space<vmem>>, %arg6: memref<128x128xbf16, #tpu.memory_space<vmem>>, %arg7: memref<128x128xf32, #tpu.memory_space<vmem>>) attributes {dimension_semantics = [#tpu.dimension_semantics<parallel>, #tpu.dimension_semantics<parallel>, #tpu.dimension_semantics<arbitrary>], iteration_bounds = array<i64: 1, 1, 1>, scalar_prefetch = 0 : i64, scratch_operands = 1 : i64, tpu.core_type = #tpu.core_type<tc>, window_params = [{transform_indices = @transform_0, window_bounds = array<i64: 128, 128>}, {transform_indices = @transform_1, window_bounds = array<i64: 128, 128>}, {transform_indices = @transform_2, window_bounds = array<i64: 1, 128>}, {transform_indices = @transform_3, window_bounds = array<i64: 128, 128>}]} {
    %c0_i32 = arith.constant 0 : i32
    %0 = arith.cmpi eq, %arg2, %c0_i32 : i32
    %1 = arith.extui %0 : i1 to i32
    %c0_i32_0 = arith.constant 0 : i32
    %2 = arith.cmpi ne, %1, %c0_i32_0 : i32
    scf.if %2 {
      %cst_10 = arith.constant 0.000000e+00 : f32
      %12 = vector.broadcast %cst_10 : f32 to vector<128x128xf32>
      %c0_11 = arith.constant 0 : index
      %c0_12 = arith.constant 0 : index
      %13 = vector.load %arg7[%c0_11, %c0_12] : memref<128x128xf32, #tpu.memory_space<vmem>>, vector<128x128xf32>
      tpu.vector_store %arg7[%c0_11, %c0_12], %12 {strides = array<i32>} : memref<128x128xf32, #tpu.memory_space<vmem>>, vector<128x128xf32>,
    } else {
    }
    %c0 = arith.constant 0 : index
    %c0_1 = arith.constant 0 : index
    %3 = vector.load %arg3[%c0, %c0_1] : memref<128x128xbf16, #tpu.memory_space<vmem>>, vector<128x128xbf16>
    %c0_2 = arith.constant 0 : index
    %c0_3 = arith.constant 0 : index
    %4 = vector.load %arg7[%c0_2, %c0_3] : memref<128x128xf32, #tpu.memory_space<vmem>>, vector<128x128xf32>
    %c0_4 = arith.constant 0 : index
    %c0_5 = arith.constant 0 : index
    %5 = vector.load %arg4[%c0_4, %c0_5] : memref<128x128xbf16, #tpu.memory_space<vmem>>, vector<128x128xbf16>
    %cst = arith.constant dense<0.000000e+00> : vector<128x128xf32>
    %6 = tpu.matmul %3, %5, %cst {dimension_numbers = #tpu.dot_dimension_numbers<[1], [0], [0], [1], [0, 0, 1, 1], [], []>} : vector<128x128xbf16>, vector<128x128xbf16>, vector<128x128xf32> -> vector<128x128xf32>
    %7 = arith.addf %4, %6 : vector<128x128xf32>
    %c0_6 = arith.constant 0 : index
    %c0_7 = arith.constant 0 : index
    %8 = vector.load %arg7[%c0_6, %c0_7] : memref<128x128xf32, #tpu.memory_space<vmem>>, vector<128x128xf32>
    tpu.vector_store %arg7[%c0_6, %c0_7], %7 {strides = array<i32>} : memref<128x128xf32, #tpu.memory_space<vmem>>, vector<128x128xf32>,
    %c0_i32_8 = arith.constant 0 : i32
    %9 = arith.cmpi eq, %arg2, %c0_i32_8 : i32
    %10 = arith.extui %9 : i1 to i32
    %c0_i32_9 = arith.constant 0 : i32
    %11 = arith.cmpi ne, %10, %c0_i32_9 : i32
    scf.if %11 {
      %c0_10 = arith.constant 0 : index
      %c0_11 = arith.constant 0 : index
      %12 = vector.load %arg7[%c0_10, %c0_11] : memref<128x128xf32, #tpu.memory_space<vmem>>, vector<128x128xf32>
      %c0_12 = arith.constant 0 : index
      %c0_13 = arith.constant 0 : index
      %13 = vector.load %arg5[%c0_12, %c0_13] : memref<1x128xf32, #tpu.memory_space<vmem>>, vector<1x128xf32>
      %14 = vector.broadcast %13 : vector<1x128xf32> to vector<128x128xf32>
      %15 = arith.addf %12, %14 : vector<128x128xf32>
      %cst_14 = arith.constant 5.000000e-01 : f32
      %16 = vector.broadcast %cst_14 : f32 to vector<128x128xf32>
      %17 = arith.mulf %16, %15 : vector<128x128xf32>
      %cst_15 = arith.constant 4.471500e-02 : f32
      %18 = vector.broadcast %cst_15 : f32 to vector<128x128xf32>
      %19 = arith.mulf %18, %15 : vector<128x128xf32>
      %20 = arith.mulf %19, %15 : vector<128x128xf32>
      %21 = arith.mulf %20, %15 : vector<128x128xf32>
      %22 = arith.addf %15, %21 : vector<128x128xf32>
      %cst_16 = arith.constant 0.797884583 : f32
      %23 = vector.broadcast %cst_16 : f32 to vector<128x128xf32>
      %24 = arith.mulf %23, %22 : vector<128x128xf32>
      %25 = math.tanh %24 : vector<128x128xf32>
      %cst_17 = arith.constant 1.000000e+00 : f32
      %26 = vector.broadcast %cst_17 : f32 to vector<128x128xf32>
      %27 = arith.addf %26, %25 : vector<128x128xf32>
      %28 = arith.mulf %17, %27 : vector<128x128xf32>
      %cst_18 = arith.constant 1.70150435 : f32
      %29 = vector.broadcast %cst_18 : f32 to vector<128x128xf32>
      %30 = arith.mulf %28, %29 : vector<128x128xf32>
      %31 = arith.truncf %30 : vector<128x128xf32> to vector<128x128xbf16>
      %c0_19 = arith.constant 0 : index
      %c0_20 = arith.constant 0 : index
      %32 = vector.load %arg6[%c0_19, %c0_20] : memref<128x128xbf16, #tpu.memory_space<vmem>>, vector<128x128xbf16>
      tpu.vector_store %arg6[%c0_19, %c0_20], %31 {strides = array<i32>} : memref<128x128xbf16, #tpu.memory_space<vmem>>, vector<128x128xbf16>,
    } else {
    }
    return
  }
  func.func @transform_0(%arg0: i32, %arg1: i32, %arg2: i32) -> (i32, i32) {
    %c0_i32 = arith.constant 0 : i32
    return %arg0, %arg2 : i32, i32
  }
  func.func @transform_1(%arg0: i32, %arg1: i32, %arg2: i32) -> (i32, i32) {
    %c0_i32 = arith.constant 0 : i32
    return %arg2, %arg1 : i32, i32
  }
  func.func @transform_2(%arg0: i32, %arg1: i32, %arg2: i32) -> (i32, i32) {
    %c0_i32 = arith.constant 0 : i32
    %c0_i32_0 = arith.constant 0 : i32
    return %c0_i32, %arg1 : i32, i32
  }
  func.func @transform_3(%arg0: i32, %arg1: i32, %arg2: i32) -> (i32, i32) {
    %c0_i32 = arith.constant 0 : i32
    return %arg0, %arg1 : i32, i32
  }
}

module attributes {stable_mosaic.version = 11 : i64} {
  func.func @_matmul_gap_kernel(%arg0: i32, %arg1: i32, %arg2: i32, %arg3: memref<64x128xbf16, #tpu.memory_space<vmem>>, %arg4: memref<128x128xbf16, #tpu.memory_space<vmem>>, %arg5: memref<1x128xf32, #tpu.memory_space<vmem>>, %arg6: memref<64x128xbf16, #tpu.memory_space<vmem>>, %arg7: memref<1x8x128xf32, #tpu.memory_space<vmem>>, %arg8: memref<64x128xf32, #tpu.memory_space<vmem>>) attributes {dimension_semantics = [#tpu.dimension_semantics<parallel>, #tpu.dimension_semantics<parallel>, #tpu.dimension_semantics<arbitrary>], iteration_bounds = array<i64: 2, 1, 1>, scalar_prefetch = 0 : i64, scratch_operands = 1 : i64, tpu.core_type = #tpu.core_type<tc>, window_params = [{transform_indices = @transform_0, window_bounds = array<i64: 64, 128>}, {transform_indices = @transform_1, window_bounds = array<i64: 128, 128>}, {transform_indices = @transform_2, window_bounds = array<i64: 1, 128>}, {transform_indices = @transform_3, window_bounds = array<i64: 64, 128>}, {transform_indices = @transform_4, window_bounds = array<i64: 1, 8, 128>}]} {
    %c0_i32 = arith.constant 0 : i32
    %0 = arith.cmpi eq, %arg2, %c0_i32 : i32
    %1 = arith.extui %0 : i1 to i32
    %c0_i32_0 = arith.constant 0 : i32
    %2 = arith.cmpi ne, %1, %c0_i32_0 : i32
    scf.if %2 {
      %cst_10 = arith.constant 0.000000e+00 : f32
      %12 = vector.broadcast %cst_10 : f32 to vector<64x128xf32>
      %c0_11 = arith.constant 0 : index
      %c0_12 = arith.constant 0 : index
      %13 = vector.load %arg8[%c0_11, %c0_12] : memref<64x128xf32, #tpu.memory_space<vmem>>, vector<64x128xf32>
      tpu.vector_store %arg8[%c0_11, %c0_12], %12 {strides = array<i32>} : memref<64x128xf32, #tpu.memory_space<vmem>>, vector<64x128xf32>,
    } else {
    }
    %c0 = arith.constant 0 : index
    %c0_1 = arith.constant 0 : index
    %3 = vector.load %arg3[%c0, %c0_1] : memref<64x128xbf16, #tpu.memory_space<vmem>>, vector<64x128xbf16>
    %c0_2 = arith.constant 0 : index
    %c0_3 = arith.constant 0 : index
    %4 = vector.load %arg8[%c0_2, %c0_3] : memref<64x128xf32, #tpu.memory_space<vmem>>, vector<64x128xf32>
    %c0_4 = arith.constant 0 : index
    %c0_5 = arith.constant 0 : index
    %5 = vector.load %arg4[%c0_4, %c0_5] : memref<128x128xbf16, #tpu.memory_space<vmem>>, vector<128x128xbf16>
    %cst = arith.constant dense<0.000000e+00> : vector<64x128xf32>
    %6 = tpu.matmul %3, %5, %cst {dimension_numbers = #tpu.dot_dimension_numbers<[1], [0], [0], [1], [0, 0, 1, 1], [], []>} : vector<64x128xbf16>, vector<128x128xbf16>, vector<64x128xf32> -> vector<64x128xf32>
    %7 = arith.addf %4, %6 : vector<64x128xf32>
    %c0_6 = arith.constant 0 : index
    %c0_7 = arith.constant 0 : index
    %8 = vector.load %arg8[%c0_6, %c0_7] : memref<64x128xf32, #tpu.memory_space<vmem>>, vector<64x128xf32>
    tpu.vector_store %arg8[%c0_6, %c0_7], %7 {strides = array<i32>} : memref<64x128xf32, #tpu.memory_space<vmem>>, vector<64x128xf32>,
    %c0_i32_8 = arith.constant 0 : i32
    %9 = arith.cmpi eq, %arg2, %c0_i32_8 : i32
    %10 = arith.extui %9 : i1 to i32
    %c0_i32_9 = arith.constant 0 : i32
    %11 = arith.cmpi ne, %10, %c0_i32_9 : i32
    scf.if %11 {
      %c0_10 = arith.constant 0 : index
      %c0_11 = arith.constant 0 : index
      %12 = vector.load %arg8[%c0_10, %c0_11] : memref<64x128xf32, #tpu.memory_space<vmem>>, vector<64x128xf32>
      %c0_12 = arith.constant 0 : index
      %c0_13 = arith.constant 0 : index
      %13 = vector.load %arg5[%c0_12, %c0_13] : memref<1x128xf32, #tpu.memory_space<vmem>>, vector<1x128xf32>
      %14 = vector.broadcast %13 : vector<1x128xf32> to vector<64x128xf32>
      %15 = arith.addf %12, %14 : vector<64x128xf32>
      %16 = arith.truncf %15 : vector<64x128xf32> to vector<64x128xbf16>
      %c0_14 = arith.constant 0 : index
      %c0_15 = arith.constant 0 : index
      %17 = vector.load %arg6[%c0_14, %c0_15] : memref<64x128xbf16, #tpu.memory_space<vmem>>, vector<64x128xbf16>
      tpu.vector_store %arg6[%c0_14, %c0_15], %16 {strides = array<i32>} : memref<64x128xbf16, #tpu.memory_space<vmem>>, vector<64x128xbf16>,
      %cst_16 = arith.constant dense<0.000000e+00> : vector<128xf32>
      %18 = vector.multi_reduction <add>, %15, %cst_16 [0] : vector<64x128xf32> to vector<128xf32>
      %19 = vector.shape_cast %18 : vector<128xf32> to vector<1x128xf32>
      %20 = vector.shape_cast %19 : vector<1x128xf32> to vector<1x128xf32>
      %21 = vector.broadcast %20 : vector<1x128xf32> to vector<8x128xf32>
      %c0_17 = arith.constant 0 : index
      %c0_18 = arith.constant 0 : index
      %c0_19 = arith.constant 0 : index
      %22 = vector.load %arg7[%c0_17, %c0_18, %c0_19] : memref<1x8x128xf32, #tpu.memory_space<vmem>>, vector<1x8x128xf32>
      %23 = vector.shape_cast %22 : vector<1x8x128xf32> to vector<8x128xf32>
      %24 = vector.shape_cast %21 : vector<8x128xf32> to vector<1x8x128xf32>
      tpu.vector_store %arg7[%c0_17, %c0_18, %c0_19], %24 {strides = array<i32>} : memref<1x8x128xf32, #tpu.memory_space<vmem>>, vector<1x8x128xf32>,
    } else {
    }
    return
  }
  func.func @transform_0(%arg0: i32, %arg1: i32, %arg2: i32) -> (i32, i32) {
    %c0_i32 = arith.constant 0 : i32
    return %arg0, %arg2 : i32, i32
  }
  func.func @transform_1(%arg0: i32, %arg1: i32, %arg2: i32) -> (i32, i32) {
    %c0_i32 = arith.constant 0 : i32
    return %arg2, %arg1 : i32, i32
  }
  func.func @transform_2(%arg0: i32, %arg1: i32, %arg2: i32) -> (i32, i32) {
    %c0_i32 = arith.constant 0 : i32
    %c0_i32_0 = arith.constant 0 : i32
    return %c0_i32, %arg1 : i32, i32
  }
  func.func @transform_3(%arg0: i32, %arg1: i32, %arg2: i32) -> (i32, i32) {
    %c0_i32 = arith.constant 0 : i32
    return %arg0, %arg1 : i32, i32
  }
  func.func @transform_4(%arg0: i32, %arg1: i32, %arg2: i32) -> (i32, i32, i32) {
    %c0_i32 = arith.constant 0 : i32
    %c0_i32_0 = arith.constant 0 : i32
    return %arg0, %c0_i32, %arg1 : i32, i32, i32
  }
}

module attributes {stable_mosaic.version = 11 : i64} {
  func.func @_matmul_kernel(%arg0: i32, %arg1: i32, %arg2: i32, %arg3: memref<128x128xbf16, #tpu.memory_space<vmem>>, %arg4: memref<128x128xbf16, #tpu.memory_space<vmem>>, %arg5: memref<1x128xf32, #tpu.memory_space<vmem>>, %arg6: memref<128x128xbf16, #tpu.memory_space<vmem>>, %arg7: memref<128x128xf32, #tpu.memory_space<vmem>>) attributes {dimension_semantics = [#tpu.dimension_semantics<parallel>, #tpu.dimension_semantics<parallel>, #tpu.dimension_semantics<arbitrary>], iteration_bounds = array<i64: 1, 1, 1>, scalar_prefetch = 0 : i64, scratch_operands = 1 : i64, tpu.core_type = #tpu.core_type<tc>, window_params = [{transform_indices = @transform_0, window_bounds = array<i64: 128, 128>}, {transform_indices = @transform_1, window_bounds = array<i64: 128, 128>}, {transform_indices = @transform_2, window_bounds = array<i64: 1, 128>}, {transform_indices = @transform_3, window_bounds = array<i64: 128, 128>}]} {
    %c0_i32 = arith.constant 0 : i32
    %0 = arith.cmpi eq, %arg2, %c0_i32 : i32
    %1 = arith.extui %0 : i1 to i32
    %c0_i32_0 = arith.constant 0 : i32
    %2 = arith.cmpi ne, %1, %c0_i32_0 : i32
    scf.if %2 {
      %cst_10 = arith.constant 0.000000e+00 : f32
      %12 = vector.broadcast %cst_10 : f32 to vector<128x128xf32>
      %c0_11 = arith.constant 0 : index
      %c0_12 = arith.constant 0 : index
      %13 = vector.load %arg7[%c0_11, %c0_12] : memref<128x128xf32, #tpu.memory_space<vmem>>, vector<128x128xf32>
      tpu.vector_store %arg7[%c0_11, %c0_12], %12 {strides = array<i32>} : memref<128x128xf32, #tpu.memory_space<vmem>>, vector<128x128xf32>,
    } else {
    }
    %c0 = arith.constant 0 : index
    %c0_1 = arith.constant 0 : index
    %3 = vector.load %arg3[%c0, %c0_1] : memref<128x128xbf16, #tpu.memory_space<vmem>>, vector<128x128xbf16>
    %c0_2 = arith.constant 0 : index
    %c0_3 = arith.constant 0 : index
    %4 = vector.load %arg7[%c0_2, %c0_3] : memref<128x128xf32, #tpu.memory_space<vmem>>, vector<128x128xf32>
    %c0_4 = arith.constant 0 : index
    %c0_5 = arith.constant 0 : index
    %5 = vector.load %arg4[%c0_4, %c0_5] : memref<128x128xbf16, #tpu.memory_space<vmem>>, vector<128x128xbf16>
    %cst = arith.constant dense<0.000000e+00> : vector<128x128xf32>
    %6 = tpu.matmul %3, %5, %cst {dimension_numbers = #tpu.dot_dimension_numbers<[1], [0], [0], [1], [0, 0, 1, 1], [], []>} : vector<128x128xbf16>, vector<128x128xbf16>, vector<128x128xf32> -> vector<128x128xf32>
    %7 = arith.addf %4, %6 : vector<128x128xf32>
    %c0_6 = arith.constant 0 : index
    %c0_7 = arith.constant 0 : index
    %8 = vector.load %arg7[%c0_6, %c0_7] : memref<128x128xf32, #tpu.memory_space<vmem>>, vector<128x128xf32>
    tpu.vector_store %arg7[%c0_6, %c0_7], %7 {strides = array<i32>} : memref<128x128xf32, #tpu.memory_space<vmem>>, vector<128x128xf32>,
    %c0_i32_8 = arith.constant 0 : i32
    %9 = arith.cmpi eq, %arg2, %c0_i32_8 : i32
    %10 = arith.extui %9 : i1 to i32
    %c0_i32_9 = arith.constant 0 : i32
    %11 = arith.cmpi ne, %10, %c0_i32_9 : i32
    scf.if %11 {
      %c0_10 = arith.constant 0 : index
      %c0_11 = arith.constant 0 : index
      %12 = vector.load %arg7[%c0_10, %c0_11] : memref<128x128xf32, #tpu.memory_space<vmem>>, vector<128x128xf32>
      %c0_12 = arith.constant 0 : index
      %c0_13 = arith.constant 0 : index
      %13 = vector.load %arg5[%c0_12, %c0_13] : memref<1x128xf32, #tpu.memory_space<vmem>>, vector<1x128xf32>
      %14 = vector.broadcast %13 : vector<1x128xf32> to vector<128x128xf32>
      %15 = arith.addf %12, %14 : vector<128x128xf32>
      %16 = arith.truncf %15 : vector<128x128xf32> to vector<128x128xbf16>
      %c0_14 = arith.constant 0 : index
      %c0_15 = arith.constant 0 : index
      %17 = vector.load %arg6[%c0_14, %c0_15] : memref<128x128xbf16, #tpu.memory_space<vmem>>, vector<128x128xbf16>
      tpu.vector_store %arg6[%c0_14, %c0_15], %16 {strides = array<i32>} : memref<128x128xbf16, #tpu.memory_space<vmem>>, vector<128x128xbf16>,
    } else {
    }
    return
  }
  func.func @transform_0(%arg0: i32, %arg1: i32, %arg2: i32) -> (i32, i32) {
    %c0_i32 = arith.constant 0 : i32
    return %arg0, %arg2 : i32, i32
  }
  func.func @transform_1(%arg0: i32, %arg1: i32, %arg2: i32) -> (i32, i32) {
    %c0_i32 = arith.constant 0 : i32
    return %arg2, %arg1 : i32, i32
  }
  func.func @transform_2(%arg0: i32, %arg1: i32, %arg2: i32) -> (i32, i32) {
    %c0_i32 = arith.constant 0 : i32
    %c0_i32_0 = arith.constant 0 : i32
    return %c0_i32, %arg1 : i32, i32
  }
  func.func @transform_3(%arg0: i32, %arg1: i32, %arg2: i32) -> (i32, i32) {
    %c0_i32 = arith.constant 0 : i32
    return %arg0, %arg1 : i32, i32
  }
}

module attributes {stable_mosaic.version = 11 : i64} {
  func.func @_tail_kernel(%arg0: i32, %arg1: i32, %arg2: memref<1x1x128xf32, #tpu.memory_space<vmem>>, %arg3: memref<128x128xf32, #tpu.memory_space<vmem>>, %arg4: memref<1x128xf32, #tpu.memory_space<vmem>>, %arg5: memref<128x128xf32, #tpu.memory_space<vmem>>, %arg6: memref<1x128xf32, #tpu.memory_space<vmem>>, %arg7: memref<1x64x128xbf16, #tpu.memory_space<vmem>>, %arg8: memref<1x64x128xbf16, #tpu.memory_space<vmem>>, %arg9: memref<128x128xf32, #tpu.memory_space<vmem>>, %arg10: memref<1x128xf32, #tpu.memory_space<vmem>>, %arg11: memref<1x1x128xf32, #tpu.memory_space<vmem>>, %arg12: memref<8x128xf32, #tpu.memory_space<vmem>>, %arg13: memref<8x128xf32, #tpu.memory_space<vmem>>) attributes {dimension_semantics = [#tpu.dimension_semantics<parallel>, #tpu.dimension_semantics<arbitrary>], iteration_bounds = array<i64: 2, 1>, scalar_prefetch = 0 : i64, scratch_operands = 2 : i64, tpu.core_type = #tpu.core_type<tc>, window_params = [{transform_indices = @transform_0, window_bounds = array<i64: 1, 1, 128>}, {pipeline_mode = #tpu.pipeline_mode<synchronous>, transform_indices = @transform_1, window_bounds = array<i64: 128, 128>}, {pipeline_mode = #tpu.pipeline_mode<synchronous>, transform_indices = @transform_2, window_bounds = array<i64: 1, 128>}, {pipeline_mode = #tpu.pipeline_mode<synchronous>, transform_indices = @transform_3, window_bounds = array<i64: 128, 128>}, {pipeline_mode = #tpu.pipeline_mode<synchronous>, transform_indices = @transform_4, window_bounds = array<i64: 1, 128>}, {transform_indices = @transform_5, window_bounds = array<i64: 1, 64, 128>}, {transform_indices = @transform_6, window_bounds = array<i64: 1, 64, 128>}, {pipeline_mode = #tpu.pipeline_mode<synchronous>, transform_indices = @transform_7, window_bounds = array<i64: 128, 128>}, {pipeline_mode = #tpu.pipeline_mode<synchronous>, transform_indices = @transform_8, window_bounds = array<i64: 1, 128>}, {transform_indices = @transform_9, window_bounds = array<i64: 1, 1, 128>}]} {
    %c0_i32 = arith.constant 0 : i32
    %0 = arith.cmpi eq, %arg1, %c0_i32 : i32
    %1 = arith.extui %0 : i1 to i32
    %c0_i32_0 = arith.constant 0 : i32
    %2 = arith.cmpi ne, %1, %c0_i32_0 : i32
    scf.if %2 {
      %c0_19 = arith.constant 0 : index
      %c0_20 = arith.constant 0 : index
      %c0_21 = arith.constant 0 : index
      %37 = vector.load %arg2[%c0_19, %c0_20, %c0_21] : memref<1x1x128xf32, #tpu.memory_space<vmem>>, vector<1x1x128xf32>
      %38 = vector.shape_cast %37 : vector<1x1x128xf32> to vector<1x128xf32>
      %cst_22 = arith.constant 1.562500e-02 : f32
      %39 = vector.broadcast %cst_22 : f32 to vector<1x128xf32>
      %40 = arith.mulf %38, %39 : vector<1x128xf32>
      %41 = vector.shape_cast %40 : vector<1x128xf32> to vector<1x128xf32>
      %42 = vector.broadcast %41 : vector<1x128xf32> to vector<8x128xf32>
      %c0_23 = arith.constant 0 : index
      %c0_24 = arith.constant 0 : index
      %43 = vector.load %arg3[%c0_23, %c0_24] : memref<128x128xf32, #tpu.memory_space<vmem>>, vector<128x128xf32>
      %cst_25 = arith.constant dense<0.000000e+00> : vector<8x128xf32>
      %44 = tpu.matmul %42, %43, %cst_25 {dimension_numbers = #tpu.dot_dimension_numbers<[1], [0], [0], [1], [0, 0, 1, 1], [], []>} : vector<8x128xf32>, vector<128x128xf32>, vector<8x128xf32> -> vector<8x128xf32>
      %c0_26 = arith.constant 0 : index
      %c0_27 = arith.constant 0 : index
      %45 = vector.load %arg4[%c0_26, %c0_27] : memref<1x128xf32, #tpu.memory_space<vmem>>, vector<1x128xf32>
      %46 = vector.broadcast %45 : vector<1x128xf32> to vector<8x128xf32>
      %47 = arith.addf %44, %46 : vector<8x128xf32>
      %cst_28 = arith.constant 0.000000e+00 : f32
      %48 = vector.broadcast %cst_28 : f32 to vector<8x128xf32>
      %49 = arith.maximumf %47, %48 : vector<8x128xf32>
      %c0_29 = arith.constant 0 : index
      %c0_30 = arith.constant 0 : index
      %50 = vector.load %arg5[%c0_29, %c0_30] : memref<128x128xf32, #tpu.memory_space<vmem>>, vector<128x128xf32>
      %cst_31 = arith.constant dense<0.000000e+00> : vector<8x128xf32>
      %51 = tpu.matmul %49, %50, %cst_31 {dimension_numbers = #tpu.dot_dimension_numbers<[1], [0], [0], [1], [0, 0, 1, 1], [], []>} : vector<8x128xf32>, vector<128x128xf32>, vector<8x128xf32> -> vector<8x128xf32>
      %c0_32 = arith.constant 0 : index
      %c0_33 = arith.constant 0 : index
      %52 = vector.load %arg6[%c0_32, %c0_33] : memref<1x128xf32, #tpu.memory_space<vmem>>, vector<1x128xf32>
      %53 = vector.broadcast %52 : vector<1x128xf32> to vector<8x128xf32>
      %54 = arith.addf %51, %53 : vector<8x128xf32>
      %cst_34 = arith.constant 0.000000e+00 : f32
      %55 = vector.broadcast %cst_34 : f32 to vector<8x128xf32>
      %56 = arith.subf %55, %54 : vector<8x128xf32>
      %57 = math.exp %56 : vector<8x128xf32>
      %cst_35 = arith.constant 1.000000e+00 : f32
      %58 = vector.broadcast %cst_35 : f32 to vector<8x128xf32>
      %59 = arith.addf %58, %57 : vector<8x128xf32>
      %60 = tpu.reciprocal %59 {approx = true} : vector<8x128xf32> -> vector<8x128xf32>
      %cst_36 = arith.constant 4.000000e-01 : f32
      %61 = vector.broadcast %cst_36 : f32 to vector<8x128xf32>
      %62 = arith.mulf %61, %60 : vector<8x128xf32>
      %c0_37 = arith.constant 0 : index
      %c0_38 = arith.constant 0 : index
      %63 = vector.load %arg12[%c0_37, %c0_38] : memref<8x128xf32, #tpu.memory_space<vmem>>, vector<8x128xf32>
      tpu.vector_store %arg12[%c0_37, %c0_38], %62 {strides = array<i32>} : memref<8x128xf32, #tpu.memory_space<vmem>>, vector<8x128xf32>,
      %cst_39 = arith.constant 0.000000e+00 : f32
      %64 = vector.broadcast %cst_39 : f32 to vector<8x128xf32>
      %c0_40 = arith.constant 0 : index
      %c0_41 = arith.constant 0 : index
      %65 = vector.load %arg13[%c0_40, %c0_41] : memref<8x128xf32, #tpu.memory_space<vmem>>, vector<8x128xf32>
      tpu.vector_store %arg13[%c0_40, %c0_41], %64 {strides = array<i32>} : memref<8x128xf32, #tpu.memory_space<vmem>>, vector<8x128xf32>,
    } else {
    }
    %c0 = arith.constant 0 : index
    %c0_1 = arith.constant 0 : index
    %c0_2 = arith.constant 0 : index
    %3 = vector.load %arg7[%c0, %c0_1, %c0_2] : memref<1x64x128xbf16, #tpu.memory_space<vmem>>, vector<1x64x128xbf16>
    %4 = vector.shape_cast %3 : vector<1x64x128xbf16> to vector<64x128xbf16>
    %5 = arith.extf %4 : vector<64x128xbf16> to vector<64x128xf32>
    %c0_3 = arith.constant 0 : index
    %c0_4 = arith.constant 0 : index
    %6 = vector.load %arg12[%c0_3, %c0_4] : memref<8x128xf32, #tpu.memory_space<vmem>>, vector<1x128xf32>
    %c0_5 = arith.constant 0 : index
    %c0_6 = arith.constant 0 : index
    %c0_7 = arith.constant 0 : index
    %7 = vector.load %arg8[%c0_5, %c0_6, %c0_7] : memref<1x64x128xbf16, #tpu.memory_space<vmem>>, vector<1x64x128xbf16>
    %8 = vector.shape_cast %7 : vector<1x64x128xbf16> to vector<64x128xbf16>
    %9 = arith.extf %8 : vector<64x128xbf16> to vector<64x128xf32>
    %10 = vector.broadcast %6 : vector<1x128xf32> to vector<64x128xf32>
    %11 = arith.mulf %10, %9 : vector<64x128xf32>
    %12 = arith.addf %5, %11 : vector<64x128xf32>
    %cst = arith.constant 5.000000e-01 : f32
    %13 = vector.broadcast %cst : f32 to vector<64x128xf32>
    %14 = arith.mulf %13, %12 : vector<64x128xf32>
    %cst_8 = arith.constant 4.471500e-02 : f32
    %15 = vector.broadcast %cst_8 : f32 to vector<64x128xf32>
    %16 = arith.mulf %15, %12 : vector<64x128xf32>
    %17 = arith.mulf %16, %12 : vector<64x128xf32>
    %18 = arith.mulf %17, %12 : vector<64x128xf32>
    %19 = arith.addf %12, %18 : vector<64x128xf32>
    %cst_9 = arith.constant 0.797884583 : f32
    %20 = vector.broadcast %cst_9 : f32 to vector<64x128xf32>
    %21 = arith.mulf %20, %19 : vector<64x128xf32>
    %22 = math.tanh %21 : vector<64x128xf32>
    %cst_10 = arith.constant 1.000000e+00 : f32
    %23 = vector.broadcast %cst_10 : f32 to vector<64x128xf32>
    %24 = arith.addf %23, %22 : vector<64x128xf32>
    %25 = arith.mulf %14, %24 : vector<64x128xf32>
    %cst_11 = arith.constant 1.70150435 : f32
    %26 = vector.broadcast %cst_11 : f32 to vector<64x128xf32>
    %27 = arith.mulf %25, %26 : vector<64x128xf32>
    %c0_12 = arith.constant 0 : index
    %c0_13 = arith.constant 0 : index
    %28 = vector.load %arg13[%c0_12, %c0_13] : memref<8x128xf32, #tpu.memory_space<vmem>>, vector<8x128xf32>
    %cst_14 = arith.constant dense<0.000000e+00> : vector<128xf32>
    %29 = vector.multi_reduction <add>, %27, %cst_14 [0] : vector<64x128xf32> to vector<128xf32>
    %30 = vector.shape_cast %29 : vector<128xf32> to vector<1x128xf32>
    %31 = vector.broadcast %30 : vector<1x128xf32> to vector<8x128xf32>
    %32 = arith.addf %28, %31 : vector<8x128xf32>
    %c0_15 = arith.constant 0 : index
    %c0_16 = arith.constant 0 : index
    %33 = vector.load %arg13[%c0_15, %c0_16] : memref<8x128xf32, #tpu.memory_space<vmem>>, vector<8x128xf32>
    tpu.vector_store %arg13[%c0_15, %c0_16], %32 {strides = array<i32>} : memref<8x128xf32, #tpu.memory_space<vmem>>, vector<8x128xf32>,
    %c0_i32_17 = arith.constant 0 : i32
    %34 = arith.cmpi eq, %arg1, %c0_i32_17 : i32
    %35 = arith.extui %34 : i1 to i32
    %c0_i32_18 = arith.constant 0 : i32
    %36 = arith.cmpi ne, %35, %c0_i32_18 : i32
    scf.if %36 {
      %c0_19 = arith.constant 0 : index
      %c0_20 = arith.constant 0 : index
      %37 = vector.load %arg13[%c0_19, %c0_20] : memref<8x128xf32, #tpu.memory_space<vmem>>, vector<8x128xf32>
      %cst_21 = arith.constant 1.562500e-02 : f32
      %38 = vector.broadcast %cst_21 : f32 to vector<8x128xf32>
      %39 = arith.mulf %37, %38 : vector<8x128xf32>
      %c0_22 = arith.constant 0 : index
      %c0_23 = arith.constant 0 : index
      %40 = vector.load %arg9[%c0_22, %c0_23] : memref<128x128xf32, #tpu.memory_space<vmem>>, vector<128x128xf32>
      %cst_24 = arith.constant dense<0.000000e+00> : vector<8x128xf32>
      %41 = tpu.matmul %39, %40, %cst_24 {dimension_numbers = #tpu.dot_dimension_numbers<[1], [0], [0], [1], [0, 0, 1, 1], [], []>} : vector<8x128xf32>, vector<128x128xf32>, vector<8x128xf32> -> vector<8x128xf32>
      %c0_25 = arith.constant 0 : index
      %c0_26 = arith.constant 0 : index
      %42 = vector.load %arg10[%c0_25, %c0_26] : memref<1x128xf32, #tpu.memory_space<vmem>>, vector<1x128xf32>
      %43 = vector.broadcast %42 : vector<1x128xf32> to vector<8x128xf32>
      %44 = arith.addf %41, %43 : vector<8x128xf32>
      %45 = vector.extract_strided_slice %44 {offsets = [0, 0], sizes = [1, 128], strides = [1, 1]} : vector<8x128xf32> to vector<1x128xf32>
      %c0_27 = arith.constant 0 : index
      %c0_28 = arith.constant 0 : index
      %c0_29 = arith.constant 0 : index
      %46 = vector.load %arg11[%c0_27, %c0_28, %c0_29] : memref<1x1x128xf32, #tpu.memory_space<vmem>>, vector<1x1x128xf32>
      %47 = vector.shape_cast %46 : vector<1x1x128xf32> to vector<1x128xf32>
      %48 = vector.shape_cast %45 : vector<1x128xf32> to vector<1x1x128xf32>
      tpu.vector_store %arg11[%c0_27, %c0_28, %c0_29], %48 {strides = array<i32>} : memref<1x1x128xf32, #tpu.memory_space<vmem>>, vector<1x1x128xf32>,
    } else {
    }
    return
  }
  func.func @transform_0(%arg0: i32, %arg1: i32) -> (i32, i32, i32) {
    %c0_i32 = arith.constant 0 : i32
    %c0_i32_0 = arith.constant 0 : i32
    %c0_i32_1 = arith.constant 0 : i32
    return %arg0, %c0_i32, %c0_i32_0 : i32, i32, i32
  }
  func.func @transform_1(%arg0: i32, %arg1: i32) -> (i32, i32) {
    %c0_i32 = arith.constant 0 : i32
    %c0_i32_0 = arith.constant 0 : i32
    %c0_i32_1 = arith.constant 0 : i32
    return %c0_i32, %c0_i32_0 : i32, i32
  }
  func.func @transform_2(%arg0: i32, %arg1: i32) -> (i32, i32) {
    %c0_i32 = arith.constant 0 : i32
    %c0_i32_0 = arith.constant 0 : i32
    %c0_i32_1 = arith.constant 0 : i32
    return %c0_i32, %c0_i32_0 : i32, i32
  }
  func.func @transform_3(%arg0: i32, %arg1: i32) -> (i32, i32) {
    %c0_i32 = arith.constant 0 : i32
    %c0_i32_0 = arith.constant 0 : i32
    %c0_i32_1 = arith.constant 0 : i32
    return %c0_i32, %c0_i32_0 : i32, i32
  }
  func.func @transform_4(%arg0: i32, %arg1: i32) -> (i32, i32) {
    %c0_i32 = arith.constant 0 : i32
    %c0_i32_0 = arith.constant 0 : i32
    %c0_i32_1 = arith.constant 0 : i32
    return %c0_i32, %c0_i32_0 : i32, i32
  }
  func.func @transform_5(%arg0: i32, %arg1: i32) -> (i32, i32, i32) {
    %c0_i32 = arith.constant 0 : i32
    %c0_i32_0 = arith.constant 0 : i32
    return %arg0, %arg1, %c0_i32 : i32, i32, i32
  }
  func.func @transform_6(%arg0: i32, %arg1: i32) -> (i32, i32, i32) {
    %c0_i32 = arith.constant 0 : i32
    %c0_i32_0 = arith.constant 0 : i32
    return %arg0, %arg1, %c0_i32 : i32, i32, i32
  }
  func.func @transform_7(%arg0: i32, %arg1: i32) -> (i32, i32) {
    %c0_i32 = arith.constant 0 : i32
    %c0_i32_0 = arith.constant 0 : i32
    %c0_i32_1 = arith.constant 0 : i32
    return %c0_i32, %c0_i32_0 : i32, i32
  }
  func.func @transform_8(%arg0: i32, %arg1: i32) -> (i32, i32) {
    %c0_i32 = arith.constant 0 : i32
    %c0_i32_0 = arith.constant 0 : i32
    %c0_i32_1 = arith.constant 0 : i32
    return %c0_i32, %c0_i32_0 : i32, i32
  }
  func.func @transform_9(%arg0: i32, %arg1: i32) -> (i32, i32, i32) {
    %c0_i32 = arith.constant 0 : i32
    %c0_i32_0 = arith.constant 0 : i32
    %c0_i32_1 = arith.constant 0 : i32
    return %arg0, %c0_i32, %c0_i32_0 : i32, i32, i32
  }
}

</mosaic_0001>

<llo_original>
// kernel: nfnet_forward.10
$region0: #{nfnet_forward.10}
  #allocation0 [shape = 'u32[]', space=smem, size = 0x4, offset = 0x4, fixed_abs, tag = 'smem constant byte address 0x4 - core index']
  #allocation1 [shape = 'u32[144,128]{1,0:T(1,128)}', space=vmem, size = 0x12000, scoped, tag = 'internal scratch']
  #allocation2 [shape = 'f32[256,128]{1,0:T(8,128)}', space=vmem, size = 0x20000, scoped, tag = 'scratch operand']
  %s0 = inlined_call_operand.vmem [shape: bf16[512,128], index: 0, kind: input, shape index: {}]
  %s1 = inlined_call_operand.vmem [shape: bf16[128,128], index: 1, kind: input, shape index: {}]
  %s2 = inlined_call_operand.vmem [shape: f32[1,128], index: 2, kind: input, shape index: {}]
  %s3 = inlined_call_operand.vmem [shape: bf16[512,128], index: 3, kind: output, shape index: {}]
  %s4 = sld [smem:[#allocation0]]
  $region53: #{nfnet_forward.10} parent=0
    _
  %s6 = ssub.s32 1, %s4
  %s7 = scalar_select 0, %s6, %s4
  loop: start=0, step=1, limit=4
  $region2: #{nfnet_forward.10} parent=0 // loop_pre_header
    _
  $region3: #{nfnet_forward.10} parent=0 // loop_header
    %s9 = sphi 0, %s13
    %p10 = scmp.ge.s32.totalorder %s9, 4
    %s16 = sphi 0, %s35
    %s17 = sphi 0, %s31
    %s18 = sphi 0, %s27
    %s19 = sphi 0, %s16
    %s20 = sphi 0, %s17
    %s21 = sphi 0, %s18
    %s22 = sphi 0, %s19
    %s23 = sphi 0, %s20
    %s24 = sphi 0, %s21
    %s40 = sphi 0, %s42
    %s43 = sphi 0, %s40
    %s44 = sphi 0, %s43
    %s60 = sphi 0, %s44
    %s68 = sphi 0, %s70
    %s71 = sphi 0, %s68
    %s72 = sphi 0, %s71
    %s88 = sphi 0, %s72
    %s94 = sphi 0, %s96
    %s97 = sphi 0, %s94
    %s98 = sphi 0, %s97
    %s114 = sphi 0, %s98
    %s122 = sphi 0, %s124
    %s125 = sphi 0, %s122
    %s126 = sphi 0, %s125
    %s142 = sphi 0, %s126
  $region4: #{nfnet_forward.10} parent=0 // loop_header_branch
    %12 = sbr.rel (%p10) target = $region8
  $region5: #{nfnet_forward.10} parent=0 // loop_body
    %s14 = ssub.s32 %s9, 1
    %s15 = ssub.s32 %s9, 2
    %s25 = sadd.s32 1, %s18
    %p26 = scmp.ge.s32.totalorder %s25, 1
    %s27 = scalar_select %p26, 0, %s25
    %s28 = sadd.s32 1, %s17
    %s29 = scalar_select %p26, %s28, %s17
    %p30 = scmp.ge.s32.totalorder %s29, 1
    %s31 = scalar_select %p30, 0, %s29
    %s32 = sadd.s32 1, %s16
    %s33 = scalar_select %p30, %s32, %s16
    %p34 = scmp.ge.s32.totalorder %s33, 2
    %s35 = scalar_select %p34, 0, %s33
    %s36 = ssub.s32 %s16, %s35
    %s37 = ssub.s32 %s18, %s27
    %s38 = sor.u32 %s36, %s37
    %p39 = scmp.eq.s32.totalorder %s38, 0
    %s41 = sadd.s32 %s40, 1
    %s42 = scalar_select %p39, %s40, %s41
    %p45 = pneg %p39
    %p46 = scmp.eq.s32.totalorder %s9, 1
    %p47 = por %p45, %p46
    %p48 = scmp.ne.s32.totalorder %s40, %s43
    %p49 = scmp.eq.s32.totalorder %s9, 0
    %p50 = por %p48, %p49
    %p51 = scmp.ne.s32.totalorder %s40, %s43
    %p52 = scmp.eq.s32.totalorder %s14, 1
    %p53 = por %p51, %p52
    %p54 = scmp.ne.s32.totalorder %s43, %s44
    %p55 = scmp.eq.s32.totalorder %s14, 0
    %p56 = por %p54, %p55
    %p57 = scmp.ne.s32.totalorder %s43, %s44
    %p58 = scmp.eq.s32.totalorder %s15, 1
    %p59 = por %p57, %p58
    %p61 = scmp.ne.s32.totalorder %s44, %s60
    %p62 = scmp.eq.s32.totalorder %s15, 0
    %p63 = por %p61, %p62
    %s64 = ssub.s32 %s18, %s27
    %s65 = ssub.s32 %s17, %s31
    %s66 = sor.u32 %s64, %s65
    %p67 = scmp.eq.s32.totalorder %s66, 0
    %s69 = sadd.s32 %s68, 1
    %s70 = scalar_select %p67, %s68, %s69
    %p73 = pneg %p67
    %p74 = scmp.eq.s32.totalorder %s9, 1
    %p75 = por %p73, %p74
    %p76 = scmp.ne.s32.totalorder %s68, %s71
    %p77 = scmp.eq.s32.totalorder %s9, 0
    %p78 = por %p76, %p77
    %p79 = scmp.ne.s32.totalorder %s68, %s71
    %p80 = scmp.eq.s32.totalorder %s14, 1
    %p81 = por %p79, %p80
    %p82 = scmp.ne.s32.totalorder %s71, %s72
    %p83 = scmp.eq.s32.totalorder %s14, 0
    %p84 = por %p82, %p83
    %p85 = scmp.ne.s32.totalorder %s71, %s72
    %p86 = scmp.eq.s32.totalorder %s15, 1
    %p87 = por %p85, %p86
    %p89 = scmp.ne.s32.totalorder %s72, %s88
    %p90 = scmp.eq.s32.totalorder %s15, 0
    %p91 = por %p89, %p90
    %s92 = ssub.s32 %s17, %s31
    %p93 = scmp.eq.s32.totalorder %s92, 0
    %s95 = sadd.s32 %s94, 1
    %s96 = scalar_select %p93, %s94, %s95
    %p99 = pneg %p93
    %p100 = scmp.eq.s32.totalorder %s9, 1
    %p101 = por %p99, %p100
    %p102 = scmp.ne.s32.totalorder %s94, %s97
    %p103 = scmp.eq.s32.totalorder %s9, 0
    %p104 = por %p102, %p103
    %p105 = scmp.ne.s32.totalorder %s94, %s97
    %p106 = scmp.eq.s32.totalorder %s14, 1
    %p107 = por %p105, %p106
    %p108 = scmp.ne.s32.totalorder %s97, %s98
    %p109 = scmp.eq.s32.totalorder %s14, 0
    %p110 = por %p108, %p109
    %p111 = scmp.ne.s32.totalorder %s97, %s98
    %p112 = scmp.eq.s32.totalorder %s15, 1
    %p113 = por %p111, %p112
    %p115 = scmp.ne.s32.totalorder %s98, %s114
    %p116 = scmp.eq.s32.totalorder %s15, 0
    %p117 = por %p115, %p116
    %s118 = ssub.s32 %s16, %s35
    %s119 = ssub.s32 %s17, %s31
    %s120 = sor.u32 %s118, %s119
    %p121 = scmp.eq.s32.totalorder %s120, 0
    %s123 = sadd.s32 %s122, 1
    %s124 = scalar_select %p121, %s122, %s123
    %p127 = pneg %p121
    %p128 = scmp.eq.s32.totalorder %s9, 1
    %p129 = por %p127, %p128
    %p130 = scmp.ne.s32.totalorder %s122, %s125
    %p131 = scmp.eq.s32.totalorder %s9, 0
    %p132 = por %p130, %p131
    %p133 = scmp.ne.s32.totalorder %s122, %s125
    %p134 = scmp.eq.s32.totalorder %s14, 1
    %p135 = por %p133, %p134
    %p136 = scmp.ne.s32.totalorder %s125, %s126
    %p137 = scmp.eq.s32.totalorder %s14, 0
    %p138 = por %p136, %p137
    %p139 = scmp.ne.s32.totalorder %s125, %s126
    %p140 = scmp.eq.s32.totalorder %s15, 1
    %p141 = por %p139, %p140
    %p143 = scmp.ne.s32.totalorder %s126, %s142
    %p144 = scmp.eq.s32.totalorder %s15, 0
    %p145 = por %p143, %p144
    %p146 = scmp.le.s32.totalorder 1, %s9
    %p147 = scmp.lt.s32.totalorder %s9, 3
    %p148 = pnand %p146, %p147
    %p149 = pneg %p148
    // Predicated region
    $region9: #{nfnet_forward.10} parent=5 // pred_check
      _
    $region10: #{nfnet_forward.10} parent=5 // pred_check_branch
      %151 = sbr.rel (%p148) target = $region12
    $region11: #{nfnet_forward.10} parent=5 // pred_region
      %s152 = ssub.s32 %s9, 1
      // Predicated region
      $region13: #{nfnet_forward.10} parent=11 // pred_check
        %p153 = pneg %p84
      $region14: #{nfnet_forward.10} parent=11 // pred_check_branch
        %155 = sbr.rel (%p153) target = $region16
      $region15: #{nfnet_forward.10} parent=11 // pred_region
        %s156 = smul.u32 16, %s21
        %p157 = scmp.lt.s32.totalorder %s156, 15
        %s158 = scalar_select %p157, %s156, 15
        %p159 = scmp.lt.s32.totalorder %s20, 0
        %s160 = scalar_select %p159, %s20, 0
        %s161 = sadd.s32 %s160, %s158
        %s162 = smul.addr %s161, 4
        %s163 = scalar_lea.vmem %s1, %s162
        %s164 = smul.u32 16, %s21
      $region16: #{nfnet_forward.10} parent=11 // pred_fallthru
        _
      // Predicated region
      $region17: #{nfnet_forward.10} parent=11 // pred_check
        %p165 = pneg %p110
      $region18: #{nfnet_forward.10} parent=11 // pred_check_branch
        %167 = sbr.rel (%p165) target = $region20
      $region19: #{nfnet_forward.10} parent=11 // pred_region
        %p168 = scmp.lt.s32.totalorder %s20, 0
        %s169 = scalar_select %p168, %s20, 0
        %s170 = scalar_lea.vmem %s2, %s169
      $region20: #{nfnet_forward.10} parent=11 // pred_fallthru
        _
    $region12: #{nfnet_forward.10} parent=5 // pred_fallthru
      _
    %p171 = scmp.lt.s32.totalorder %s9, 2
    // Predicated region
    $region21: #{nfnet_forward.10} parent=5 // pred_check
      %p172 = pneg %p171
    $region22: #{nfnet_forward.10} parent=5 // pred_check_branch
      %174 = sbr.rel (%p172) target = $region24
    $region23: #{nfnet_forward.10} parent=5 // pred_region
      // Predicated region
      $region25: #{nfnet_forward.10} parent=23 // pred_check
        %p175 = pneg %p50
      $region26: #{nfnet_forward.10} parent=23 // pred_check_branch
        %177 = sbr.rel (%p175) target = $region28
      $region27: #{nfnet_forward.10} parent=23 // pred_region
        %s178 = smul.u32 32, %s16
        %p179 = scmp.lt.s32.totalorder %s178, 63
        %s180 = scalar_select %p179, %s178, 63
        %p181 = scmp.lt.s32.totalorder %s18, 0
        %s182 = scalar_select %p181, %s18, 0
        %s183 = sadd.s32 %s182, %s180
        %s184 = smul.addr %s183, 4
        %s185 = scalar_lea.vmem %s0, %s184
        %s186 = smul.u32 32, %s16
      $region28: #{nfnet_forward.10} parent=23 // pred_fallthru
        _
    $region24: #{nfnet_forward.10} parent=5 // pred_fallthru
      _
    %p187 = scmp.le.s32.totalorder 1, %s9
    %p188 = scmp.lt.s32.totalorder %s9, 3
    %p189 = pnand %p187, %p188
    %p190 = pneg %p189
    // Predicated region
    $region29: #{nfnet_forward.10} parent=5 // pred_check
      _
    $region30: #{nfnet_forward.10} parent=5 // pred_check_branch
      %192 = sbr.rel (%p189) target = $region32
    $region31: #{nfnet_forward.10} parent=5 // pred_region
      %s193 = ssub.s32 %s9, 1
      %s194 = smul.u32 32, %s19
      %p195 = scmp.lt.s32.totalorder %s194, 63
      %s196 = scalar_select %p195, %s194, 63
      %p197 = scmp.lt.s32.totalorder %s21, 0
      %s198 = scalar_select %p197, %s21, 0
      %s199 = sadd.s32 %s198, %s196
      %s200 = smul.addr %s199, 4
      %s201 = scalar_lea.vmem %s0, %s200
      %p202 = pneg %p56
      %p203 = pneg %p53
      %s204 = smul.u32 16, %s21
      %p205 = scmp.lt.s32.totalorder %s204, 15
      %s206 = scalar_select %p205, %s204, 15
      %p207 = scmp.lt.s32.totalorder %s20, 0
      %s208 = scalar_select %p207, %s20, 0
      %s209 = sadd.s32 %s208, %s206
      %s210 = smul.addr %s209, 4
      %s211 = scalar_lea.vmem %s1, %s210
      %p212 = pneg %p84
      %p213 = pneg %p81
      %p214 = scmp.lt.s32.totalorder %s20, 0
      %s215 = scalar_select %p214, %s20, 0
      %s216 = scalar_lea.vmem %s2, %s215
      %p217 = pneg %p110
      %p218 = pneg %p107
      %p219 = pneg %p138
      %p220 = pneg %p135
      %s221 = smul.u32 32, %s19
      %p222 = scmp.lt.s32.totalorder %s221, 63
      %s223 = scalar_select %p222, %s221, 63
      %p224 = scmp.lt.s32.totalorder %s20, 0
      %s225 = scalar_select %p224, %s20, 0
      %s226 = sadd.s32 %s225, %s223
      %s227 = smul.addr %s226, 4
      %s228 = scalar_lea.vmem %s3, %s227
      %s229 = smul.u32 32, %s19
      %p230 = scmp.lt.s32.totalorder %s229, 63
      %s231 = scalar_select %p230, %s229, 63
      %p232 = scmp.lt.s32.totalorder %s21, 0
      %s233 = scalar_select %p232, %s21, 0
      %s234 = sadd.s32 %s233, %s231
      %s235 = smul.addr %s234, 4
      %s236 = scalar_lea.vmem %s0, %s235
      %s237 = smul.u32 32, %s19
      %s238 = smul.u32 16, %s21
      %p239 = scmp.lt.s32.totalorder %s238, 15
      %s240 = scalar_select %p239, %s238, 15
      %p241 = scmp.lt.s32.totalorder %s20, 0
      %s242 = scalar_select %p241, %s20, 0
      %s243 = sadd.s32 %s242, %s240
      %s244 = smul.addr %s243, 4
      %s245 = scalar_lea.vmem %s1, %s244
      %s246 = smul.u32 16, %s21
      %p247 = scmp.lt.s32.totalorder %s20, 0
      %s248 = scalar_select %p247, %s20, 0
      %s249 = scalar_lea.vmem %s2, %s248
      %s250 = smul.u32 32, %s19
      %p251 = scmp.lt.s32.totalorder %s250, 63
      %s252 = scalar_select %p251, %s250, 63
      %p253 = scmp.lt.s32.totalorder %s20, 0
      %s254 = scalar_select %p253, %s20, 0
      %s255 = sadd.s32 %s254, %s252
      %s256 = smul.addr %s255, 4
      %s257 = scalar_lea.vmem %s3, %s256
      %s258 = smul.u32 32, %s19
      %p260 = scmp.eq.s32.totalorder %s21, 0
      // Predicated region
      $region33: #{nfnet_forward.10} parent=31 // pred_check
        %p261 = pneg %p260
      $region34: #{nfnet_forward.10} parent=31 // pred_check_branch
        %263 = sbr.rel (%p261) target = $region36
      $region35: #{nfnet_forward.10} parent=31 // pred_region
        %264 = vst [vmem:[#allocation2] sm:$0xff] 0.0
        %265 = vst [vmem:[#allocation2 + $0x8] sm:$0xff] 0.0
        %266 = vst [vmem:[#allocation2 + $0x10] sm:$0xff] 0.0
        %267 = vst [vmem:[#allocation2 + $0x18] sm:$0xff] 0.0
        %268 = vst [vmem:[#allocation2 + $0x20] sm:$0xff] 0.0
        %269 = vst [vmem:[#allocation2 + $0x28] sm:$0xff] 0.0
        %270 = vst [vmem:[#allocation2 + $0x30] sm:$0xff] 0.0
        %271 = vst [vmem:[#allocation2 + $0x38] sm:$0xff] 0.0
        %272 = vst [vmem:[#allocation2 + $0x40] sm:$0xff] 0.0
        %273 = vst [vmem:[#allocation2 + $0x48] sm:$0xff] 0.0
        %274 = vst [vmem:[#allocation2 + $0x50] sm:$0xff] 0.0
        %275 = vst [vmem:[#allocation2 + $0x58] sm:$0xff] 0.0
        %276 = vst [vmem:[#allocation2 + $0x60] sm:$0xff] 0.0
        %277 = vst [vmem:[#allocation2 + $0x68] sm:$0xff] 0.0
        %278 = vst [vmem:[#allocation2 + $0x70] sm:$0xff] 0.0
        %279 = vst [vmem:[#allocation2 + $0x78] sm:$0xff] 0.0
        %280 = vst [vmem:[#allocation2 + $0x80] sm:$0xff] 0.0
        %281 = vst [vmem:[#allocation2 + $0x88] sm:$0xff] 0.0
        %282 = vst [vmem:[#allocation2 + $0x90] sm:$0xff] 0.0
        %283 = vst [vmem:[#allocation2 + $0x98] sm:$0xff] 0.0
        %284 = vst [vmem:[#allocation2 + $0xa0] sm:$0xff] 0.0
        %285 = vst [vmem:[#allocation2 + $0xa8] sm:$0xff] 0.0
        %286 = vst [vmem:[#allocation2 + $0xb0] sm:$0xff] 0.0
        %287 = vst [vmem:[#allocation2 + $0xb8] sm:$0xff] 0.0
        %288 = vst [vmem:[#allocation2 + $0xc0] sm:$0xff] 0.0
        %289 = vst [vmem:[#allocation2 + $0xc8] sm:$0xff] 0.0
        %290 = vst [vmem:[#allocation2 + $0xd0] sm:$0xff] 0.0
        %291 = vst [vmem:[#allocation2 + $0xd8] sm:$0xff] 0.0
        %292 = vst [vmem:[#allocation2 + $0xe0] sm:$0xff] 0.0
        %293 = vst [vmem:[#allocation2 + $0xe8] sm:$0xff] 0.0
        %294 = vst [vmem:[#allocation2 + $0xf0] sm:$0xff] 0.0
        %295 = vst [vmem:[#allocation2 + $0xf8] sm:$0xff] 0.0
      $region36: #{nfnet_forward.10} parent=31 // pred_fallthru
        _
      %v296 = vld [vmem:[%s236] sm:$0xf]
      %v297 = vld [vmem:[%s236 + $0x4] sm:$0xf]
      %v298 = vld [vmem:[%s236 + $0x8] sm:$0xf]
      %v299 = vld [vmem:[%s236 + $0xc] sm:$0xf]
      %v300 = vld [vmem:[%s236 + $0x10] sm:$0xf]
      %v301 = vld [vmem:[%s236 + $0x14] sm:$0xf]
      %v302 = vld [vmem:[%s236 + $0x18] sm:$0xf]
      %v303 = vld [vmem:[%s236 + $0x1c] sm:$0xf]
      %v304 = vld [vmem:[%s236 + $0x20] sm:$0xf]
      %v305 = vld [vmem:[%s236 + $0x24] sm:$0xf]
      %v306 = vld [vmem:[%s236 + $0x28] sm:$0xf]
      %v307 = vld [vmem:[%s236 + $0x2c] sm:$0xf]
      %v308 = vld [vmem:[%s236 + $0x30] sm:$0xf]
      %v309 = vld [vmem:[%s236 + $0x34] sm:$0xf]
      %v310 = vld [vmem:[%s236 + $0x38] sm:$0xf]
      %v311 = vld [vmem:[%s236 + $0x3c] sm:$0xf]
      %v312 = vld [vmem:[%s236 + $0x40] sm:$0xf]
      %v313 = vld [vmem:[%s236 + $0x44] sm:$0xf]
      %v314 = vld [vmem:[%s236 + $0x48] sm:$0xf]
      %v315 = vld [vmem:[%s236 + $0x4c] sm:$0xf]
      %v316 = vld [vmem:[%s236 + $0x50] sm:$0xf]
      %v317 = vld [vmem:[%s236 + $0x54] sm:$0xf]
      %v318 = vld [vmem:[%s236 + $0x58] sm:$0xf]
      %v319 = vld [vmem:[%s236 + $0x5c] sm:$0xf]
      %v320 = vld [vmem:[%s236 + $0x60] sm:$0xf]
      %v321 = vld [vmem:[%s236 + $0x64] sm:$0xf]
      %v322 = vld [vmem:[%s236 + $0x68] sm:$0xf]
      %v323 = vld [vmem:[%s236 + $0x6c] sm:$0xf]
      %v324 = vld [vmem:[%s236 + $0x70] sm:$0xf]
      %v325 = vld [vmem:[%s236 + $0x74] sm:$0xf]
      %v326 = vld [vmem:[%s236 + $0x78] sm:$0xf]
      %v327 = vld [vmem:[%s236 + $0x7c] sm:$0xf]
      %v328 = vld [vmem:[#allocation2] sm:$0xff]
      %v329 = vld [vmem:[#allocation2 + $0x8] sm:$0xff]
      %v330 = vld [vmem:[#allocation2 + $0x10] sm:$0xff]
      %v331 = vld [vmem:[#allocation2 + $0x18] sm:$0xff]
      %v332 = vld [vmem:[#allocation2 + $0x20] sm:$0xff]
      %v333 = vld [vmem:[#allocation2 + $0x28] sm:$0xff]
      %v334 = vld [vmem:[#allocation2 + $0x30] sm:$0xff]
      %v335 = vld [vmem:[#allocation2 + $0x38] sm:$0xff]
      %v336 = vld [vmem:[#allocation2 + $0x40] sm:$0xff]
      %v337 = vld [vmem:[#allocation2 + $0x48] sm:$0xff]
      %v338 = vld [vmem:[#allocation2 + $0x50] sm:$0xff]
      %v339 = vld [vmem:[#allocation2 + $0x58] sm:$0xff]
      %v340 = vld [vmem:[#allocation2 + $0x60] sm:$0xff]
      %v341 = vld [vmem:[#allocation2 + $0x68] sm:$0xff]
      %v342 = vld [vmem:[#allocation2 + $0x70] sm:$0xff]
      %v343 = vld [vmem:[#allocation2 + $0x78] sm:$0xff]
      %v344 = vld [vmem:[#allocation2 + $0x80] sm:$0xff]
      %v345 = vld [vmem:[#allocation2 + $0x88] sm:$0xff]
      %v346 = vld [vmem:[#allocation2 + $0x90] sm:$0xff]
      %v347 = vld [vmem:[#allocation2 + $0x98] sm:$0xff]
      %v348 = vld [vmem:[#allocation2 + $0xa0] sm:$0xff]
      %v349 = vld [vmem:[#allocation2 + $0xa8] sm:$0xff]
      %v350 = vld [vmem:[#allocation2 + $0xb0] sm:$0xff]
      %v351 = vld [vmem:[#allocation2 + $0xb8] sm:$0xff]
      %v352 = vld [vmem:[#allocation2 + $0xc0] sm:$0xff]
      %v353 = vld [vmem:[#allocation2 + $0xc8] sm:$0xff]
      %v354 = vld [vmem:[#allocation2 + $0xd0] sm:$0xff]
      %v355 = vld [vmem:[#allocation2 + $0xd8] sm:$0xff]
      %v356 = vld [vmem:[#allocation2 + $0xe0] sm:$0xff]
      %v357 = vld [vmem:[#allocation2 + $0xe8] sm:$0xff]
      %v358 = vld [vmem:[#allocation2 + $0xf0] sm:$0xff]
      %v359 = vld [vmem:[#allocation2 + $0xf8] sm:$0xff]
      %v360 = vld [vmem:[%s245] sm:$0xf]
      %v361 = vld [vmem:[%s245 + $0x4] sm:$0xf]
      %v362 = vld [vmem:[%s245 + $0x8] sm:$0xf]
      %v363 = vld [vmem:[%s245 + $0xc] sm:$0xf]
      %v364 = vld [vmem:[%s245 + $0x10] sm:$0xf]
      %v365 = vld [vmem:[%s245 + $0x14] sm:$0xf]
      %v366 = vld [vmem:[%s245 + $0x18] sm:$0xf]
      %v367 = vld [vmem:[%s245 + $0x1c] sm:$0xf]
      %v368 = vld [vmem:[%s245 + $0x20] sm:$0xf]
      %v369 = vld [vmem:[%s245 + $0x24] sm:$0xf]
      %v370 = vld [vmem:[%s245 + $0x28] sm:$0xf]
      %v371 = vld [vmem:[%s245 + $0x2c] sm:$0xf]
      %v372 = vld [vmem:[%s245 + $0x30] sm:$0xf]
      %v373 = vld [vmem:[%s245 + $0x34] sm:$0xf]
      %v374 = vld [vmem:[%s245 + $0x38] sm:$0xf]
      %v375 = vld [vmem:[%s245 + $0x3c] sm:$0xf]
      %v408 = vunpack.c.l.b16 %v296
      %v409 = vunpack.c.l.b16 %v297
      %v410 = vunpack.c.l.b16 %v298
      %v411 = vunpack.c.l.b16 %v299
      %v412 = vunpack.c.l.b16 %v300
      %v413 = vunpack.c.l.b16 %v301
      %v414 = vunpack.c.l.b16 %v302
      %v415 = vunpack.c.l.b16 %v303
      %v416 = vunpack.c.l.b16 %v304
      %v417 = vunpack.c.l.b16 %v305
      %v418 = vunpack.c.l.b16 %v306
      %v419 = vunpack.c.l.b16 %v307
      %v420 = vunpack.c.l.b16 %v308
      %v421 = vunpack.c.l.b16 %v309
      %v422 = vunpack.c.l.b16 %v310
      %v423 = vunpack.c.l.b16 %v311
      %v424 = vunpack.c.l.b16 %v312
      %v425 = vunpack.c.l.b16 %v313
      %v426 = vunpack.c.l.b16 %v314
      %v427 = vunpack.c.l.b16 %v315
      %v428 = vunpack.c.l.b16 %v316
      %v429 = vunpack.c.l.b16 %v317
      %v430 = vunpack.c.l.b16 %v318
      %v431 = vunpack.c.l.b16 %v319
      %v432 = vunpack.c.l.b16 %v320
      %v433 = vunpack.c.l.b16 %v321
      %v434 = vunpack.c.l.b16 %v322
      %v435 = vunpack.c.l.b16 %v323
      %v436 = vunpack.c.l.b16 %v324
      %v437 = vunpack.c.l.b16 %v325
      %v438 = vunpack.c.l.b16 %v326
      %v439 = vunpack.c.l.b16 %v327
      %v440 = vpack.c.b16 %v409, %v408
      %v441 = vpack.c.b16 %v411, %v410
      %v442 = vpack.c.b16 %v413, %v412
      %v443 = vpack.c.b16 %v415, %v414
      %v444 = vpack.c.b16 %v417, %v416
      %v445 = vpack.c.b16 %v419, %v418
      %v446 = vpack.c.b16 %v421, %v420
      %v447 = vpack.c.b16 %v423, %v422
      %v448 = vpack.c.b16 %v425, %v424
      %v449 = vpack.c.b16 %v427, %v426
      %v450 = vpack.c.b16 %v429, %v428
      %v451 = vpack.c.b16 %v431, %v430
      %v452 = vpack.c.b16 %v433, %v432
      %v453 = vpack.c.b16 %v435, %v434
      %v454 = vpack.c.b16 %v437, %v436
      %v455 = vpack.c.b16 %v439, %v438
      %v488 = vunpack.c.l.b16 %v360
      %v489 = vunpack.c.l.b16 %v361
      %v490 = vunpack.c.l.b16 %v362
      %v491 = vunpack.c.l.b16 %v363
      %v492 = vunpack.c.l.b16 %v364
      %v493 = vunpack.c.l.b16 %v365
      %v494 = vunpack.c.l.b16 %v366
      %v495 = vunpack.c.l.b16 %v367
      %v496 = vunpack.c.l.b16 %v368
      %v497 = vunpack.c.l.b16 %v369
      %v498 = vunpack.c.l.b16 %v370
      %v499 = vunpack.c.l.b16 %v371
      %v500 = vunpack.c.l.b16 %v372
      %v501 = vunpack.c.l.b16 %v373
      %v502 = vunpack.c.l.b16 %v374
      %v503 = vunpack.c.l.b16 %v375
      %v504 = vpack.c.b16 %v489, %v488
      %v505 = vpack.c.b16 %v491, %v490
      %v506 = vpack.c.b16 %v493, %v492
      %v507 = vpack.c.b16 %v495, %v494
      %v508 = vpack.c.b16 %v497, %v496
      %v509 = vpack.c.b16 %v499, %v498
      %v510 = vpack.c.b16 %v501, %v500
      %v511 = vpack.c.b16 %v503, %v502
      %520 = vmatprep.subr.bf16.mxu0 0
      %521 = vmatpush1.bf16.msra.mxu0 %v504
      %522 = vmatprep.subr.bf16.mxu0 0
      %523 = vmatpush1.bf16.msra.mxu0 %v505
      %524 = vmatprep.subr.bf16.mxu0 0
      %525 = vmatpush1.bf16.msra.mxu0 %v506
      %526 = vmatprep.subr.bf16.mxu0 0
      %527 = vmatpush1.bf16.msra.mxu0 %v507
      %528 = vmatprep.subr.bf16.mxu0 0
      %529 = vmatpush1.bf16.msra.mxu0 %v508
      %530 = vmatprep.subr.bf16.mxu0 0
      %531 = vmatpush1.bf16.msra.mxu0 %v509
      %532 = vmatprep.subr.bf16.mxu0 0
      %533 = vmatpush1.bf16.msra.mxu0 %v510
      %534 = vmatprep.subr.bf16.mxu0 0
      %535 = vmatpush1.bf16.msra.mxu0 %v511
      %536 = vmatprep.subr.bf16.mxu0 0
      %537 = vmatpush1.bf16.msra.mxu0 0
      %538 = vmatprep.subr.bf16.mxu0 0
      %539 = vmatpush1.bf16.msra.mxu0 0
      %540 = vmatprep.subr.bf16.mxu0 0
      %541 = vmatpush1.bf16.msra.mxu0 0
      %542 = vmatprep.subr.bf16.mxu0 0
      %543 = vmatpush1.bf16.msra.mxu0 0
      %544 = vmatprep.subr.bf16.mxu0 0
      %545 = vmatpush1.bf16.msra.mxu0 0
      %546 = vmatprep.subr.bf16.mxu0 0
      %547 = vmatpush1.bf16.msra.mxu0 0
      %548 = vmatprep.subr.bf16.mxu0 0
      %549 = vmatpush1.bf16.msra.mxu0 0
      %550 = vmatprep.subr.bf16.mxu0 0
      %551 = vmatpush1.bf16.msra.mxu0 0
      %552 = vmatprep.mubr.bf16.mxu0 0
      %553 = vmatmul.mubr.bf16.gmra.mrb[0].mxu0 %v440
      %v554 = vpop.f32.mrb[0].mxu0
      %v555 = vadd.f32 0.0, %v554
      %v556 = vpop.f32.mrb[0].mxu0
      %v557 = vpop.f32.mrb[0].mxu0
      %v558 = vadd.f32 0.0, %v557
      %v559 = vpop.f32.mrb[0].mxu0
      %560 = vmatprep.mubr.bf16.mxu0 0
      %561 = vmatmul.mubr.bf16.gmra.mrb[0].mxu0 %v441
      %v562 = vpop.f32.mrb[0].mxu0
      %v563 = vadd.f32 0.0, %v562
      %v564 = vpop.f32.mrb[0].mxu0
      %v565 = vpop.f32.mrb[0].mxu0
      %v566 = vadd.f32 0.0, %v565
      %v567 = vpop.f32.mrb[0].mxu0
      %568 = vmatprep.mubr.bf16.mxu0 0
      %569 = vmatmul.mubr.bf16.gmra.mrb[0].mxu0 %v442
      %v570 = vpop.f32.mrb[0].mxu0
      %v571 = vadd.f32 0.0, %v570
      %v572 = vpop.f32.mrb[0].mxu0
      %v573 = vpop.f32.mrb[0].mxu0
      %v574 = vadd.f32 0.0, %v573
      %v575 = vpop.f32.mrb[0].mxu0
      %576 = vmatprep.mubr.bf16.mxu0 0
      %577 = vmatmul.mubr.bf16.gmra.mrb[0].mxu0 %v443
      %v578 = vpop.f32.mrb[0].mxu0
      %v579 = vadd.f32 0.0, %v578
      %v580 = vpop.f32.mrb[0].mxu0
      %v581 = vpop.f32.mrb[0].mxu0
      %v582 = vadd.f32 0.0, %v581
      %v583 = vpop.f32.mrb[0].mxu0
      %584 = vmatprep.mubr.bf16.mxu0 0
      %585 = vmatmul.mubr.bf16.gmra.mrb[0].mxu0 %v444
      %v586 = vpop.f32.mrb[0].mxu0
      %v587 = vadd.f32 0.0, %v586
      %v588 = vpop.f32.mrb[0].mxu0
      %v589 = vpop.f32.mrb[0].mxu0
      %v590 = vadd.f32 0.0, %v589
      %v591 = vpop.f32.mrb[0].mxu0
      %592 = vmatprep.mubr.bf16.mxu0 0
      %593 = vmatmul.mubr.bf16.gmra.mrb[0].mxu0 %v445
      %v594 = vpop.f32.mrb[0].mxu0
      %v595 = vadd.f32 0.0, %v594
      %v596 = vpop.f32.mrb[0].mxu0
      %v597 = vpop.f32.mrb[0].mxu0
      %v598 = vadd.f32 0.0, %v597
      %v599 = vpop.f32.mrb[0].mxu0
      %600 = vmatprep.mubr.bf16.mxu0 0
      %601 = vmatmul.mubr.bf16.gmra.mrb[0].mxu0 %v446
      %v602 = vpop.f32.mrb[0].mxu0
      %v603 = vadd.f32 0.0, %v602
      %v604 = vpop.f32.mrb[0].mxu0
      %v605 = vpop.f32.mrb[0].mxu0
      %v606 = vadd.f32 0.0, %v605
      %v607 = vpop.f32.mrb[0].mxu0
      %608 = vmatprep.mubr.bf16.mxu0 0
      %609 = vmatmul.mubr.bf16.gmra.mrb[0].mxu0 %v447
      %v610 = vpop.f32.mrb[0].mxu0
      %v611 = vadd.f32 0.0, %v610
      %v612 = vpop.f32.mrb[0].mxu0
      %v613 = vpop.f32.mrb[0].mxu0
      %v614 = vadd.f32 0.0, %v613
      %v615 = vpop.f32.mrb[0].mxu0
      %616 = vmatprep.mubr.bf16.mxu0 0
      %617 = vmatmul.mubr.bf16.gmra.mrb[0].mxu0 %v448
      %v618 = vpop.f32.mrb[0].mxu0
      %v619 = vadd.f32 0.0, %v618
      %v620 = vpop.f32.mrb[0].mxu0
      %v621 = vpop.f32.mrb[0].mxu0
      %v622 = vadd.f32 0.0, %v621
      %v623 = vpop.f32.mrb[0].mxu0
      %624 = vmatprep.mubr.bf16.mxu0 0
      %625 = vmatmul.mubr.bf16.gmra.mrb[0].mxu0 %v449
      %v626 = vpop.f32.mrb[0].mxu0
      %v627 = vadd.f32 0.0, %v626
      %v628 = vpop.f32.mrb[0].mxu0
      %v629 = vpop.f32.mrb[0].mxu0
      %v630 = vadd.f32 0.0, %v629
      %v631 = vpop.f32.mrb[0].mxu0
      %632 = vmatprep.mubr.bf16.mxu0 0
      %633 = vmatmul.mubr.bf16.gmra.mrb[0].mxu0 %v450
      %v634 = vpop.f32.mrb[0].mxu0
      %v635 = vadd.f32 0.0, %v634
      %v636 = vpop.f32.mrb[0].mxu0
      %v637 = vpop.f32.mrb[0].mxu0
      %v638 = vadd.f32 0.0, %v637
      %v639 = vpop.f32.mrb[0].mxu0
      %640 = vmatprep.mubr.bf16.mxu0 0
      %641 = vmatmul.mubr.bf16.gmra.mrb[0].mxu0 %v451
      %v642 = vpop.f32.mrb[0].mxu0
      %v643 = vadd.f32 0.0, %v642
      %v644 = vpop.f32.mrb[0].mxu0
      %v645 = vpop.f32.mrb[0].mxu0
      %v646 = vadd.f32 0.0, %v645
      %v647 = vpop.f32.mrb[0].mxu0
      %648 = vmatprep.mubr.bf16.mxu0 0
      %649 = vmatmul.mubr.bf16.gmra.mrb[0].mxu0 %v452
      %v650 = vpop.f32.mrb[0].mxu0
      %v651 = vadd.f32 0.0, %v650
      %v652 = vpop.f32.mrb[0].mxu0
      %v653 = vpop.f32.mrb[0].mxu0
      %v654 = vadd.f32 0.0, %v653
      %v655 = vpop.f32.mrb[0].mxu0
      %656 = vmatprep.mubr.bf16.mxu0 0
      %657 = vmatmul.mubr.bf16.gmra.mrb[0].mxu0 %v453
      %v658 = vpop.f32.mrb[0].mxu0
      %v659 = vadd.f32 0.0, %v658
      %v660 = vpop.f32.mrb[0].mxu0
      %v661 = vpop.f32.mrb[0].mxu0
      %v662 = vadd.f32 0.0, %v661
      %v663 = vpop.f32.mrb[0].mxu0
      %664 = vmatprep.mubr.bf16.mxu0 0
      %665 = vmatmul.mubr.bf16.gmra.mrb[0].mxu0 %v454
      %v666 = vpop.f32.mrb[0].mxu0
      %v667 = vadd.f32 0.0, %v666
      %v668 = vpop.f32.mrb[0].mxu0
      %v669 = vpop.f32.mrb[0].mxu0
      %v670 = vadd.f32 0.0, %v669
      %v671 = vpop.f32.mrb[0].mxu0
      %672 = vmatprep.mubr.bf16.mxu0 0
      %673 = vmatmul.mubr.bf16.gmra.mrb[0].mxu0 %v455
      %v674 = vpop.f32.mrb[0].mxu0
      %v675 = vadd.f32 0.0, %v674
      %v676 = vpop.f32.mrb[0].mxu0
      %v677 = vpop.f32.mrb[0].mxu0
      %v678 = vadd.f32 0.0, %v677
      %v679 = vpop.f32.mrb[0].mxu0
      %680 = vdwg.mxu0
      %v681 = vadd.f32 %v328, %v555
      %v682 = vadd.f32 %v329, %v558
      %v683 = vadd.f32 %v330, %v563
      %v684 = vadd.f32 %v331, %v566
      %v685 = vadd.f32 %v332, %v571
      %v686 = vadd.f32 %v333, %v574
      %v687 = vadd.f32 %v334, %v579
      %v688 = vadd.f32 %v335, %v582
      %v689 = vadd.f32 %v336, %v587
      %v690 = vadd.f32 %v337, %v590
      %v691 = vadd.f32 %v338, %v595
      %v692 = vadd.f32 %v339, %v598
      %v693 = vadd.f32 %v340, %v603
      %v694 = vadd.f32 %v341, %v606
      %v695 = vadd.f32 %v342, %v611
      %v696 = vadd.f32 %v343, %v614
      %v697 = vadd.f32 %v344, %v619
      %v698 = vadd.f32 %v345, %v622
      %v699 = vadd.f32 %v346, %v627
      %v700 = vadd.f32 %v347, %v630
      %v701 = vadd.f32 %v348, %v635
      %v702 = vadd.f32 %v349, %v638
      %v703 = vadd.f32 %v350, %v643
      %v704 = vadd.f32 %v351, %v646
      %v705 = vadd.f32 %v352, %v651
      %v706 = vadd.f32 %v353, %v654
      %v707 = vadd.f32 %v354, %v659
      %v708 = vadd.f32 %v355, %v662
      %v709 = vadd.f32 %v356, %v667
      %v710 = vadd.f32 %v357, %v670
      %v711 = vadd.f32 %v358, %v675
      %v712 = vadd.f32 %v359, %v678
      %713 = vst [vmem:[#allocation2] sm:$0xff] %v681
      %714 = vst [vmem:[#allocation2 + $0x8] sm:$0xff] %v682
      %715 = vst [vmem:[#allocation2 + $0x10] sm:$0xff] %v683
      %716 = vst [vmem:[#allocation2 + $0x18] sm:$0xff] %v684
      %717 = vst [vmem:[#allocation2 + $0x20] sm:$0xff] %v685
      %718 = vst [vmem:[#allocation2 + $0x28] sm:$0xff] %v686
      %719 = vst [vmem:[#allocation2 + $0x30] sm:$0xff] %v687
      %720 = vst [vmem:[#allocation2 + $0x38] sm:$0xff] %v688
      %721 = vst [vmem:[#allocation2 + $0x40] sm:$0xff] %v689
      %722 = vst [vmem:[#allocation2 + $0x48] sm:$0xff] %v690
      %723 = vst [vmem:[#allocation2 + $0x50] sm:$0xff] %v691
      %724 = vst [vmem:[#allocation2 + $0x58] sm:$0xff] %v692
      %725 = vst [vmem:[#allocation2 + $0x60] sm:$0xff] %v693
      %726 = vst [vmem:[#allocation2 + $0x68] sm:$0xff] %v694
      %727 = vst [vmem:[#allocation2 + $0x70] sm:$0xff] %v695
      %728 = vst [vmem:[#allocation2 + $0x78] sm:$0xff] %v696
      %729 = vst [vmem:[#allocation2 + $0x80] sm:$0xff] %v697
      %730 = vst [vmem:[#allocation2 + $0x88] sm:$0xff] %v698
      %731 = vst [vmem:[#allocation2 + $0x90] sm:$0xff] %v699
      %732 = vst [vmem:[#allocation2 + $0x98] sm:$0xff] %v700
      %733 = vst [vmem:[#allocation2 + $0xa0] sm:$0xff] %v701
      %734 = vst [vmem:[#allocation2 + $0xa8] sm:$0xff] %v702
      %735 = vst [vmem:[#allocation2 + $0xb0] sm:$0xff] %v703
      %736 = vst [vmem:[#allocation2 + $0xb8] sm:$0xff] %v704
      %737 = vst [vmem:[#allocation2 + $0xc0] sm:$0xff] %v705
      %738 = vst [vmem:[#allocation2 + $0xc8] sm:$0xff] %v706
      %739 = vst [vmem:[#allocation2 + $0xd0] sm:$0xff] %v707
      %740 = vst [vmem:[#allocation2 + $0xd8] sm:$0xff] %v708
      %741 = vst [vmem:[#allocation2 + $0xe0] sm:$0xff] %v709
      %742 = vst [vmem:[#allocation2 + $0xe8] sm:$0xff] %v710
      %743 = vst [vmem:[#allocation2 + $0xf0] sm:$0xff] %v711
      %744 = vst [vmem:[#allocation2 + $0xf8] sm:$0xff] %v712
      // Predicated region
      $region37: #{nfnet_forward.10} parent=31 // pred_check
        %p745 = pneg %p260
      $region38: #{nfnet_forward.10} parent=31 // pred_check_branch
        %747 = sbr.rel (%p745) target = $region40
      $region39: #{nfnet_forward.10} parent=31 // pred_region
        %v748 = vld [vmem:[#allocation2] sm:$0xff]
        %v749 = vld [vmem:[#allocation2 + $0x8] sm:$0xff]
        %v750 = vld [vmem:[#allocation2 + $0x10] sm:$0xff]
        %v751 = vld [vmem:[#allocation2 + $0x18] sm:$0xff]
        %v752 = vld [vmem:[#allocation2 + $0x20] sm:$0xff]
        %v753 = vld [vmem:[#allocation2 + $0x28] sm:$0xff]
        %v754 = vld [vmem:[#allocation2 + $0x30] sm:$0xff]
        %v755 = vld [vmem:[#allocation2 + $0x38] sm:$0xff]
        %v756 = vld [vmem:[#allocation2 + $0x40] sm:$0xff]
        %v757 = vld [vmem:[#allocation2 + $0x48] sm:$0xff]
        %v758 = vld [vmem:[#allocation2 + $0x50] sm:$0xff]
        %v759 = vld [vmem:[#allocation2 + $0x58] sm:$0xff]
        %v760 = vld [vmem:[#allocation2 + $0x60] sm:$0xff]
        %v761 = vld [vmem:[#allocation2 + $0x68] sm:$0xff]
        %v762 = vld [vmem:[#allocation2 + $0x70] sm:$0xff]
        %v763 = vld [vmem:[#allocation2 + $0x78] sm:$0xff]
        %v764 = vld [vmem:[#allocation2 + $0x80] sm:$0xff]
        %v765 = vld [vmem:[#allocation2 + $0x88] sm:$0xff]
        %v766 = vld [vmem:[#allocation2 + $0x90] sm:$0xff]
        %v767 = vld [vmem:[#allocation2 + $0x98] sm:$0xff]
        %v768 = vld [vmem:[#allocation2 + $0xa0] sm:$0xff]
        %v769 = vld [vmem:[#allocation2 + $0xa8] sm:$0xff]
        %v770 = vld [vmem:[#allocation2 + $0xb0] sm:$0xff]
        %v771 = vld [vmem:[#allocation2 + $0xb8] sm:$0xff]
        %v772 = vld [vmem:[#allocation2 + $0xc0] sm:$0xff]
        %v773 = vld [vmem:[#allocation2 + $0xc8] sm:$0xff]
        %v774 = vld [vmem:[#allocation2 + $0xd0] sm:$0xff]
        %v775 = vld [vmem:[#allocation2 + $0xd8] sm:$0xff]
        %v776 = vld [vmem:[#allocation2 + $0xe0] sm:$0xff]
        %v777 = vld [vmem:[#allocation2 + $0xe8] sm:$0xff]
        %v778 = vld [vmem:[#allocation2 + $0xf0] sm:$0xff]
        %v779 = vld [vmem:[#allocation2 + $0xf8] sm:$0xff]
        %v780 = vld [vmem:[%s249] sm:$0x1]
        %v782 = vlaneseq
        %v783 = vshrl.u32 %v782, 7
        %v784 = vsub.s32 0, %v783
        %v785 = vrot.slane %v780, %v784
        %v787 = vadd.f32 %v748, %v785
        %v788 = vadd.f32 %v749, %v785
        %v789 = vadd.f32 %v750, %v785
        %v790 = vadd.f32 %v751, %v785
        %v791 = vadd.f32 %v752, %v785
        %v792 = vadd.f32 %v753, %v785
        %v793 = vadd.f32 %v754, %v785
        %v794 = vadd.f32 %v755, %v785
        %v795 = vadd.f32 %v756, %v785
        %v796 = vadd.f32 %v757, %v785
        %v797 = vadd.f32 %v758, %v785
        %v798 = vadd.f32 %v759, %v785
        %v799 = vadd.f32 %v760, %v785
        %v800 = vadd.f32 %v761, %v785
        %v801 = vadd.f32 %v762, %v785
        %v802 = vadd.f32 %v763, %v785
        %v803 = vadd.f32 %v764, %v785
        %v804 = vadd.f32 %v765, %v785
        %v805 = vadd.f32 %v766, %v785
        %v806 = vadd.f32 %v767, %v785
        %v807 = vadd.f32 %v768, %v785
        %v808 = vadd.f32 %v769, %v785
        %v809 = vadd.f32 %v770, %v785
        %v810 = vadd.f32 %v771, %v785
        %v811 = vadd.f32 %v772, %v785
        %v812 = vadd.f32 %v773, %v785
        %v813 = vadd.f32 %v774, %v785
        %v814 = vadd.f32 %v775, %v785
        %v815 = vadd.f32 %v776, %v785
        %v816 = vadd.f32 %v777, %v785
        %v817 = vadd.f32 %v778, %v785
        %v818 = vadd.f32 %v779, %v785
        %v819 = vmul.f32 %v787, 0.5
        %v820 = vmul.f32 %v788, 0.5
        %v821 = vmul.f32 %v789, 0.5
        %v822 = vmul.f32 %v790, 0.5
        %v823 = vmul.f32 %v791, 0.5
        %v824 = vmul.f32 %v792, 0.5
        %v825 = vmul.f32 %v793, 0.5
        %v826 = vmul.f32 %v794, 0.5
        %v827 = vmul.f32 %v795, 0.5
        %v828 = vmul.f32 %v796, 0.5
        %v829 = vmul.f32 %v797, 0.5
        %v830 = vmul.f32 %v798, 0.5
        %v831 = vmul.f32 %v799, 0.5
        %v832 = vmul.f32 %v800, 0.5
        %v833 = vmul.f32 %v801, 0.5
        %v834 = vmul.f32 %v802, 0.5
        %v835 = vmul.f32 %v803, 0.5
        %v836 = vmul.f32 %v804, 0.5
        %v837 = vmul.f32 %v805, 0.5
        %v838 = vmul.f32 %v806, 0.5
        %v839 = vmul.f32 %v807, 0.5
        %v840 = vmul.f32 %v808, 0.5
        %v841 = vmul.f32 %v809, 0.5
        %v842 = vmul.f32 %v810, 0.5
        %v843 = vmul.f32 %v811, 0.5
        %v844 = vmul.f32 %v812, 0.5
        %v845 = vmul.f32 %v813, 0.5
        %v846 = vmul.f32 %v814, 0.5
        %v847 = vmul.f32 %v815, 0.5
        %v848 = vmul.f32 %v816, 0.5
        %v849 = vmul.f32 %v817, 0.5
        %v850 = vmul.f32 %v818, 0.5
        %v851 = vmul.f32 %v787, 0.044715
        %v852 = vmul.f32 %v788, 0.044715
        %v853 = vmul.f32 %v789, 0.044715
        %v854 = vmul.f32 %v790, 0.044715
        %v855 = vmul.f32 %v791, 0.044715
        %v856 = vmul.f32 %v792, 0.044715
        %v857 = vmul.f32 %v793, 0.044715
        %v858 = vmul.f32 %v794, 0.044715
        %v859 = vmul.f32 %v795, 0.044715
        %v860 = vmul.f32 %v796, 0.044715
        %v861 = vmul.f32 %v797, 0.044715
        %v862 = vmul.f32 %v798, 0.044715
        %v863 = vmul.f32 %v799, 0.044715
        %v864 = vmul.f32 %v800, 0.044715
        %v865 = vmul.f32 %v801, 0.044715
        %v866 = vmul.f32 %v802, 0.044715
        %v867 = vmul.f32 %v803, 0.044715
        %v868 = vmul.f32 %v804, 0.044715
        %v869 = vmul.f32 %v805, 0.044715
        %v870 = vmul.f32 %v806, 0.044715
        %v871 = vmul.f32 %v807, 0.044715
        %v872 = vmul.f32 %v808, 0.044715
        %v873 = vmul.f32 %v809, 0.044715
        %v874 = vmul.f32 %v810, 0.044715
        %v875 = vmul.f32 %v811, 0.044715
        %v876 = vmul.f32 %v812, 0.044715
        %v877 = vmul.f32 %v813, 0.044715
        %v878 = vmul.f32 %v814, 0.044715
        %v879 = vmul.f32 %v815, 0.044715
        %v880 = vmul.f32 %v816, 0.044715
        %v881 = vmul.f32 %v817, 0.044715
        %v882 = vmul.f32 %v818, 0.044715
        %v883 = vmul.f32 %v851, %v787
        %v884 = vmul.f32 %v852, %v788
        %v885 = vmul.f32 %v853, %v789
        %v886 = vmul.f32 %v854, %v790
        %v887 = vmul.f32 %v855, %v791
        %v888 = vmul.f32 %v856, %v792
        %v889 = vmul.f32 %v857, %v793
        %v890 = vmul.f32 %v858, %v794
        %v891 = vmul.f32 %v859, %v795
        %v892 = vmul.f32 %v860, %v796
        %v893 = vmul.f32 %v861, %v797
        %v894 = vmul.f32 %v862, %v798
        %v895 = vmul.f32 %v863, %v799
        %v896 = vmul.f32 %v864, %v800
        %v897 = vmul.f32 %v865, %v801
        %v898 = vmul.f32 %v866, %v802
        %v899 = vmul.f32 %v867, %v803
        %v900 = vmul.f32 %v868, %v804
        %v901 = vmul.f32 %v869, %v805
        %v902 = vmul.f32 %v870, %v806
        %v903 = vmul.f32 %v871, %v807
        %v904 = vmul.f32 %v872, %v808
        %v905 = vmul.f32 %v873, %v809
        %v906 = vmul.f32 %v874, %v810
        %v907 = vmul.f32 %v875, %v811
        %v908 = vmul.f32 %v876, %v812
        %v909 = vmul.f32 %v877, %v813
        %v910 = vmul.f32 %v878, %v814
        %v911 = vmul.f32 %v879, %v815
        %v912 = vmul.f32 %v880, %v816
        %v913 = vmul.f32 %v881, %v817
        %v914 = vmul.f32 %v882, %v818
        %v915 = vmul.f32 %v883, %v787
        %v916 = vmul.f32 %v884, %v788
        %v917 = vmul.f32 %v885, %v789
        %v918 = vmul.f32 %v886, %v790
        %v919 = vmul.f32 %v887, %v791
        %v920 = vmul.f32 %v888, %v792
        %v921 = vmul.f32 %v889, %v793
        %v922 = vmul.f32 %v890, %v794
        %v923 = vmul.f32 %v891, %v795
        %v924 = vmul.f32 %v892, %v796
        %v925 = vmul.f32 %v893, %v797
        %v926 = vmul.f32 %v894, %v798
        %v927 = vmul.f32 %v895, %v799
        %v928 = vmul.f32 %v896, %v800
        %v929 = vmul.f32 %v897, %v801
        %v930 = vmul.f32 %v898, %v802
        %v931 = vmul.f32 %v899, %v803
        %v932 = vmul.f32 %v900, %v804
        %v933 = vmul.f32 %v901, %v805
        %v934 = vmul.f32 %v902, %v806
        %v935 = vmul.f32 %v903, %v807
        %v936 = vmul.f32 %v904, %v808
        %v937 = vmul.f32 %v905, %v809
        %v938 = vmul.f32 %v906, %v810
        %v939 = vmul.f32 %v907, %v811
        %v940 = vmul.f32 %v908, %v812
        %v941 = vmul.f32 %v909, %v813
        %v942 = vmul.f32 %v910, %v814
        %v943 = vmul.f32 %v911, %v815
        %v944 = vmul.f32 %v912, %v816
        %v945 = vmul.f32 %v913, %v817
        %v946 = vmul.f32 %v914, %v818
        %v947 = vadd.f32 %v787, %v915
        %v948 = vadd.f32 %v788, %v916
        %v949 = vadd.f32 %v789, %v917
        %v950 = vadd.f32 %v790, %v918
        %v951 = vadd.f32 %v791, %v919
        %v952 = vadd.f32 %v792, %v920
        %v953 = vadd.f32 %v793, %v921
        %v954 = vadd.f32 %v794, %v922
        %v955 = vadd.f32 %v795, %v923
        %v956 = vadd.f32 %v796, %v924
        %v957 = vadd.f32 %v797, %v925
        %v958 = vadd.f32 %v798, %v926
        %v959 = vadd.f32 %v799, %v927
        %v960 = vadd.f32 %v800, %v928
        %v961 = vadd.f32 %v801, %v929
        %v962 = vadd.f32 %v802, %v930
        %v963 = vadd.f32 %v803, %v931
        %v964 = vadd.f32 %v804, %v932
        %v965 = vadd.f32 %v805, %v933
        %v966 = vadd.f32 %v806, %v934
        %v967 = vadd.f32 %v807, %v935
        %v968 = vadd.f32 %v808, %v936
        %v969 = vadd.f32 %v809, %v937
        %v970 = vadd.f32 %v810, %v938
        %v971 = vadd.f32 %v811, %v939
        %v972 = vadd.f32 %v812, %v940
        %v973 = vadd.f32 %v813, %v941
        %v974 = vadd.f32 %v814, %v942
        %v975 = vadd.f32 %v815, %v943
        %v976 = vadd.f32 %v816, %v944
        %v977 = vadd.f32 %v817, %v945
        %v978 = vadd.f32 %v818, %v946
        %v979 = vmul.f32 %v947, 0.7978846
        %v980 = vmul.f32 %v948, 0.7978846
        %v981 = vmul.f32 %v949, 0.7978846
        %v982 = vmul.f32 %v950, 0.7978846
        %v983 = vmul.f32 %v951, 0.7978846
        %v984 = vmul.f32 %v952, 0.7978846
        %v985 = vmul.f32 %v953, 0.7978846
        %v986 = vmul.f32 %v954, 0.7978846
        %v987 = vmul.f32 %v955, 0.7978846
        %v988 = vmul.f32 %v956, 0.7978846
        %v989 = vmul.f32 %v957, 0.7978846
        %v990 = vmul.f32 %v958, 0.7978846
        %v991 = vmul.f32 %v959, 0.7978846
        %v992 = vmul.f32 %v960, 0.7978846
        %v993 = vmul.f32 %v961, 0.7978846
        %v994 = vmul.f32 %v962, 0.7978846
        %v995 = vmul.f32 %v963, 0.7978846
        %v996 = vmul.f32 %v964, 0.7978846
        %v997 = vmul.f32 %v965, 0.7978846
        %v998 = vmul.f32 %v966, 0.7978846
        %v999 = vmul.f32 %v967, 0.7978846
        %v1000 = vmul.f32 %v968, 0.7978846
        %v1001 = vmul.f32 %v969, 0.7978846
        %v1002 = vmul.f32 %v970, 0.7978846
        %v1003 = vmul.f32 %v971, 0.7978846
        %v1004 = vmul.f32 %v972, 0.7978846
        %v1005 = vmul.f32 %v973, 0.7978846
        %v1006 = vmul.f32 %v974, 0.7978846
        %v1007 = vmul.f32 %v975, 0.7978846
        %v1008 = vmul.f32 %v976, 0.7978846
        %v1009 = vmul.f32 %v977, 0.7978846
        %v1010 = vmul.f32 %v978, 0.7978846
        %v1011 = vtanh.pop %v979
        %v1012 = vtanh.pop %v980
        %v1013 = vtanh.pop %v981
        %v1014 = vtanh.pop %v982
        %v1015 = vtanh.pop %v983
        %v1016 = vtanh.pop %v984
        %v1017 = vtanh.pop %v985
        %v1018 = vtanh.pop %v986
        %v1019 = vtanh.pop %v987
        %v1020 = vtanh.pop %v988
        %v1021 = vtanh.pop %v989
        %v1022 = vtanh.pop %v990
        %v1023 = vtanh.pop %v991
        %v1024 = vtanh.pop %v992
        %v1025 = vtanh.pop %v993
        %v1026 = vtanh.pop %v994
        %v1027 = vtanh.pop %v995
        %v1028 = vtanh.pop %v996
        %v1029 = vtanh.pop %v997
        %v1030 = vtanh.pop %v998
        %v1031 = vtanh.pop %v999
        %v1032 = vtanh.pop %v1000
        %v1033 = vtanh.pop %v1001
        %v1034 = vtanh.pop %v1002
        %v1035 = vtanh.pop %v1003
        %v1036 = vtanh.pop %v1004
        %v1037 = vtanh.pop %v1005
        %v1038 = vtanh.pop %v1006
        %v1039 = vtanh.pop %v1007
        %v1040 = vtanh.pop %v1008
        %v1041 = vtanh.pop %v1009
        %v1042 = vtanh.pop %v1010
        %v1043 = vadd.f32 %v1011, 1.0
        %v1044 = vadd.f32 %v1012, 1.0
        %v1045 = vadd.f32 %v1013, 1.0
        %v1046 = vadd.f32 %v1014, 1.0
        %v1047 = vadd.f32 %v1015, 1.0
        %v1048 = vadd.f32 %v1016, 1.0
        %v1049 = vadd.f32 %v1017, 1.0
        %v1050 = vadd.f32 %v1018, 1.0
        %v1051 = vadd.f32 %v1019, 1.0
        %v1052 = vadd.f32 %v1020, 1.0
        %v1053 = vadd.f32 %v1021, 1.0
        %v1054 = vadd.f32 %v1022, 1.0
        %v1055 = vadd.f32 %v1023, 1.0
        %v1056 = vadd.f32 %v1024, 1.0
        %v1057 = vadd.f32 %v1025, 1.0
        %v1058 = vadd.f32 %v1026, 1.0
        %v1059 = vadd.f32 %v1027, 1.0
        %v1060 = vadd.f32 %v1028, 1.0
        %v1061 = vadd.f32 %v1029, 1.0
        %v1062 = vadd.f32 %v1030, 1.0
        %v1063 = vadd.f32 %v1031, 1.0
        %v1064 = vadd.f32 %v1032, 1.0
        %v1065 = vadd.f32 %v1033, 1.0
        %v1066 = vadd.f32 %v1034, 1.0
        %v1067 = vadd.f32 %v1035, 1.0
        %v1068 = vadd.f32 %v1036, 1.0
        %v1069 = vadd.f32 %v1037, 1.0
        %v1070 = vadd.f32 %v1038, 1.0
        %v1071 = vadd.f32 %v1039, 1.0
        %v1072 = vadd.f32 %v1040, 1.0
        %v1073 = vadd.f32 %v1041, 1.0
        %v1074 = vadd.f32 %v1042, 1.0
        %v1075 = vmul.f32 %v819, %v1043
        %v1076 = vmul.f32 %v820, %v1044
        %v1077 = vmul.f32 %v821, %v1045
        %v1078 = vmul.f32 %v822, %v1046
        %v1079 = vmul.f32 %v823, %v1047
        %v1080 = vmul.f32 %v824, %v1048
        %v1081 = vmul.f32 %v825, %v1049
        %v1082 = vmul.f32 %v826, %v1050
        %v1083 = vmul.f32 %v827, %v1051
        %v1084 = vmul.f32 %v828, %v1052
        %v1085 = vmul.f32 %v829, %v1053
        %v1086 = vmul.f32 %v830, %v1054
        %v1087 = vmul.f32 %v831, %v1055
        %v1088 = vmul.f32 %v832, %v1056
        %v1089 = vmul.f32 %v833, %v1057
        %v1090 = vmul.f32 %v834, %v1058
        %v1091 = vmul.f32 %v835, %v1059
        %v1092 = vmul.f32 %v836, %v1060
        %v1093 = vmul.f32 %v837, %v1061
        %v1094 = vmul.f32 %v838, %v1062
        %v1095 = vmul.f32 %v839, %v1063
        %v1096 = vmul.f32 %v840, %v1064
        %v1097 = vmul.f32 %v841, %v1065
        %v1098 = vmul.f32 %v842, %v1066
        %v1099 = vmul.f32 %v843, %v1067
        %v1100 = vmul.f32 %v844, %v1068
        %v1101 = vmul.f32 %v845, %v1069
        %v1102 = vmul.f32 %v846, %v1070
        %v1103 = vmul.f32 %v847, %v1071
        %v1104 = vmul.f32 %v848, %v1072
        %v1105 = vmul.f32 %v849, %v1073
        %v1106 = vmul.f32 %v850, %v1074
        %v1107 = vmul.f32 %v1075, 1.7015043
        %v1108 = vmul.f32 %v1076, 1.7015043
        %v1109 = vmul.f32 %v1077, 1.7015043
        %v1110 = vmul.f32 %v1078, 1.7015043
        %v1111 = vmul.f32 %v1079, 1.7015043
        %v1112 = vmul.f32 %v1080, 1.7015043
        %v1113 = vmul.f32 %v1081, 1.7015043
        %v1114 = vmul.f32 %v1082, 1.7015043
        %v1115 = vmul.f32 %v1083, 1.7015043
        %v1116 = vmul.f32 %v1084, 1.7015043
        %v1117 = vmul.f32 %v1085, 1.7015043
        %v1118 = vmul.f32 %v1086, 1.7015043
        %v1119 = vmul.f32 %v1087, 1.7015043
        %v1120 = vmul.f32 %v1088, 1.7015043
        %v1121 = vmul.f32 %v1089, 1.7015043
        %v1122 = vmul.f32 %v1090, 1.7015043
        %v1123 = vmul.f32 %v1091, 1.7015043
        %v1124 = vmul.f32 %v1092, 1.7015043
        %v1125 = vmul.f32 %v1093, 1.7015043
        %v1126 = vmul.f32 %v1094, 1.7015043
        %v1127 = vmul.f32 %v1095, 1.7015043
        %v1128 = vmul.f32 %v1096, 1.7015043
        %v1129 = vmul.f32 %v1097, 1.7015043
        %v1130 = vmul.f32 %v1098, 1.7015043
        %v1131 = vmul.f32 %v1099, 1.7015043
        %v1132 = vmul.f32 %v1100, 1.7015043
        %v1133 = vmul.f32 %v1101, 1.7015043
        %v1134 = vmul.f32 %v1102, 1.7015043
        %v1135 = vmul.f32 %v1103, 1.7015043
        %v1136 = vmul.f32 %v1104, 1.7015043
        %v1137 = vmul.f32 %v1105, 1.7015043
        %v1138 = vmul.f32 %v1106, 1.7015043
        %v1139 = vpack.c.bf16 %v1108, %v1107
        %v1140 = vpack.c.bf16 %v1110, %v1109
        %v1141 = vpack.c.bf16 %v1112, %v1111
        %v1142 = vpack.c.bf16 %v1114, %v1113
        %v1143 = vpack.c.bf16 %v1116, %v1115
        %v1144 = vpack.c.bf16 %v1118, %v1117
        %v1145 = vpack.c.bf16 %v1120, %v1119
        %v1146 = vpack.c.bf16 %v1122, %v1121
        %v1147 = vpack.c.bf16 %v1124, %v1123
        %v1148 = vpack.c.bf16 %v1126, %v1125
        %v1149 = vpack.c.bf16 %v1128, %v1127
        %v1150 = vpack.c.bf16 %v1130, %v1129
        %v1151 = vpack.c.bf16 %v1132, %v1131
        %v1152 = vpack.c.bf16 %v1134, %v1133
        %v1153 = vpack.c.bf16 %v1136, %v1135
        %v1154 = vpack.c.bf16 %v1138, %v1137
        %v1171 = vunpack.c.l.b16 %v1139
        %v1172 = vunpack.c.h.b16 %v1139
        %v1173 = vunpack.c.l.b16 %v1140
        %v1174 = vunpack.c.h.b16 %v1140
        %v1175 = vunpack.c.l.b16 %v1141
        %v1176 = vunpack.c.h.b16 %v1141
        %v1177 = vunpack.c.l.b16 %v1142
        %v1178 = vunpack.c.h.b16 %v1142
        %v1179 = vunpack.c.l.b16 %v1143
        %v1180 = vunpack.c.h.b16 %v1143
        %v1181 = vunpack.c.l.b16 %v1144
        %v1182 = vunpack.c.h.b16 %v1144
        %v1183 = vunpack.c.l.b16 %v1145
        %v1184 = vunpack.c.h.b16 %v1145
        %v1185 = vunpack.c.l.b16 %v1146
        %v1186 = vunpack.c.h.b16 %v1146
        %v1187 = vunpack.c.l.b16 %v1147
        %v1188 = vunpack.c.h.b16 %v1147
        %v1189 = vunpack.c.l.b16 %v1148
        %v1190 = vunpack.c.h.b16 %v1148
        %v1191 = vunpack.c.l.b16 %v1149
        %v1192 = vunpack.c.h.b16 %v1149
        %v1193 = vunpack.c.l.b16 %v1150
        %v1194 = vunpack.c.h.b16 %v1150
        %v1195 = vunpack.c.l.b16 %v1151
        %v1196 = vunpack.c.h.b16 %v1151
        %v1197 = vunpack.c.l.b16 %v1152
        %v1198 = vunpack.c.h.b16 %v1152
        %v1199 = vunpack.c.l.b16 %v1153
        %v1200 = vunpack.c.h.b16 %v1153
        %v1201 = vunpack.c.l.b16 %v1154
        %v1202 = vunpack.c.h.b16 %v1154
        %v1203 = vpack.c.b16 %v1171, %v1171
        %v1204 = vpack.c.b16 %v1172, %v1172
        %v1205 = vpack.c.b16 %v1173, %v1173
        %v1206 = vpack.c.b16 %v1174, %v1174
        %v1207 = vpack.c.b16 %v1175, %v1175
        %v1208 = vpack.c.b16 %v1176, %v1176
        %v1209 = vpack.c.b16 %v1177, %v1177
        %v1210 = vpack.c.b16 %v1178, %v1178
        %v1211 = vpack.c.b16 %v1179, %v1179
        %v1212 = vpack.c.b16 %v1180, %v1180
        %v1213 = vpack.c.b16 %v1181, %v1181
        %v1214 = vpack.c.b16 %v1182, %v1182
        %v1215 = vpack.c.b16 %v1183, %v1183
        %v1216 = vpack.c.b16 %v1184, %v1184
        %v1217 = vpack.c.b16 %v1185, %v1185
        %v1218 = vpack.c.b16 %v1186, %v1186
        %v1219 = vpack.c.b16 %v1187, %v1187
        %v1220 = vpack.c.b16 %v1188, %v1188
        %v1221 = vpack.c.b16 %v1189, %v1189
        %v1222 = vpack.c.b16 %v1190, %v1190
        %v1223 = vpack.c.b16 %v1191, %v1191
        %v1224 = vpack.c.b16 %v1192, %v1192
        %v1225 = vpack.c.b16 %v1193, %v1193
        %v1226 = vpack.c.b16 %v1194, %v1194
        %v1227 = vpack.c.b16 %v1195, %v1195
        %v1228 = vpack.c.b16 %v1196, %v1196
        %v1229 = vpack.c.b16 %v1197, %v1197
        %v1230 = vpack.c.b16 %v1198, %v1198
        %v1231 = vpack.c.b16 %v1199, %v1199
        %v1232 = vpack.c.b16 %v1200, %v1200
        %v1233 = vpack.c.b16 %v1201, %v1201
        %v1234 = vpack.c.b16 %v1202, %v1202
        %1267 = vst [vmem:[%s257] sm:$0xf] %v1203
        %1268 = vst [vmem:[%s257 + $0x4] sm:$0xf] %v1204
        %1269 = vst [vmem:[%s257 + $0x8] sm:$0xf] %v1205
        %1270 = vst [vmem:[%s257 + $0xc] sm:$0xf] %v1206
        %1271 = vst [vmem:[%s257 + $0x10] sm:$0xf] %v1207
        %1272 = vst [vmem:[%s257 + $0x14] sm:$0xf] %v1208
        %1273 = vst [vmem:[%s257 + $0x18] sm:$0xf] %v1209
        %1274 = vst [vmem:[%s257 + $0x1c] sm:$0xf] %v1210
        %1275 = vst [vmem:[%s257 + $0x20] sm:$0xf] %v1211
        %1276 = vst [vmem:[%s257 + $0x24] sm:$0xf] %v1212
        %1277 = vst [vmem:[%s257 + $0x28] sm:$0xf] %v1213
        %1278 = vst [vmem:[%s257 + $0x2c] sm:$0xf] %v1214
        %1279 = vst [vmem:[%s257 + $0x30] sm:$0xf] %v1215
        %1280 = vst [vmem:[%s257 + $0x34] sm:$0xf] %v1216
        %1281 = vst [vmem:[%s257 + $0x38] sm:$0xf] %v1217
        %1282 = vst [vmem:[%s257 + $0x3c] sm:$0xf] %v1218
        %1283 = vst [vmem:[%s257 + $0x40] sm:$0xf] %v1219
        %1284 = vst [vmem:[%s257 + $0x44] sm:$0xf] %v1220
        %1285 = vst [vmem:[%s257 + $0x48] sm:$0xf] %v1221
        %1286 = vst [vmem:[%s257 + $0x4c] sm:$0xf] %v1222
        %1287 = vst [vmem:[%s257 + $0x50] sm:$0xf] %v1223
        %1288 = vst [vmem:[%s257 + $0x54] sm:$0xf] %v1224
        %1289 = vst [vmem:[%s257 + $0x58] sm:$0xf] %v1225
        %1290 = vst [vmem:[%s257 + $0x5c] sm:$0xf] %v1226
        %1291 = vst [vmem:[%s257 + $0x60] sm:$0xf] %v1227
        %1292 = vst [vmem:[%s257 + $0x64] sm:$0xf] %v1228
        %1293 = vst [vmem:[%s257 + $0x68] sm:$0xf] %v1229
        %1294 = vst [vmem:[%s257 + $0x6c] sm:$0xf] %v1230
        %1295 = vst [vmem:[%s257 + $0x70] sm:$0xf] %v1231
        %1296 = vst [vmem:[%s257 + $0x74] sm:$0xf] %v1232
        %1297 = vst [vmem:[%s257 + $0x78] sm:$0xf] %v1233
        %1298 = vst [vmem:[%s257 + $0x7c] sm:$0xf] %v1234
      $region40: #{nfnet_forward.10} parent=31 // pred_fallthru
        _
      %s1299 = smul.u32 32, %s19
      %p1300 = scmp.lt.s32.totalorder %s1299, 63
      %s1301 = scalar_select %p1300, %s1299, 63
      %p1302 = scmp.lt.s32.totalorder %s20, 0
      %s1303 = scalar_select %p1302, %s20, 0
      %s1304 = sadd.s32 %s1303, %s1301
      %s1305 = smul.addr %s1304, 4
      %s1306 = scalar_lea.vmem %s3, %s1305
      // Predicated region
      $region41: #{nfnet_forward.10} parent=31 // pred_check
        %p1307 = pneg %p135
      $region42: #{nfnet_forward.10} parent=31 // pred_check_branch
        %1309 = sbr.rel (%p1307) target = $region44
      $region43: #{nfnet_forward.10} parent=31 // pred_region
        %s1310 = smul.u32 32, %s19
      $region44: #{nfnet_forward.10} parent=31 // pred_fallthru
        _
    $region32: #{nfnet_forward.10} parent=5 // pred_fallthru
      _
    %p1311 = scmp.le.s32.totalorder 2, %s9
    // Predicated region
    $region45: #{nfnet_forward.10} parent=5 // pred_check
      %p1312 = pneg %p1311
    $region46: #{nfnet_forward.10} parent=5 // pred_check_branch
      %1314 = sbr.rel (%p1312) target = $region48
    $region47: #{nfnet_forward.10} parent=5 // pred_region
      %s1315 = ssub.s32 %s9, 2
      // Predicated region
      $region49: #{nfnet_forward.10} parent=47 // pred_check
        %p1316 = pneg %p141
      $region50: #{nfnet_forward.10} parent=47 // pred_check_branch
        %1318 = sbr.rel (%p1316) target = $region52
      $region51: #{nfnet_forward.10} parent=47 // pred_region
        %s1319 = smul.u32 32, %s22
        %p1320 = scmp.lt.s32.totalorder %s1319, 63
        %s1321 = scalar_select %p1320, %s1319, 63
        %p1322 = scmp.lt.s32.totalorder %s23, 0
        %s1323 = scalar_select %p1322, %s23, 0
        %s1324 = sadd.s32 %s1323, %s1321
        %s1325 = smul.addr %s1324, 4
        %s1326 = scalar_lea.vmem %s3, %s1325
      $region52: #{nfnet_forward.10} parent=47 // pred_fallthru
        _
    $region48: #{nfnet_forward.10} parent=5 // pred_fallthru
      _
  $region6: #{nfnet_forward.10} parent=0 // loop_footer
    %s13 = sadd.s32 1, %s9
  $region7: #{nfnet_forward.10} parent=0 // loop_footer_branch
    %8 = sbr.rel target = $region3
  $region8: #{nfnet_forward.10} parent=0 // loop_exit
    _

// kernel: nfnet_forward.11
$region0: #{nfnet_forward.11}
  #allocation0 [shape = 'u32[]', space=smem, size = 0x4, offset = 0x4, fixed_abs, tag = 'smem constant byte address 0x4 - core index']
  #allocation1 [shape = 'u32[144,128]{1,0:T(1,128)}', space=vmem, size = 0x12000, scoped, tag = 'internal scratch']
  #allocation2 [shape = 'f32[256,128]{1,0:T(8,128)}', space=vmem, size = 0x20000, scoped, tag = 'scratch operand']
  %s0 = inlined_call_operand.vmem [shape: bf16[512,1152], index: 0, kind: input, shape index: {}]
  %s1 = inlined_call_operand.vmem [shape: bf16[1152,128], index: 1, kind: input, shape index: {}]
  %s2 = inlined_call_operand.vmem [shape: f32[1,128], index: 2, kind: input, shape index: {}]
  %s3 = inlined_call_operand.vmem [shape: bf16[512,128], index: 3, kind: output, shape index: {}]
  %s4 = sld [smem:[#allocation0]]
  $region79: #{nfnet_forward.11} parent=0
    _
  %s6 = ssub.s32 1, %s4
  %s7 = scalar_select 0, %s6, %s4
  $region1: #{nfnet_forward.11} parent=0
    #allocation3 [shape = 'u8[393216]{0}', space=vmem, size = 0x60000, scoped, tag = 'input window, operand 0']
    loop: start=0, step=1, limit=8
    $region2: #{nfnet_forward.11} parent=1 // loop_pre_header
      _
    $region3: #{nfnet_forward.11} parent=1 // loop_header
      %s9 = sphi 0, %s13
      %p10 = scmp.ge.s32.totalorder %s9, 8
      %s16 = sphi 0, %s35
      %s17 = sphi 0, %s31
      %s18 = sphi 0, %s27
      %s19 = sphi 0, %s16
      %s20 = sphi 0, %s17
      %s21 = sphi 0, %s18
      %s22 = sphi 0, %s19
      %s23 = sphi 0, %s20
      %s24 = sphi 0, %s21
      %s40 = sphi 0, %s42
      %s43 = sphi 0, %s40
      %s44 = sphi 0, %s43
      %s60 = sphi 0, %s44
      %s68 = sphi 0, %s70
      %s71 = sphi 0, %s68
      %s72 = sphi 0, %s71
      %s88 = sphi 0, %s72
      %s94 = sphi 0, %s96
      %s97 = sphi 0, %s94
      %s98 = sphi 0, %s97
      %s114 = sphi 0, %s98
      %s122 = sphi 0, %s124
      %s125 = sphi 0, %s122
      %s126 = sphi 0, %s125
      %s142 = sphi 0, %s126
    $region4: #{nfnet_forward.11} parent=1 // loop_header_branch
      %12 = sbr.rel (%p10) target = $region8
    $region5: #{nfnet_forward.11} parent=1 // loop_body
      %s14 = ssub.s32 %s9, 1
      %s15 = ssub.s32 %s9, 2
      %s25 = sadd.s32 1, %s18
      %p26 = scmp.ge.s32.totalorder %s25, 3
      %s27 = scalar_select %p26, 0, %s25
      %s28 = sadd.s32 1, %s17
      %s29 = scalar_select %p26, %s28, %s17
      %p30 = scmp.ge.s32.totalorder %s29, 1
      %s31 = scalar_select %p30, 0, %s29
      %s32 = sadd.s32 1, %s16
      %s33 = scalar_select %p30, %s32, %s16
      %p34 = scmp.ge.s32.totalorder %s33, 2
      %s35 = scalar_select %p34, 0, %s33
      %s36 = ssub.s32 %s16, %s35
      %s37 = ssub.s32 %s18, %s27
      %s38 = sor.u32 %s36, %s37
      %p39 = scmp.eq.s32.totalorder %s38, 0
      %s41 = sadd.s32 %s40, 1
      %s42 = scalar_select %p39, %s40, %s41
      %p45 = pneg %p39
      %p46 = scmp.eq.s32.totalorder %s9, 5
      %p47 = por %p45, %p46
      %p48 = scmp.ne.s32.totalorder %s40, %s43
      %p49 = scmp.eq.s32.totalorder %s9, 0
      %p50 = por %p48, %p49
      %p51 = scmp.ne.s32.totalorder %s40, %s43
      %p52 = scmp.eq.s32.totalorder %s14, 5
      %p53 = por %p51, %p52
      %p54 = scmp.ne.s32.totalorder %s43, %s44
      %p55 = scmp.eq.s32.totalorder %s14, 0
      %p56 = por %p54, %p55
      %p57 = scmp.ne.s32.totalorder %s43, %s44
      %p58 = scmp.eq.s32.totalorder %s15, 5
      %p59 = por %p57, %p58
      %p61 = scmp.ne.s32.totalorder %s44, %s60
      %p62 = scmp.eq.s32.totalorder %s15, 0
      %p63 = por %p61, %p62
      %s64 = ssub.s32 %s18, %s27
      %s65 = ssub.s32 %s17, %s31
      %s66 = sor.u32 %s64, %s65
      %p67 = scmp.eq.s32.totalorder %s66, 0
      %s69 = sadd.s32 %s68, 1
      %s70 = scalar_select %p67, %s68, %s69
      %p73 = pneg %p67
      %p74 = scmp.eq.s32.totalorder %s9, 5
      %p75 = por %p73, %p74
      %p76 = scmp.ne.s32.totalorder %s68, %s71
      %p77 = scmp.eq.s32.totalorder %s9, 0
      %p78 = por %p76, %p77
      %p79 = scmp.ne.s32.totalorder %s68, %s71
      %p80 = scmp.eq.s32.totalorder %s14, 5
      %p81 = por %p79, %p80
      %p82 = scmp.ne.s32.totalorder %s71, %s72
      %p83 = scmp.eq.s32.totalorder %s14, 0
      %p84 = por %p82, %p83
      %p85 = scmp.ne.s32.totalorder %s71, %s72
      %p86 = scmp.eq.s32.totalorder %s15, 5
      %p87 = por %p85, %p86
      %p89 = scmp.ne.s32.totalorder %s72, %s88
      %p90 = scmp.eq.s32.totalorder %s15, 0
      %p91 = por %p89, %p90
      %s92 = ssub.s32 %s17, %s31
      %p93 = scmp.eq.s32.totalorder %s92, 0
      %s95 = sadd.s32 %s94, 1
      %s96 = scalar_select %p93, %s94, %s95
      %p99 = pneg %p93
      %p100 = scmp.eq.s32.totalorder %s9, 5
      %p101 = por %p99, %p100
      %p102 = scmp.ne.s32.totalorder %s94, %s97
      %p103 = scmp.eq.s32.totalorder %s9, 0
      %p104 = por %p102, %p103
      %p105 = scmp.ne.s32.totalorder %s94, %s97
      %p106 = scmp.eq.s32.totalorder %s14, 5
      %p107 = por %p105, %p106
      %p108 = scmp.ne.s32.totalorder %s97, %s98
      %p109 = scmp.eq.s32.totalorder %s14, 0
      %p110 = por %p108, %p109
      %p111 = scmp.ne.s32.totalorder %s97, %s98
      %p112 = scmp.eq.s32.totalorder %s15, 5
      %p113 = por %p111, %p112
      %p115 = scmp.ne.s32.totalorder %s98, %s114
      %p116 = scmp.eq.s32.totalorder %s15, 0
      %p117 = por %p115, %p116
      %s118 = ssub.s32 %s16, %s35
      %s119 = ssub.s32 %s17, %s31
      %s120 = sor.u32 %s118, %s119
      %p121 = scmp.eq.s32.totalorder %s120, 0
      %s123 = sadd.s32 %s122, 1
      %s124 = scalar_select %p121, %s122, %s123
      %p127 = pneg %p121
      %p128 = scmp.eq.s32.totalorder %s9, 5
      %p129 = por %p127, %p128
      %p130 = scmp.ne.s32.totalorder %s122, %s125
      %p131 = scmp.eq.s32.totalorder %s9, 0
      %p132 = por %p130, %p131
      %p133 = scmp.ne.s32.totalorder %s122, %s125
      %p134 = scmp.eq.s32.totalorder %s14, 5
      %p135 = por %p133, %p134
      %p136 = scmp.ne.s32.totalorder %s125, %s126
      %p137 = scmp.eq.s32.totalorder %s14, 0
      %p138 = por %p136, %p137
      %p139 = scmp.ne.s32.totalorder %s125, %s126
      %p140 = scmp.eq.s32.totalorder %s15, 5
      %p141 = por %p139, %p140
      %p143 = scmp.ne.s32.totalorder %s126, %s142
      %p144 = scmp.eq.s32.totalorder %s15, 0
      %p145 = por %p143, %p144
      %p146 = scmp.le.s32.totalorder 1, %s9
      %p147 = scmp.lt.s32.totalorder %s9, 7
      %p148 = pnand %p146, %p147
      %p149 = pneg %p148
      // Predicated region
      $region9: #{nfnet_forward.11} parent=5 // pred_check
        _
      $region10: #{nfnet_forward.11} parent=5 // pred_check_branch
        %151 = sbr.rel (%p148) target = $region12
      $region11: #{nfnet_forward.11} parent=5 // pred_region
        %s152 = ssub.s32 %s9, 1
        // Predicated region
        $region13: #{nfnet_forward.11} parent=11 // pred_check
          %p153 = pneg %p110
        $region14: #{nfnet_forward.11} parent=11 // pred_check_branch
          %155 = sbr.rel (%p153) target = $region16
        $region15: #{nfnet_forward.11} parent=11 // pred_region
          %p156 = scmp.lt.s32.totalorder %s20, 0
          %s157 = scalar_select %p156, %s20, 0
          %s158 = scalar_lea.vmem %s2, %s157
        $region16: #{nfnet_forward.11} parent=11 // pred_fallthru
          _
      $region12: #{nfnet_forward.11} parent=5 // pred_fallthru
        _
      %p159 = scmp.lt.s32.totalorder %s9, 6
      // Predicated region
      $region17: #{nfnet_forward.11} parent=5 // pred_check
        %p160 = pneg %p159
      $region18: #{nfnet_forward.11} parent=5 // pred_check_branch
        %162 = sbr.rel (%p160) target = $region20
      $region19: #{nfnet_forward.11} parent=5 // pred_region
        // Predicated region
        $region21: #{nfnet_forward.11} parent=19 // pred_check
          %p163 = pneg %p50
        $region22: #{nfnet_forward.11} parent=19 // pred_check_branch
          %165 = sbr.rel (%p163) target = $region24
        $region23: #{nfnet_forward.11} parent=19 // pred_region
          %s166 = sand.u32 %s40, 1
          %s167 = sand.u32 %s40, 1
          %s168 = smul.addr %s167, 384
          %s169 = scalar_lea.vmem [#allocation3], %s168
          %s170 = smul.u32 32, %s16
          %s171 = smul.u32 3, %s18
          %s172 = smul.addr %s170, 9
          %s173 = sadd.s32 %s171, %s172
          %s174 = smul.addr %s173, 4
          %s175 = scalar_lea.vmem %s0, %s174
          // Predicated region
          $region25: #{nfnet_forward.11} parent=23 // pred_check
            _
          $region26: #{nfnet_forward.11} parent=23 // pred_check_branch
            %177 = sbr.rel (0) target = $region28
          $region27: #{nfnet_forward.11} parent=23 // pred_region
            // Predicated region
            $region29: #{nfnet_forward.11} parent=27 // pred_check
              _
            $region30: #{nfnet_forward.11} parent=27 // pred_check_branch
              %179 = sbr.rel (0) target = $region32
            $region31: #{nfnet_forward.11} parent=27 // pred_region
              %s180 = scalar_lea.vmem %s175, 8
              %s181 = scalar_lea.vmem %s169, 8 [#allocation3]
              loop: start=0, step=1, limit=1
              $region33: #{nfnet_forward.11} parent=31 // loop_pre_header
                _
              $region34: #{nfnet_forward.11} parent=31 // loop_header
                %s183 = sphi 0, %s187
                %p184 = scmp.ge.s32.totalorder %s183, 1
                %s188 = sphi %s175, %s175
                %s189 = sphi %s169, %s169
              $region35: #{nfnet_forward.11} parent=31 // loop_header_branch
                %186 = sbr.rel (%p184) target = $region39
              $region36: #{nfnet_forward.11} parent=31 // loop_body
                %v190 = vld [vmem:[%s188] sm:$0xff]
                %191 = vst [vmem:[%s189] sm:$0xff] %v190
                %v192 = vld [vmem:[%s188 + $0x24] sm:$0xff]
                %193 = vst [vmem:[%s189 + $0xc] sm:$0xff] %v192
                %v194 = vld [vmem:[%s188 + $0x48] sm:$0xff]
                %195 = vst [vmem:[%s189 + $0x18] sm:$0xff] %v194
                %v196 = vld [vmem:[%s188 + $0x6c] sm:$0xff]
                %197 = vst [vmem:[%s189 + $0x24] sm:$0xff] %v196
                %v198 = vld [vmem:[%s188 + $0x90] sm:$0xff]
                %199 = vst [vmem:[%s189 + $0x30] sm:$0xff] %v198
                %v200 = vld [vmem:[%s188 + $0xb4] sm:$0xff]
                %201 = vst [vmem:[%s189 + $0x3c] sm:$0xff] %v200
                %v202 = vld [vmem:[%s188 + $0xd8] sm:$0xff]
                %203 = vst [vmem:[%s189 + $0x48] sm:$0xff] %v202
                %v204 = vld [vmem:[%s188 + $0xfc] sm:$0xff]
                %205 = vst [vmem:[%s189 + $0x54] sm:$0xff] %v204
                %v206 = vld [vmem:[%s188 + $0x120] sm:$0xff]
                %207 = vst [vmem:[%s189 + $0x60] sm:$0xff] %v206
                %v208 = vld [vmem:[%s188 + $0x144] sm:$0xff]
                %209 = vst [vmem:[%s189 + $0x6c] sm:$0xff] %v208
                %v210 = vld [vmem:[%s188 + $0x168] sm:$0xff]
                %211 = vst [vmem:[%s189 + $0x78] sm:$0xff] %v210
                %v212 = vld [vmem:[%s188 + $0x18c] sm:$0xff]
                %213 = vst [vmem:[%s189 + $0x84] sm:$0xff] %v212
                %v214 = vld [vmem:[%s188 + $0x1b0] sm:$0xff]
                %215 = vst [vmem:[%s189 + $0x90] sm:$0xff] %v214
                %v216 = vld [vmem:[%s188 + $0x1d4] sm:$0xff]
                %217 = vst [vmem:[%s189 + $0x9c] sm:$0xff] %v216
                %v218 = vld [vmem:[%s188 + $0x1f8] sm:$0xff]
                %219 = vst [vmem:[%s189 + $0xa8] sm:$0xff] %v218
                %v220 = vld [vmem:[%s188 + $0x21c] sm:$0xff]
                %221 = vst [vmem:[%s189 + $0xb4] sm:$0xff] %v220
                %v222 = vld [vmem:[%s188 + $0x240] sm:$0xff]
                %223 = vst [vmem:[%s189 + $0xc0] sm:$0xff] %v222
                %v224 = vld [vmem:[%s188 + $0x264] sm:$0xff]
                %225 = vst [vmem:[%s189 + $0xcc] sm:$0xff] %v224
                %v226 = vld [vmem:[%s188 + $0x288] sm:$0xff]
                %227 = vst [vmem:[%s189 + $0xd8] sm:$0xff] %v226
                %v228 = vld [vmem:[%s188 + $0x2ac] sm:$0xff]
                %229 = vst [vmem:[%s189 + $0xe4] sm:$0xff] %v228
                %v230 = vld [vmem:[%s188 + $0x2d0] sm:$0xff]
                %231 = vst [vmem:[%s189 + $0xf0] sm:$0xff] %v230
                %v232 = vld [vmem:[%s188 + $0x2f4] sm:$0xff]
                %233 = vst [vmem:[%s189 + $0xfc] sm:$0xff] %v232
                %v234 = vld [vmem:[%s188 + $0x318] sm:$0xff]
                %235 = vst [vmem:[%s189 + $0x108] sm:$0xff] %v234
                %v236 = vld [vmem:[%s188 + $0x33c] sm:$0xff]
                %237 = vst [vmem:[%s189 + $0x114] sm:$0xff] %v236
                %v238 = vld [vmem:[%s188 + $0x360] sm:$0xff]
                %239 = vst [vmem:[%s189 + $0x120] sm:$0xff] %v238
                %v240 = vld [vmem:[%s188 + $0x384] sm:$0xff]
                %241 = vst [vmem:[%s189 + $0x12c] sm:$0xff] %v240
                %v242 = vld [vmem:[%s188 + $0x3a8] sm:$0xff]
                %243 = vst [vmem:[%s189 + $0x138] sm:$0xff] %v242
                %v244 = vld [vmem:[%s188 + $0x3cc] sm:$0xff]
                %245 = vst [vmem:[%s189 + $0x144] sm:$0xff] %v244
                %v246 = vld [vmem:[%s188 + $0x3f0] sm:$0xff]
                %247 = vst [vmem:[%s189 + $0x150] sm:$0xff] %v246
                %v248 = vld [vmem:[%s188 + $0x414] sm:$0xff]
                %249 = vst [vmem:[%s189 + $0x15c] sm:$0xff] %v248
                %v250 = vld [vmem:[%s188 + $0x438] sm:$0xff]
                %251 = vst [vmem:[%s189 + $0x168] sm:$0xff] %v250
                %v252 = vld [vmem:[%s188 + $0x45c] sm:$0xff]
                %253 = vst [vmem:[%s189 + $0x174] sm:$0xff] %v252
              $region37: #{nfnet_forward.11} parent=31 // loop_footer
                %s187 = sadd.s32 1, %s183
              $region38: #{nfnet_forward.11} parent=31 // loop_footer_branch
                %182 = sbr.rel target = $region34
              $region39: #{nfnet_forward.11} parent=31 // loop_exit
                _
              loop: start=0, step=1, limit=1
              $region40: #{nfnet_forward.11} parent=31 // loop_pre_header
                _
              $region41: #{nfnet_forward.11} parent=31 // loop_header
                %s256 = sphi 0, %s260
                %p257 = scmp.ge.s32.totalorder %s256, 1
                %s261 = sphi %s180, %s180
                %s262 = sphi %s181, %s181
              $region42: #{nfnet_forward.11} parent=31 // loop_header_branch
                %259 = sbr.rel (%p257) target = $region46
              $region43: #{nfnet_forward.11} parent=31 // loop_body
                %v263 = vld [vmem:[%s261] sm:$0xf]
                %264 = vst [vmem:[%s262] sm:$0xf] %v263
                %v265 = vld [vmem:[%s261 + $0x24] sm:$0xf]
                %266 = vst [vmem:[%s262 + $0xc] sm:$0xf] %v265
                %v267 = vld [vmem:[%s261 + $0x48] sm:$0xf]
                %268 = vst [vmem:[%s262 + $0x18] sm:$0xf] %v267
                %v269 = vld [vmem:[%s261 + $0x6c] sm:$0xf]
                %270 = vst [vmem:[%s262 + $0x24] sm:$0xf] %v269
                %v271 = vld [vmem:[%s261 + $0x90] sm:$0xf]
                %272 = vst [vmem:[%s262 + $0x30] sm:$0xf] %v271
                %v273 = vld [vmem:[%s261 + $0xb4] sm:$0xf]
                %274 = vst [vmem:[%s262 + $0x3c] sm:$0xf] %v273
                %v275 = vld [vmem:[%s261 + $0xd8] sm:$0xf]
                %276 = vst [vmem:[%s262 + $0x48] sm:$0xf] %v275
                %v277 = vld [vmem:[%s261 + $0xfc] sm:$0xf]
                %278 = vst [vmem:[%s262 + $0x54] sm:$0xf] %v277
                %v279 = vld [vmem:[%s261 + $0x120] sm:$0xf]
                %280 = vst [vmem:[%s262 + $0x60] sm:$0xf] %v279
                %v281 = vld [vmem:[%s261 + $0x144] sm:$0xf]
                %282 = vst [vmem:[%s262 + $0x6c] sm:$0xf] %v281
                %v283 = vld [vmem:[%s261 + $0x168] sm:$0xf]
                %284 = vst [vmem:[%s262 + $0x78] sm:$0xf] %v283
                %v285 = vld [vmem:[%s261 + $0x18c] sm:$0xf]
                %286 = vst [vmem:[%s262 + $0x84] sm:$0xf] %v285
                %v287 = vld [vmem:[%s261 + $0x1b0] sm:$0xf]
                %288 = vst [vmem:[%s262 + $0x90] sm:$0xf] %v287
                %v289 = vld [vmem:[%s261 + $0x1d4] sm:$0xf]
                %290 = vst [vmem:[%s262 + $0x9c] sm:$0xf] %v289
                %v291 = vld [vmem:[%s261 + $0x1f8] sm:$0xf]
                %292 = vst [vmem:[%s262 + $0xa8] sm:$0xf] %v291
                %v293 = vld [vmem:[%s261 + $0x21c] sm:$0xf]
                %294 = vst [vmem:[%s262 + $0xb4] sm:$0xf] %v293
                %v295 = vld [vmem:[%s261 + $0x240] sm:$0xf]
                %296 = vst [vmem:[%s262 + $0xc0] sm:$0xf] %v295
                %v297 = vld [vmem:[%s261 + $0x264] sm:$0xf]
                %298 = vst [vmem:[%s262 + $0xcc] sm:$0xf] %v297
                %v299 = vld [vmem:[%s261 + $0x288] sm:$0xf]
                %300 = vst [vmem:[%s262 + $0xd8] sm:$0xf] %v299
                %v301 = vld [vmem:[%s261 + $0x2ac] sm:$0xf]
                %302 = vst [vmem:[%s262 + $0xe4] sm:$0xf] %v301
                %v303 = vld [vmem:[%s261 + $0x2d0] sm:$0xf]
                %304 = vst [vmem:[%s262 + $0xf0] sm:$0xf] %v303
                %v305 = vld [vmem:[%s261 + $0x2f4] sm:$0xf]
                %306 = vst [vmem:[%s262 + $0xfc] sm:$0xf] %v305
                %v307 = vld [vmem:[%s261 + $0x318] sm:$0xf]
                %308 = vst [vmem:[%s262 + $0x108] sm:$0xf] %v307
                %v309 = vld [vmem:[%s261 + $0x33c] sm:$0xf]
                %310 = vst [vmem:[%s262 + $0x114] sm:$0xf] %v309
                %v311 = vld [vmem:[%s261 + $0x360] sm:$0xf]
                %312 = vst [vmem:[%s262 + $0x120] sm:$0xf] %v311
                %v313 = vld [vmem:[%s261 + $0x384] sm:$0xf]
                %314 = vst [vmem:[%s262 + $0x12c] sm:$0xf] %v313
                %v315 = vld [vmem:[%s261 + $0x3a8] sm:$0xf]
                %316 = vst [vmem:[%s262 + $0x138] sm:$0xf] %v315
                %v317 = vld [vmem:[%s261 + $0x3cc] sm:$0xf]
                %318 = vst [vmem:[%s262 + $0x144] sm:$0xf] %v317
                %v319 = vld [vmem:[%s261 + $0x3f0] sm:$0xf]
                %320 = vst [vmem:[%s262 + $0x150] sm:$0xf] %v319
                %v321 = vld [vmem:[%s261 + $0x414] sm:$0xf]
                %322 = vst [vmem:[%s262 + $0x15c] sm:$0xf] %v321
                %v323 = vld [vmem:[%s261 + $0x438] sm:$0xf]
                %324 = vst [vmem:[%s262 + $0x168] sm:$0xf] %v323
                %v325 = vld [vmem:[%s261 + $0x45c] sm:$0xf]
                %326 = vst [vmem:[%s262 + $0x174] sm:$0xf] %v325
              $region44: #{nfnet_forward.11} parent=31 // loop_footer
                %s260 = sadd.s32 1, %s256
              $region45: #{nfnet_forward.11} parent=31 // loop_footer_branch
                %255 = sbr.rel target = $region41
              $region46: #{nfnet_forward.11} parent=31 // loop_exit
                _
            $region32: #{nfnet_forward.11} parent=27 // pred_fallthru
              _
          $region28: #{nfnet_forward.11} parent=23 // pred_fallthru
            _
          %327 = vnop
        $region24: #{nfnet_forward.11} parent=19 // pred_fallthru
          _
        // Predicated region
        $region47: #{nfnet_forward.11} parent=19 // pred_check
          %p328 = pneg %p78
        $region48: #{nfnet_forward.11} parent=19 // pred_check_branch
          %330 = sbr.rel (%p328) target = $region50
        $region49: #{nfnet_forward.11} parent=19 // pred_region
          %s331 = smul.u32 48, %s18
          %p332 = scmp.lt.s32.totalorder %s331, 143
          %s333 = scalar_select %p332, %s331, 143
          %p334 = scmp.lt.s32.totalorder %s17, 0
          %s335 = scalar_select %p334, %s17, 0
          %s336 = sadd.s32 %s335, %s333
          %s337 = smul.addr %s336, 4
          %s338 = scalar_lea.vmem %s1, %s337
          %s339 = smul.u32 48, %s18
        $region50: #{nfnet_forward.11} parent=19 // pred_fallthru
          _
      $region20: #{nfnet_forward.11} parent=5 // pred_fallthru
        _
      %p340 = scmp.le.s32.totalorder 1, %s9
      %p341 = scmp.lt.s32.totalorder %s9, 7
      %p342 = pnand %p340, %p341
      %p343 = pneg %p342
      // Predicated region
      $region51: #{nfnet_forward.11} parent=5 // pred_check
        _
      $region52: #{nfnet_forward.11} parent=5 // pred_check_branch
        %345 = sbr.rel (%p342) target = $region54
      $region53: #{nfnet_forward.11} parent=5 // pred_region
        %s346 = ssub.s32 %s9, 1
        %s347 = sand.u32 %s43, 1
        %s348 = sand.u32 %s43, 1
        %s349 = smul.addr %s348, 384
        %s350 = scalar_lea.vmem [#allocation3], %s349
        // Predicated region
        $region55: #{nfnet_forward.11} parent=53 // pred_check
          %p351 = pneg %p56
        $region56: #{nfnet_forward.11} parent=53 // pred_check_branch
          %353 = sbr.rel (%p351) target = $region58
        $region57: #{nfnet_forward.11} parent=53 // pred_region
          _
        $region58: #{nfnet_forward.11} parent=53 // pred_fallthru
          _
        %s354 = sand.u32 %s43, 1
        %s355 = sand.u32 %s43, 1
        %s356 = smul.addr %s355, 384
        %s357 = scalar_lea.vmem [#allocation3], %s356
        %p358 = pneg %p56
        %p359 = pneg %p53
        %s360 = smul.u32 48, %s21
        %p361 = scmp.lt.s32.totalorder %s360, 143
        %s362 = scalar_select %p361, %s360, 143
        %p363 = scmp.lt.s32.totalorder %s20, 0
        %s364 = scalar_select %p363, %s20, 0
        %s365 = sadd.s32 %s364, %s362
        %s366 = smul.addr %s365, 4
        %s367 = scalar_lea.vmem %s1, %s366
        %p368 = pneg %p84
        %p369 = pneg %p81
        %p370 = scmp.lt.s32.totalorder %s20, 0
        %s371 = scalar_select %p370, %s20, 0
        %s372 = scalar_lea.vmem %s2, %s371
        %p373 = pneg %p110
        %p374 = pneg %p107
        %p375 = pneg %p138
        %p376 = pneg %p135
        %s377 = smul.u32 32, %s19
        %p378 = scmp.lt.s32.totalorder %s377, 63
        %s379 = scalar_select %p378, %s377, 63
        %p380 = scmp.lt.s32.totalorder %s20, 0
        %s381 = scalar_select %p380, %s20, 0
        %s382 = sadd.s32 %s381, %s379
        %s383 = smul.addr %s382, 4
        %s384 = scalar_lea.vmem %s3, %s383
        %s385 = smul.u32 32, %s19
        %s386 = smul.u32 3, %s21
        %s387 = smul.u32 48, %s21
        %p388 = scmp.lt.s32.totalorder %s387, 143
        %s389 = scalar_select %p388, %s387, 143
        %p390 = scmp.lt.s32.totalorder %s20, 0
        %s391 = scalar_select %p390, %s20, 0
        %s392 = sadd.s32 %s391, %s389
        %s393 = smul.addr %s392, 4
        %s394 = scalar_lea.vmem %s1, %s393
        %s395 = smul.u32 48, %s21
        %p396 = scmp.lt.s32.totalorder %s20, 0
        %s397 = scalar_select %p396, %s20, 0
        %s398 = scalar_lea.vmem %s2, %s397
        %s399 = smul.u32 32, %s19
        %p400 = scmp.lt.s32.totalorder %s399, 63
        %s401 = scalar_select %p400, %s399, 63
        %p402 = scmp.lt.s32.totalorder %s20, 0
        %s403 = scalar_select %p402, %s20, 0
        %s404 = sadd.s32 %s403, %s401
        %s405 = smul.addr %s404, 4
        %s406 = scalar_lea.vmem %s3, %s405
        %s407 = smul.u32 32, %s19
        %p409 = scmp.eq.s32.totalorder %s21, 0
        // Predicated region
        $region59: #{nfnet_forward.11} parent=53 // pred_check
          %p410 = pneg %p409
        $region60: #{nfnet_forward.11} parent=53 // pred_check_branch
          %412 = sbr.rel (%p410) target = $region62
        $region61: #{nfnet_forward.11} parent=53 // pred_region
          %413 = vst [vmem:[#allocation2] sm:$0xff] 0.0
          %414 = vst [vmem:[#allocation2 + $0x8] sm:$0xff] 0.0
          %415 = vst [vmem:[#allocation2 + $0x10] sm:$0xff] 0.0
          %416 = vst [vmem:[#allocation2 + $0x18] sm:$0xff] 0.0
          %417 = vst [vmem:[#allocation2 + $0x20] sm:$0xff] 0.0
          %418 = vst [vmem:[#allocation2 + $0x28] sm:$0xff] 0.0
          %419 = vst [vmem:[#allocation2 + $0x30] sm:$0xff] 0.0
          %420 = vst [vmem:[#allocation2 + $0x38] sm:$0xff] 0.0
          %421 = vst [vmem:[#allocation2 + $0x40] sm:$0xff] 0.0
          %422 = vst [vmem:[#allocation2 + $0x48] sm:$0xff] 0.0
          %423 = vst [vmem:[#allocation2 + $0x50] sm:$0xff] 0.0
          %424 = vst [vmem:[#allocation2 + $0x58] sm:$0xff] 0.0
          %425 = vst [vmem:[#allocation2 + $0x60] sm:$0xff] 0.0
          %426 = vst [vmem:[#allocation2 + $0x68] sm:$0xff] 0.0
          %427 = vst [vmem:[#allocation2 + $0x70] sm:$0xff] 0.0
          %428 = vst [vmem:[#allocation2 + $0x78] sm:$0xff] 0.0
          %429 = vst [vmem:[#allocation2 + $0x80] sm:$0xff] 0.0
          %430 = vst [vmem:[#allocation2 + $0x88] sm:$0xff] 0.0
          %431 = vst [vmem:[#allocation2 + $0x90] sm:$0xff] 0.0
          %432 = vst [vmem:[#allocation2 + $0x98] sm:$0xff] 0.0
          %433 = vst [vmem:[#allocation2 + $0xa0] sm:$0xff] 0.0
          %434 = vst [vmem:[#allocation2 + $0xa8] sm:$0xff] 0.0
          %435 = vst [vmem:[#allocation2 + $0xb0] sm:$0xff] 0.0
          %436 = vst [vmem:[#allocation2 + $0xb8] sm:$0xff] 0.0
          %437 = vst [vmem:[#allocation2 + $0xc0] sm:$0xff] 0.0
          %438 = vst [vmem:[#allocation2 + $0xc8] sm:$0xff] 0.0
          %439 = vst [vmem:[#allocation2 + $0xd0] sm:$0xff] 0.0
          %440 = vst [vmem:[#allocation2 + $0xd8] sm:$0xff] 0.0
          %441 = vst [vmem:[#allocation2 + $0xe0] sm:$0xff] 0.0
          %442 = vst [vmem:[#allocation2 + $0xe8] sm:$0xff] 0.0
          %443 = vst [vmem:[#allocation2 + $0xf0] sm:$0xff] 0.0
          %444 = vst [vmem:[#allocation2 + $0xf8] sm:$0xff] 0.0
        $region62: #{nfnet_forward.11} parent=53 // pred_fallthru
          _
        %v445 = vld [vmem:[%s350] sm:$0xff]
        %v446 = vld [vmem:[%s350 + $0x8] sm:$0xf]
        %v447 = vld [vmem:[%s350 + $0xc] sm:$0xff]
        %v448 = vld [vmem:[%s350 + $0x14] sm:$0xf]
        %v449 = vld [vmem:[%s350 + $0x18] sm:$0xff]
        %v450 = vld [vmem:[%s350 + $0x20] sm:$0xf]
        %v451 = vld [vmem:[%s350 + $0x24] sm:$0xff]
        %v452 = vld [vmem:[%s350 + $0x2c] sm:$0xf]
        %v453 = vld [vmem:[%s350 + $0x30] sm:$0xff]
        %v454 = vld [vmem:[%s350 + $0x38] sm:$0xf]
        %v455 = vld [vmem:[%s350 + $0x3c] sm:$0xff]
        %v456 = vld [vmem:[%s350 + $0x44] sm:$0xf]
        %v457 = vld [vmem:[%s350 + $0x48] sm:$0xff]
        %v458 = vld [vmem:[%s350 + $0x50] sm:$0xf]
        %v459 = vld [vmem:[%s350 + $0x54] sm:$0xff]
        %v460 = vld [vmem:[%s350 + $0x5c] sm:$0xf]
        %v461 = vld [vmem:[%s350 + $0x60] sm:$0xff]
        %v462 = vld [vmem:[%s350 + $0x68] sm:$0xf]
        %v463 = vld [vmem:[%s350 + $0x6c] sm:$0xff]
        %v464 = vld [vmem:[%s350 + $0x74] sm:$0xf]
        %v465 = vld [vmem:[%s350 + $0x78] sm:$0xff]
        %v466 = vld [vmem:[%s350 + $0x80] sm:$0xf]
        %v467 = vld [vmem:[%s350 + $0x84] sm:$0xff]
        %v468 = vld [vmem:[%s350 + $0x8c] sm:$0xf]
        %v469 = vld [vmem:[%s350 + $0x90] sm:$0xff]
        %v470 = vld [vmem:[%s350 + $0x98] sm:$0xf]
        %v471 = vld [vmem:[%s350 + $0x9c] sm:$0xff]
        %v472 = vld [vmem:[%s350 + $0xa4] sm:$0xf]
        %v473 = vld [vmem:[%s350 + $0xa8] sm:$0xff]
        %v474 = vld [vmem:[%s350 + $0xb0] sm:$0xf]
        %v475 = vld [vmem:[%s350 + $0xb4] sm:$0xff]
        %v476 = vld [vmem:[%s350 + $0xbc] sm:$0xf]
        %v477 = vld [vmem:[%s350 + $0xc0] sm:$0xff]
        %v478 = vld [vmem:[%s350 + $0xc8] sm:$0xf]
        %v479 = vld [vmem:[%s350 + $0xcc] sm:$0xff]
        %v480 = vld [vmem:[%s350 + $0xd4] sm:$0xf]
        %v481 = vld [vmem:[%s350 + $0xd8] sm:$0xff]
        %v482 = vld [vmem:[%s350 + $0xe0] sm:$0xf]
        %v483 = vld [vmem:[%s350 + $0xe4] sm:$0xff]
        %v484 = vld [vmem:[%s350 + $0xec] sm:$0xf]
        %v485 = vld [vmem:[%s350 + $0xf0] sm:$0xff]
        %v486 = vld [vmem:[%s350 + $0xf8] sm:$0xf]
        %v487 = vld [vmem:[%s350 + $0xfc] sm:$0xff]
        %v488 = vld [vmem:[%s350 + $0x104] sm:$0xf]
        %v489 = vld [vmem:[%s350 + $0x108] sm:$0xff]
        %v490 = vld [vmem:[%s350 + $0x110] sm:$0xf]
        %v491 = vld [vmem:[%s350 + $0x114] sm:$0xff]
        %v492 = vld [vmem:[%s350 + $0x11c] sm:$0xf]
        %v493 = vld [vmem:[%s350 + $0x120] sm:$0xff]
        %v494 = vld [vmem:[%s350 + $0x128] sm:$0xf]
        %v495 = vld [vmem:[%s350 + $0x12c] sm:$0xff]
        %v496 = vld [vmem:[%s350 + $0x134] sm:$0xf]
        %v497 = vld [vmem:[%s350 + $0x138] sm:$0xff]
        %v498 = vld [vmem:[%s350 + $0x140] sm:$0xf]
        %v499 = vld [vmem:[%s350 + $0x144] sm:$0xff]
        %v500 = vld [vmem:[%s350 + $0x14c] sm:$0xf]
        %v501 = vld [vmem:[%s350 + $0x150] sm:$0xff]
        %v502 = vld [vmem:[%s350 + $0x158] sm:$0xf]
        %v503 = vld [vmem:[%s350 + $0x15c] sm:$0xff]
        %v504 = vld [vmem:[%s350 + $0x164] sm:$0xf]
        %v505 = vld [vmem:[%s350 + $0x168] sm:$0xff]
        %v506 = vld [vmem:[%s350 + $0x170] sm:$0xf]
        %v507 = vld [vmem:[%s350 + $0x174] sm:$0xff]
        %v508 = vld [vmem:[%s350 + $0x17c] sm:$0xf]
        %v509 = vld [vmem:[#allocation2] sm:$0xff]
        %v510 = vld [vmem:[#allocation2 + $0x8] sm:$0xff]
        %v511 = vld [vmem:[#allocation2 + $0x10] sm:$0xff]
        %v512 = vld [vmem:[#allocation2 + $0x18] sm:$0xff]
        %v513 = vld [vmem:[#allocation2 + $0x20] sm:$0xff]
        %v514 = vld [vmem:[#allocation2 + $0x28] sm:$0xff]
        %v515 = vld [vmem:[#allocation2 + $0x30] sm:$0xff]
        %v516 = vld [vmem:[#allocation2 + $0x38] sm:$0xff]
        %v517 = vld [vmem:[#allocation2 + $0x40] sm:$0xff]
        %v518 = vld [vmem:[#allocation2 + $0x48] sm:$0xff]
        %v519 = vld [vmem:[#allocation2 + $0x50] sm:$0xff]
        %v520 = vld [vmem:[#allocation2 + $0x58] sm:$0xff]
        %v521 = vld [vmem:[#allocation2 + $0x60] sm:$0xff]
        %v522 = vld [vmem:[#allocation2 + $0x68] sm:$0xff]
        %v523 = vld [vmem:[#allocation2 + $0x70] sm:$0xff]
        %v524 = vld [vmem:[#allocation2 + $0x78] sm:$0xff]
        %v525 = vld [vmem:[#allocation2 + $0x80] sm:$0xff]
        %v526 = vld [vmem:[#allocation2 + $0x88] sm:$0xff]
        %v527 = vld [vmem:[#allocation2 + $0x90] sm:$0xff]
        %v528 = vld [vmem:[#allocation2 + $0x98] sm:$0xff]
        %v529 = vld [vmem:[#allocation2 + $0xa0] sm:$0xff]
        %v530 = vld [vmem:[#allocation2 + $0xa8] sm:$0xff]
        %v531 = vld [vmem:[#allocation2 + $0xb0] sm:$0xff]
        %v532 = vld [vmem:[#allocation2 + $0xb8] sm:$0xff]
        %v533 = vld [vmem:[#allocation2 + $0xc0] sm:$0xff]
        %v534 = vld [vmem:[#allocation2 + $0xc8] sm:$0xff]
        %v535 = vld [vmem:[#allocation2 + $0xd0] sm:$0xff]
        %v536 = vld [vmem:[#allocation2 + $0xd8] sm:$0xff]
        %v537 = vld [vmem:[#allocation2 + $0xe0] sm:$0xff]
        %v538 = vld [vmem:[#allocation2 + $0xe8] sm:$0xff]
        %v539 = vld [vmem:[#allocation2 + $0xf0] sm:$0xff]
        %v540 = vld [vmem:[#allocation2 + $0xf8] sm:$0xff]
        %v541 = vld [vmem:[%s394] sm:$0xf]
        %v542 = vld [vmem:[%s394 + $0x4] sm:$0xf]
        %v543 = vld [vmem:[%s394 + $0x8] sm:$0xf]
        %v544 = vld [vmem:[%s394 + $0xc] sm:$0xf]
        %v545 = vld [vmem:[%s394 + $0x10] sm:$0xf]
        %v546 = vld [vmem:[%s394 + $0x14] sm:$0xf]
        %v547 = vld [vmem:[%s394 + $0x18] sm:$0xf]
        %v548 = vld [vmem:[%s394 + $0x1c] sm:$0xf]
        %v549 = vld [vmem:[%s394 + $0x20] sm:$0xf]
        %v550 = vld [vmem:[%s394 + $0x24] sm:$0xf]
        %v551 = vld [vmem:[%s394 + $0x28] sm:$0xf]
        %v552 = vld [vmem:[%s394 + $0x2c] sm:$0xf]
        %v553 = vld [vmem:[%s394 + $0x30] sm:$0xf]
        %v554 = vld [vmem:[%s394 + $0x34] sm:$0xf]
        %v555 = vld [vmem:[%s394 + $0x38] sm:$0xf]
        %v556 = vld [vmem:[%s394 + $0x3c] sm:$0xf]
        %v557 = vld [vmem:[%s394 + $0x40] sm:$0xf]
        %v558 = vld [vmem:[%s394 + $0x44] sm:$0xf]
        %v559 = vld [vmem:[%s394 + $0x48] sm:$0xf]
        %v560 = vld [vmem:[%s394 + $0x4c] sm:$0xf]
        %v561 = vld [vmem:[%s394 + $0x50] sm:$0xf]
        %v562 = vld [vmem:[%s394 + $0x54] sm:$0xf]
        %v563 = vld [vmem:[%s394 + $0x58] sm:$0xf]
        %v564 = vld [vmem:[%s394 + $0x5c] sm:$0xf]
        %v565 = vld [vmem:[%s394 + $0x60] sm:$0xf]
        %v566 = vld [vmem:[%s394 + $0x64] sm:$0xf]
        %v567 = vld [vmem:[%s394 + $0x68] sm:$0xf]
        %v568 = vld [vmem:[%s394 + $0x6c] sm:$0xf]
        %v569 = vld [vmem:[%s394 + $0x70] sm:$0xf]
        %v570 = vld [vmem:[%s394 + $0x74] sm:$0xf]
        %v571 = vld [vmem:[%s394 + $0x78] sm:$0xf]
        %v572 = vld [vmem:[%s394 + $0x7c] sm:$0xf]
        %v573 = vld [vmem:[%s394 + $0x80] sm:$0xf]
        %v574 = vld [vmem:[%s394 + $0x84] sm:$0xf]
        %v575 = vld [vmem:[%s394 + $0x88] sm:$0xf]
        %v576 = vld [vmem:[%s394 + $0x8c] sm:$0xf]
        %v577 = vld [vmem:[%s394 + $0x90] sm:$0xf]
        %v578 = vld [vmem:[%s394 + $0x94] sm:$0xf]
        %v579 = vld [vmem:[%s394 + $0x98] sm:$0xf]
        %v580 = vld [vmem:[%s394 + $0x9c] sm:$0xf]
        %v581 = vld [vmem:[%s394 + $0xa0] sm:$0xf]
        %v582 = vld [vmem:[%s394 + $0xa4] sm:$0xf]
        %v583 = vld [vmem:[%s394 + $0xa8] sm:$0xf]
        %v584 = vld [vmem:[%s394 + $0xac] sm:$0xf]
        %v585 = vld [vmem:[%s394 + $0xb0] sm:$0xf]
        %v586 = vld [vmem:[%s394 + $0xb4] sm:$0xf]
        %v587 = vld [vmem:[%s394 + $0xb8] sm:$0xf]
        %v588 = vld [vmem:[%s394 + $0xbc] sm:$0xf]
        %v653 = vunpack.c.l.b16 %v445
        %v654 = vunpack.c.h.b16 %v445
        %v655 = vunpack.c.l.b16 %v446
        %v656 = vunpack.c.l.b16 %v447
        %v657 = vunpack.c.h.b16 %v447
        %v658 = vunpack.c.l.b16 %v448
        %v659 = vunpack.c.l.b16 %v449
        %v660 = vunpack.c.h.b16 %v449
        %v661 = vunpack.c.l.b16 %v450
        %v662 = vunpack.c.l.b16 %v451
        %v663 = vunpack.c.h.b16 %v451
        %v664 = vunpack.c.l.b16 %v452
        %v665 = vunpack.c.l.b16 %v453
        %v666 = vunpack.c.h.b16 %v453
        %v667 = vunpack.c.l.b16 %v454
        %v668 = vunpack.c.l.b16 %v455
        %v669 = vunpack.c.h.b16 %v455
        %v670 = vunpack.c.l.b16 %v456
        %v671 = vunpack.c.l.b16 %v457
        %v672 = vunpack.c.h.b16 %v457
        %v673 = vunpack.c.l.b16 %v458
        %v674 = vunpack.c.l.b16 %v459
        %v675 = vunpack.c.h.b16 %v459
        %v676 = vunpack.c.l.b16 %v460
        %v677 = vunpack.c.l.b16 %v461
        %v678 = vunpack.c.h.b16 %v461
        %v679 = vunpack.c.l.b16 %v462
        %v680 = vunpack.c.l.b16 %v463
        %v681 = vunpack.c.h.b16 %v463
        %v682 = vunpack.c.l.b16 %v464
        %v683 = vunpack.c.l.b16 %v465
        %v684 = vunpack.c.h.b16 %v465
        %v685 = vunpack.c.l.b16 %v466
        %v686 = vunpack.c.l.b16 %v467
        %v687 = vunpack.c.h.b16 %v467
        %v688 = vunpack.c.l.b16 %v468
        %v689 = vunpack.c.l.b16 %v469
        %v690 = vunpack.c.h.b16 %v469
        %v691 = vunpack.c.l.b16 %v470
        %v692 = vunpack.c.l.b16 %v471
        %v693 = vunpack.c.h.b16 %v471
        %v694 = vunpack.c.l.b16 %v472
        %v695 = vunpack.c.l.b16 %v473
        %v696 = vunpack.c.h.b16 %v473
        %v697 = vunpack.c.l.b16 %v474
        %v698 = vunpack.c.l.b16 %v475
        %v699 = vunpack.c.h.b16 %v475
        %v700 = vunpack.c.l.b16 %v476
        %v701 = vunpack.c.l.b16 %v477
        %v702 = vunpack.c.h.b16 %v477
        %v703 = vunpack.c.l.b16 %v478
        %v704 = vunpack.c.l.b16 %v479
        %v705 = vunpack.c.h.b16 %v479
        %v706 = vunpack.c.l.b16 %v480
        %v707 = vunpack.c.l.b16 %v481
        %v708 = vunpack.c.h.b16 %v481
        %v709 = vunpack.c.l.b16 %v482
        %v710 = vunpack.c.l.b16 %v483
        %v711 = vunpack.c.h.b16 %v483
        %v712 = vunpack.c.l.b16 %v484
        %v713 = vunpack.c.l.b16 %v485
        %v714 = vunpack.c.h.b16 %v485
        %v715 = vunpack.c.l.b16 %v486
        %v716 = vunpack.c.l.b16 %v487
        %v717 = vunpack.c.h.b16 %v487
        %v718 = vunpack.c.l.b16 %v488
        %v719 = vunpack.c.l.b16 %v489
        %v720 = vunpack.c.h.b16 %v489
        %v721 = vunpack.c.l.b16 %v490
        %v722 = vunpack.c.l.b16 %v491
        %v723 = vunpack.c.h.b16 %v491
        %v724 = vunpack.c.l.b16 %v492
        %v725 = vunpack.c.l.b16 %v493
        %v726 = vunpack.c.h.b16 %v493
        %v727 = vunpack.c.l.b16 %v494
        %v728 = vunpack.c.l.b16 %v495
        %v729 = vunpack.c.h.b16 %v495
        %v730 = vunpack.c.l.b16 %v496
        %v731 = vunpack.c.l.b16 %v497
        %v732 = vunpack.c.h.b16 %v497
        %v733 = vunpack.c.l.b16 %v498
        %v734 = vunpack.c.l.b16 %v499
        %v735 = vunpack.c.h.b16 %v499
        %v736 = vunpack.c.l.b16 %v500
        %v737 = vunpack.c.l.b16 %v501
        %v738 = vunpack.c.h.b16 %v501
        %v739 = vunpack.c.l.b16 %v502
        %v740 = vunpack.c.l.b16 %v503
        %v741 = vunpack.c.h.b16 %v503
        %v742 = vunpack.c.l.b16 %v504
        %v743 = vunpack.c.l.b16 %v505
        %v744 = vunpack.c.h.b16 %v505
        %v745 = vunpack.c.l.b16 %v506
        %v746 = vunpack.c.l.b16 %v507
        %v747 = vunpack.c.h.b16 %v507
        %v748 = vunpack.c.l.b16 %v508
        %v749 = vpack.c.b16 %v656, %v653
        %v750 = vpack.c.b16 %v657, %v654
        %v751 = vpack.c.b16 %v658, %v655
        %v752 = vpack.c.b16 %v662, %v659
        %v753 = vpack.c.b16 %v663, %v660
        %v754 = vpack.c.b16 %v664, %v661
        %v755 = vpack.c.b16 %v668, %v665
        %v756 = vpack.c.b16 %v669, %v666
        %v757 = vpack.c.b16 %v670, %v667
        %v758 = vpack.c.b16 %v674, %v671
        %v759 = vpack.c.b16 %v675, %v672
        %v760 = vpack.c.b16 %v676, %v673
        %v761 = vpack.c.b16 %v680, %v677
        %v762 = vpack.c.b16 %v681, %v678
        %v763 = vpack.c.b16 %v682, %v679
        %v764 = vpack.c.b16 %v686, %v683
        %v765 = vpack.c.b16 %v687, %v684
        %v766 = vpack.c.b16 %v688, %v685
        %v767 = vpack.c.b16 %v692, %v689
        %v768 = vpack.c.b16 %v693, %v690
        %v769 = vpack.c.b16 %v694, %v691
        %v770 = vpack.c.b16 %v698, %v695
        %v771 = vpack.c.b16 %v699, %v696
        %v772 = vpack.c.b16 %v700, %v697
        %v773 = vpack.c.b16 %v704, %v701
        %v774 = vpack.c.b16 %v705, %v702
        %v775 = vpack.c.b16 %v706, %v703
        %v776 = vpack.c.b16 %v710, %v707
        %v777 = vpack.c.b16 %v711, %v708
        %v778 = vpack.c.b16 %v712, %v709
        %v779 = vpack.c.b16 %v716, %v713
        %v780 = vpack.c.b16 %v717, %v714
        %v781 = vpack.c.b16 %v718, %v715
        %v782 = vpack.c.b16 %v722, %v719
        %v783 = vpack.c.b16 %v723, %v720
        %v784 = vpack.c.b16 %v724, %v721
        %v785 = vpack.c.b16 %v728, %v725
        %v786 = vpack.c.b16 %v729, %v726
        %v787 = vpack.c.b16 %v730, %v727
        %v788 = vpack.c.b16 %v734, %v731
        %v789 = vpack.c.b16 %v735, %v732
        %v790 = vpack.c.b16 %v736, %v733
        %v791 = vpack.c.b16 %v740, %v737
        %v792 = vpack.c.b16 %v741, %v738
        %v793 = vpack.c.b16 %v742, %v739
        %v794 = vpack.c.b16 %v746, %v743
        %v795 = vpack.c.b16 %v747, %v744
        %v796 = vpack.c.b16 %v748, %v745
        %v893 = vunpack.c.l.b16 %v541
        %v894 = vunpack.c.l.b16 %v542
        %v895 = vunpack.c.l.b16 %v543
        %v896 = vunpack.c.l.b16 %v544
        %v897 = vunpack.c.l.b16 %v545
        %v898 = vunpack.c.l.b16 %v546
        %v899 = vunpack.c.l.b16 %v547
        %v900 = vunpack.c.l.b16 %v548
        %v901 = vunpack.c.l.b16 %v549
        %v902 = vunpack.c.l.b16 %v550
        %v903 = vunpack.c.l.b16 %v551
        %v904 = vunpack.c.l.b16 %v552
        %v905 = vunpack.c.l.b16 %v553
        %v906 = vunpack.c.l.b16 %v554
        %v907 = vunpack.c.l.b16 %v555
        %v908 = vunpack.c.l.b16 %v556
        %v909 = vunpack.c.l.b16 %v557
        %v910 = vunpack.c.l.b16 %v558
        %v911 = vunpack.c.l.b16 %v559
        %v912 = vunpack.c.l.b16 %v560
        %v913 = vunpack.c.l.b16 %v561
        %v914 = vunpack.c.l.b16 %v562
        %v915 = vunpack.c.l.b16 %v563
        %v916 = vunpack.c.l.b16 %v564
        %v917 = vunpack.c.l.b16 %v565
        %v918 = vunpack.c.l.b16 %v566
        %v919 = vunpack.c.l.b16 %v567
        %v920 = vunpack.c.l.b16 %v568
        %v921 = vunpack.c.l.b16 %v569
        %v922 = vunpack.c.l.b16 %v570
        %v923 = vunpack.c.l.b16 %v571
        %v924 = vunpack.c.l.b16 %v572
        %v925 = vunpack.c.l.b16 %v573
        %v926 = vunpack.c.l.b16 %v574
        %v927 = vunpack.c.l.b16 %v575
        %v928 = vunpack.c.l.b16 %v576
        %v929 = vunpack.c.l.b16 %v577
        %v930 = vunpack.c.l.b16 %v578
        %v931 = vunpack.c.l.b16 %v579
        %v932 = vunpack.c.l.b16 %v580
        %v933 = vunpack.c.l.b16 %v581
        %v934 = vunpack.c.l.b16 %v582
        %v935 = vunpack.c.l.b16 %v583
        %v936 = vunpack.c.l.b16 %v584
        %v937 = vunpack.c.l.b16 %v585
        %v938 = vunpack.c.l.b16 %v586
        %v939 = vunpack.c.l.b16 %v587
        %v940 = vunpack.c.l.b16 %v588
        %v941 = vpack.c.b16 %v894, %v893
        %v942 = vpack.c.b16 %v896, %v895
        %v943 = vpack.c.b16 %v898, %v897
        %v944 = vpack.c.b16 %v900, %v899
        %v945 = vpack.c.b16 %v902, %v901
        %v946 = vpack.c.b16 %v904, %v903
        %v947 = vpack.c.b16 %v906, %v905
        %v948 = vpack.c.b16 %v908, %v907
        %v949 = vpack.c.b16 %v910, %v909
        %v950 = vpack.c.b16 %v912, %v911
        %v951 = vpack.c.b16 %v914, %v913
        %v952 = vpack.c.b16 %v916, %v915
        %v953 = vpack.c.b16 %v918, %v917
        %v954 = vpack.c.b16 %v920, %v919
        %v955 = vpack.c.b16 %v922, %v921
        %v956 = vpack.c.b16 %v924, %v923
        %v957 = vpack.c.b16 %v926, %v925
        %v958 = vpack.c.b16 %v928, %v927
        %v959 = vpack.c.b16 %v930, %v929
        %v960 = vpack.c.b16 %v932, %v931
        %v961 = vpack.c.b16 %v934, %v933
        %v962 = vpack.c.b16 %v936, %v935
        %v963 = vpack.c.b16 %v938, %v937
        %v964 = vpack.c.b16 %v940, %v939
        %989 = vmatprep.subr.bf16.mxu0 0
        %990 = vmatpush1.bf16.msra.mxu0 %v941
        %991 = vmatprep.subr.bf16.mxu0 0
        %992 = vmatpush1.bf16.msra.mxu0 %v942
        %993 = vmatprep.subr.bf16.mxu0 0
        %994 = vmatpush1.bf16.msra.mxu0 %v943
        %995 = vmatprep.subr.bf16.mxu0 0
        %996 = vmatpush1.bf16.msra.mxu0 %v944
        %997 = vmatprep.subr.bf16.mxu0 0
        %998 = vmatpush1.bf16.msra.mxu0 %v945
        %999 = vmatprep.subr.bf16.mxu0 0
        %1000 = vmatpush1.bf16.msra.mxu0 %v946
        %1001 = vmatprep.subr.bf16.mxu0 0
        %1002 = vmatpush1.bf16.msra.mxu0 %v947
        %1003 = vmatprep.subr.bf16.mxu0 0
        %1004 = vmatpush1.bf16.msra.mxu0 %v948
        %1005 = vmatprep.subr.bf16.mxu0 0
        %1006 = vmatpush1.bf16.msra.mxu0 %v949
        %1007 = vmatprep.subr.bf16.mxu0 0
        %1008 = vmatpush1.bf16.msra.mxu0 %v950
        %1009 = vmatprep.subr.bf16.mxu0 0
        %1010 = vmatpush1.bf16.msra.mxu0 %v951
        %1011 = vmatprep.subr.bf16.mxu0 0
        %1012 = vmatpush1.bf16.msra.mxu0 %v952
        %1013 = vmatprep.subr.bf16.mxu0 0
        %1014 = vmatpush1.bf16.msra.mxu0 %v953
        %1015 = vmatprep.subr.bf16.mxu0 0
        %1016 = vmatpush1.bf16.msra.mxu0 %v954
        %1017 = vmatprep.subr.bf16.mxu0 0
        %1018 = vmatpush1.bf16.msra.mxu0 %v955
        %1019 = vmatprep.subr.bf16.mxu0 0
        %1020 = vmatpush1.bf16.msra.mxu0 %v956
        %1021 = vmatprep.mubr.bf16.mxu0 %v750
        %1022 = vmatmul.mubr.bf16.gmra.mrb[0].mxu0 %v749
        %v1023 = vpop.f32.mrb[0].mxu0
        %v1024 = vadd.f32 0.0, %v1023
        %v1025 = vpop.f32.mrb[0].mxu0
        %v1026 = vpop.f32.mrb[0].mxu0
        %v1027 = vadd.f32 0.0, %v1026
        %v1028 = vpop.f32.mrb[0].mxu0
        %1029 = vmatprep.mubr.bf16.mxu0 %v753
        %1030 = vmatmul.mubr.bf16.gmra.mrb[0].mxu0 %v752
        %v1031 = vpop.f32.mrb[0].mxu0
        %v1032 = vadd.f32 0.0, %v1031
        %v1033 = vpop.f32.mrb[0].mxu0
        %v1034 = vpop.f32.mrb[0].mxu0
        %v1035 = vadd.f32 0.0, %v1034
        %v1036 = vpop.f32.mrb[0].mxu0
        %1037 = vmatprep.mubr.bf16.mxu0 %v756
        %1038 = vmatmul.mubr.bf16.gmra.mrb[0].mxu0 %v755
        %v1039 = vpop.f32.mrb[0].mxu0
        %v1040 = vadd.f32 0.0, %v1039
        %v1041 = vpop.f32.mrb[0].mxu0
        %v1042 = vpop.f32.mrb[0].mxu0
        %v1043 = vadd.f32 0.0, %v1042
        %v1044 = vpop.f32.mrb[0].mxu0
        %1045 = vmatprep.mubr.bf16.mxu0 %v759
        %1046 = vmatmul.mubr.bf16.gmra.mrb[0].mxu0 %v758
        %v1047 = vpop.f32.mrb[0].mxu0
        %v1048 = vadd.f32 0.0, %v1047
        %v1049 = vpop.f32.mrb[0].mxu0
        %v1050 = vpop.f32.mrb[0].mxu0
        %v1051 = vadd.f32 0.0, %v1050
        %v1052 = vpop.f32.mrb[0].mxu0
        %1053 = vmatprep.mubr.bf16.mxu0 %v762
        %1054 = vmatmul.mubr.bf16.gmra.mrb[0].mxu0 %v761
        %v1055 = vpop.f32.mrb[0].mxu0
        %v1056 = vadd.f32 0.0, %v1055
        %v1057 = vpop.f32.mrb[0].mxu0
        %v1058 = vpop.f32.mrb[0].mxu0
        %v1059 = vadd.f32 0.0, %v1058
        %v1060 = vpop.f32.mrb[0].mxu0
        %1061 = vmatprep.mubr.bf16.mxu0 %v765
        %1062 = vmatmul.mubr.bf16.gmra.mrb[0].mxu0 %v764
        %v1063 = vpop.f32.mrb[0].mxu0
        %v1064 = vadd.f32 0.0, %v1063
        %v1065 = vpop.f32.mrb[0].mxu0
        %v1066 = vpop.f32.mrb[0].mxu0
        %v1067 = vadd.f32 0.0, %v1066
        %v1068 = vpop.f32.mrb[0].mxu0
        %1069 = vmatprep.mubr.bf16.mxu0 %v768
        %1070 = vmatmul.mubr.bf16.gmra.mrb[0].mxu0 %v767
        %v1071 = vpop.f32.mrb[0].mxu0
        %v1072 = vadd.f32 0.0, %v1071
        %v1073 = vpop.f32.mrb[0].mxu0
        %v1074 = vpop.f32.mrb[0].mxu0
        %v1075 = vadd.f32 0.0, %v1074
        %v1076 = vpop.f32.mrb[0].mxu0
        %1077 = vmatprep.mubr.bf16.mxu0 %v771
        %1078 = vmatmul.mubr.bf16.gmra.mrb[0].mxu0 %v770
        %v1079 = vpop.f32.mrb[0].mxu0
        %v1080 = vadd.f32 0.0, %v1079
        %v1081 = vpop.f32.mrb[0].mxu0
        %v1082 = vpop.f32.mrb[0].mxu0
        %v1083 = vadd.f32 0.0, %v1082
        %v1084 = vpop.f32.mrb[0].mxu0
        %1085 = vmatprep.mubr.bf16.mxu0 %v774
        %1086 = vmatmul.mubr.bf16.gmra.mrb[0].mxu0 %v773
        %v1087 = vpop.f32.mrb[0].mxu0
        %v1088 = vadd.f32 0.0, %v1087
        %v1089 = vpop.f32.mrb[0].mxu0
        %v1090 = vpop.f32.mrb[0].mxu0
        %v1091 = vadd.f32 0.0, %v1090
        %v1092 = vpop.f32.mrb[0].mxu0
        %1093 = vmatprep.mubr.bf16.mxu0 %v777
        %1094 = vmatmul.mubr.bf16.gmra.mrb[0].mxu0 %v776
        %v1095 = vpop.f32.mrb[0].mxu0
        %v1096 = vadd.f32 0.0, %v1095
        %v1097 = vpop.f32.mrb[0].mxu0
        %v1098 = vpop.f32.mrb[0].mxu0
        %v1099 = vadd.f32 0.0, %v1098
        %v1100 = vpop.f32.mrb[0].mxu0
        %1101 = vmatprep.mubr.bf16.mxu0 %v780
        %1102 = vmatmul.mubr.bf16.gmra.mrb[0].mxu0 %v779
        %v1103 = vpop.f32.mrb[0].mxu0
        %v1104 = vadd.f32 0.0, %v1103
        %v1105 = vpop.f32.mrb[0].mxu0
        %v1106 = vpop.f32.mrb[0].mxu0
        %v1107 = vadd.f32 0.0, %v1106
        %v1108 = vpop.f32.mrb[0].mxu0
        %1109 = vmatprep.mubr.bf16.mxu0 %v783
        %1110 = vmatmul.mubr.bf16.gmra.mrb[0].mxu0 %v782
        %v1111 = vpop.f32.mrb[0].mxu0
        %v1112 = vadd.f32 0.0, %v1111
        %v1113 = vpop.f32.mrb[0].mxu0
        %v1114 = vpop.f32.mrb[0].mxu0
        %v1115 = vadd.f32 0.0, %v1114
        %v1116 = vpop.f32.mrb[0].mxu0
        %1117 = vmatprep.mubr.bf16.mxu0 %v786
        %1118 = vmatmul.mubr.bf16.gmra.mrb[0].mxu0 %v785
        %v1119 = vpop.f32.mrb[0].mxu0
        %v1120 = vadd.f32 0.0, %v1119
        %v1121 = vpop.f32.mrb[0].mxu0
        %v1122 = vpop.f32.mrb[0].mxu0
        %v1123 = vadd.f32 0.0, %v1122
        %v1124 = vpop.f32.mrb[0].mxu0
        %1125 = vmatprep.mubr.bf16.mxu0 %v789
        %1126 = vmatmul.mubr.bf16.gmra.mrb[0].mxu0 %v788
        %v1127 = vpop.f32.mrb[0].mxu0
        %v1128 = vadd.f32 0.0, %v1127
        %v1129 = vpop.f32.mrb[0].mxu0
        %v1130 = vpop.f32.mrb[0].mxu0
        %v1131 = vadd.f32 0.0, %v1130
        %v1132 = vpop.f32.mrb[0].mxu0
        %1133 = vmatprep.mubr.bf16.mxu0 %v792
        %1134 = vmatmul.mubr.bf16.gmra.mrb[0].mxu0 %v791
        %v1135 = vpop.f32.mrb[0].mxu0
        %v1136 = vadd.f32 0.0, %v1135
        %v1137 = vpop.f32.mrb[0].mxu0
        %v1138 = vpop.f32.mrb[0].mxu0
        %v1139 = vadd.f32 0.0, %v1138
        %v1140 = vpop.f32.mrb[0].mxu0
        %1141 = vmatprep.mubr.bf16.mxu0 %v795
        %1142 = vmatmul.mubr.bf16.gmra.mrb[0].mxu0 %v794
        %v1143 = vpop.f32.mrb[0].mxu0
        %v1144 = vadd.f32 0.0, %v1143
        %v1145 = vpop.f32.mrb[0].mxu0
        %v1146 = vpop.f32.mrb[0].mxu0
        %v1147 = vadd.f32 0.0, %v1146
        %v1148 = vpop.f32.mrb[0].mxu0
        %1149 = vdwg.mxu0
        %1150 = vmatprep.subr.bf16.mxu0 0
        %1151 = vmatpush1.bf16.msra.mxu0 %v957
        %1152 = vmatprep.subr.bf16.mxu0 0
        %1153 = vmatpush1.bf16.msra.mxu0 %v958
        %1154 = vmatprep.subr.bf16.mxu0 0
        %1155 = vmatpush1.bf16.msra.mxu0 %v959
        %1156 = vmatprep.subr.bf16.mxu0 0
        %1157 = vmatpush1.bf16.msra.mxu0 %v960
        %1158 = vmatprep.subr.bf16.mxu0 0
        %1159 = vmatpush1.bf16.msra.mxu0 %v961
        %1160 = vmatprep.subr.bf16.mxu0 0
        %1161 = vmatpush1.bf16.msra.mxu0 %v962
        %1162 = vmatprep.subr.bf16.mxu0 0
        %1163 = vmatpush1.bf16.msra.mxu0 %v963
        %1164 = vmatprep.subr.bf16.mxu0 0
        %1165 = vmatpush1.bf16.msra.mxu0 %v964
        %1166 = vmatprep.subr.bf16.mxu0 0
        %1167 = vmatpush1.bf16.msra.mxu0 0
        %1168 = vmatprep.subr.bf16.mxu0 0
        %1169 = vmatpush1.bf16.msra.mxu0 0
        %1170 = vmatprep.subr.bf16.mxu0 0
        %1171 = vmatpush1.bf16.msra.mxu0 0
        %1172 = vmatprep.subr.bf16.mxu0 0
        %1173 = vmatpush1.bf16.msra.mxu0 0
        %1174 = vmatprep.subr.bf16.mxu0 0
        %1175 = vmatpush1.bf16.msra.mxu0 0
        %1176 = vmatprep.subr.bf16.mxu0 0
        %1177 = vmatpush1.bf16.msra.mxu0 0
        %1178 = vmatprep.subr.bf16.mxu0 0
        %1179 = vmatpush1.bf16.msra.mxu0 0
        %1180 = vmatprep.subr.bf16.mxu0 0
        %1181 = vmatpush1.bf16.msra.mxu0 0
        %1182 = vmatprep.mubr.bf16.mxu0 0
        %1183 = vmatmul.mubr.bf16.gmra.mrb[0].mxu0 %v751
        %v1184 = vpop.f32.mrb[0].mxu0
        %v1185 = vadd.f32 %v1024, %v1184
        %v1186 = vpop.f32.mrb[0].mxu0
        %v1187 = vpop.f32.mrb[0].mxu0
        %v1188 = vadd.f32 %v1027, %v1187
        %v1189 = vpop.f32.mrb[0].mxu0
        %1190 = vmatprep.mubr.bf16.mxu0 0
        %1191 = vmatmul.mubr.bf16.gmra.mrb[0].mxu0 %v754
        %v1192 = vpop.f32.mrb[0].mxu0
        %v1193 = vadd.f32 %v1032, %v1192
        %v1194 = vpop.f32.mrb[0].mxu0
        %v1195 = vpop.f32.mrb[0].mxu0
        %v1196 = vadd.f32 %v1035, %v1195
        %v1197 = vpop.f32.mrb[0].mxu0
        %1198 = vmatprep.mubr.bf16.mxu0 0
        %1199 = vmatmul.mubr.bf16.gmra.mrb[0].mxu0 %v757
        %v1200 = vpop.f32.mrb[0].mxu0
        %v1201 = vadd.f32 %v1040, %v1200
        %v1202 = vpop.f32.mrb[0].mxu0
        %v1203 = vpop.f32.mrb[0].mxu0
        %v1204 = vadd.f32 %v1043, %v1203
        %v1205 = vpop.f32.mrb[0].mxu0
        %1206 = vmatprep.mubr.bf16.mxu0 0
        %1207 = vmatmul.mubr.bf16.gmra.mrb[0].mxu0 %v760
        %v1208 = vpop.f32.mrb[0].mxu0
        %v1209 = vadd.f32 %v1048, %v1208
        %v1210 = vpop.f32.mrb[0].mxu0
        %v1211 = vpop.f32.mrb[0].mxu0
        %v1212 = vadd.f32 %v1051, %v1211
        %v1213 = vpop.f32.mrb[0].mxu0
        %1214 = vmatprep.mubr.bf16.mxu0 0
        %1215 = vmatmul.mubr.bf16.gmra.mrb[0].mxu0 %v763
        %v1216 = vpop.f32.mrb[0].mxu0
        %v1217 = vadd.f32 %v1056, %v1216
        %v1218 = vpop.f32.mrb[0].mxu0
        %v1219 = vpop.f32.mrb[0].mxu0
        %v1220 = vadd.f32 %v1059, %v1219
        %v1221 = vpop.f32.mrb[0].mxu0
        %1222 = vmatprep.mubr.bf16.mxu0 0
        %1223 = vmatmul.mubr.bf16.gmra.mrb[0].mxu0 %v766
        %v1224 = vpop.f32.mrb[0].mxu0
        %v1225 = vadd.f32 %v1064, %v1224
        %v1226 = vpop.f32.mrb[0].mxu0
        %v1227 = vpop.f32.mrb[0].mxu0
        %v1228 = vadd.f32 %v1067, %v1227
        %v1229 = vpop.f32.mrb[0].mxu0
        %1230 = vmatprep.mubr.bf16.mxu0 0
        %1231 = vmatmul.mubr.bf16.gmra.mrb[0].mxu0 %v769
        %v1232 = vpop.f32.mrb[0].mxu0
        %v1233 = vadd.f32 %v1072, %v1232
        %v1234 = vpop.f32.mrb[0].mxu0
        %v1235 = vpop.f32.mrb[0].mxu0
        %v1236 = vadd.f32 %v1075, %v1235
        %v1237 = vpop.f32.mrb[0].mxu0
        %1238 = vmatprep.mubr.bf16.mxu0 0
        %1239 = vmatmul.mubr.bf16.gmra.mrb[0].mxu0 %v772
        %v1240 = vpop.f32.mrb[0].mxu0
        %v1241 = vadd.f32 %v1080, %v1240
        %v1242 = vpop.f32.mrb[0].mxu0
        %v1243 = vpop.f32.mrb[0].mxu0
        %v1244 = vadd.f32 %v1083, %v1243
        %v1245 = vpop.f32.mrb[0].mxu0
        %1246 = vmatprep.mubr.bf16.mxu0 0
        %1247 = vmatmul.mubr.bf16.gmra.mrb[0].mxu0 %v775
        %v1248 = vpop.f32.mrb[0].mxu0
        %v1249 = vadd.f32 %v1088, %v1248
        %v1250 = vpop.f32.mrb[0].mxu0
        %v1251 = vpop.f32.mrb[0].mxu0
        %v1252 = vadd.f32 %v1091, %v1251
        %v1253 = vpop.f32.mrb[0].mxu0
        %1254 = vmatprep.mubr.bf16.mxu0 0
        %1255 = vmatmul.mubr.bf16.gmra.mrb[0].mxu0 %v778
        %v1256 = vpop.f32.mrb[0].mxu0
        %v1257 = vadd.f32 %v1096, %v1256
        %v1258 = vpop.f32.mrb[0].mxu0
        %v1259 = vpop.f32.mrb[0].mxu0
        %v1260 = vadd.f32 %v1099, %v1259
        %v1261 = vpop.f32.mrb[0].mxu0
        %1262 = vmatprep.mubr.bf16.mxu0 0
        %1263 = vmatmul.mubr.bf16.gmra.mrb[0].mxu0 %v781
        %v1264 = vpop.f32.mrb[0].mxu0
        %v1265 = vadd.f32 %v1104, %v1264
        %v1266 = vpop.f32.mrb[0].mxu0
        %v1267 = vpop.f32.mrb[0].mxu0
        %v1268 = vadd.f32 %v1107, %v1267
        %v1269 = vpop.f32.mrb[0].mxu0
        %1270 = vmatprep.mubr.bf16.mxu0 0
        %1271 = vmatmul.mubr.bf16.gmra.mrb[0].mxu0 %v784
        %v1272 = vpop.f32.mrb[0].mxu0
        %v1273 = vadd.f32 %v1112, %v1272
        %v1274 = vpop.f32.mrb[0].mxu0
        %v1275 = vpop.f32.mrb[0].mxu0
        %v1276 = vadd.f32 %v1115, %v1275
        %v1277 = vpop.f32.mrb[0].mxu0
        %1278 = vmatprep.mubr.bf16.mxu0 0
        %1279 = vmatmul.mubr.bf16.gmra.mrb[0].mxu0 %v787
        %v1280 = vpop.f32.mrb[0].mxu0
        %v1281 = vadd.f32 %v1120, %v1280
        %v1282 = vpop.f32.mrb[0].mxu0
        %v1283 = vpop.f32.mrb[0].mxu0
        %v1284 = vadd.f32 %v1123, %v1283
        %v1285 = vpop.f32.mrb[0].mxu0
        %1286 = vmatprep.mubr.bf16.mxu0 0
        %1287 = vmatmul.mubr.bf16.gmra.mrb[0].mxu0 %v790
        %v1288 = vpop.f32.mrb[0].mxu0
        %v1289 = vadd.f32 %v1128, %v1288
        %v1290 = vpop.f32.mrb[0].mxu0
        %v1291 = vpop.f32.mrb[0].mxu0
        %v1292 = vadd.f32 %v1131, %v1291
        %v1293 = vpop.f32.mrb[0].mxu0
        %1294 = vmatprep.mubr.bf16.mxu0 0
        %1295 = vmatmul.mubr.bf16.gmra.mrb[0].mxu0 %v793
        %v1296 = vpop.f32.mrb[0].mxu0
        %v1297 = vadd.f32 %v1136, %v1296
        %v1298 = vpop.f32.mrb[0].mxu0
        %v1299 = vpop.f32.mrb[0].mxu0
        %v1300 = vadd.f32 %v1139, %v1299
        %v1301 = vpop.f32.mrb[0].mxu0
        %1302 = vmatprep.mubr.bf16.mxu0 0
        %1303 = vmatmul.mubr.bf16.gmra.mrb[0].mxu0 %v796
        %v1304 = vpop.f32.mrb[0].mxu0
        %v1305 = vadd.f32 %v1144, %v1304
        %v1306 = vpop.f32.mrb[0].mxu0
        %v1307 = vpop.f32.mrb[0].mxu0
        %v1308 = vadd.f32 %v1147, %v1307
        %v1309 = vpop.f32.mrb[0].mxu0
        %1310 = vdwg.mxu0
        %v1311 = vadd.f32 %v509, %v1185
        %v1312 = vadd.f32 %v510, %v1188
        %v1313 = vadd.f32 %v511, %v1193
        %v1314 = vadd.f32 %v512, %v1196
        %v1315 = vadd.f32 %v513, %v1201
        %v1316 = vadd.f32 %v514, %v1204
        %v1317 = vadd.f32 %v515, %v1209
        %v1318 = vadd.f32 %v516, %v1212
        %v1319 = vadd.f32 %v517, %v1217
        %v1320 = vadd.f32 %v518, %v1220
        %v1321 = vadd.f32 %v519, %v1225
        %v1322 = vadd.f32 %v520, %v1228
        %v1323 = vadd.f32 %v521, %v1233
        %v1324 = vadd.f32 %v522, %v1236
        %v1325 = vadd.f32 %v523, %v1241
        %v1326 = vadd.f32 %v524, %v1244
        %v1327 = vadd.f32 %v525, %v1249
        %v1328 = vadd.f32 %v526, %v1252
        %v1329 = vadd.f32 %v527, %v1257
        %v1330 = vadd.f32 %v528, %v1260
        %v1331 = vadd.f32 %v529, %v1265
        %v1332 = vadd.f32 %v530, %v1268
        %v1333 = vadd.f32 %v531, %v1273
        %v1334 = vadd.f32 %v532, %v1276
        %v1335 = vadd.f32 %v533, %v1281
        %v1336 = vadd.f32 %v534, %v1284
        %v1337 = vadd.f32 %v535, %v1289
        %v1338 = vadd.f32 %v536, %v1292
        %v1339 = vadd.f32 %v537, %v1297
        %v1340 = vadd.f32 %v538, %v1300
        %v1341 = vadd.f32 %v539, %v1305
        %v1342 = vadd.f32 %v540, %v1308
        %1343 = vst [vmem:[#allocation2] sm:$0xff] %v1311
        %1344 = vst [vmem:[#allocation2 + $0x8] sm:$0xff] %v1312
        %1345 = vst [vmem:[#allocation2 + $0x10] sm:$0xff] %v1313
        %1346 = vst [vmem:[#allocation2 + $0x18] sm:$0xff] %v1314
        %1347 = vst [vmem:[#allocation2 + $0x20] sm:$0xff] %v1315
        %1348 = vst [vmem:[#allocation2 + $0x28] sm:$0xff] %v1316
        %1349 = vst [vmem:[#allocation2 + $0x30] sm:$0xff] %v1317
        %1350 = vst [vmem:[#allocation2 + $0x38] sm:$0xff] %v1318
        %1351 = vst [vmem:[#allocation2 + $0x40] sm:$0xff] %v1319
        %1352 = vst [vmem:[#allocation2 + $0x48] sm:$0xff] %v1320
        %1353 = vst [vmem:[#allocation2 + $0x50] sm:$0xff] %v1321
        %1354 = vst [vmem:[#allocation2 + $0x58] sm:$0xff] %v1322
        %1355 = vst [vmem:[#allocation2 + $0x60] sm:$0xff] %v1323
        %1356 = vst [vmem:[#allocation2 + $0x68] sm:$0xff] %v1324
        %1357 = vst [vmem:[#allocation2 + $0x70] sm:$0xff] %v1325
        %1358 = vst [vmem:[#allocation2 + $0x78] sm:$0xff] %v1326
        %1359 = vst [vmem:[#allocation2 + $0x80] sm:$0xff] %v1327
        %1360 = vst [vmem:[#allocation2 + $0x88] sm:$0xff] %v1328
        %1361 = vst [vmem:[#allocation2 + $0x90] sm:$0xff] %v1329
        %1362 = vst [vmem:[#allocation2 + $0x98] sm:$0xff] %v1330
        %1363 = vst [vmem:[#allocation2 + $0xa0] sm:$0xff] %v1331
        %1364 = vst [vmem:[#allocation2 + $0xa8] sm:$0xff] %v1332
        %1365 = vst [vmem:[#allocation2 + $0xb0] sm:$0xff] %v1333
        %1366 = vst [vmem:[#allocation2 + $0xb8] sm:$0xff] %v1334
        %1367 = vst [vmem:[#allocation2 + $0xc0] sm:$0xff] %v1335
        %1368 = vst [vmem:[#allocation2 + $0xc8] sm:$0xff] %v1336
        %1369 = vst [vmem:[#allocation2 + $0xd0] sm:$0xff] %v1337
        %1370 = vst [vmem:[#allocation2 + $0xd8] sm:$0xff] %v1338
        %1371 = vst [vmem:[#allocation2 + $0xe0] sm:$0xff] %v1339
        %1372 = vst [vmem:[#allocation2 + $0xe8] sm:$0xff] %v1340
        %1373 = vst [vmem:[#allocation2 + $0xf0] sm:$0xff] %v1341
        %1374 = vst [vmem:[#allocation2 + $0xf8] sm:$0xff] %v1342
        %p1375 = scmp.eq.s32.totalorder %s21, 2
        // Predicated region
        $region63: #{nfnet_forward.11} parent=53 // pred_check
          %p1376 = pneg %p1375
        $region64: #{nfnet_forward.11} parent=53 // pred_check_branch
          %1378 = sbr.rel (%p1376) target = $region66
        $region65: #{nfnet_forward.11} parent=53 // pred_region
          %v1379 = vld [vmem:[#allocation2] sm:$0xff]
          %v1380 = vld [vmem:[#allocation2 + $0x8] sm:$0xff]
          %v1381 = vld [vmem:[#allocation2 + $0x10] sm:$0xff]
          %v1382 = vld [vmem:[#allocation2 + $0x18] sm:$0xff]
          %v1383 = vld [vmem:[#allocation2 + $0x20] sm:$0xff]
          %v1384 = vld [vmem:[#allocation2 + $0x28] sm:$0xff]
          %v1385 = vld [vmem:[#allocation2 + $0x30] sm:$0xff]
          %v1386 = vld [vmem:[#allocation2 + $0x38] sm:$0xff]
          %v1387 = vld [vmem:[#allocation2 + $0x40] sm:$0xff]
          %v1388 = vld [vmem:[#allocation2 + $0x48] sm:$0xff]
          %v1389 = vld [vmem:[#allocation2 + $0x50] sm:$0xff]
          %v1390 = vld [vmem:[#allocation2 + $0x58] sm:$0xff]
          %v1391 = vld [vmem:[#allocation2 + $0x60] sm:$0xff]
          %v1392 = vld [vmem:[#allocation2 + $0x68] sm:$0xff]
          %v1393 = vld [vmem:[#allocation2 + $0x70] sm:$0xff]
          %v1394 = vld [vmem:[#allocation2 + $0x78] sm:$0xff]
          %v1395 = vld [vmem:[#allocation2 + $0x80] sm:$0xff]
          %v1396 = vld [vmem:[#allocation2 + $0x88] sm:$0xff]
          %v1397 = vld [vmem:[#allocation2 + $0x90] sm:$0xff]
          %v1398 = vld [vmem:[#allocation2 + $0x98] sm:$0xff]
          %v1399 = vld [vmem:[#allocation2 + $0xa0] sm:$0xff]
          %v1400 = vld [vmem:[#allocation2 + $0xa8] sm:$0xff]
          %v1401 = vld [vmem:[#allocation2 + $0xb0] sm:$0xff]
          %v1402 = vld [vmem:[#allocation2 + $0xb8] sm:$0xff]
          %v1403 = vld [vmem:[#allocation2 + $0xc0] sm:$0xff]
          %v1404 = vld [vmem:[#allocation2 + $0xc8] sm:$0xff]
          %v1405 = vld [vmem:[#allocation2 + $0xd0] sm:$0xff]
          %v1406 = vld [vmem:[#allocation2 + $0xd8] sm:$0xff]
          %v1407 = vld [vmem:[#allocation2 + $0xe0] sm:$0xff]
          %v1408 = vld [vmem:[#allocation2 + $0xe8] sm:$0xff]
          %v1409 = vld [vmem:[#allocation2 + $0xf0] sm:$0xff]
          %v1410 = vld [vmem:[#allocation2 + $0xf8] sm:$0xff]
          %v1411 = vld [vmem:[%s398] sm:$0x1]
          %v1413 = vlaneseq
          %v1414 = vshrl.u32 %v1413, 7
          %v1415 = vsub.s32 0, %v1414
          %v1416 = vrot.slane %v1411, %v1415
          %v1418 = vadd.f32 %v1379, %v1416
          %v1419 = vadd.f32 %v1380, %v1416
          %v1420 = vadd.f32 %v1381, %v1416
          %v1421 = vadd.f32 %v1382, %v1416
          %v1422 = vadd.f32 %v1383, %v1416
          %v1423 = vadd.f32 %v1384, %v1416
          %v1424 = vadd.f32 %v1385, %v1416
          %v1425 = vadd.f32 %v1386, %v1416
          %v1426 = vadd.f32 %v1387, %v1416
          %v1427 = vadd.f32 %v1388, %v1416
          %v1428 = vadd.f32 %v1389, %v1416
          %v1429 = vadd.f32 %v1390, %v1416
          %v1430 = vadd.f32 %v1391, %v1416
          %v1431 = vadd.f32 %v1392, %v1416
          %v1432 = vadd.f32 %v1393, %v1416
          %v1433 = vadd.f32 %v1394, %v1416
          %v1434 = vadd.f32 %v1395, %v1416
          %v1435 = vadd.f32 %v1396, %v1416
          %v1436 = vadd.f32 %v1397, %v1416
          %v1437 = vadd.f32 %v1398, %v1416
          %v1438 = vadd.f32 %v1399, %v1416
          %v1439 = vadd.f32 %v1400, %v1416
          %v1440 = vadd.f32 %v1401, %v1416
          %v1441 = vadd.f32 %v1402, %v1416
          %v1442 = vadd.f32 %v1403, %v1416
          %v1443 = vadd.f32 %v1404, %v1416
          %v1444 = vadd.f32 %v1405, %v1416
          %v1445 = vadd.f32 %v1406, %v1416
          %v1446 = vadd.f32 %v1407, %v1416
          %v1447 = vadd.f32 %v1408, %v1416
          %v1448 = vadd.f32 %v1409, %v1416
          %v1449 = vadd.f32 %v1410, %v1416
          %v1450 = vmul.f32 %v1418, 0.5
          %v1451 = vmul.f32 %v1419, 0.5
          %v1452 = vmul.f32 %v1420, 0.5
          %v1453 = vmul.f32 %v1421, 0.5
          %v1454 = vmul.f32 %v1422, 0.5
          %v1455 = vmul.f32 %v1423, 0.5
          %v1456 = vmul.f32 %v1424, 0.5
          %v1457 = vmul.f32 %v1425, 0.5
          %v1458 = vmul.f32 %v1426, 0.5
          %v1459 = vmul.f32 %v1427, 0.5
          %v1460 = vmul.f32 %v1428, 0.5
          %v1461 = vmul.f32 %v1429, 0.5
          %v1462 = vmul.f32 %v1430, 0.5
          %v1463 = vmul.f32 %v1431, 0.5
          %v1464 = vmul.f32 %v1432, 0.5
          %v1465 = vmul.f32 %v1433, 0.5
          %v1466 = vmul.f32 %v1434, 0.5
          %v1467 = vmul.f32 %v1435, 0.5
          %v1468 = vmul.f32 %v1436, 0.5
          %v1469 = vmul.f32 %v1437, 0.5
          %v1470 = vmul.f32 %v1438, 0.5
          %v1471 = vmul.f32 %v1439, 0.5
          %v1472 = vmul.f32 %v1440, 0.5
          %v1473 = vmul.f32 %v1441, 0.5
          %v1474 = vmul.f32 %v1442, 0.5
          %v1475 = vmul.f32 %v1443, 0.5
          %v1476 = vmul.f32 %v1444, 0.5
          %v1477 = vmul.f32 %v1445, 0.5
          %v1478 = vmul.f32 %v1446, 0.5
          %v1479 = vmul.f32 %v1447, 0.5
          %v1480 = vmul.f32 %v1448, 0.5
          %v1481 = vmul.f32 %v1449, 0.5
          %v1482 = vmul.f32 %v1418, 0.044715
          %v1483 = vmul.f32 %v1419, 0.044715
          %v1484 = vmul.f32 %v1420, 0.044715
          %v1485 = vmul.f32 %v1421, 0.044715
          %v1486 = vmul.f32 %v1422, 0.044715
          %v1487 = vmul.f32 %v1423, 0.044715
          %v1488 = vmul.f32 %v1424, 0.044715
          %v1489 = vmul.f32 %v1425, 0.044715
          %v1490 = vmul.f32 %v1426, 0.044715
          %v1491 = vmul.f32 %v1427, 0.044715
          %v1492 = vmul.f32 %v1428, 0.044715
          %v1493 = vmul.f32 %v1429, 0.044715
          %v1494 = vmul.f32 %v1430, 0.044715
          %v1495 = vmul.f32 %v1431, 0.044715
          %v1496 = vmul.f32 %v1432, 0.044715
          %v1497 = vmul.f32 %v1433, 0.044715
          %v1498 = vmul.f32 %v1434, 0.044715
          %v1499 = vmul.f32 %v1435, 0.044715
          %v1500 = vmul.f32 %v1436, 0.044715
          %v1501 = vmul.f32 %v1437, 0.044715
          %v1502 = vmul.f32 %v1438, 0.044715
          %v1503 = vmul.f32 %v1439, 0.044715
          %v1504 = vmul.f32 %v1440, 0.044715
          %v1505 = vmul.f32 %v1441, 0.044715
          %v1506 = vmul.f32 %v1442, 0.044715
          %v1507 = vmul.f32 %v1443, 0.044715
          %v1508 = vmul.f32 %v1444, 0.044715
          %v1509 = vmul.f32 %v1445, 0.044715
          %v1510 = vmul.f32 %v1446, 0.044715
          %v1511 = vmul.f32 %v1447, 0.044715
          %v1512 = vmul.f32 %v1448, 0.044715
          %v1513 = vmul.f32 %v1449, 0.044715
          %v1514 = vmul.f32 %v1482, %v1418
          %v1515 = vmul.f32 %v1483, %v1419
          %v1516 = vmul.f32 %v1484, %v1420
          %v1517 = vmul.f32 %v1485, %v1421
          %v1518 = vmul.f32 %v1486, %v1422
          %v1519 = vmul.f32 %v1487, %v1423
          %v1520 = vmul.f32 %v1488, %v1424
          %v1521 = vmul.f32 %v1489, %v1425
          %v1522 = vmul.f32 %v1490, %v1426
          %v1523 = vmul.f32 %v1491, %v1427
          %v1524 = vmul.f32 %v1492, %v1428
          %v1525 = vmul.f32 %v1493, %v1429
          %v1526 = vmul.f32 %v1494, %v1430
          %v1527 = vmul.f32 %v1495, %v1431
          %v1528 = vmul.f32 %v1496, %v1432
          %v1529 = vmul.f32 %v1497, %v1433
          %v1530 = vmul.f32 %v1498, %v1434
          %v1531 = vmul.f32 %v1499, %v1435
          %v1532 = vmul.f32 %v1500, %v1436
          %v1533 = vmul.f32 %v1501, %v1437
          %v1534 = vmul.f32 %v1502, %v1438
          %v1535 = vmul.f32 %v1503, %v1439
          %v1536 = vmul.f32 %v1504, %v1440
          %v1537 = vmul.f32 %v1505, %v1441
          %v1538 = vmul.f32 %v1506, %v1442
          %v1539 = vmul.f32 %v1507, %v1443
          %v1540 = vmul.f32 %v1508, %v1444
          %v1541 = vmul.f32 %v1509, %v1445
          %v1542 = vmul.f32 %v1510, %v1446
          %v1543 = vmul.f32 %v1511, %v1447
          %v1544 = vmul.f32 %v1512, %v1448
          %v1545 = vmul.f32 %v1513, %v1449
          %v1546 = vmul.f32 %v1514, %v1418
          %v1547 = vmul.f32 %v1515, %v1419
          %v1548 = vmul.f32 %v1516, %v1420
          %v1549 = vmul.f32 %v1517, %v1421
          %v1550 = vmul.f32 %v1518, %v1422
          %v1551 = vmul.f32 %v1519, %v1423
          %v1552 = vmul.f32 %v1520, %v1424
          %v1553 = vmul.f32 %v1521, %v1425
          %v1554 = vmul.f32 %v1522, %v1426
          %v1555 = vmul.f32 %v1523, %v1427
          %v1556 = vmul.f32 %v1524, %v1428
          %v1557 = vmul.f32 %v1525, %v1429
          %v1558 = vmul.f32 %v1526, %v1430
          %v1559 = vmul.f32 %v1527, %v1431
          %v1560 = vmul.f32 %v1528, %v1432
          %v1561 = vmul.f32 %v1529, %v1433
          %v1562 = vmul.f32 %v1530, %v1434
          %v1563 = vmul.f32 %v1531, %v1435
          %v1564 = vmul.f32 %v1532, %v1436
          %v1565 = vmul.f32 %v1533, %v1437
          %v1566 = vmul.f32 %v1534, %v1438
          %v1567 = vmul.f32 %v1535, %v1439
          %v1568 = vmul.f32 %v1536, %v1440
          %v1569 = vmul.f32 %v1537, %v1441
          %v1570 = vmul.f32 %v1538, %v1442
          %v1571 = vmul.f32 %v1539, %v1443
          %v1572 = vmul.f32 %v1540, %v1444
          %v1573 = vmul.f32 %v1541, %v1445
          %v1574 = vmul.f32 %v1542, %v1446
          %v1575 = vmul.f32 %v1543, %v1447
          %v1576 = vmul.f32 %v1544, %v1448
          %v1577 = vmul.f32 %v1545, %v1449
          %v1578 = vadd.f32 %v1418, %v1546
          %v1579 = vadd.f32 %v1419, %v1547
          %v1580 = vadd.f32 %v1420, %v1548
          %v1581 = vadd.f32 %v1421, %v1549
          %v1582 = vadd.f32 %v1422, %v1550
          %v1583 = vadd.f32 %v1423, %v1551
          %v1584 = vadd.f32 %v1424, %v1552
          %v1585 = vadd.f32 %v1425, %v1553
          %v1586 = vadd.f32 %v1426, %v1554
          %v1587 = vadd.f32 %v1427, %v1555
          %v1588 = vadd.f32 %v1428, %v1556
          %v1589 = vadd.f32 %v1429, %v1557
          %v1590 = vadd.f32 %v1430, %v1558
          %v1591 = vadd.f32 %v1431, %v1559
          %v1592 = vadd.f32 %v1432, %v1560
          %v1593 = vadd.f32 %v1433, %v1561
          %v1594 = vadd.f32 %v1434, %v1562
          %v1595 = vadd.f32 %v1435, %v1563
          %v1596 = vadd.f32 %v1436, %v1564
          %v1597 = vadd.f32 %v1437, %v1565
          %v1598 = vadd.f32 %v1438, %v1566
          %v1599 = vadd.f32 %v1439, %v1567
          %v1600 = vadd.f32 %v1440, %v1568
          %v1601 = vadd.f32 %v1441, %v1569
          %v1602 = vadd.f32 %v1442, %v1570
          %v1603 = vadd.f32 %v1443, %v1571
          %v1604 = vadd.f32 %v1444, %v1572
          %v1605 = vadd.f32 %v1445, %v1573
          %v1606 = vadd.f32 %v1446, %v1574
          %v1607 = vadd.f32 %v1447, %v1575
          %v1608 = vadd.f32 %v1448, %v1576
          %v1609 = vadd.f32 %v1449, %v1577
          %v1610 = vmul.f32 %v1578, 0.7978846
          %v1611 = vmul.f32 %v1579, 0.7978846
          %v1612 = vmul.f32 %v1580, 0.7978846
          %v1613 = vmul.f32 %v1581, 0.7978846
          %v1614 = vmul.f32 %v1582, 0.7978846
          %v1615 = vmul.f32 %v1583, 0.7978846
          %v1616 = vmul.f32 %v1584, 0.7978846
          %v1617 = vmul.f32 %v1585, 0.7978846
          %v1618 = vmul.f32 %v1586, 0.7978846
          %v1619 = vmul.f32 %v1587, 0.7978846
          %v1620 = vmul.f32 %v1588, 0.7978846
          %v1621 = vmul.f32 %v1589, 0.7978846
          %v1622 = vmul.f32 %v1590, 0.7978846
          %v1623 = vmul.f32 %v1591, 0.7978846
          %v1624 = vmul.f32 %v1592, 0.7978846
          %v1625 = vmul.f32 %v1593, 0.7978846
          %v1626 = vmul.f32 %v1594, 0.7978846
          %v1627 = vmul.f32 %v1595, 0.7978846
          %v1628 = vmul.f32 %v1596, 0.7978846
          %v1629 = vmul.f32 %v1597, 0.7978846
          %v1630 = vmul.f32 %v1598, 0.7978846
          %v1631 = vmul.f32 %v1599, 0.7978846
          %v1632 = vmul.f32 %v1600, 0.7978846
          %v1633 = vmul.f32 %v1601, 0.7978846
          %v1634 = vmul.f32 %v1602, 0.7978846
          %v1635 = vmul.f32 %v1603, 0.7978846
          %v1636 = vmul.f32 %v1604, 0.7978846
          %v1637 = vmul.f32 %v1605, 0.7978846
          %v1638 = vmul.f32 %v1606, 0.7978846
          %v1639 = vmul.f32 %v1607, 0.7978846
          %v1640 = vmul.f32 %v1608, 0.7978846
          %v1641 = vmul.f32 %v1609, 0.7978846
          %v1642 = vtanh.pop %v1610
          %v1643 = vtanh.pop %v1611
          %v1644 = vtanh.pop %v1612
          %v1645 = vtanh.pop %v1613
          %v1646 = vtanh.pop %v1614
          %v1647 = vtanh.pop %v1615
          %v1648 = vtanh.pop %v1616
          %v1649 = vtanh.pop %v1617
          %v1650 = vtanh.pop %v1618
          %v1651 = vtanh.pop %v1619
          %v1652 = vtanh.pop %v1620
          %v1653 = vtanh.pop %v1621
          %v1654 = vtanh.pop %v1622
          %v1655 = vtanh.pop %v1623
          %v1656 = vtanh.pop %v1624
          %v1657 = vtanh.pop %v1625
          %v1658 = vtanh.pop %v1626
          %v1659 = vtanh.pop %v1627
          %v1660 = vtanh.pop %v1628
          %v1661 = vtanh.pop %v1629
          %v1662 = vtanh.pop %v1630
          %v1663 = vtanh.pop %v1631
          %v1664 = vtanh.pop %v1632
          %v1665 = vtanh.pop %v1633
          %v1666 = vtanh.pop %v1634
          %v1667 = vtanh.pop %v1635
          %v1668 = vtanh.pop %v1636
          %v1669 = vtanh.pop %v1637
          %v1670 = vtanh.pop %v1638
          %v1671 = vtanh.pop %v1639
          %v1672 = vtanh.pop %v1640
          %v1673 = vtanh.pop %v1641
          %v1674 = vadd.f32 %v1642, 1.0
          %v1675 = vadd.f32 %v1643, 1.0
          %v1676 = vadd.f32 %v1644, 1.0
          %v1677 = vadd.f32 %v1645, 1.0
          %v1678 = vadd.f32 %v1646, 1.0
          %v1679 = vadd.f32 %v1647, 1.0
          %v1680 = vadd.f32 %v1648, 1.0
          %v1681 = vadd.f32 %v1649, 1.0
          %v1682 = vadd.f32 %v1650, 1.0
          %v1683 = vadd.f32 %v1651, 1.0
          %v1684 = vadd.f32 %v1652, 1.0
          %v1685 = vadd.f32 %v1653, 1.0
          %v1686 = vadd.f32 %v1654, 1.0
          %v1687 = vadd.f32 %v1655, 1.0
          %v1688 = vadd.f32 %v1656, 1.0
          %v1689 = vadd.f32 %v1657, 1.0
          %v1690 = vadd.f32 %v1658, 1.0
          %v1691 = vadd.f32 %v1659, 1.0
          %v1692 = vadd.f32 %v1660, 1.0
          %v1693 = vadd.f32 %v1661, 1.0
          %v1694 = vadd.f32 %v1662, 1.0
          %v1695 = vadd.f32 %v1663, 1.0
          %v1696 = vadd.f32 %v1664, 1.0
          %v1697 = vadd.f32 %v1665, 1.0
          %v1698 = vadd.f32 %v1666, 1.0
          %v1699 = vadd.f32 %v1667, 1.0
          %v1700 = vadd.f32 %v1668, 1.0
          %v1701 = vadd.f32 %v1669, 1.0
          %v1702 = vadd.f32 %v1670, 1.0
          %v1703 = vadd.f32 %v1671, 1.0
          %v1704 = vadd.f32 %v1672, 1.0
          %v1705 = vadd.f32 %v1673, 1.0
          %v1706 = vmul.f32 %v1450, %v1674
          %v1707 = vmul.f32 %v1451, %v1675
          %v1708 = vmul.f32 %v1452, %v1676
          %v1709 = vmul.f32 %v1453, %v1677
          %v1710 = vmul.f32 %v1454, %v1678
          %v1711 = vmul.f32 %v1455, %v1679
          %v1712 = vmul.f32 %v1456, %v1680
          %v1713 = vmul.f32 %v1457, %v1681
          %v1714 = vmul.f32 %v1458, %v1682
          %v1715 = vmul.f32 %v1459, %v1683
          %v1716 = vmul.f32 %v1460, %v1684
          %v1717 = vmul.f32 %v1461, %v1685
          %v1718 = vmul.f32 %v1462, %v1686
          %v1719 = vmul.f32 %v1463, %v1687
          %v1720 = vmul.f32 %v1464, %v1688
          %v1721 = vmul.f32 %v1465, %v1689
          %v1722 = vmul.f32 %v1466, %v1690
          %v1723 = vmul.f32 %v1467, %v1691
          %v1724 = vmul.f32 %v1468, %v1692
          %v1725 = vmul.f32 %v1469, %v1693
          %v1726 = vmul.f32 %v1470, %v1694
          %v1727 = vmul.f32 %v1471, %v1695
          %v1728 = vmul.f32 %v1472, %v1696
          %v1729 = vmul.f32 %v1473, %v1697
          %v1730 = vmul.f32 %v1474, %v1698
          %v1731 = vmul.f32 %v1475, %v1699
          %v1732 = vmul.f32 %v1476, %v1700
          %v1733 = vmul.f32 %v1477, %v1701
          %v1734 = vmul.f32 %v1478, %v1702
          %v1735 = vmul.f32 %v1479, %v1703
          %v1736 = vmul.f32 %v1480, %v1704
          %v1737 = vmul.f32 %v1481, %v1705
          %v1738 = vmul.f32 %v1706, 1.7015043
          %v1739 = vmul.f32 %v1707, 1.7015043
          %v1740 = vmul.f32 %v1708, 1.7015043
          %v1741 = vmul.f32 %v1709, 1.7015043
          %v1742 = vmul.f32 %v1710, 1.7015043
          %v1743 = vmul.f32 %v1711, 1.7015043
          %v1744 = vmul.f32 %v1712, 1.7015043
          %v1745 = vmul.f32 %v1713, 1.7015043
          %v1746 = vmul.f32 %v1714, 1.7015043
          %v1747 = vmul.f32 %v1715, 1.7015043
          %v1748 = vmul.f32 %v1716, 1.7015043
          %v1749 = vmul.f32 %v1717, 1.7015043
          %v1750 = vmul.f32 %v1718, 1.7015043
          %v1751 = vmul.f32 %v1719, 1.7015043
          %v1752 = vmul.f32 %v1720, 1.7015043
          %v1753 = vmul.f32 %v1721, 1.7015043
          %v1754 = vmul.f32 %v1722, 1.7015043
          %v1755 = vmul.f32 %v1723, 1.7015043
          %v1756 = vmul.f32 %v1724, 1.7015043
          %v1757 = vmul.f32 %v1725, 1.7015043
          %v1758 = vmul.f32 %v1726, 1.7015043
          %v1759 = vmul.f32 %v1727, 1.7015043
          %v1760 = vmul.f32 %v1728, 1.7015043
          %v1761 = vmul.f32 %v1729, 1.7015043
          %v1762 = vmul.f32 %v1730, 1.7015043
          %v1763 = vmul.f32 %v1731, 1.7015043
          %v1764 = vmul.f32 %v1732, 1.7015043
          %v1765 = vmul.f32 %v1733, 1.7015043
          %v1766 = vmul.f32 %v1734, 1.7015043
          %v1767 = vmul.f32 %v1735, 1.7015043
          %v1768 = vmul.f32 %v1736, 1.7015043
          %v1769 = vmul.f32 %v1737, 1.7015043
          %v1770 = vpack.c.bf16 %v1739, %v1738
          %v1771 = vpack.c.bf16 %v1741, %v1740
          %v1772 = vpack.c.bf16 %v1743, %v1742
          %v1773 = vpack.c.bf16 %v1745, %v1744
          %v1774 = vpack.c.bf16 %v1747, %v1746
          %v1775 = vpack.c.bf16 %v1749, %v1748
          %v1776 = vpack.c.bf16 %v1751, %v1750
          %v1777 = vpack.c.bf16 %v1753, %v1752
          %v1778 = vpack.c.bf16 %v1755, %v1754
          %v1779 = vpack.c.bf16 %v1757, %v1756
          %v1780 = vpack.c.bf16 %v1759, %v1758
          %v1781 = vpack.c.bf16 %v1761, %v1760
          %v1782 = vpack.c.bf16 %v1763, %v1762
          %v1783 = vpack.c.bf16 %v1765, %v1764
          %v1784 = vpack.c.bf16 %v1767, %v1766
          %v1785 = vpack.c.bf16 %v1769, %v1768
          %v1802 = vunpack.c.l.b16 %v1770
          %v1803 = vunpack.c.h.b16 %v1770
          %v1804 = vunpack.c.l.b16 %v1771
          %v1805 = vunpack.c.h.b16 %v1771
          %v1806 = vunpack.c.l.b16 %v1772
          %v1807 = vunpack.c.h.b16 %v1772
          %v1808 = vunpack.c.l.b16 %v1773
          %v1809 = vunpack.c.h.b16 %v1773
          %v1810 = vunpack.c.l.b16 %v1774
          %v1811 = vunpack.c.h.b16 %v1774
          %v1812 = vunpack.c.l.b16 %v1775
          %v1813 = vunpack.c.h.b16 %v1775
          %v1814 = vunpack.c.l.b16 %v1776
          %v1815 = vunpack.c.h.b16 %v1776
          %v1816 = vunpack.c.l.b16 %v1777
          %v1817 = vunpack.c.h.b16 %v1777
          %v1818 = vunpack.c.l.b16 %v1778
          %v1819 = vunpack.c.h.b16 %v1778
          %v1820 = vunpack.c.l.b16 %v1779
          %v1821 = vunpack.c.h.b16 %v1779
          %v1822 = vunpack.c.l.b16 %v1780
          %v1823 = vunpack.c.h.b16 %v1780
          %v1824 = vunpack.c.l.b16 %v1781
          %v1825 = vunpack.c.h.b16 %v1781
          %v1826 = vunpack.c.l.b16 %v1782
          %v1827 = vunpack.c.h.b16 %v1782
          %v1828 = vunpack.c.l.b16 %v1783
          %v1829 = vunpack.c.h.b16 %v1783
          %v1830 = vunpack.c.l.b16 %v1784
          %v1831 = vunpack.c.h.b16 %v1784
          %v1832 = vunpack.c.l.b16 %v1785
          %v1833 = vunpack.c.h.b16 %v1785
          %v1834 = vpack.c.b16 %v1802, %v1802
          %v1835 = vpack.c.b16 %v1803, %v1803
          %v1836 = vpack.c.b16 %v1804, %v1804
          %v1837 = vpack.c.b16 %v1805, %v1805
          %v1838 = vpack.c.b16 %v1806, %v1806
          %v1839 = vpack.c.b16 %v1807, %v1807
          %v1840 = vpack.c.b16 %v1808, %v1808
          %v1841 = vpack.c.b16 %v1809, %v1809
          %v1842 = vpack.c.b16 %v1810, %v1810
          %v1843 = vpack.c.b16 %v1811, %v1811
          %v1844 = vpack.c.b16 %v1812, %v1812
          %v1845 = vpack.c.b16 %v1813, %v1813
          %v1846 = vpack.c.b16 %v1814, %v1814
          %v1847 = vpack.c.b16 %v1815, %v1815
          %v1848 = vpack.c.b16 %v1816, %v1816
          %v1849 = vpack.c.b16 %v1817, %v1817
          %v1850 = vpack.c.b16 %v1818, %v1818
          %v1851 = vpack.c.b16 %v1819, %v1819
          %v1852 = vpack.c.b16 %v1820, %v1820
          %v1853 = vpack.c.b16 %v1821, %v1821
          %v1854 = vpack.c.b16 %v1822, %v1822
          %v1855 = vpack.c.b16 %v1823, %v1823
          %v1856 = vpack.c.b16 %v1824, %v1824
          %v1857 = vpack.c.b16 %v1825, %v1825
          %v1858 = vpack.c.b16 %v1826, %v1826
          %v1859 = vpack.c.b16 %v1827, %v1827
          %v1860 = vpack.c.b16 %v1828, %v1828
          %v1861 = vpack.c.b16 %v1829, %v1829
          %v1862 = vpack.c.b16 %v1830, %v1830
          %v1863 = vpack.c.b16 %v1831, %v1831
          %v1864 = vpack.c.b16 %v1832, %v1832
          %v1865 = vpack.c.b16 %v1833, %v1833
          %1898 = vst [vmem:[%s406] sm:$0xf] %v1834
          %1899 = vst [vmem:[%s406 + $0x4] sm:$0xf] %v1835
          %1900 = vst [vmem:[%s406 + $0x8] sm:$0xf] %v1836
          %1901 = vst [vmem:[%s406 + $0xc] sm:$0xf] %v1837
          %1902 = vst [vmem:[%s406 + $0x10] sm:$0xf] %v1838
          %1903 = vst [vmem:[%s406 + $0x14] sm:$0xf] %v1839
          %1904 = vst [vmem:[%s406 + $0x18] sm:$0xf] %v1840
          %1905 = vst [vmem:[%s406 + $0x1c] sm:$0xf] %v1841
          %1906 = vst [vmem:[%s406 + $0x20] sm:$0xf] %v1842
          %1907 = vst [vmem:[%s406 + $0x24] sm:$0xf] %v1843
          %1908 = vst [vmem:[%s406 + $0x28] sm:$0xf] %v1844
          %1909 = vst [vmem:[%s406 + $0x2c] sm:$0xf] %v1845
          %1910 = vst [vmem:[%s406 + $0x30] sm:$0xf] %v1846
          %1911 = vst [vmem:[%s406 + $0x34] sm:$0xf] %v1847
          %1912 = vst [vmem:[%s406 + $0x38] sm:$0xf] %v1848
          %1913 = vst [vmem:[%s406 + $0x3c] sm:$0xf] %v1849
          %1914 = vst [vmem:[%s406 + $0x40] sm:$0xf] %v1850
          %1915 = vst [vmem:[%s406 + $0x44] sm:$0xf] %v1851
          %1916 = vst [vmem:[%s406 + $0x48] sm:$0xf] %v1852
          %1917 = vst [vmem:[%s406 + $0x4c] sm:$0xf] %v1853
          %1918 = vst [vmem:[%s406 + $0x50] sm:$0xf] %v1854
          %1919 = vst [vmem:[%s406 + $0x54] sm:$0xf] %v1855
          %1920 = vst [vmem:[%s406 + $0x58] sm:$0xf] %v1856
          %1921 = vst [vmem:[%s406 + $0x5c] sm:$0xf] %v1857
          %1922 = vst [vmem:[%s406 + $0x60] sm:$0xf] %v1858
          %1923 = vst [vmem:[%s406 + $0x64] sm:$0xf] %v1859
          %1924 = vst [vmem:[%s406 + $0x68] sm:$0xf] %v1860
          %1925 = vst [vmem:[%s406 + $0x6c] sm:$0xf] %v1861
          %1926 = vst [vmem:[%s406 + $0x70] sm:$0xf] %v1862
          %1927 = vst [vmem:[%s406 + $0x74] sm:$0xf] %v1863
          %1928 = vst [vmem:[%s406 + $0x78] sm:$0xf] %v1864
          %1929 = vst [vmem:[%s406 + $0x7c] sm:$0xf] %v1865
        $region66: #{nfnet_forward.11} parent=53 // pred_fallthru
          _
        %s1930 = smul.u32 32, %s19
        %p1931 = scmp.lt.s32.totalorder %s1930, 63
        %s1932 = scalar_select %p1931, %s1930, 63
        %p1933 = scmp.lt.s32.totalorder %s20, 0
        %s1934 = scalar_select %p1933, %s20, 0
        %s1935 = sadd.s32 %s1934, %s1932
        %s1936 = smul.addr %s1935, 4
        %s1937 = scalar_lea.vmem %s3, %s1936
        // Predicated region
        $region67: #{nfnet_forward.11} parent=53 // pred_check
          %p1938 = pneg %p135
        $region68: #{nfnet_forward.11} parent=53 // pred_check_branch
          %1940 = sbr.rel (%p1938) target = $region70
        $region69: #{nfnet_forward.11} parent=53 // pred_region
          %s1941 = smul.u32 32, %s19
        $region70: #{nfnet_forward.11} parent=53 // pred_fallthru
          _
      $region54: #{nfnet_forward.11} parent=5 // pred_fallthru
        _
      %p1942 = scmp.le.s32.totalorder 2, %s9
      // Predicated region
      $region71: #{nfnet_forward.11} parent=5 // pred_check
        %p1943 = pneg %p1942
      $region72: #{nfnet_forward.11} parent=5 // pred_check_branch
        %1945 = sbr.rel (%p1943) target = $region74
      $region73: #{nfnet_forward.11} parent=5 // pred_region
        %s1946 = ssub.s32 %s9, 2
        // Predicated region
        $region75: #{nfnet_forward.11} parent=73 // pred_check
          %p1947 = pneg %p141
        $region76: #{nfnet_forward.11} parent=73 // pred_check_branch
          %1949 = sbr.rel (%p1947) target = $region78
        $region77: #{nfnet_forward.11} parent=73 // pred_region
          %s1950 = smul.u32 32, %s22
          %p1951 = scmp.lt.s32.totalorder %s1950, 63
          %s1952 = scalar_select %p1951, %s1950, 63
          %p1953 = scmp.lt.s32.totalorder %s23, 0
          %s1954 = scalar_select %p1953, %s23, 0
          %s1955 = sadd.s32 %s1954, %s1952
          %s1956 = smul.addr %s1955, 4
          %s1957 = scalar_lea.vmem %s3, %s1956
        $region78: #{nfnet_forward.11} parent=73 // pred_fallthru
          _
      $region74: #{nfnet_forward.11} parent=5 // pred_fallthru
        _
    $region6: #{nfnet_forward.11} parent=1 // loop_footer
      %s13 = sadd.s32 1, %s9
    $region7: #{nfnet_forward.11} parent=1 // loop_footer_branch
      %8 = sbr.rel target = $region3
    $region8: #{nfnet_forward.11} parent=1 // loop_exit
      _

// kernel: nfnet_forward.13
$region0: #{nfnet_forward.13}
  #allocation0 [shape = 'u32[]', space=smem, size = 0x4, offset = 0x4, fixed_abs, tag = 'smem constant byte address 0x4 - core index']
  #allocation1 [shape = 'u32[144,128]{1,0:T(1,128)}', space=vmem, size = 0x12000, scoped, tag = 'internal scratch']
  #allocation2 [shape = 'f32[128,128]{1,0:T(8,128)}', space=vmem, size = 0x10000, scoped, tag = 'scratch operand']
  %s0 = inlined_call_operand.vmem [shape: bf16[128,1152], index: 0, kind: input, shape index: {}]
  %s1 = inlined_call_operand.vmem [shape: bf16[1152,128], index: 1, kind: input, shape index: {}]
  %s2 = inlined_call_operand.vmem [shape: f32[1,128], index: 2, kind: input, shape index: {}]
  %s3 = inlined_call_operand.vmem [shape: bf16[128,128], index: 3, kind: output, shape index: {}]
  %s4 = sld [smem:[#allocation0]]
  $region79: #{nfnet_forward.13} parent=0
    _
  %s6 = ssub.s32 1, %s4
  %s7 = scalar_select 0, %s6, %s4
  $region1: #{nfnet_forward.13} parent=0
    #allocation3 [shape = 'u8[196608]{0}', space=vmem, size = 0x30000, scoped, tag = 'input window, operand 0']
    loop: start=0, step=1, limit=5
    $region2: #{nfnet_forward.13} parent=1 // loop_pre_header
      _
    $region3: #{nfnet_forward.13} parent=1 // loop_header
      %s9 = sphi 0, %s13
      %p10 = scmp.ge.s32.totalorder %s9, 5
      %s16 = sphi 0, %s35
      %s17 = sphi 0, %s31
      %s18 = sphi 0, %s27
      %s19 = sphi 0, %s16
      %s20 = sphi 0, %s17
      %s21 = sphi 0, %s18
      %s22 = sphi 0, %s19
      %s23 = sphi 0, %s20
      %s24 = sphi 0, %s21
      %s40 = sphi 0, %s42
      %s43 = sphi 0, %s40
      %s44 = sphi 0, %s43
      %s60 = sphi 0, %s44
      %s68 = sphi 0, %s70
      %s71 = sphi 0, %s68
      %s72 = sphi 0, %s71
      %s88 = sphi 0, %s72
      %s94 = sphi 0, %s96
      %s97 = sphi 0, %s94
      %s98 = sphi 0, %s97
      %s114 = sphi 0, %s98
      %s122 = sphi 0, %s124
      %s125 = sphi 0, %s122
      %s126 = sphi 0, %s125
      %s142 = sphi 0, %s126
    $region4: #{nfnet_forward.13} parent=1 // loop_header_branch
      %12 = sbr.rel (%p10) target = $region8
    $region5: #{nfnet_forward.13} parent=1 // loop_body
      %s14 = ssub.s32 %s9, 1
      %s15 = ssub.s32 %s9, 2
      %s25 = sadd.s32 1, %s18
      %p26 = scmp.ge.s32.totalorder %s25, 3
      %s27 = scalar_select %p26, 0, %s25
      %s28 = sadd.s32 1, %s17
      %s29 = scalar_select %p26, %s28, %s17
      %p30 = scmp.ge.s32.totalorder %s29, 1
      %s31 = scalar_select %p30, 0, %s29
      %s32 = sadd.s32 1, %s16
      %s33 = scalar_select %p30, %s32, %s16
      %p34 = scmp.ge.s32.totalorder %s33, 1
      %s35 = scalar_select %p34, 0, %s33
      %s36 = ssub.s32 %s16, %s35
      %s37 = ssub.s32 %s18, %s27
      %s38 = sor.u32 %s36, %s37
      %p39 = scmp.eq.s32.totalorder %s38, 0
      %s41 = sadd.s32 %s40, 1
      %s42 = scalar_select %p39, %s40, %s41
      %p45 = pneg %p39
      %p46 = scmp.eq.s32.totalorder %s9, 2
      %p47 = por %p45, %p46
      %p48 = scmp.ne.s32.totalorder %s40, %s43
      %p49 = scmp.eq.s32.totalorder %s9, 0
      %p50 = por %p48, %p49
      %p51 = scmp.ne.s32.totalorder %s40, %s43
      %p52 = scmp.eq.s32.totalorder %s14, 2
      %p53 = por %p51, %p52
      %p54 = scmp.ne.s32.totalorder %s43, %s44
      %p55 = scmp.eq.s32.totalorder %s14, 0
      %p56 = por %p54, %p55
      %p57 = scmp.ne.s32.totalorder %s43, %s44
      %p58 = scmp.eq.s32.totalorder %s15, 2
      %p59 = por %p57, %p58
      %p61 = scmp.ne.s32.totalorder %s44, %s60
      %p62 = scmp.eq.s32.totalorder %s15, 0
      %p63 = por %p61, %p62
      %s64 = ssub.s32 %s18, %s27
      %s65 = ssub.s32 %s17, %s31
      %s66 = sor.u32 %s64, %s65
      %p67 = scmp.eq.s32.totalorder %s66, 0
      %s69 = sadd.s32 %s68, 1
      %s70 = scalar_select %p67, %s68, %s69
      %p73 = pneg %p67
      %p74 = scmp.eq.s32.totalorder %s9, 2
      %p75 = por %p73, %p74
      %p76 = scmp.ne.s32.totalorder %s68, %s71
      %p77 = scmp.eq.s32.totalorder %s9, 0
      %p78 = por %p76, %p77
      %p79 = scmp.ne.s32.totalorder %s68, %s71
      %p80 = scmp.eq.s32.totalorder %s14, 2
      %p81 = por %p79, %p80
      %p82 = scmp.ne.s32.totalorder %s71, %s72
      %p83 = scmp.eq.s32.totalorder %s14, 0
      %p84 = por %p82, %p83
      %p85 = scmp.ne.s32.totalorder %s71, %s72
      %p86 = scmp.eq.s32.totalorder %s15, 2
      %p87 = por %p85, %p86
      %p89 = scmp.ne.s32.totalorder %s72, %s88
      %p90 = scmp.eq.s32.totalorder %s15, 0
      %p91 = por %p89, %p90
      %s92 = ssub.s32 %s17, %s31
      %p93 = scmp.eq.s32.totalorder %s92, 0
      %s95 = sadd.s32 %s94, 1
      %s96 = scalar_select %p93, %s94, %s95
      %p99 = pneg %p93
      %p100 = scmp.eq.s32.totalorder %s9, 2
      %p101 = por %p99, %p100
      %p102 = scmp.ne.s32.totalorder %s94, %s97
      %p103 = scmp.eq.s32.totalorder %s9, 0
      %p104 = por %p102, %p103
      %p105 = scmp.ne.s32.totalorder %s94, %s97
      %p106 = scmp.eq.s32.totalorder %s14, 2
      %p107 = por %p105, %p106
      %p108 = scmp.ne.s32.totalorder %s97, %s98
      %p109 = scmp.eq.s32.totalorder %s14, 0
      %p110 = por %p108, %p109
      %p111 = scmp.ne.s32.totalorder %s97, %s98
      %p112 = scmp.eq.s32.totalorder %s15, 2
      %p113 = por %p111, %p112
      %p115 = scmp.ne.s32.totalorder %s98, %s114
      %p116 = scmp.eq.s32.totalorder %s15, 0
      %p117 = por %p115, %p116
      %s118 = ssub.s32 %s16, %s35
      %s119 = ssub.s32 %s17, %s31
      %s120 = sor.u32 %s118, %s119
      %p121 = scmp.eq.s32.totalorder %s120, 0
      %s123 = sadd.s32 %s122, 1
      %s124 = scalar_select %p121, %s122, %s123
      %p127 = pneg %p121
      %p128 = scmp.eq.s32.totalorder %s9, 2
      %p129 = por %p127, %p128
      %p130 = scmp.ne.s32.totalorder %s122, %s125
      %p131 = scmp.eq.s32.totalorder %s9, 0
      %p132 = por %p130, %p131
      %p133 = scmp.ne.s32.totalorder %s122, %s125
      %p134 = scmp.eq.s32.totalorder %s14, 2
      %p135 = por %p133, %p134
      %p136 = scmp.ne.s32.totalorder %s125, %s126
      %p137 = scmp.eq.s32.totalorder %s14, 0
      %p138 = por %p136, %p137
      %p139 = scmp.ne.s32.totalorder %s125, %s126
      %p140 = scmp.eq.s32.totalorder %s15, 2
      %p141 = por %p139, %p140
      %p143 = scmp.ne.s32.totalorder %s126, %s142
      %p144 = scmp.eq.s32.totalorder %s15, 0
      %p145 = por %p143, %p144
      %p146 = scmp.le.s32.totalorder 1, %s9
      %p147 = scmp.lt.s32.totalorder %s9, 4
      %p148 = pnand %p146, %p147
      %p149 = pneg %p148
      // Predicated region
      $region9: #{nfnet_forward.13} parent=5 // pred_check
        _
      $region10: #{nfnet_forward.13} parent=5 // pred_check_branch
        %151 = sbr.rel (%p148) target = $region12
      $region11: #{nfnet_forward.13} parent=5 // pred_region
        %s152 = ssub.s32 %s9, 1
        // Predicated region
        $region13: #{nfnet_forward.13} parent=11 // pred_check
          %p153 = pneg %p110
        $region14: #{nfnet_forward.13} parent=11 // pred_check_branch
          %155 = sbr.rel (%p153) target = $region16
        $region15: #{nfnet_forward.13} parent=11 // pred_region
          %p156 = scmp.lt.s32.totalorder %s20, 0
          %s157 = scalar_select %p156, %s20, 0
          %s158 = scalar_lea.vmem %s2, %s157
        $region16: #{nfnet_forward.13} parent=11 // pred_fallthru
          _
      $region12: #{nfnet_forward.13} parent=5 // pred_fallthru
        _
      %p159 = scmp.lt.s32.totalorder %s9, 3
      // Predicated region
      $region17: #{nfnet_forward.13} parent=5 // pred_check
        %p160 = pneg %p159
      $region18: #{nfnet_forward.13} parent=5 // pred_check_branch
        %162 = sbr.rel (%p160) target = $region20
      $region19: #{nfnet_forward.13} parent=5 // pred_region
        // Predicated region
        $region21: #{nfnet_forward.13} parent=19 // pred_check
          %p163 = pneg %p50
        $region22: #{nfnet_forward.13} parent=19 // pred_check_branch
          %165 = sbr.rel (%p163) target = $region24
        $region23: #{nfnet_forward.13} parent=19 // pred_region
          %s166 = sand.u32 %s40, 1
          %s167 = sand.u32 %s40, 1
          %s168 = smul.addr %s167, 192
          %s169 = scalar_lea.vmem [#allocation3], %s168
          %s170 = smul.u32 16, %s16
          %s171 = smul.u32 3, %s18
          %s172 = smul.addr %s170, 9
          %s173 = sadd.s32 %s171, %s172
          %s174 = smul.addr %s173, 4
          %s175 = scalar_lea.vmem %s0, %s174
          // Predicated region
          $region25: #{nfnet_forward.13} parent=23 // pred_check
            _
          $region26: #{nfnet_forward.13} parent=23 // pred_check_branch
            %177 = sbr.rel (0) target = $region28
          $region27: #{nfnet_forward.13} parent=23 // pred_region
            // Predicated region
            $region29: #{nfnet_forward.13} parent=27 // pred_check
              _
            $region30: #{nfnet_forward.13} parent=27 // pred_check_branch
              %179 = sbr.rel (0) target = $region32
            $region31: #{nfnet_forward.13} parent=27 // pred_region
              %s180 = scalar_lea.vmem %s175, 8
              %s181 = scalar_lea.vmem %s169, 8 [#allocation3]
              loop: start=0, step=1, limit=1
              $region33: #{nfnet_forward.13} parent=31 // loop_pre_header
                _
              $region34: #{nfnet_forward.13} parent=31 // loop_header
                %s183 = sphi 0, %s187
                %p184 = scmp.ge.s32.totalorder %s183, 1
                %s188 = sphi %s175, %s175
                %s189 = sphi %s169, %s169
              $region35: #{nfnet_forward.13} parent=31 // loop_header_branch
                %186 = sbr.rel (%p184) target = $region39
              $region36: #{nfnet_forward.13} parent=31 // loop_body
                %v190 = vld [vmem:[%s188] sm:$0xff]
                %191 = vst [vmem:[%s189] sm:$0xff] %v190
                %v192 = vld [vmem:[%s188 + $0x24] sm:$0xff]
                %193 = vst [vmem:[%s189 + $0xc] sm:$0xff] %v192
                %v194 = vld [vmem:[%s188 + $0x48] sm:$0xff]
                %195 = vst [vmem:[%s189 + $0x18] sm:$0xff] %v194
                %v196 = vld [vmem:[%s188 + $0x6c] sm:$0xff]
                %197 = vst [vmem:[%s189 + $0x24] sm:$0xff] %v196
                %v198 = vld [vmem:[%s188 + $0x90] sm:$0xff]
                %199 = vst [vmem:[%s189 + $0x30] sm:$0xff] %v198
                %v200 = vld [vmem:[%s188 + $0xb4] sm:$0xff]
                %201 = vst [vmem:[%s189 + $0x3c] sm:$0xff] %v200
                %v202 = vld [vmem:[%s188 + $0xd8] sm:$0xff]
                %203 = vst [vmem:[%s189 + $0x48] sm:$0xff] %v202
                %v204 = vld [vmem:[%s188 + $0xfc] sm:$0xff]
                %205 = vst [vmem:[%s189 + $0x54] sm:$0xff] %v204
                %v206 = vld [vmem:[%s188 + $0x120] sm:$0xff]
                %207 = vst [vmem:[%s189 + $0x60] sm:$0xff] %v206
                %v208 = vld [vmem:[%s188 + $0x144] sm:$0xff]
                %209 = vst [vmem:[%s189 + $0x6c] sm:$0xff] %v208
                %v210 = vld [vmem:[%s188 + $0x168] sm:$0xff]
                %211 = vst [vmem:[%s189 + $0x78] sm:$0xff] %v210
                %v212 = vld [vmem:[%s188 + $0x18c] sm:$0xff]
                %213 = vst [vmem:[%s189 + $0x84] sm:$0xff] %v212
                %v214 = vld [vmem:[%s188 + $0x1b0] sm:$0xff]
                %215 = vst [vmem:[%s189 + $0x90] sm:$0xff] %v214
                %v216 = vld [vmem:[%s188 + $0x1d4] sm:$0xff]
                %217 = vst [vmem:[%s189 + $0x9c] sm:$0xff] %v216
                %v218 = vld [vmem:[%s188 + $0x1f8] sm:$0xff]
                %219 = vst [vmem:[%s189 + $0xa8] sm:$0xff] %v218
                %v220 = vld [vmem:[%s188 + $0x21c] sm:$0xff]
                %221 = vst [vmem:[%s189 + $0xb4] sm:$0xff] %v220
              $region37: #{nfnet_forward.13} parent=31 // loop_footer
                %s187 = sadd.s32 1, %s183
              $region38: #{nfnet_forward.13} parent=31 // loop_footer_branch
                %182 = sbr.rel target = $region34
              $region39: #{nfnet_forward.13} parent=31 // loop_exit
                _
              loop: start=0, step=1, limit=1
              $region40: #{nfnet_forward.13} parent=31 // loop_pre_header
                _
              $region41: #{nfnet_forward.13} parent=31 // loop_header
                %s224 = sphi 0, %s228
                %p225 = scmp.ge.s32.totalorder %s224, 1
                %s229 = sphi %s180, %s180
                %s230 = sphi %s181, %s181
              $region42: #{nfnet_forward.13} parent=31 // loop_header_branch
                %227 = sbr.rel (%p225) target = $region46
              $region43: #{nfnet_forward.13} parent=31 // loop_body
                %v231 = vld [vmem:[%s229] sm:$0xf]
                %232 = vst [vmem:[%s230] sm:$0xf] %v231
                %v233 = vld [vmem:[%s229 + $0x24] sm:$0xf]
                %234 = vst [vmem:[%s230 + $0xc] sm:$0xf] %v233
                %v235 = vld [vmem:[%s229 + $0x48] sm:$0xf]
                %236 = vst [vmem:[%s230 + $0x18] sm:$0xf] %v235
                %v237 = vld [vmem:[%s229 + $0x6c] sm:$0xf]
                %238 = vst [vmem:[%s230 + $0x24] sm:$0xf] %v237
                %v239 = vld [vmem:[%s229 + $0x90] sm:$0xf]
                %240 = vst [vmem:[%s230 + $0x30] sm:$0xf] %v239
                %v241 = vld [vmem:[%s229 + $0xb4] sm:$0xf]
                %242 = vst [vmem:[%s230 + $0x3c] sm:$0xf] %v241
                %v243 = vld [vmem:[%s229 + $0xd8] sm:$0xf]
                %244 = vst [vmem:[%s230 + $0x48] sm:$0xf] %v243
                %v245 = vld [vmem:[%s229 + $0xfc] sm:$0xf]
                %246 = vst [vmem:[%s230 + $0x54] sm:$0xf] %v245
                %v247 = vld [vmem:[%s229 + $0x120] sm:$0xf]
                %248 = vst [vmem:[%s230 + $0x60] sm:$0xf] %v247
                %v249 = vld [vmem:[%s229 + $0x144] sm:$0xf]
                %250 = vst [vmem:[%s230 + $0x6c] sm:$0xf] %v249
                %v251 = vld [vmem:[%s229 + $0x168] sm:$0xf]
                %252 = vst [vmem:[%s230 + $0x78] sm:$0xf] %v251
                %v253 = vld [vmem:[%s229 + $0x18c] sm:$0xf]
                %254 = vst [vmem:[%s230 + $0x84] sm:$0xf] %v253
                %v255 = vld [vmem:[%s229 + $0x1b0] sm:$0xf]
                %256 = vst [vmem:[%s230 + $0x90] sm:$0xf] %v255
                %v257 = vld [vmem:[%s229 + $0x1d4] sm:$0xf]
                %258 = vst [vmem:[%s230 + $0x9c] sm:$0xf] %v257
                %v259 = vld [vmem:[%s229 + $0x1f8] sm:$0xf]
                %260 = vst [vmem:[%s230 + $0xa8] sm:$0xf] %v259
                %v261 = vld [vmem:[%s229 + $0x21c] sm:$0xf]
                %262 = vst [vmem:[%s230 + $0xb4] sm:$0xf] %v261
              $region44: #{nfnet_forward.13} parent=31 // loop_footer
                %s228 = sadd.s32 1, %s224
              $region45: #{nfnet_forward.13} parent=31 // loop_footer_branch
                %223 = sbr.rel target = $region41
              $region46: #{nfnet_forward.13} parent=31 // loop_exit
                _
            $region32: #{nfnet_forward.13} parent=27 // pred_fallthru
              _
          $region28: #{nfnet_forward.13} parent=23 // pred_fallthru
            _
          %263 = vnop
        $region24: #{nfnet_forward.13} parent=19 // pred_fallthru
          _
        // Predicated region
        $region47: #{nfnet_forward.13} parent=19 // pred_check
          %p264 = pneg %p78
        $region48: #{nfnet_forward.13} parent=19 // pred_check_branch
          %266 = sbr.rel (%p264) target = $region50
        $region49: #{nfnet_forward.13} parent=19 // pred_region
          %s267 = smul.u32 48, %s18
          %p268 = scmp.lt.s32.totalorder %s267, 143
          %s269 = scalar_select %p268, %s267, 143
          %p270 = scmp.lt.s32.totalorder %s17, 0
          %s271 = scalar_select %p270, %s17, 0
          %s272 = sadd.s32 %s271, %s269
          %s273 = smul.addr %s272, 4
          %s274 = scalar_lea.vmem %s1, %s273
          %s275 = smul.u32 48, %s18
        $region50: #{nfnet_forward.13} parent=19 // pred_fallthru
          _
      $region20: #{nfnet_forward.13} parent=5 // pred_fallthru
        _
      %p276 = scmp.le.s32.totalorder 1, %s9
      %p277 = scmp.lt.s32.totalorder %s9, 4
      %p278 = pnand %p276, %p277
      %p279 = pneg %p278
      // Predicated region
      $region51: #{nfnet_forward.13} parent=5 // pred_check
        _
      $region52: #{nfnet_forward.13} parent=5 // pred_check_branch
        %281 = sbr.rel (%p278) target = $region54
      $region53: #{nfnet_forward.13} parent=5 // pred_region
        %s282 = ssub.s32 %s9, 1
        %s283 = sand.u32 %s43, 1
        %s284 = sand.u32 %s43, 1
        %s285 = smul.addr %s284, 192
        %s286 = scalar_lea.vmem [#allocation3], %s285
        // Predicated region
        $region55: #{nfnet_forward.13} parent=53 // pred_check
          %p287 = pneg %p56
        $region56: #{nfnet_forward.13} parent=53 // pred_check_branch
          %289 = sbr.rel (%p287) target = $region58
        $region57: #{nfnet_forward.13} parent=53 // pred_region
          _
        $region58: #{nfnet_forward.13} parent=53 // pred_fallthru
          _
        %s290 = sand.u32 %s43, 1
        %s291 = sand.u32 %s43, 1
        %s292 = smul.addr %s291, 192
        %s293 = scalar_lea.vmem [#allocation3], %s292
        %p294 = pneg %p56
        %p295 = pneg %p53
        %s296 = smul.u32 48, %s21
        %p297 = scmp.lt.s32.totalorder %s296, 143
        %s298 = scalar_select %p297, %s296, 143
        %p299 = scmp.lt.s32.totalorder %s20, 0
        %s300 = scalar_select %p299, %s20, 0
        %s301 = sadd.s32 %s300, %s298
        %s302 = smul.addr %s301, 4
        %s303 = scalar_lea.vmem %s1, %s302
        %p304 = pneg %p84
        %p305 = pneg %p81
        %p306 = scmp.lt.s32.totalorder %s20, 0
        %s307 = scalar_select %p306, %s20, 0
        %s308 = scalar_lea.vmem %s2, %s307
        %p309 = pneg %p110
        %p310 = pneg %p107
        %p311 = pneg %p138
        %p312 = pneg %p135
        %s313 = smul.u32 16, %s19
        %p314 = scmp.lt.s32.totalorder %s313, 15
        %s315 = scalar_select %p314, %s313, 15
        %p316 = scmp.lt.s32.totalorder %s20, 0
        %s317 = scalar_select %p316, %s20, 0
        %s318 = sadd.s32 %s317, %s315
        %s319 = smul.addr %s318, 4
        %s320 = scalar_lea.vmem %s3, %s319
        %s321 = smul.u32 16, %s19
        %s322 = smul.u32 3, %s21
        %s323 = smul.u32 48, %s21
        %p324 = scmp.lt.s32.totalorder %s323, 143
        %s325 = scalar_select %p324, %s323, 143
        %p326 = scmp.lt.s32.totalorder %s20, 0
        %s327 = scalar_select %p326, %s20, 0
        %s328 = sadd.s32 %s327, %s325
        %s329 = smul.addr %s328, 4
        %s330 = scalar_lea.vmem %s1, %s329
        %s331 = smul.u32 48, %s21
        %p332 = scmp.lt.s32.totalorder %s20, 0
        %s333 = scalar_select %p332, %s20, 0
        %s334 = scalar_lea.vmem %s2, %s333
        %s335 = smul.u32 16, %s19
        %p336 = scmp.lt.s32.totalorder %s335, 15
        %s337 = scalar_select %p336, %s335, 15
        %p338 = scmp.lt.s32.totalorder %s20, 0
        %s339 = scalar_select %p338, %s20, 0
        %s340 = sadd.s32 %s339, %s337
        %s341 = smul.addr %s340, 4
        %s342 = scalar_lea.vmem %s3, %s341
        %s343 = smul.u32 16, %s19
        %p345 = scmp.eq.s32.totalorder %s21, 0
        // Predicated region
        $region59: #{nfnet_forward.13} parent=53 // pred_check
          %p346 = pneg %p345
        $region60: #{nfnet_forward.13} parent=53 // pred_check_branch
          %348 = sbr.rel (%p346) target = $region62
        $region61: #{nfnet_forward.13} parent=53 // pred_region
          %349 = vst [vmem:[#allocation2] sm:$0xff] 0.0
          %350 = vst [vmem:[#allocation2 + $0x8] sm:$0xff] 0.0
          %351 = vst [vmem:[#allocation2 + $0x10] sm:$0xff] 0.0
          %352 = vst [vmem:[#allocation2 + $0x18] sm:$0xff] 0.0
          %353 = vst [vmem:[#allocation2 + $0x20] sm:$0xff] 0.0
          %354 = vst [vmem:[#allocation2 + $0x28] sm:$0xff] 0.0
          %355 = vst [vmem:[#allocation2 + $0x30] sm:$0xff] 0.0
          %356 = vst [vmem:[#allocation2 + $0x38] sm:$0xff] 0.0
          %357 = vst [vmem:[#allocation2 + $0x40] sm:$0xff] 0.0
          %358 = vst [vmem:[#allocation2 + $0x48] sm:$0xff] 0.0
          %359 = vst [vmem:[#allocation2 + $0x50] sm:$0xff] 0.0
          %360 = vst [vmem:[#allocation2 + $0x58] sm:$0xff] 0.0
          %361 = vst [vmem:[#allocation2 + $0x60] sm:$0xff] 0.0
          %362 = vst [vmem:[#allocation2 + $0x68] sm:$0xff] 0.0
          %363 = vst [vmem:[#allocation2 + $0x70] sm:$0xff] 0.0
          %364 = vst [vmem:[#allocation2 + $0x78] sm:$0xff] 0.0
        $region62: #{nfnet_forward.13} parent=53 // pred_fallthru
          _
        %v365 = vld [vmem:[%s286] sm:$0xff]
        %v366 = vld [vmem:[%s286 + $0x8] sm:$0xf]
        %v367 = vld [vmem:[%s286 + $0xc] sm:$0xff]
        %v368 = vld [vmem:[%s286 + $0x14] sm:$0xf]
        %v369 = vld [vmem:[%s286 + $0x18] sm:$0xff]
        %v370 = vld [vmem:[%s286 + $0x20] sm:$0xf]
        %v371 = vld [vmem:[%s286 + $0x24] sm:$0xff]
        %v372 = vld [vmem:[%s286 + $0x2c] sm:$0xf]
        %v373 = vld [vmem:[%s286 + $0x30] sm:$0xff]
        %v374 = vld [vmem:[%s286 + $0x38] sm:$0xf]
        %v375 = vld [vmem:[%s286 + $0x3c] sm:$0xff]
        %v376 = vld [vmem:[%s286 + $0x44] sm:$0xf]
        %v377 = vld [vmem:[%s286 + $0x48] sm:$0xff]
        %v378 = vld [vmem:[%s286 + $0x50] sm:$0xf]
        %v379 = vld [vmem:[%s286 + $0x54] sm:$0xff]
        %v380 = vld [vmem:[%s286 + $0x5c] sm:$0xf]
        %v381 = vld [vmem:[%s286 + $0x60] sm:$0xff]
        %v382 = vld [vmem:[%s286 + $0x68] sm:$0xf]
        %v383 = vld [vmem:[%s286 + $0x6c] sm:$0xff]
        %v384 = vld [vmem:[%s286 + $0x74] sm:$0xf]
        %v385 = vld [vmem:[%s286 + $0x78] sm:$0xff]
        %v386 = vld [vmem:[%s286 + $0x80] sm:$0xf]
        %v387 = vld [vmem:[%s286 + $0x84] sm:$0xff]
        %v388 = vld [vmem:[%s286 + $0x8c] sm:$0xf]
        %v389 = vld [vmem:[%s286 + $0x90] sm:$0xff]
        %v390 = vld [vmem:[%s286 + $0x98] sm:$0xf]
        %v391 = vld [vmem:[%s286 + $0x9c] sm:$0xff]
        %v392 = vld [vmem:[%s286 + $0xa4] sm:$0xf]
        %v393 = vld [vmem:[%s286 + $0xa8] sm:$0xff]
        %v394 = vld [vmem:[%s286 + $0xb0] sm:$0xf]
        %v395 = vld [vmem:[%s286 + $0xb4] sm:$0xff]
        %v396 = vld [vmem:[%s286 + $0xbc] sm:$0xf]
        %v397 = vld [vmem:[#allocation2] sm:$0xff]
        %v398 = vld [vmem:[#allocation2 + $0x8] sm:$0xff]
        %v399 = vld [vmem:[#allocation2 + $0x10] sm:$0xff]
        %v400 = vld [vmem:[#allocation2 + $0x18] sm:$0xff]
        %v401 = vld [vmem:[#allocation2 + $0x20] sm:$0xff]
        %v402 = vld [vmem:[#allocation2 + $0x28] sm:$0xff]
        %v403 = vld [vmem:[#allocation2 + $0x30] sm:$0xff]
        %v404 = vld [vmem:[#allocation2 + $0x38] sm:$0xff]
        %v405 = vld [vmem:[#allocation2 + $0x40] sm:$0xff]
        %v406 = vld [vmem:[#allocation2 + $0x48] sm:$0xff]
        %v407 = vld [vmem:[#allocation2 + $0x50] sm:$0xff]
        %v408 = vld [vmem:[#allocation2 + $0x58] sm:$0xff]
        %v409 = vld [vmem:[#allocation2 + $0x60] sm:$0xff]
        %v410 = vld [vmem:[#allocation2 + $0x68] sm:$0xff]
        %v411 = vld [vmem:[#allocation2 + $0x70] sm:$0xff]
        %v412 = vld [vmem:[#allocation2 + $0x78] sm:$0xff]
        %v413 = vld [vmem:[%s330] sm:$0xf]
        %v414 = vld [vmem:[%s330 + $0x4] sm:$0xf]
        %v415 = vld [vmem:[%s330 + $0x8] sm:$0xf]
        %v416 = vld [vmem:[%s330 + $0xc] sm:$0xf]
        %v417 = vld [vmem:[%s330 + $0x10] sm:$0xf]
        %v418 = vld [vmem:[%s330 + $0x14] sm:$0xf]
        %v419 = vld [vmem:[%s330 + $0x18] sm:$0xf]
        %v420 = vld [vmem:[%s330 + $0x1c] sm:$0xf]
        %v421 = vld [vmem:[%s330 + $0x20] sm:$0xf]
        %v422 = vld [vmem:[%s330 + $0x24] sm:$0xf]
        %v423 = vld [vmem:[%s330 + $0x28] sm:$0xf]
        %v424 = vld [vmem:[%s330 + $0x2c] sm:$0xf]
        %v425 = vld [vmem:[%s330 + $0x30] sm:$0xf]
        %v426 = vld [vmem:[%s330 + $0x34] sm:$0xf]
        %v427 = vld [vmem:[%s330 + $0x38] sm:$0xf]
        %v428 = vld [vmem:[%s330 + $0x3c] sm:$0xf]
        %v429 = vld [vmem:[%s330 + $0x40] sm:$0xf]
        %v430 = vld [vmem:[%s330 + $0x44] sm:$0xf]
        %v431 = vld [vmem:[%s330 + $0x48] sm:$0xf]
        %v432 = vld [vmem:[%s330 + $0x4c] sm:$0xf]
        %v433 = vld [vmem:[%s330 + $0x50] sm:$0xf]
        %v434 = vld [vmem:[%s330 + $0x54] sm:$0xf]
        %v435 = vld [vmem:[%s330 + $0x58] sm:$0xf]
        %v436 = vld [vmem:[%s330 + $0x5c] sm:$0xf]
        %v437 = vld [vmem:[%s330 + $0x60] sm:$0xf]
        %v438 = vld [vmem:[%s330 + $0x64] sm:$0xf]
        %v439 = vld [vmem:[%s330 + $0x68] sm:$0xf]
        %v440 = vld [vmem:[%s330 + $0x6c] sm:$0xf]
        %v441 = vld [vmem:[%s330 + $0x70] sm:$0xf]
        %v442 = vld [vmem:[%s330 + $0x74] sm:$0xf]
        %v443 = vld [vmem:[%s330 + $0x78] sm:$0xf]
        %v444 = vld [vmem:[%s330 + $0x7c] sm:$0xf]
        %v445 = vld [vmem:[%s330 + $0x80] sm:$0xf]
        %v446 = vld [vmem:[%s330 + $0x84] sm:$0xf]
        %v447 = vld [vmem:[%s330 + $0x88] sm:$0xf]
        %v448 = vld [vmem:[%s330 + $0x8c] sm:$0xf]
        %v449 = vld [vmem:[%s330 + $0x90] sm:$0xf]
        %v450 = vld [vmem:[%s330 + $0x94] sm:$0xf]
        %v451 = vld [vmem:[%s330 + $0x98] sm:$0xf]
        %v452 = vld [vmem:[%s330 + $0x9c] sm:$0xf]
        %v453 = vld [vmem:[%s330 + $0xa0] sm:$0xf]
        %v454 = vld [vmem:[%s330 + $0xa4] sm:$0xf]
        %v455 = vld [vmem:[%s330 + $0xa8] sm:$0xf]
        %v456 = vld [vmem:[%s330 + $0xac] sm:$0xf]
        %v457 = vld [vmem:[%s330 + $0xb0] sm:$0xf]
        %v458 = vld [vmem:[%s330 + $0xb4] sm:$0xf]
        %v459 = vld [vmem:[%s330 + $0xb8] sm:$0xf]
        %v460 = vld [vmem:[%s330 + $0xbc] sm:$0xf]
        %v493 = vunpack.c.l.b16 %v365
        %v494 = vunpack.c.h.b16 %v365
        %v495 = vunpack.c.l.b16 %v366
        %v496 = vunpack.c.l.b16 %v367
        %v497 = vunpack.c.h.b16 %v367
        %v498 = vunpack.c.l.b16 %v368
        %v499 = vunpack.c.l.b16 %v369
        %v500 = vunpack.c.h.b16 %v369
        %v501 = vunpack.c.l.b16 %v370
        %v502 = vunpack.c.l.b16 %v371
        %v503 = vunpack.c.h.b16 %v371
        %v504 = vunpack.c.l.b16 %v372
        %v505 = vunpack.c.l.b16 %v373
        %v506 = vunpack.c.h.b16 %v373
        %v507 = vunpack.c.l.b16 %v374
        %v508 = vunpack.c.l.b16 %v375
        %v509 = vunpack.c.h.b16 %v375
        %v510 = vunpack.c.l.b16 %v376
        %v511 = vunpack.c.l.b16 %v377
        %v512 = vunpack.c.h.b16 %v377
        %v513 = vunpack.c.l.b16 %v378
        %v514 = vunpack.c.l.b16 %v379
        %v515 = vunpack.c.h.b16 %v379
        %v516 = vunpack.c.l.b16 %v380
        %v517 = vunpack.c.l.b16 %v381
        %v518 = vunpack.c.h.b16 %v381
        %v519 = vunpack.c.l.b16 %v382
        %v520 = vunpack.c.l.b16 %v383
        %v521 = vunpack.c.h.b16 %v383
        %v522 = vunpack.c.l.b16 %v384
        %v523 = vunpack.c.l.b16 %v385
        %v524 = vunpack.c.h.b16 %v385
        %v525 = vunpack.c.l.b16 %v386
        %v526 = vunpack.c.l.b16 %v387
        %v527 = vunpack.c.h.b16 %v387
        %v528 = vunpack.c.l.b16 %v388
        %v529 = vunpack.c.l.b16 %v389
        %v530 = vunpack.c.h.b16 %v389
        %v531 = vunpack.c.l.b16 %v390
        %v532 = vunpack.c.l.b16 %v391
        %v533 = vunpack.c.h.b16 %v391
        %v534 = vunpack.c.l.b16 %v392
        %v535 = vunpack.c.l.b16 %v393
        %v536 = vunpack.c.h.b16 %v393
        %v537 = vunpack.c.l.b16 %v394
        %v538 = vunpack.c.l.b16 %v395
        %v539 = vunpack.c.h.b16 %v395
        %v540 = vunpack.c.l.b16 %v396
        %v541 = vpack.c.b16 %v496, %v493
        %v542 = vpack.c.b16 %v497, %v494
        %v543 = vpack.c.b16 %v498, %v495
        %v544 = vpack.c.b16 %v502, %v499
        %v545 = vpack.c.b16 %v503, %v500
        %v546 = vpack.c.b16 %v504, %v501
        %v547 = vpack.c.b16 %v508, %v505
        %v548 = vpack.c.b16 %v509, %v506
        %v549 = vpack.c.b16 %v510, %v507
        %v550 = vpack.c.b16 %v514, %v511
        %v551 = vpack.c.b16 %v515, %v512
        %v552 = vpack.c.b16 %v516, %v513
        %v553 = vpack.c.b16 %v520, %v517
        %v554 = vpack.c.b16 %v521, %v518
        %v555 = vpack.c.b16 %v522, %v519
        %v556 = vpack.c.b16 %v526, %v523
        %v557 = vpack.c.b16 %v527, %v524
        %v558 = vpack.c.b16 %v528, %v525
        %v559 = vpack.c.b16 %v532, %v529
        %v560 = vpack.c.b16 %v533, %v530
        %v561 = vpack.c.b16 %v534, %v531
        %v562 = vpack.c.b16 %v538, %v535
        %v563 = vpack.c.b16 %v539, %v536
        %v564 = vpack.c.b16 %v540, %v537
        %v637 = vunpack.c.l.b16 %v413
        %v638 = vunpack.c.l.b16 %v414
        %v639 = vunpack.c.l.b16 %v415
        %v640 = vunpack.c.l.b16 %v416
        %v641 = vunpack.c.l.b16 %v417
        %v642 = vunpack.c.l.b16 %v418
        %v643 = vunpack.c.l.b16 %v419
        %v644 = vunpack.c.l.b16 %v420
        %v645 = vunpack.c.l.b16 %v421
        %v646 = vunpack.c.l.b16 %v422
        %v647 = vunpack.c.l.b16 %v423
        %v648 = vunpack.c.l.b16 %v424
        %v649 = vunpack.c.l.b16 %v425
        %v650 = vunpack.c.l.b16 %v426
        %v651 = vunpack.c.l.b16 %v427
        %v652 = vunpack.c.l.b16 %v428
        %v653 = vunpack.c.l.b16 %v429
        %v654 = vunpack.c.l.b16 %v430
        %v655 = vunpack.c.l.b16 %v431
        %v656 = vunpack.c.l.b16 %v432
        %v657 = vunpack.c.l.b16 %v433
        %v658 = vunpack.c.l.b16 %v434
        %v659 = vunpack.c.l.b16 %v435
        %v660 = vunpack.c.l.b16 %v436
        %v661 = vunpack.c.l.b16 %v437
        %v662 = vunpack.c.l.b16 %v438
        %v663 = vunpack.c.l.b16 %v439
        %v664 = vunpack.c.l.b16 %v440
        %v665 = vunpack.c.l.b16 %v441
        %v666 = vunpack.c.l.b16 %v442
        %v667 = vunpack.c.l.b16 %v443
        %v668 = vunpack.c.l.b16 %v444
        %v669 = vunpack.c.l.b16 %v445
        %v670 = vunpack.c.l.b16 %v446
        %v671 = vunpack.c.l.b16 %v447
        %v672 = vunpack.c.l.b16 %v448
        %v673 = vunpack.c.l.b16 %v449
        %v674 = vunpack.c.l.b16 %v450
        %v675 = vunpack.c.l.b16 %v451
        %v676 = vunpack.c.l.b16 %v452
        %v677 = vunpack.c.l.b16 %v453
        %v678 = vunpack.c.l.b16 %v454
        %v679 = vunpack.c.l.b16 %v455
        %v680 = vunpack.c.l.b16 %v456
        %v681 = vunpack.c.l.b16 %v457
        %v682 = vunpack.c.l.b16 %v458
        %v683 = vunpack.c.l.b16 %v459
        %v684 = vunpack.c.l.b16 %v460
        %v685 = vpack.c.b16 %v638, %v637
        %v686 = vpack.c.b16 %v640, %v639
        %v687 = vpack.c.b16 %v642, %v641
        %v688 = vpack.c.b16 %v644, %v643
        %v689 = vpack.c.b16 %v646, %v645
        %v690 = vpack.c.b16 %v648, %v647
        %v691 = vpack.c.b16 %v650, %v649
        %v692 = vpack.c.b16 %v652, %v651
        %v693 = vpack.c.b16 %v654, %v653
        %v694 = vpack.c.b16 %v656, %v655
        %v695 = vpack.c.b16 %v658, %v657
        %v696 = vpack.c.b16 %v660, %v659
        %v697 = vpack.c.b16 %v662, %v661
        %v698 = vpack.c.b16 %v664, %v663
        %v699 = vpack.c.b16 %v666, %v665
        %v700 = vpack.c.b16 %v668, %v667
        %v701 = vpack.c.b16 %v670, %v669
        %v702 = vpack.c.b16 %v672, %v671
        %v703 = vpack.c.b16 %v674, %v673
        %v704 = vpack.c.b16 %v676, %v675
        %v705 = vpack.c.b16 %v678, %v677
        %v706 = vpack.c.b16 %v680, %v679
        %v707 = vpack.c.b16 %v682, %v681
        %v708 = vpack.c.b16 %v684, %v683
        %733 = vmatprep.subr.bf16.mxu0 0
        %734 = vmatpush1.bf16.msra.mxu0 %v685
        %735 = vmatprep.subr.bf16.mxu0 0
        %736 = vmatpush1.bf16.msra.mxu0 %v686
        %737 = vmatprep.subr.bf16.mxu0 0
        %738 = vmatpush1.bf16.msra.mxu0 %v687
        %739 = vmatprep.subr.bf16.mxu0 0
        %740 = vmatpush1.bf16.msra.mxu0 %v688
        %741 = vmatprep.subr.bf16.mxu0 0
        %742 = vmatpush1.bf16.msra.mxu0 %v689
        %743 = vmatprep.subr.bf16.mxu0 0
        %744 = vmatpush1.bf16.msra.mxu0 %v690
        %745 = vmatprep.subr.bf16.mxu0 0
        %746 = vmatpush1.bf16.msra.mxu0 %v691
        %747 = vmatprep.subr.bf16.mxu0 0
        %748 = vmatpush1.bf16.msra.mxu0 %v692
        %749 = vmatprep.subr.bf16.mxu0 0
        %750 = vmatpush1.bf16.msra.mxu0 %v693
        %751 = vmatprep.subr.bf16.mxu0 0
        %752 = vmatpush1.bf16.msra.mxu0 %v694
        %753 = vmatprep.subr.bf16.mxu0 0
        %754 = vmatpush1.bf16.msra.mxu0 %v695
        %755 = vmatprep.subr.bf16.mxu0 0
        %756 = vmatpush1.bf16.msra.mxu0 %v696
        %757 = vmatprep.subr.bf16.mxu0 0
        %758 = vmatpush1.bf16.msra.mxu0 %v697
        %759 = vmatprep.subr.bf16.mxu0 0
        %760 = vmatpush1.bf16.msra.mxu0 %v698
        %761 = vmatprep.subr.bf16.mxu0 0
        %762 = vmatpush1.bf16.msra.mxu0 %v699
        %763 = vmatprep.subr.bf16.mxu0 0
        %764 = vmatpush1.bf16.msra.mxu0 %v700
        %765 = vmatprep.mubr.bf16.mxu0 %v542
        %766 = vmatmul.mubr.bf16.gmra.mrb[0].mxu0 %v541
        %v767 = vpop.f32.mrb[0].mxu0
        %v768 = vadd.f32 0.0, %v767
        %v769 = vpop.f32.mrb[0].mxu0
        %v770 = vpop.f32.mrb[0].mxu0
        %v771 = vadd.f32 0.0, %v770
        %v772 = vpop.f32.mrb[0].mxu0
        %773 = vmatprep.mubr.bf16.mxu0 %v545
        %774 = vmatmul.mubr.bf16.gmra.mrb[0].mxu0 %v544
        %v775 = vpop.f32.mrb[0].mxu0
        %v776 = vadd.f32 0.0, %v775
        %v777 = vpop.f32.mrb[0].mxu0
        %v778 = vpop.f32.mrb[0].mxu0
        %v779 = vadd.f32 0.0, %v778
        %v780 = vpop.f32.mrb[0].mxu0
        %781 = vmatprep.mubr.bf16.mxu0 %v548
        %782 = vmatmul.mubr.bf16.gmra.mrb[0].mxu0 %v547
        %v783 = vpop.f32.mrb[0].mxu0
        %v784 = vadd.f32 0.0, %v783
        %v785 = vpop.f32.mrb[0].mxu0
        %v786 = vpop.f32.mrb[0].mxu0
        %v787 = vadd.f32 0.0, %v786
        %v788 = vpop.f32.mrb[0].mxu0
        %789 = vmatprep.mubr.bf16.mxu0 %v551
        %790 = vmatmul.mubr.bf16.gmra.mrb[0].mxu0 %v550
        %v791 = vpop.f32.mrb[0].mxu0
        %v792 = vadd.f32 0.0, %v791
        %v793 = vpop.f32.mrb[0].mxu0
        %v794 = vpop.f32.mrb[0].mxu0
        %v795 = vadd.f32 0.0, %v794
        %v796 = vpop.f32.mrb[0].mxu0
        %797 = vmatprep.mubr.bf16.mxu0 %v554
        %798 = vmatmul.mubr.bf16.gmra.mrb[0].mxu0 %v553
        %v799 = vpop.f32.mrb[0].mxu0
        %v800 = vadd.f32 0.0, %v799
        %v801 = vpop.f32.mrb[0].mxu0
        %v802 = vpop.f32.mrb[0].mxu0
        %v803 = vadd.f32 0.0, %v802
        %v804 = vpop.f32.mrb[0].mxu0
        %805 = vmatprep.mubr.bf16.mxu0 %v557
        %806 = vmatmul.mubr.bf16.gmra.mrb[0].mxu0 %v556
        %v807 = vpop.f32.mrb[0].mxu0
        %v808 = vadd.f32 0.0, %v807
        %v809 = vpop.f32.mrb[0].mxu0
        %v810 = vpop.f32.mrb[0].mxu0
        %v811 = vadd.f32 0.0, %v810
        %v812 = vpop.f32.mrb[0].mxu0
        %813 = vmatprep.mubr.bf16.mxu0 %v560
        %814 = vmatmul.mubr.bf16.gmra.mrb[0].mxu0 %v559
        %v815 = vpop.f32.mrb[0].mxu0
        %v816 = vadd.f32 0.0, %v815
        %v817 = vpop.f32.mrb[0].mxu0
        %v818 = vpop.f32.mrb[0].mxu0
        %v819 = vadd.f32 0.0, %v818
        %v820 = vpop.f32.mrb[0].mxu0
        %821 = vmatprep.mubr.bf16.mxu0 %v563
        %822 = vmatmul.mubr.bf16.gmra.mrb[0].mxu0 %v562
        %v823 = vpop.f32.mrb[0].mxu0
        %v824 = vadd.f32 0.0, %v823
        %v825 = vpop.f32.mrb[0].mxu0
        %v826 = vpop.f32.mrb[0].mxu0
        %v827 = vadd.f32 0.0, %v826
        %v828 = vpop.f32.mrb[0].mxu0
        %829 = vdwg.mxu0
        %830 = vmatprep.subr.bf16.mxu0 0
        %831 = vmatpush1.bf16.msra.mxu0 %v701
        %832 = vmatprep.subr.bf16.mxu0 0
        %833 = vmatpush1.bf16.msra.mxu0 %v702
        %834 = vmatprep.subr.bf16.mxu0 0
        %835 = vmatpush1.bf16.msra.mxu0 %v703
        %836 = vmatprep.subr.bf16.mxu0 0
        %837 = vmatpush1.bf16.msra.mxu0 %v704
        %838 = vmatprep.subr.bf16.mxu0 0
        %839 = vmatpush1.bf16.msra.mxu0 %v705
        %840 = vmatprep.subr.bf16.mxu0 0
        %841 = vmatpush1.bf16.msra.mxu0 %v706
        %842 = vmatprep.subr.bf16.mxu0 0
        %843 = vmatpush1.bf16.msra.mxu0 %v707
        %844 = vmatprep.subr.bf16.mxu0 0
        %845 = vmatpush1.bf16.msra.mxu0 %v708
        %846 = vmatprep.subr.bf16.mxu0 0
        %847 = vmatpush1.bf16.msra.mxu0 0
        %848 = vmatprep.subr.bf16.mxu0 0
        %849 = vmatpush1.bf16.msra.mxu0 0
        %850 = vmatprep.subr.bf16.mxu0 0
        %851 = vmatpush1.bf16.msra.mxu0 0
        %852 = vmatprep.subr.bf16.mxu0 0
        %853 = vmatpush1.bf16.msra.mxu0 0
        %854 = vmatprep.subr.bf16.mxu0 0
        %855 = vmatpush1.bf16.msra.mxu0 0
        %856 = vmatprep.subr.bf16.mxu0 0
        %857 = vmatpush1.bf16.msra.mxu0 0
        %858 = vmatprep.subr.bf16.mxu0 0
        %859 = vmatpush1.bf16.msra.mxu0 0
        %860 = vmatprep.subr.bf16.mxu0 0
        %861 = vmatpush1.bf16.msra.mxu0 0
        %862 = vmatprep.mubr.bf16.mxu0 0
        %863 = vmatmul.mubr.bf16.gmra.mrb[0].mxu0 %v543
        %v864 = vpop.f32.mrb[0].mxu0
        %v865 = vadd.f32 %v768, %v864
        %v866 = vpop.f32.mrb[0].mxu0
        %v867 = vpop.f32.mrb[0].mxu0
        %v868 = vadd.f32 %v771, %v867
        %v869 = vpop.f32.mrb[0].mxu0
        %870 = vmatprep.mubr.bf16.mxu0 0
        %871 = vmatmul.mubr.bf16.gmra.mrb[0].mxu0 %v546
        %v872 = vpop.f32.mrb[0].mxu0
        %v873 = vadd.f32 %v776, %v872
        %v874 = vpop.f32.mrb[0].mxu0
        %v875 = vpop.f32.mrb[0].mxu0
        %v876 = vadd.f32 %v779, %v875
        %v877 = vpop.f32.mrb[0].mxu0
        %878 = vmatprep.mubr.bf16.mxu0 0
        %879 = vmatmul.mubr.bf16.gmra.mrb[0].mxu0 %v549
        %v880 = vpop.f32.mrb[0].mxu0
        %v881 = vadd.f32 %v784, %v880
        %v882 = vpop.f32.mrb[0].mxu0
        %v883 = vpop.f32.mrb[0].mxu0
        %v884 = vadd.f32 %v787, %v883
        %v885 = vpop.f32.mrb[0].mxu0
        %886 = vmatprep.mubr.bf16.mxu0 0
        %887 = vmatmul.mubr.bf16.gmra.mrb[0].mxu0 %v552
        %v888 = vpop.f32.mrb[0].mxu0
        %v889 = vadd.f32 %v792, %v888
        %v890 = vpop.f32.mrb[0].mxu0
        %v891 = vpop.f32.mrb[0].mxu0
        %v892 = vadd.f32 %v795, %v891
        %v893 = vpop.f32.mrb[0].mxu0
        %894 = vmatprep.mubr.bf16.mxu0 0
        %895 = vmatmul.mubr.bf16.gmra.mrb[0].mxu0 %v555
        %v896 = vpop.f32.mrb[0].mxu0
        %v897 = vadd.f32 %v800, %v896
        %v898 = vpop.f32.mrb[0].mxu0
        %v899 = vpop.f32.mrb[0].mxu0
        %v900 = vadd.f32 %v803, %v899
        %v901 = vpop.f32.mrb[0].mxu0
        %902 = vmatprep.mubr.bf16.mxu0 0
        %903 = vmatmul.mubr.bf16.gmra.mrb[0].mxu0 %v558
        %v904 = vpop.f32.mrb[0].mxu0
        %v905 = vadd.f32 %v808, %v904
        %v906 = vpop.f32.mrb[0].mxu0
        %v907 = vpop.f32.mrb[0].mxu0
        %v908 = vadd.f32 %v811, %v907
        %v909 = vpop.f32.mrb[0].mxu0
        %910 = vmatprep.mubr.bf16.mxu0 0
        %911 = vmatmul.mubr.bf16.gmra.mrb[0].mxu0 %v561
        %v912 = vpop.f32.mrb[0].mxu0
        %v913 = vadd.f32 %v816, %v912
        %v914 = vpop.f32.mrb[0].mxu0
        %v915 = vpop.f32.mrb[0].mxu0
        %v916 = vadd.f32 %v819, %v915
        %v917 = vpop.f32.mrb[0].mxu0
        %918 = vmatprep.mubr.bf16.mxu0 0
        %919 = vmatmul.mubr.bf16.gmra.mrb[0].mxu0 %v564
        %v920 = vpop.f32.mrb[0].mxu0
        %v921 = vadd.f32 %v824, %v920
        %v922 = vpop.f32.mrb[0].mxu0
        %v923 = vpop.f32.mrb[0].mxu0
        %v924 = vadd.f32 %v827, %v923
        %v925 = vpop.f32.mrb[0].mxu0
        %926 = vdwg.mxu0
        %v927 = vadd.f32 %v397, %v865
        %v928 = vadd.f32 %v398, %v868
        %v929 = vadd.f32 %v399, %v873
        %v930 = vadd.f32 %v400, %v876
        %v931 = vadd.f32 %v401, %v881
        %v932 = vadd.f32 %v402, %v884
        %v933 = vadd.f32 %v403, %v889
        %v934 = vadd.f32 %v404, %v892
        %v935 = vadd.f32 %v405, %v897
        %v936 = vadd.f32 %v406, %v900
        %v937 = vadd.f32 %v407, %v905
        %v938 = vadd.f32 %v408, %v908
        %v939 = vadd.f32 %v409, %v913
        %v940 = vadd.f32 %v410, %v916
        %v941 = vadd.f32 %v411, %v921
        %v942 = vadd.f32 %v412, %v924
        %943 = vst [vmem:[#allocation2] sm:$0xff] %v927
        %944 = vst [vmem:[#allocation2 + $0x8] sm:$0xff] %v928
        %945 = vst [vmem:[#allocation2 + $0x10] sm:$0xff] %v929
        %946 = vst [vmem:[#allocation2 + $0x18] sm:$0xff] %v930
        %947 = vst [vmem:[#allocation2 + $0x20] sm:$0xff] %v931
        %948 = vst [vmem:[#allocation2 + $0x28] sm:$0xff] %v932
        %949 = vst [vmem:[#allocation2 + $0x30] sm:$0xff] %v933
        %950 = vst [vmem:[#allocation2 + $0x38] sm:$0xff] %v934
        %951 = vst [vmem:[#allocation2 + $0x40] sm:$0xff] %v935
        %952 = vst [vmem:[#allocation2 + $0x48] sm:$0xff] %v936
        %953 = vst [vmem:[#allocation2 + $0x50] sm:$0xff] %v937
        %954 = vst [vmem:[#allocation2 + $0x58] sm:$0xff] %v938
        %955 = vst [vmem:[#allocation2 + $0x60] sm:$0xff] %v939
        %956 = vst [vmem:[#allocation2 + $0x68] sm:$0xff] %v940
        %957 = vst [vmem:[#allocation2 + $0x70] sm:$0xff] %v941
        %958 = vst [vmem:[#allocation2 + $0x78] sm:$0xff] %v942
        %p959 = scmp.eq.s32.totalorder %s21, 2
        // Predicated region
        $region63: #{nfnet_forward.13} parent=53 // pred_check
          %p960 = pneg %p959
        $region64: #{nfnet_forward.13} parent=53 // pred_check_branch
          %962 = sbr.rel (%p960) target = $region66
        $region65: #{nfnet_forward.13} parent=53 // pred_region
          %v963 = vld [vmem:[#allocation2] sm:$0xff]
          %v964 = vld [vmem:[#allocation2 + $0x8] sm:$0xff]
          %v965 = vld [vmem:[#allocation2 + $0x10] sm:$0xff]
          %v966 = vld [vmem:[#allocation2 + $0x18] sm:$0xff]
          %v967 = vld [vmem:[#allocation2 + $0x20] sm:$0xff]
          %v968 = vld [vmem:[#allocation2 + $0x28] sm:$0xff]
          %v969 = vld [vmem:[#allocation2 + $0x30] sm:$0xff]
          %v970 = vld [vmem:[#allocation2 + $0x38] sm:$0xff]
          %v971 = vld [vmem:[#allocation2 + $0x40] sm:$0xff]
          %v972 = vld [vmem:[#allocation2 + $0x48] sm:$0xff]
          %v973 = vld [vmem:[#allocation2 + $0x50] sm:$0xff]
          %v974 = vld [vmem:[#allocation2 + $0x58] sm:$0xff]
          %v975 = vld [vmem:[#allocation2 + $0x60] sm:$0xff]
          %v976 = vld [vmem:[#allocation2 + $0x68] sm:$0xff]
          %v977 = vld [vmem:[#allocation2 + $0x70] sm:$0xff]
          %v978 = vld [vmem:[#allocation2 + $0x78] sm:$0xff]
          %v979 = vld [vmem:[%s334] sm:$0x1]
          %v981 = vlaneseq
          %v982 = vshrl.u32 %v981, 7
          %v983 = vsub.s32 0, %v982
          %v984 = vrot.slane %v979, %v983
          %v986 = vadd.f32 %v963, %v984
          %v987 = vadd.f32 %v964, %v984
          %v988 = vadd.f32 %v965, %v984
          %v989 = vadd.f32 %v966, %v984
          %v990 = vadd.f32 %v967, %v984
          %v991 = vadd.f32 %v968, %v984
          %v992 = vadd.f32 %v969, %v984
          %v993 = vadd.f32 %v970, %v984
          %v994 = vadd.f32 %v971, %v984
          %v995 = vadd.f32 %v972, %v984
          %v996 = vadd.f32 %v973, %v984
          %v997 = vadd.f32 %v974, %v984
          %v998 = vadd.f32 %v975, %v984
          %v999 = vadd.f32 %v976, %v984
          %v1000 = vadd.f32 %v977, %v984
          %v1001 = vadd.f32 %v978, %v984
          %v1002 = vmul.f32 %v986, 0.5
          %v1003 = vmul.f32 %v987, 0.5
          %v1004 = vmul.f32 %v988, 0.5
          %v1005 = vmul.f32 %v989, 0.5
          %v1006 = vmul.f32 %v990, 0.5
          %v1007 = vmul.f32 %v991, 0.5
          %v1008 = vmul.f32 %v992, 0.5
          %v1009 = vmul.f32 %v993, 0.5
          %v1010 = vmul.f32 %v994, 0.5
          %v1011 = vmul.f32 %v995, 0.5
          %v1012 = vmul.f32 %v996, 0.5
          %v1013 = vmul.f32 %v997, 0.5
          %v1014 = vmul.f32 %v998, 0.5
          %v1015 = vmul.f32 %v999, 0.5
          %v1016 = vmul.f32 %v1000, 0.5
          %v1017 = vmul.f32 %v1001, 0.5
          %v1018 = vmul.f32 %v986, 0.044715
          %v1019 = vmul.f32 %v987, 0.044715
          %v1020 = vmul.f32 %v988, 0.044715
          %v1021 = vmul.f32 %v989, 0.044715
          %v1022 = vmul.f32 %v990, 0.044715
          %v1023 = vmul.f32 %v991, 0.044715
          %v1024 = vmul.f32 %v992, 0.044715
          %v1025 = vmul.f32 %v993, 0.044715
          %v1026 = vmul.f32 %v994, 0.044715
          %v1027 = vmul.f32 %v995, 0.044715
          %v1028 = vmul.f32 %v996, 0.044715
          %v1029 = vmul.f32 %v997, 0.044715
          %v1030 = vmul.f32 %v998, 0.044715
          %v1031 = vmul.f32 %v999, 0.044715
          %v1032 = vmul.f32 %v1000, 0.044715
          %v1033 = vmul.f32 %v1001, 0.044715
          %v1034 = vmul.f32 %v1018, %v986
          %v1035 = vmul.f32 %v1019, %v987
          %v1036 = vmul.f32 %v1020, %v988
          %v1037 = vmul.f32 %v1021, %v989
          %v1038 = vmul.f32 %v1022, %v990
          %v1039 = vmul.f32 %v1023, %v991
          %v1040 = vmul.f32 %v1024, %v992
          %v1041 = vmul.f32 %v1025, %v993
          %v1042 = vmul.f32 %v1026, %v994
          %v1043 = vmul.f32 %v1027, %v995
          %v1044 = vmul.f32 %v1028, %v996
          %v1045 = vmul.f32 %v1029, %v997
          %v1046 = vmul.f32 %v1030, %v998
          %v1047 = vmul.f32 %v1031, %v999
          %v1048 = vmul.f32 %v1032, %v1000
          %v1049 = vmul.f32 %v1033, %v1001
          %v1050 = vmul.f32 %v1034, %v986
          %v1051 = vmul.f32 %v1035, %v987
          %v1052 = vmul.f32 %v1036, %v988
          %v1053 = vmul.f32 %v1037, %v989
          %v1054 = vmul.f32 %v1038, %v990
          %v1055 = vmul.f32 %v1039, %v991
          %v1056 = vmul.f32 %v1040, %v992
          %v1057 = vmul.f32 %v1041, %v993
          %v1058 = vmul.f32 %v1042, %v994
          %v1059 = vmul.f32 %v1043, %v995
          %v1060 = vmul.f32 %v1044, %v996
          %v1061 = vmul.f32 %v1045, %v997
          %v1062 = vmul.f32 %v1046, %v998
          %v1063 = vmul.f32 %v1047, %v999
          %v1064 = vmul.f32 %v1048, %v1000
          %v1065 = vmul.f32 %v1049, %v1001
          %v1066 = vadd.f32 %v986, %v1050
          %v1067 = vadd.f32 %v987, %v1051
          %v1068 = vadd.f32 %v988, %v1052
          %v1069 = vadd.f32 %v989, %v1053
          %v1070 = vadd.f32 %v990, %v1054
          %v1071 = vadd.f32 %v991, %v1055
          %v1072 = vadd.f32 %v992, %v1056
          %v1073 = vadd.f32 %v993, %v1057
          %v1074 = vadd.f32 %v994, %v1058
          %v1075 = vadd.f32 %v995, %v1059
          %v1076 = vadd.f32 %v996, %v1060
          %v1077 = vadd.f32 %v997, %v1061
          %v1078 = vadd.f32 %v998, %v1062
          %v1079 = vadd.f32 %v999, %v1063
          %v1080 = vadd.f32 %v1000, %v1064
          %v1081 = vadd.f32 %v1001, %v1065
          %v1082 = vmul.f32 %v1066, 0.7978846
          %v1083 = vmul.f32 %v1067, 0.7978846
          %v1084 = vmul.f32 %v1068, 0.7978846
          %v1085 = vmul.f32 %v1069, 0.7978846
          %v1086 = vmul.f32 %v1070, 0.7978846
          %v1087 = vmul.f32 %v1071, 0.7978846
          %v1088 = vmul.f32 %v1072, 0.7978846
          %v1089 = vmul.f32 %v1073, 0.7978846
          %v1090 = vmul.f32 %v1074, 0.7978846
          %v1091 = vmul.f32 %v1075, 0.7978846
          %v1092 = vmul.f32 %v1076, 0.7978846
          %v1093 = vmul.f32 %v1077, 0.7978846
          %v1094 = vmul.f32 %v1078, 0.7978846
          %v1095 = vmul.f32 %v1079, 0.7978846
          %v1096 = vmul.f32 %v1080, 0.7978846
          %v1097 = vmul.f32 %v1081, 0.7978846
          %v1098 = vtanh.pop %v1082
          %v1099 = vtanh.pop %v1083
          %v1100 = vtanh.pop %v1084
          %v1101 = vtanh.pop %v1085
          %v1102 = vtanh.pop %v1086
          %v1103 = vtanh.pop %v1087
          %v1104 = vtanh.pop %v1088
          %v1105 = vtanh.pop %v1089
          %v1106 = vtanh.pop %v1090
          %v1107 = vtanh.pop %v1091
          %v1108 = vtanh.pop %v1092
          %v1109 = vtanh.pop %v1093
          %v1110 = vtanh.pop %v1094
          %v1111 = vtanh.pop %v1095
          %v1112 = vtanh.pop %v1096
          %v1113 = vtanh.pop %v1097
          %v1114 = vadd.f32 %v1098, 1.0
          %v1115 = vadd.f32 %v1099, 1.0
          %v1116 = vadd.f32 %v1100, 1.0
          %v1117 = vadd.f32 %v1101, 1.0
          %v1118 = vadd.f32 %v1102, 1.0
          %v1119 = vadd.f32 %v1103, 1.0
          %v1120 = vadd.f32 %v1104, 1.0
          %v1121 = vadd.f32 %v1105, 1.0
          %v1122 = vadd.f32 %v1106, 1.0
          %v1123 = vadd.f32 %v1107, 1.0
          %v1124 = vadd.f32 %v1108, 1.0
          %v1125 = vadd.f32 %v1109, 1.0
          %v1126 = vadd.f32 %v1110, 1.0
          %v1127 = vadd.f32 %v1111, 1.0
          %v1128 = vadd.f32 %v1112, 1.0
          %v1129 = vadd.f32 %v1113, 1.0
          %v1130 = vmul.f32 %v1002, %v1114
          %v1131 = vmul.f32 %v1003, %v1115
          %v1132 = vmul.f32 %v1004, %v1116
          %v1133 = vmul.f32 %v1005, %v1117
          %v1134 = vmul.f32 %v1006, %v1118
          %v1135 = vmul.f32 %v1007, %v1119
          %v1136 = vmul.f32 %v1008, %v1120
          %v1137 = vmul.f32 %v1009, %v1121
          %v1138 = vmul.f32 %v1010, %v1122
          %v1139 = vmul.f32 %v1011, %v1123
          %v1140 = vmul.f32 %v1012, %v1124
          %v1141 = vmul.f32 %v1013, %v1125
          %v1142 = vmul.f32 %v1014, %v1126
          %v1143 = vmul.f32 %v1015, %v1127
          %v1144 = vmul.f32 %v1016, %v1128
          %v1145 = vmul.f32 %v1017, %v1129
          %v1146 = vmul.f32 %v1130, 1.7015043
          %v1147 = vmul.f32 %v1131, 1.7015043
          %v1148 = vmul.f32 %v1132, 1.7015043
          %v1149 = vmul.f32 %v1133, 1.7015043
          %v1150 = vmul.f32 %v1134, 1.7015043
          %v1151 = vmul.f32 %v1135, 1.7015043
          %v1152 = vmul.f32 %v1136, 1.7015043
          %v1153 = vmul.f32 %v1137, 1.7015043
          %v1154 = vmul.f32 %v1138, 1.7015043
          %v1155 = vmul.f32 %v1139, 1.7015043
          %v1156 = vmul.f32 %v1140, 1.7015043
          %v1157 = vmul.f32 %v1141, 1.7015043
          %v1158 = vmul.f32 %v1142, 1.7015043
          %v1159 = vmul.f32 %v1143, 1.7015043
          %v1160 = vmul.f32 %v1144, 1.7015043
          %v1161 = vmul.f32 %v1145, 1.7015043
          %v1162 = vpack.c.bf16 %v1147, %v1146
          %v1163 = vpack.c.bf16 %v1149, %v1148
          %v1164 = vpack.c.bf16 %v1151, %v1150
          %v1165 = vpack.c.bf16 %v1153, %v1152
          %v1166 = vpack.c.bf16 %v1155, %v1154
          %v1167 = vpack.c.bf16 %v1157, %v1156
          %v1168 = vpack.c.bf16 %v1159, %v1158
          %v1169 = vpack.c.bf16 %v1161, %v1160
          %v1178 = vunpack.c.l.b16 %v1162
          %v1179 = vunpack.c.h.b16 %v1162
          %v1180 = vunpack.c.l.b16 %v1163
          %v1181 = vunpack.c.h.b16 %v1163
          %v1182 = vunpack.c.l.b16 %v1164
          %v1183 = vunpack.c.h.b16 %v1164
          %v1184 = vunpack.c.l.b16 %v1165
          %v1185 = vunpack.c.h.b16 %v1165
          %v1186 = vunpack.c.l.b16 %v1166
          %v1187 = vunpack.c.h.b16 %v1166
          %v1188 = vunpack.c.l.b16 %v1167
          %v1189 = vunpack.c.h.b16 %v1167
          %v1190 = vunpack.c.l.b16 %v1168
          %v1191 = vunpack.c.h.b16 %v1168
          %v1192 = vunpack.c.l.b16 %v1169
          %v1193 = vunpack.c.h.b16 %v1169
          %v1194 = vpack.c.b16 %v1178, %v1178
          %v1195 = vpack.c.b16 %v1179, %v1179
          %v1196 = vpack.c.b16 %v1180, %v1180
          %v1197 = vpack.c.b16 %v1181, %v1181
          %v1198 = vpack.c.b16 %v1182, %v1182
          %v1199 = vpack.c.b16 %v1183, %v1183
          %v1200 = vpack.c.b16 %v1184, %v1184
          %v1201 = vpack.c.b16 %v1185, %v1185
          %v1202 = vpack.c.b16 %v1186, %v1186
          %v1203 = vpack.c.b16 %v1187, %v1187
          %v1204 = vpack.c.b16 %v1188, %v1188
          %v1205 = vpack.c.b16 %v1189, %v1189
          %v1206 = vpack.c.b16 %v1190, %v1190
          %v1207 = vpack.c.b16 %v1191, %v1191
          %v1208 = vpack.c.b16 %v1192, %v1192
          %v1209 = vpack.c.b16 %v1193, %v1193
          %1226 = vst [vmem:[%s342] sm:$0xf] %v1194
          %1227 = vst [vmem:[%s342 + $0x4] sm:$0xf] %v1195
          %1228 = vst [vmem:[%s342 + $0x8] sm:$0xf] %v1196
          %1229 = vst [vmem:[%s342 + $0xc] sm:$0xf] %v1197
          %1230 = vst [vmem:[%s342 + $0x10] sm:$0xf] %v1198
          %1231 = vst [vmem:[%s342 + $0x14] sm:$0xf] %v1199
          %1232 = vst [vmem:[%s342 + $0x18] sm:$0xf] %v1200
          %1233 = vst [vmem:[%s342 + $0x1c] sm:$0xf] %v1201
          %1234 = vst [vmem:[%s342 + $0x20] sm:$0xf] %v1202
          %1235 = vst [vmem:[%s342 + $0x24] sm:$0xf] %v1203
          %1236 = vst [vmem:[%s342 + $0x28] sm:$0xf] %v1204
          %1237 = vst [vmem:[%s342 + $0x2c] sm:$0xf] %v1205
          %1238 = vst [vmem:[%s342 + $0x30] sm:$0xf] %v1206
          %1239 = vst [vmem:[%s342 + $0x34] sm:$0xf] %v1207
          %1240 = vst [vmem:[%s342 + $0x38] sm:$0xf] %v1208
          %1241 = vst [vmem:[%s342 + $0x3c] sm:$0xf] %v1209
        $region66: #{nfnet_forward.13} parent=53 // pred_fallthru
          _
        %s1242 = smul.u32 16, %s19
        %p1243 = scmp.lt.s32.totalorder %s1242, 15
        %s1244 = scalar_select %p1243, %s1242, 15
        %p1245 = scmp.lt.s32.totalorder %s20, 0
        %s1246 = scalar_select %p1245, %s20, 0
        %s1247 = sadd.s32 %s1246, %s1244
        %s1248 = smul.addr %s1247, 4
        %s1249 = scalar_lea.vmem %s3, %s1248
        // Predicated region
        $region67: #{nfnet_forward.13} parent=53 // pred_check
          %p1250 = pneg %p135
        $region68: #{nfnet_forward.13} parent=53 // pred_check_branch
          %1252 = sbr.rel (%p1250) target = $region70
        $region69: #{nfnet_forward.13} parent=53 // pred_region
          %s1253 = smul.u32 16, %s19
        $region70: #{nfnet_forward.13} parent=53 // pred_fallthru
          _
        // Predicated region
        $region71: #{nfnet_forward.13} parent=53 // pred_check
          %p1254 = pneg %p135
        $region72: #{nfnet_forward.13} parent=53 // pred_check_branch
          %1256 = sbr.rel (%p1254) target = $region74
        $region73: #{nfnet_forward.13} parent=53 // pred_region
          %s1257 = smul.u32 16, %s19
          %p1258 = scmp.lt.s32.totalorder %s1257, 15
          %s1259 = scalar_select %p1258, %s1257, 15
          %p1260 = scmp.lt.s32.totalorder %s20, 0
          %s1261 = scalar_select %p1260, %s20, 0
          %s1262 = sadd.s32 %s1261, %s1259
          %s1263 = smul.addr %s1262, 4
          %s1264 = scalar_lea.vmem %s3, %s1263
        $region74: #{nfnet_forward.13} parent=53 // pred_fallthru
          _
      $region54: #{nfnet_forward.13} parent=5 // pred_fallthru
        _
      %p1265 = scmp.le.s32.totalorder 2, %s9
      // Predicated region
      $region75: #{nfnet_forward.13} parent=5 // pred_check
        %p1266 = pneg %p1265
      $region76: #{nfnet_forward.13} parent=5 // pred_check_branch
        %1268 = sbr.rel (%p1266) target = $region78
      $region77: #{nfnet_forward.13} parent=5 // pred_region
        %s1269 = ssub.s32 %s9, 2
      $region78: #{nfnet_forward.13} parent=5 // pred_fallthru
        _
    $region6: #{nfnet_forward.13} parent=1 // loop_footer
      %s13 = sadd.s32 1, %s9
    $region7: #{nfnet_forward.13} parent=1 // loop_footer_branch
      %8 = sbr.rel target = $region3
    $region8: #{nfnet_forward.13} parent=1 // loop_exit
      _

// kernel: nfnet_forward.15
$region0: #{nfnet_forward.15}
  #allocation0 [shape = 'u32[]', space=smem, size = 0x4, offset = 0x4, fixed_abs, tag = 'smem constant byte address 0x4 - core index']
  #allocation1 [shape = 'u32[144,128]{1,0:T(1,128)}', space=vmem, size = 0x12000, scoped, tag = 'internal scratch']
  #allocation2 [shape = 'f32[128,128]{1,0:T(8,128)}', space=vmem, size = 0x10000, scoped, tag = 'scratch operand']
  %s0 = inlined_call_operand.vmem [shape: bf16[128,128], index: 0, kind: input, shape index: {}]
  %s1 = inlined_call_operand.vmem [shape: bf16[128,128], index: 1, kind: input, shape index: {}]
  %s2 = inlined_call_operand.vmem [shape: f32[1,128], index: 2, kind: input, shape index: {}]
  %s3 = inlined_call_operand.vmem [shape: bf16[128,128], index: 3, kind: output, shape index: {}]
  %s4 = sld [smem:[#allocation0]]
  $region30: #{nfnet_forward.15} parent=0
    _
  %s6 = ssub.s32 1, %s4
  %s7 = scalar_select 0, %s6, %s4
  // Predicated region
  $region2: #{nfnet_forward.15} parent=0 // pred_check
    _
  $region3: #{nfnet_forward.15} parent=0 // pred_check_branch
    %9 = sbr.rel (0) target = $region5
  $region4: #{nfnet_forward.15} parent=0 // pred_region
    _
  $region5: #{nfnet_forward.15} parent=0 // pred_fallthru
    _
  // Predicated region
  $region6: #{nfnet_forward.15} parent=0 // pred_check
    _
  $region7: #{nfnet_forward.15} parent=0 // pred_check_branch
    %11 = sbr.rel (0) target = $region9
  $region8: #{nfnet_forward.15} parent=0 // pred_region
    _
  $region9: #{nfnet_forward.15} parent=0 // pred_fallthru
    _
  // Predicated region
  $region10: #{nfnet_forward.15} parent=0 // pred_check
    _
  $region11: #{nfnet_forward.15} parent=0 // pred_check_branch
    %13 = sbr.rel (0) target = $region13
  $region12: #{nfnet_forward.15} parent=0 // pred_region
    _
  $region13: #{nfnet_forward.15} parent=0 // pred_fallthru
    _
  %p15 = scmp.eq.s32.totalorder 0, 0
  // Predicated region
  $region14: #{nfnet_forward.15} parent=0 // pred_check
    %p16 = pneg %p15
  $region15: #{nfnet_forward.15} parent=0 // pred_check_branch
    %18 = sbr.rel (%p16) target = $region17
  $region16: #{nfnet_forward.15} parent=0 // pred_region
    %19 = vst [vmem:[#allocation2] sm:$0xff] 0.0
    %20 = vst [vmem:[#allocation2 + $0x8] sm:$0xff] 0.0
    %21 = vst [vmem:[#allocation2 + $0x10] sm:$0xff] 0.0
    %22 = vst [vmem:[#allocation2 + $0x18] sm:$0xff] 0.0
    %23 = vst [vmem:[#allocation2 + $0x20] sm:$0xff] 0.0
    %24 = vst [vmem:[#allocation2 + $0x28] sm:$0xff] 0.0
    %25 = vst [vmem:[#allocation2 + $0x30] sm:$0xff] 0.0
    %26 = vst [vmem:[#allocation2 + $0x38] sm:$0xff] 0.0
    %27 = vst [vmem:[#allocation2 + $0x40] sm:$0xff] 0.0
    %28 = vst [vmem:[#allocation2 + $0x48] sm:$0xff] 0.0
    %29 = vst [vmem:[#allocation2 + $0x50] sm:$0xff] 0.0
    %30 = vst [vmem:[#allocation2 + $0x58] sm:$0xff] 0.0
    %31 = vst [vmem:[#allocation2 + $0x60] sm:$0xff] 0.0
    %32 = vst [vmem:[#allocation2 + $0x68] sm:$0xff] 0.0
    %33 = vst [vmem:[#allocation2 + $0x70] sm:$0xff] 0.0
    %34 = vst [vmem:[#allocation2 + $0x78] sm:$0xff] 0.0
  $region17: #{nfnet_forward.15} parent=0 // pred_fallthru
    _
  %v35 = vld [vmem:[%s0] sm:$0xf]
  %v36 = vld [vmem:[%s0 + $0x4] sm:$0xf]
  %v37 = vld [vmem:[%s0 + $0x8] sm:$0xf]
  %v38 = vld [vmem:[%s0 + $0xc] sm:$0xf]
  %v39 = vld [vmem:[%s0 + $0x10] sm:$0xf]
  %v40 = vld [vmem:[%s0 + $0x14] sm:$0xf]
  %v41 = vld [vmem:[%s0 + $0x18] sm:$0xf]
  %v42 = vld [vmem:[%s0 + $0x1c] sm:$0xf]
  %v43 = vld [vmem:[%s0 + $0x20] sm:$0xf]
  %v44 = vld [vmem:[%s0 + $0x24] sm:$0xf]
  %v45 = vld [vmem:[%s0 + $0x28] sm:$0xf]
  %v46 = vld [vmem:[%s0 + $0x2c] sm:$0xf]
  %v47 = vld [vmem:[%s0 + $0x30] sm:$0xf]
  %v48 = vld [vmem:[%s0 + $0x34] sm:$0xf]
  %v49 = vld [vmem:[%s0 + $0x38] sm:$0xf]
  %v50 = vld [vmem:[%s0 + $0x3c] sm:$0xf]
  %v51 = vld [vmem:[#allocation2] sm:$0xff]
  %v52 = vld [vmem:[#allocation2 + $0x8] sm:$0xff]
  %v53 = vld [vmem:[#allocation2 + $0x10] sm:$0xff]
  %v54 = vld [vmem:[#allocation2 + $0x18] sm:$0xff]
  %v55 = vld [vmem:[#allocation2 + $0x20] sm:$0xff]
  %v56 = vld [vmem:[#allocation2 + $0x28] sm:$0xff]
  %v57 = vld [vmem:[#allocation2 + $0x30] sm:$0xff]
  %v58 = vld [vmem:[#allocation2 + $0x38] sm:$0xff]
  %v59 = vld [vmem:[#allocation2 + $0x40] sm:$0xff]
  %v60 = vld [vmem:[#allocation2 + $0x48] sm:$0xff]
  %v61 = vld [vmem:[#allocation2 + $0x50] sm:$0xff]
  %v62 = vld [vmem:[#allocation2 + $0x58] sm:$0xff]
  %v63 = vld [vmem:[#allocation2 + $0x60] sm:$0xff]
  %v64 = vld [vmem:[#allocation2 + $0x68] sm:$0xff]
  %v65 = vld [vmem:[#allocation2 + $0x70] sm:$0xff]
  %v66 = vld [vmem:[#allocation2 + $0x78] sm:$0xff]
  %v67 = vld [vmem:[%s1] sm:$0xf]
  %v68 = vld [vmem:[%s1 + $0x4] sm:$0xf]
  %v69 = vld [vmem:[%s1 + $0x8] sm:$0xf]
  %v70 = vld [vmem:[%s1 + $0xc] sm:$0xf]
  %v71 = vld [vmem:[%s1 + $0x10] sm:$0xf]
  %v72 = vld [vmem:[%s1 + $0x14] sm:$0xf]
  %v73 = vld [vmem:[%s1 + $0x18] sm:$0xf]
  %v74 = vld [vmem:[%s1 + $0x1c] sm:$0xf]
  %v75 = vld [vmem:[%s1 + $0x20] sm:$0xf]
  %v76 = vld [vmem:[%s1 + $0x24] sm:$0xf]
  %v77 = vld [vmem:[%s1 + $0x28] sm:$0xf]
  %v78 = vld [vmem:[%s1 + $0x2c] sm:$0xf]
  %v79 = vld [vmem:[%s1 + $0x30] sm:$0xf]
  %v80 = vld [vmem:[%s1 + $0x34] sm:$0xf]
  %v81 = vld [vmem:[%s1 + $0x38] sm:$0xf]
  %v82 = vld [vmem:[%s1 + $0x3c] sm:$0xf]
  %v99 = vunpack.c.l.b16 %v35
  %v100 = vunpack.c.l.b16 %v36
  %v101 = vunpack.c.l.b16 %v37
  %v102 = vunpack.c.l.b16 %v38
  %v103 = vunpack.c.l.b16 %v39
  %v104 = vunpack.c.l.b16 %v40
  %v105 = vunpack.c.l.b16 %v41
  %v106 = vunpack.c.l.b16 %v42
  %v107 = vunpack.c.l.b16 %v43
  %v108 = vunpack.c.l.b16 %v44
  %v109 = vunpack.c.l.b16 %v45
  %v110 = vunpack.c.l.b16 %v46
  %v111 = vunpack.c.l.b16 %v47
  %v112 = vunpack.c.l.b16 %v48
  %v113 = vunpack.c.l.b16 %v49
  %v114 = vunpack.c.l.b16 %v50
  %v115 = vpack.c.b16 %v100, %v99
  %v116 = vpack.c.b16 %v102, %v101
  %v117 = vpack.c.b16 %v104, %v103
  %v118 = vpack.c.b16 %v106, %v105
  %v119 = vpack.c.b16 %v108, %v107
  %v120 = vpack.c.b16 %v110, %v109
  %v121 = vpack.c.b16 %v112, %v111
  %v122 = vpack.c.b16 %v114, %v113
  %v147 = vunpack.c.l.b16 %v67
  %v148 = vunpack.c.l.b16 %v68
  %v149 = vunpack.c.l.b16 %v69
  %v150 = vunpack.c.l.b16 %v70
  %v151 = vunpack.c.l.b16 %v71
  %v152 = vunpack.c.l.b16 %v72
  %v153 = vunpack.c.l.b16 %v73
  %v154 = vunpack.c.l.b16 %v74
  %v155 = vunpack.c.l.b16 %v75
  %v156 = vunpack.c.l.b16 %v76
  %v157 = vunpack.c.l.b16 %v77
  %v158 = vunpack.c.l.b16 %v78
  %v159 = vunpack.c.l.b16 %v79
  %v160 = vunpack.c.l.b16 %v80
  %v161 = vunpack.c.l.b16 %v81
  %v162 = vunpack.c.l.b16 %v82
  %v163 = vpack.c.b16 %v148, %v147
  %v164 = vpack.c.b16 %v150, %v149
  %v165 = vpack.c.b16 %v152, %v151
  %v166 = vpack.c.b16 %v154, %v153
  %v167 = vpack.c.b16 %v156, %v155
  %v168 = vpack.c.b16 %v158, %v157
  %v169 = vpack.c.b16 %v160, %v159
  %v170 = vpack.c.b16 %v162, %v161
  %179 = vmatprep.subr.bf16.mxu0 0
  %180 = vmatpush1.bf16.msra.mxu0 %v163
  %181 = vmatprep.subr.bf16.mxu0 0
  %182 = vmatpush1.bf16.msra.mxu0 %v164
  %183 = vmatprep.subr.bf16.mxu0 0
  %184 = vmatpush1.bf16.msra.mxu0 %v165
  %185 = vmatprep.subr.bf16.mxu0 0
  %186 = vmatpush1.bf16.msra.mxu0 %v166
  %187 = vmatprep.subr.bf16.mxu0 0
  %188 = vmatpush1.bf16.msra.mxu0 %v167
  %189 = vmatprep.subr.bf16.mxu0 0
  %190 = vmatpush1.bf16.msra.mxu0 %v168
  %191 = vmatprep.subr.bf16.mxu0 0
  %192 = vmatpush1.bf16.msra.mxu0 %v169
  %193 = vmatprep.subr.bf16.mxu0 0
  %194 = vmatpush1.bf16.msra.mxu0 %v170
  %195 = vmatprep.subr.bf16.mxu0 0
  %196 = vmatpush1.bf16.msra.mxu0 0
  %197 = vmatprep.subr.bf16.mxu0 0
  %198 = vmatpush1.bf16.msra.mxu0 0
  %199 = vmatprep.subr.bf16.mxu0 0
  %200 = vmatpush1.bf16.msra.mxu0 0
  %201 = vmatprep.subr.bf16.mxu0 0
  %202 = vmatpush1.bf16.msra.mxu0 0
  %203 = vmatprep.subr.bf16.mxu0 0
  %204 = vmatpush1.bf16.msra.mxu0 0
  %205 = vmatprep.subr.bf16.mxu0 0
  %206 = vmatpush1.bf16.msra.mxu0 0
  %207 = vmatprep.subr.bf16.mxu0 0
  %208 = vmatpush1.bf16.msra.mxu0 0
  %209 = vmatprep.subr.bf16.mxu0 0
  %210 = vmatpush1.bf16.msra.mxu0 0
  %211 = vmatprep.mubr.bf16.mxu0 0
  %212 = vmatmul.mubr.bf16.gmra.mrb[0].mxu0 %v115
  %v213 = vpop.f32.mrb[0].mxu0
  %v214 = vadd.f32 0.0, %v213
  %v215 = vpop.f32.mrb[0].mxu0
  %v216 = vpop.f32.mrb[0].mxu0
  %v217 = vadd.f32 0.0, %v216
  %v218 = vpop.f32.mrb[0].mxu0
  %219 = vmatprep.mubr.bf16.mxu0 0
  %220 = vmatmul.mubr.bf16.gmra.mrb[0].mxu0 %v116
  %v221 = vpop.f32.mrb[0].mxu0
  %v222 = vadd.f32 0.0, %v221
  %v223 = vpop.f32.mrb[0].mxu0
  %v224 = vpop.f32.mrb[0].mxu0
  %v225 = vadd.f32 0.0, %v224
  %v226 = vpop.f32.mrb[0].mxu0
  %227 = vmatprep.mubr.bf16.mxu0 0
  %228 = vmatmul.mubr.bf16.gmra.mrb[0].mxu0 %v117
  %v229 = vpop.f32.mrb[0].mxu0
  %v230 = vadd.f32 0.0, %v229
  %v231 = vpop.f32.mrb[0].mxu0
  %v232 = vpop.f32.mrb[0].mxu0
  %v233 = vadd.f32 0.0, %v232
  %v234 = vpop.f32.mrb[0].mxu0
  %235 = vmatprep.mubr.bf16.mxu0 0
  %236 = vmatmul.mubr.bf16.gmra.mrb[0].mxu0 %v118
  %v237 = vpop.f32.mrb[0].mxu0
  %v238 = vadd.f32 0.0, %v237
  %v239 = vpop.f32.mrb[0].mxu0
  %v240 = vpop.f32.mrb[0].mxu0
  %v241 = vadd.f32 0.0, %v240
  %v242 = vpop.f32.mrb[0].mxu0
  %243 = vmatprep.mubr.bf16.mxu0 0
  %244 = vmatmul.mubr.bf16.gmra.mrb[0].mxu0 %v119
  %v245 = vpop.f32.mrb[0].mxu0
  %v246 = vadd.f32 0.0, %v245
  %v247 = vpop.f32.mrb[0].mxu0
  %v248 = vpop.f32.mrb[0].mxu0
  %v249 = vadd.f32 0.0, %v248
  %v250 = vpop.f32.mrb[0].mxu0
  %251 = vmatprep.mubr.bf16.mxu0 0
  %252 = vmatmul.mubr.bf16.gmra.mrb[0].mxu0 %v120
  %v253 = vpop.f32.mrb[0].mxu0
  %v254 = vadd.f32 0.0, %v253
  %v255 = vpop.f32.mrb[0].mxu0
  %v256 = vpop.f32.mrb[0].mxu0
  %v257 = vadd.f32 0.0, %v256
  %v258 = vpop.f32.mrb[0].mxu0
  %259 = vmatprep.mubr.bf16.mxu0 0
  %260 = vmatmul.mubr.bf16.gmra.mrb[0].mxu0 %v121
  %v261 = vpop.f32.mrb[0].mxu0
  %v262 = vadd.f32 0.0, %v261
  %v263 = vpop.f32.mrb[0].mxu0
  %v264 = vpop.f32.mrb[0].mxu0
  %v265 = vadd.f32 0.0, %v264
  %v266 = vpop.f32.mrb[0].mxu0
  %267 = vmatprep.mubr.bf16.mxu0 0
  %268 = vmatmul.mubr.bf16.gmra.mrb[0].mxu0 %v122
  %v269 = vpop.f32.mrb[0].mxu0
  %v270 = vadd.f32 0.0, %v269
  %v271 = vpop.f32.mrb[0].mxu0
  %v272 = vpop.f32.mrb[0].mxu0
  %v273 = vadd.f32 0.0, %v272
  %v274 = vpop.f32.mrb[0].mxu0
  %275 = vdwg.mxu0
  %v276 = vadd.f32 %v51, %v214
  %v277 = vadd.f32 %v52, %v217
  %v278 = vadd.f32 %v53, %v222
  %v279 = vadd.f32 %v54, %v225
  %v280 = vadd.f32 %v55, %v230
  %v281 = vadd.f32 %v56, %v233
  %v282 = vadd.f32 %v57, %v238
  %v283 = vadd.f32 %v58, %v241
  %v284 = vadd.f32 %v59, %v246
  %v285 = vadd.f32 %v60, %v249
  %v286 = vadd.f32 %v61, %v254
  %v287 = vadd.f32 %v62, %v257
  %v288 = vadd.f32 %v63, %v262
  %v289 = vadd.f32 %v64, %v265
  %v290 = vadd.f32 %v65, %v270
  %v291 = vadd.f32 %v66, %v273
  %292 = vst [vmem:[#allocation2] sm:$0xff] %v276
  %293 = vst [vmem:[#allocation2 + $0x8] sm:$0xff] %v277
  %294 = vst [vmem:[#allocation2 + $0x10] sm:$0xff] %v278
  %295 = vst [vmem:[#allocation2 + $0x18] sm:$0xff] %v279
  %296 = vst [vmem:[#allocation2 + $0x20] sm:$0xff] %v280
  %297 = vst [vmem:[#allocation2 + $0x28] sm:$0xff] %v281
  %298 = vst [vmem:[#allocation2 + $0x30] sm:$0xff] %v282
  %299 = vst [vmem:[#allocation2 + $0x38] sm:$0xff] %v283
  %300 = vst [vmem:[#allocation2 + $0x40] sm:$0xff] %v284
  %301 = vst [vmem:[#allocation2 + $0x48] sm:$0xff] %v285
  %302 = vst [vmem:[#allocation2 + $0x50] sm:$0xff] %v286
  %303 = vst [vmem:[#allocation2 + $0x58] sm:$0xff] %v287
  %304 = vst [vmem:[#allocation2 + $0x60] sm:$0xff] %v288
  %305 = vst [vmem:[#allocation2 + $0x68] sm:$0xff] %v289
  %306 = vst [vmem:[#allocation2 + $0x70] sm:$0xff] %v290
  %307 = vst [vmem:[#allocation2 + $0x78] sm:$0xff] %v291
  // Predicated region
  $region18: #{nfnet_forward.15} parent=0 // pred_check
    %p308 = pneg %p15
  $region19: #{nfnet_forward.15} parent=0 // pred_check_branch
    %310 = sbr.rel (%p308) target = $region21
  $region20: #{nfnet_forward.15} parent=0 // pred_region
    %v311 = vld [vmem:[#allocation2] sm:$0xff]
    %v312 = vld [vmem:[#allocation2 + $0x8] sm:$0xff]
    %v313 = vld [vmem:[#allocation2 + $0x10] sm:$0xff]
    %v314 = vld [vmem:[#allocation2 + $0x18] sm:$0xff]
    %v315 = vld [vmem:[#allocation2 + $0x20] sm:$0xff]
    %v316 = vld [vmem:[#allocation2 + $0x28] sm:$0xff]
    %v317 = vld [vmem:[#allocation2 + $0x30] sm:$0xff]
    %v318 = vld [vmem:[#allocation2 + $0x38] sm:$0xff]
    %v319 = vld [vmem:[#allocation2 + $0x40] sm:$0xff]
    %v320 = vld [vmem:[#allocation2 + $0x48] sm:$0xff]
    %v321 = vld [vmem:[#allocation2 + $0x50] sm:$0xff]
    %v322 = vld [vmem:[#allocation2 + $0x58] sm:$0xff]
    %v323 = vld [vmem:[#allocation2 + $0x60] sm:$0xff]
    %v324 = vld [vmem:[#allocation2 + $0x68] sm:$0xff]
    %v325 = vld [vmem:[#allocation2 + $0x70] sm:$0xff]
    %v326 = vld [vmem:[#allocation2 + $0x78] sm:$0xff]
    %v327 = vld [vmem:[%s2] sm:$0x1]
    %v329 = vlaneseq
    %v330 = vshrl.u32 %v329, 7
    %v331 = vsub.s32 0, %v330
    %v332 = vrot.slane %v327, %v331
    %v334 = vadd.f32 %v311, %v332
    %v335 = vadd.f32 %v312, %v332
    %v336 = vadd.f32 %v313, %v332
    %v337 = vadd.f32 %v314, %v332
    %v338 = vadd.f32 %v315, %v332
    %v339 = vadd.f32 %v316, %v332
    %v340 = vadd.f32 %v317, %v332
    %v341 = vadd.f32 %v318, %v332
    %v342 = vadd.f32 %v319, %v332
    %v343 = vadd.f32 %v320, %v332
    %v344 = vadd.f32 %v321, %v332
    %v345 = vadd.f32 %v322, %v332
    %v346 = vadd.f32 %v323, %v332
    %v347 = vadd.f32 %v324, %v332
    %v348 = vadd.f32 %v325, %v332
    %v349 = vadd.f32 %v326, %v332
    %v350 = vmul.f32 %v334, 0.5
    %v351 = vmul.f32 %v335, 0.5
    %v352 = vmul.f32 %v336, 0.5
    %v353 = vmul.f32 %v337, 0.5
    %v354 = vmul.f32 %v338, 0.5
    %v355 = vmul.f32 %v339, 0.5
    %v356 = vmul.f32 %v340, 0.5
    %v357 = vmul.f32 %v341, 0.5
    %v358 = vmul.f32 %v342, 0.5
    %v359 = vmul.f32 %v343, 0.5
    %v360 = vmul.f32 %v344, 0.5
    %v361 = vmul.f32 %v345, 0.5
    %v362 = vmul.f32 %v346, 0.5
    %v363 = vmul.f32 %v347, 0.5
    %v364 = vmul.f32 %v348, 0.5
    %v365 = vmul.f32 %v349, 0.5
    %v366 = vmul.f32 %v334, 0.044715
    %v367 = vmul.f32 %v335, 0.044715
    %v368 = vmul.f32 %v336, 0.044715
    %v369 = vmul.f32 %v337, 0.044715
    %v370 = vmul.f32 %v338, 0.044715
    %v371 = vmul.f32 %v339, 0.044715
    %v372 = vmul.f32 %v340, 0.044715
    %v373 = vmul.f32 %v341, 0.044715
    %v374 = vmul.f32 %v342, 0.044715
    %v375 = vmul.f32 %v343, 0.044715
    %v376 = vmul.f32 %v344, 0.044715
    %v377 = vmul.f32 %v345, 0.044715
    %v378 = vmul.f32 %v346, 0.044715
    %v379 = vmul.f32 %v347, 0.044715
    %v380 = vmul.f32 %v348, 0.044715
    %v381 = vmul.f32 %v349, 0.044715
    %v382 = vmul.f32 %v366, %v334
    %v383 = vmul.f32 %v367, %v335
    %v384 = vmul.f32 %v368, %v336
    %v385 = vmul.f32 %v369, %v337
    %v386 = vmul.f32 %v370, %v338
    %v387 = vmul.f32 %v371, %v339
    %v388 = vmul.f32 %v372, %v340
    %v389 = vmul.f32 %v373, %v341
    %v390 = vmul.f32 %v374, %v342
    %v391 = vmul.f32 %v375, %v343
    %v392 = vmul.f32 %v376, %v344
    %v393 = vmul.f32 %v377, %v345
    %v394 = vmul.f32 %v378, %v346
    %v395 = vmul.f32 %v379, %v347
    %v396 = vmul.f32 %v380, %v348
    %v397 = vmul.f32 %v381, %v349
    %v398 = vmul.f32 %v382, %v334
    %v399 = vmul.f32 %v383, %v335
    %v400 = vmul.f32 %v384, %v336
    %v401 = vmul.f32 %v385, %v337
    %v402 = vmul.f32 %v386, %v338
    %v403 = vmul.f32 %v387, %v339
    %v404 = vmul.f32 %v388, %v340
    %v405 = vmul.f32 %v389, %v341
    %v406 = vmul.f32 %v390, %v342
    %v407 = vmul.f32 %v391, %v343
    %v408 = vmul.f32 %v392, %v344
    %v409 = vmul.f32 %v393, %v345
    %v410 = vmul.f32 %v394, %v346
    %v411 = vmul.f32 %v395, %v347
    %v412 = vmul.f32 %v396, %v348
    %v413 = vmul.f32 %v397, %v349
    %v414 = vadd.f32 %v334, %v398
    %v415 = vadd.f32 %v335, %v399
    %v416 = vadd.f32 %v336, %v400
    %v417 = vadd.f32 %v337, %v401
    %v418 = vadd.f32 %v338, %v402
    %v419 = vadd.f32 %v339, %v403
    %v420 = vadd.f32 %v340, %v404
    %v421 = vadd.f32 %v341, %v405
    %v422 = vadd.f32 %v342, %v406
    %v423 = vadd.f32 %v343, %v407
    %v424 = vadd.f32 %v344, %v408
    %v425 = vadd.f32 %v345, %v409
    %v426 = vadd.f32 %v346, %v410
    %v427 = vadd.f32 %v347, %v411
    %v428 = vadd.f32 %v348, %v412
    %v429 = vadd.f32 %v349, %v413
    %v430 = vmul.f32 %v414, 0.7978846
    %v431 = vmul.f32 %v415, 0.7978846
    %v432 = vmul.f32 %v416, 0.7978846
    %v433 = vmul.f32 %v417, 0.7978846
    %v434 = vmul.f32 %v418, 0.7978846
    %v435 = vmul.f32 %v419, 0.7978846
    %v436 = vmul.f32 %v420, 0.7978846
    %v437 = vmul.f32 %v421, 0.7978846
    %v438 = vmul.f32 %v422, 0.7978846
    %v439 = vmul.f32 %v423, 0.7978846
    %v440 = vmul.f32 %v424, 0.7978846
    %v441 = vmul.f32 %v425, 0.7978846
    %v442 = vmul.f32 %v426, 0.7978846
    %v443 = vmul.f32 %v427, 0.7978846
    %v444 = vmul.f32 %v428, 0.7978846
    %v445 = vmul.f32 %v429, 0.7978846
    %v446 = vtanh.pop %v430
    %v447 = vtanh.pop %v431
    %v448 = vtanh.pop %v432
    %v449 = vtanh.pop %v433
    %v450 = vtanh.pop %v434
    %v451 = vtanh.pop %v435
    %v452 = vtanh.pop %v436
    %v453 = vtanh.pop %v437
    %v454 = vtanh.pop %v438
    %v455 = vtanh.pop %v439
    %v456 = vtanh.pop %v440
    %v457 = vtanh.pop %v441
    %v458 = vtanh.pop %v442
    %v459 = vtanh.pop %v443
    %v460 = vtanh.pop %v444
    %v461 = vtanh.pop %v445
    %v462 = vadd.f32 %v446, 1.0
    %v463 = vadd.f32 %v447, 1.0
    %v464 = vadd.f32 %v448, 1.0
    %v465 = vadd.f32 %v449, 1.0
    %v466 = vadd.f32 %v450, 1.0
    %v467 = vadd.f32 %v451, 1.0
    %v468 = vadd.f32 %v452, 1.0
    %v469 = vadd.f32 %v453, 1.0
    %v470 = vadd.f32 %v454, 1.0
    %v471 = vadd.f32 %v455, 1.0
    %v472 = vadd.f32 %v456, 1.0
    %v473 = vadd.f32 %v457, 1.0
    %v474 = vadd.f32 %v458, 1.0
    %v475 = vadd.f32 %v459, 1.0
    %v476 = vadd.f32 %v460, 1.0
    %v477 = vadd.f32 %v461, 1.0
    %v478 = vmul.f32 %v350, %v462
    %v479 = vmul.f32 %v351, %v463
    %v480 = vmul.f32 %v352, %v464
    %v481 = vmul.f32 %v353, %v465
    %v482 = vmul.f32 %v354, %v466
    %v483 = vmul.f32 %v355, %v467
    %v484 = vmul.f32 %v356, %v468
    %v485 = vmul.f32 %v357, %v469
    %v486 = vmul.f32 %v358, %v470
    %v487 = vmul.f32 %v359, %v471
    %v488 = vmul.f32 %v360, %v472
    %v489 = vmul.f32 %v361, %v473
    %v490 = vmul.f32 %v362, %v474
    %v491 = vmul.f32 %v363, %v475
    %v492 = vmul.f32 %v364, %v476
    %v493 = vmul.f32 %v365, %v477
    %v494 = vmul.f32 %v478, 1.7015043
    %v495 = vmul.f32 %v479, 1.7015043
    %v496 = vmul.f32 %v480, 1.7015043
    %v497 = vmul.f32 %v481, 1.7015043
    %v498 = vmul.f32 %v482, 1.7015043
    %v499 = vmul.f32 %v483, 1.7015043
    %v500 = vmul.f32 %v484, 1.7015043
    %v501 = vmul.f32 %v485, 1.7015043
    %v502 = vmul.f32 %v486, 1.7015043
    %v503 = vmul.f32 %v487, 1.7015043
    %v504 = vmul.f32 %v488, 1.7015043
    %v505 = vmul.f32 %v489, 1.7015043
    %v506 = vmul.f32 %v490, 1.7015043
    %v507 = vmul.f32 %v491, 1.7015043
    %v508 = vmul.f32 %v492, 1.7015043
    %v509 = vmul.f32 %v493, 1.7015043
    %v510 = vpack.c.bf16 %v495, %v494
    %v511 = vpack.c.bf16 %v497, %v496
    %v512 = vpack.c.bf16 %v499, %v498
    %v513 = vpack.c.bf16 %v501, %v500
    %v514 = vpack.c.bf16 %v503, %v502
    %v515 = vpack.c.bf16 %v505, %v504
    %v516 = vpack.c.bf16 %v507, %v506
    %v517 = vpack.c.bf16 %v509, %v508
    %v526 = vunpack.c.l.b16 %v510
    %v527 = vunpack.c.h.b16 %v510
    %v528 = vunpack.c.l.b16 %v511
    %v529 = vunpack.c.h.b16 %v511
    %v530 = vunpack.c.l.b16 %v512
    %v531 = vunpack.c.h.b16 %v512
    %v532 = vunpack.c.l.b16 %v513
    %v533 = vunpack.c.h.b16 %v513
    %v534 = vunpack.c.l.b16 %v514
    %v535 = vunpack.c.h.b16 %v514
    %v536 = vunpack.c.l.b16 %v515
    %v537 = vunpack.c.h.b16 %v515
    %v538 = vunpack.c.l.b16 %v516
    %v539 = vunpack.c.h.b16 %v516
    %v540 = vunpack.c.l.b16 %v517
    %v541 = vunpack.c.h.b16 %v517
    %v542 = vpack.c.b16 %v526, %v526
    %v543 = vpack.c.b16 %v527, %v527
    %v544 = vpack.c.b16 %v528, %v528
    %v545 = vpack.c.b16 %v529, %v529
    %v546 = vpack.c.b16 %v530, %v530
    %v547 = vpack.c.b16 %v531, %v531
    %v548 = vpack.c.b16 %v532, %v532
    %v549 = vpack.c.b16 %v533, %v533
    %v550 = vpack.c.b16 %v534, %v534
    %v551 = vpack.c.b16 %v535, %v535
    %v552 = vpack.c.b16 %v536, %v536
    %v553 = vpack.c.b16 %v537, %v537
    %v554 = vpack.c.b16 %v538, %v538
    %v555 = vpack.c.b16 %v539, %v539
    %v556 = vpack.c.b16 %v540, %v540
    %v557 = vpack.c.b16 %v541, %v541
    %574 = vst [vmem:[%s3] sm:$0xf] %v542
    %575 = vst [vmem:[%s3 + $0x4] sm:$0xf] %v543
    %576 = vst [vmem:[%s3 + $0x8] sm:$0xf] %v544
    %577 = vst [vmem:[%s3 + $0xc] sm:$0xf] %v545
    %578 = vst [vmem:[%s3 + $0x10] sm:$0xf] %v546
    %579 = vst [vmem:[%s3 + $0x14] sm:$0xf] %v547
    %580 = vst [vmem:[%s3 + $0x18] sm:$0xf] %v548
    %581 = vst [vmem:[%s3 + $0x1c] sm:$0xf] %v549
    %582 = vst [vmem:[%s3 + $0x20] sm:$0xf] %v550
    %583 = vst [vmem:[%s3 + $0x24] sm:$0xf] %v551
    %584 = vst [vmem:[%s3 + $0x28] sm:$0xf] %v552
    %585 = vst [vmem:[%s3 + $0x2c] sm:$0xf] %v553
    %586 = vst [vmem:[%s3 + $0x30] sm:$0xf] %v554
    %587 = vst [vmem:[%s3 + $0x34] sm:$0xf] %v555
    %588 = vst [vmem:[%s3 + $0x38] sm:$0xf] %v556
    %589 = vst [vmem:[%s3 + $0x3c] sm:$0xf] %v557
  $region21: #{nfnet_forward.15} parent=0 // pred_fallthru
    _
  // Predicated region
  $region22: #{nfnet_forward.15} parent=0 // pred_check
    _
  $region23: #{nfnet_forward.15} parent=0 // pred_check_branch
    %591 = sbr.rel (0) target = $region25
  $region24: #{nfnet_forward.15} parent=0 // pred_region
    _
  $region25: #{nfnet_forward.15} parent=0 // pred_fallthru
    _
  // Predicated region
  $region26: #{nfnet_forward.15} parent=0 // pred_check
    _
  $region27: #{nfnet_forward.15} parent=0 // pred_check_branch
    %593 = sbr.rel (0) target = $region29
  $region28: #{nfnet_forward.15} parent=0 // pred_region
    _
  $region29: #{nfnet_forward.15} parent=0 // pred_fallthru
    _

// kernel: nfnet_forward.18
$region0: #{nfnet_forward.18}
  #allocation0 [shape = 'u32[]', space=smem, size = 0x4, offset = 0x4, fixed_abs, tag = 'smem constant byte address 0x4 - core index']
  #allocation1 [shape = 'u32[144,128]{1,0:T(1,128)}', space=vmem, size = 0x12000, scoped, tag = 'internal scratch']
  #allocation2 [shape = 'f32[64,128]{1,0:T(8,128)}', space=vmem, size = 0x8000, scoped, tag = 'scratch operand']
  %s0 = inlined_call_operand.vmem [shape: bf16[128,128], index: 0, kind: input, shape index: {}]
  %s1 = inlined_call_operand.vmem [shape: bf16[128,128], index: 1, kind: input, shape index: {}]
  %s2 = inlined_call_operand.vmem [shape: f32[1,128], index: 2, kind: input, shape index: {}]
  %s3 = inlined_call_operand.vmem [shape: bf16[128,128], index: 3, kind: output, shape index: {0}]
  %s4 = inlined_call_operand.vmem [shape: f32[2,8,128], index: 4, kind: output, shape index: {1}]
  %5 = xla_tuple %s3, %s4
  %s6 = sld [smem:[#allocation0]]
  $region61: #{nfnet_forward.18} parent=0
    _
  %s8 = ssub.s32 1, %s6
  %s9 = scalar_select 0, %s8, %s6
  loop: start=0, step=1, limit=4
  $region2: #{nfnet_forward.18} parent=0 // loop_pre_header
    _
  $region3: #{nfnet_forward.18} parent=0 // loop_header
    %s11 = sphi 0, %s15
    %p12 = scmp.ge.s32.totalorder %s11, 4
    %s18 = sphi 0, %s37
    %s19 = sphi 0, %s33
    %s20 = sphi 0, %s29
    %s21 = sphi 0, %s18
    %s22 = sphi 0, %s19
    %s23 = sphi 0, %s20
    %s24 = sphi 0, %s21
    %s25 = sphi 0, %s22
    %s26 = sphi 0, %s23
    %s42 = sphi 0, %s44
    %s45 = sphi 0, %s42
    %s46 = sphi 0, %s45
    %s62 = sphi 0, %s46
    %s70 = sphi 0, %s72
    %s73 = sphi 0, %s70
    %s74 = sphi 0, %s73
    %s90 = sphi 0, %s74
    %s96 = sphi 0, %s98
    %s99 = sphi 0, %s96
    %s100 = sphi 0, %s99
    %s116 = sphi 0, %s100
    %s124 = sphi 0, %s126
    %s127 = sphi 0, %s124
    %s128 = sphi 0, %s127
    %s144 = sphi 0, %s128
    %s152 = sphi 0, %s154
    %s155 = sphi 0, %s152
    %s156 = sphi 0, %s155
    %s172 = sphi 0, %s156
  $region4: #{nfnet_forward.18} parent=0 // loop_header_branch
    %14 = sbr.rel (%p12) target = $region8
  $region5: #{nfnet_forward.18} parent=0 // loop_body
    %s16 = ssub.s32 %s11, 1
    %s17 = ssub.s32 %s11, 2
    %s27 = sadd.s32 1, %s20
    %p28 = scmp.ge.s32.totalorder %s27, 1
    %s29 = scalar_select %p28, 0, %s27
    %s30 = sadd.s32 1, %s19
    %s31 = scalar_select %p28, %s30, %s19
    %p32 = scmp.ge.s32.totalorder %s31, 1
    %s33 = scalar_select %p32, 0, %s31
    %s34 = sadd.s32 1, %s18
    %s35 = scalar_select %p32, %s34, %s18
    %p36 = scmp.ge.s32.totalorder %s35, 2
    %s37 = scalar_select %p36, 0, %s35
    %s38 = ssub.s32 %s18, %s37
    %s39 = ssub.s32 %s20, %s29
    %s40 = sor.u32 %s38, %s39
    %p41 = scmp.eq.s32.totalorder %s40, 0
    %s43 = sadd.s32 %s42, 1
    %s44 = scalar_select %p41, %s42, %s43
    %p47 = pneg %p41
    %p48 = scmp.eq.s32.totalorder %s11, 1
    %p49 = por %p47, %p48
    %p50 = scmp.ne.s32.totalorder %s42, %s45
    %p51 = scmp.eq.s32.totalorder %s11, 0
    %p52 = por %p50, %p51
    %p53 = scmp.ne.s32.totalorder %s42, %s45
    %p54 = scmp.eq.s32.totalorder %s16, 1
    %p55 = por %p53, %p54
    %p56 = scmp.ne.s32.totalorder %s45, %s46
    %p57 = scmp.eq.s32.totalorder %s16, 0
    %p58 = por %p56, %p57
    %p59 = scmp.ne.s32.totalorder %s45, %s46
    %p60 = scmp.eq.s32.totalorder %s17, 1
    %p61 = por %p59, %p60
    %p63 = scmp.ne.s32.totalorder %s46, %s62
    %p64 = scmp.eq.s32.totalorder %s17, 0
    %p65 = por %p63, %p64
    %s66 = ssub.s32 %s20, %s29
    %s67 = ssub.s32 %s19, %s33
    %s68 = sor.u32 %s66, %s67
    %p69 = scmp.eq.s32.totalorder %s68, 0
    %s71 = sadd.s32 %s70, 1
    %s72 = scalar_select %p69, %s70, %s71
    %p75 = pneg %p69
    %p76 = scmp.eq.s32.totalorder %s11, 1
    %p77 = por %p75, %p76
    %p78 = scmp.ne.s32.totalorder %s70, %s73
    %p79 = scmp.eq.s32.totalorder %s11, 0
    %p80 = por %p78, %p79
    %p81 = scmp.ne.s32.totalorder %s70, %s73
    %p82 = scmp.eq.s32.totalorder %s16, 1
    %p83 = por %p81, %p82
    %p84 = scmp.ne.s32.totalorder %s73, %s74
    %p85 = scmp.eq.s32.totalorder %s16, 0
    %p86 = por %p84, %p85
    %p87 = scmp.ne.s32.totalorder %s73, %s74
    %p88 = scmp.eq.s32.totalorder %s17, 1
    %p89 = por %p87, %p88
    %p91 = scmp.ne.s32.totalorder %s74, %s90
    %p92 = scmp.eq.s32.totalorder %s17, 0
    %p93 = por %p91, %p92
    %s94 = ssub.s32 %s19, %s33
    %p95 = scmp.eq.s32.totalorder %s94, 0
    %s97 = sadd.s32 %s96, 1
    %s98 = scalar_select %p95, %s96, %s97
    %p101 = pneg %p95
    %p102 = scmp.eq.s32.totalorder %s11, 1
    %p103 = por %p101, %p102
    %p104 = scmp.ne.s32.totalorder %s96, %s99
    %p105 = scmp.eq.s32.totalorder %s11, 0
    %p106 = por %p104, %p105
    %p107 = scmp.ne.s32.totalorder %s96, %s99
    %p108 = scmp.eq.s32.totalorder %s16, 1
    %p109 = por %p107, %p108
    %p110 = scmp.ne.s32.totalorder %s99, %s100
    %p111 = scmp.eq.s32.totalorder %s16, 0
    %p112 = por %p110, %p111
    %p113 = scmp.ne.s32.totalorder %s99, %s100
    %p114 = scmp.eq.s32.totalorder %s17, 1
    %p115 = por %p113, %p114
    %p117 = scmp.ne.s32.totalorder %s100, %s116
    %p118 = scmp.eq.s32.totalorder %s17, 0
    %p119 = por %p117, %p118
    %s120 = ssub.s32 %s18, %s37
    %s121 = ssub.s32 %s19, %s33
    %s122 = sor.u32 %s120, %s121
    %p123 = scmp.eq.s32.totalorder %s122, 0
    %s125 = sadd.s32 %s124, 1
    %s126 = scalar_select %p123, %s124, %s125
    %p129 = pneg %p123
    %p130 = scmp.eq.s32.totalorder %s11, 1
    %p131 = por %p129, %p130
    %p132 = scmp.ne.s32.totalorder %s124, %s127
    %p133 = scmp.eq.s32.totalorder %s11, 0
    %p134 = por %p132, %p133
    %p135 = scmp.ne.s32.totalorder %s124, %s127
    %p136 = scmp.eq.s32.totalorder %s16, 1
    %p137 = por %p135, %p136
    %p138 = scmp.ne.s32.totalorder %s127, %s128
    %p139 = scmp.eq.s32.totalorder %s16, 0
    %p140 = por %p138, %p139
    %p141 = scmp.ne.s32.totalorder %s127, %s128
    %p142 = scmp.eq.s32.totalorder %s17, 1
    %p143 = por %p141, %p142
    %p145 = scmp.ne.s32.totalorder %s128, %s144
    %p146 = scmp.eq.s32.totalorder %s17, 0
    %p147 = por %p145, %p146
    %s148 = ssub.s32 %s18, %s37
    %s149 = ssub.s32 %s19, %s33
    %s150 = sor.u32 %s148, %s149
    %p151 = scmp.eq.s32.totalorder %s150, 0
    %s153 = sadd.s32 %s152, 1
    %s154 = scalar_select %p151, %s152, %s153
    %p157 = pneg %p151
    %p158 = scmp.eq.s32.totalorder %s11, 1
    %p159 = por %p157, %p158
    %p160 = scmp.ne.s32.totalorder %s152, %s155
    %p161 = scmp.eq.s32.totalorder %s11, 0
    %p162 = por %p160, %p161
    %p163 = scmp.ne.s32.totalorder %s152, %s155
    %p164 = scmp.eq.s32.totalorder %s16, 1
    %p165 = por %p163, %p164
    %p166 = scmp.ne.s32.totalorder %s155, %s156
    %p167 = scmp.eq.s32.totalorder %s16, 0
    %p168 = por %p166, %p167
    %p169 = scmp.ne.s32.totalorder %s155, %s156
    %p170 = scmp.eq.s32.totalorder %s17, 1
    %p171 = por %p169, %p170
    %p173 = scmp.ne.s32.totalorder %s156, %s172
    %p174 = scmp.eq.s32.totalorder %s17, 0
    %p175 = por %p173, %p174
    %p176 = scmp.le.s32.totalorder 1, %s11
    %p177 = scmp.lt.s32.totalorder %s11, 3
    %p178 = pnand %p176, %p177
    %p179 = pneg %p178
    // Predicated region
    $region9: #{nfnet_forward.18} parent=5 // pred_check
      _
    $region10: #{nfnet_forward.18} parent=5 // pred_check_branch
      %181 = sbr.rel (%p178) target = $region12
    $region11: #{nfnet_forward.18} parent=5 // pred_region
      %s182 = ssub.s32 %s11, 1
      // Predicated region
      $region13: #{nfnet_forward.18} parent=11 // pred_check
        %p183 = pneg %p86
      $region14: #{nfnet_forward.18} parent=11 // pred_check_branch
        %185 = sbr.rel (%p183) target = $region16
      $region15: #{nfnet_forward.18} parent=11 // pred_region
        %s186 = smul.u32 16, %s23
        %p187 = scmp.lt.s32.totalorder %s186, 15
        %s188 = scalar_select %p187, %s186, 15
        %p189 = scmp.lt.s32.totalorder %s22, 0
        %s190 = scalar_select %p189, %s22, 0
        %s191 = sadd.s32 %s190, %s188
        %s192 = smul.addr %s191, 4
        %s193 = scalar_lea.vmem %s1, %s192
        %s194 = smul.u32 16, %s23
      $region16: #{nfnet_forward.18} parent=11 // pred_fallthru
        _
      // Predicated region
      $region17: #{nfnet_forward.18} parent=11 // pred_check
        %p195 = pneg %p112
      $region18: #{nfnet_forward.18} parent=11 // pred_check_branch
        %197 = sbr.rel (%p195) target = $region20
      $region19: #{nfnet_forward.18} parent=11 // pred_region
        %p198 = scmp.lt.s32.totalorder %s22, 0
        %s199 = scalar_select %p198, %s22, 0
        %s200 = scalar_lea.vmem %s2, %s199
      $region20: #{nfnet_forward.18} parent=11 // pred_fallthru
        _
    $region12: #{nfnet_forward.18} parent=5 // pred_fallthru
      _
    %p201 = scmp.lt.s32.totalorder %s11, 2
    // Predicated region
    $region21: #{nfnet_forward.18} parent=5 // pred_check
      %p202 = pneg %p201
    $region22: #{nfnet_forward.18} parent=5 // pred_check_branch
      %204 = sbr.rel (%p202) target = $region24
    $region23: #{nfnet_forward.18} parent=5 // pred_region
      // Predicated region
      $region25: #{nfnet_forward.18} parent=23 // pred_check
        %p205 = pneg %p52
      $region26: #{nfnet_forward.18} parent=23 // pred_check_branch
        %207 = sbr.rel (%p205) target = $region28
      $region27: #{nfnet_forward.18} parent=23 // pred_region
        %s208 = smul.u32 8, %s18
        %p209 = scmp.lt.s32.totalorder %s208, 15
        %s210 = scalar_select %p209, %s208, 15
        %p211 = scmp.lt.s32.totalorder %s20, 0
        %s212 = scalar_select %p211, %s20, 0
        %s213 = sadd.s32 %s212, %s210
        %s214 = smul.addr %s213, 4
        %s215 = scalar_lea.vmem %s0, %s214
        %s216 = smul.u32 8, %s18
      $region28: #{nfnet_forward.18} parent=23 // pred_fallthru
        _
    $region24: #{nfnet_forward.18} parent=5 // pred_fallthru
      _
    %p217 = scmp.le.s32.totalorder 1, %s11
    %p218 = scmp.lt.s32.totalorder %s11, 3
    %p219 = pnand %p217, %p218
    %p220 = pneg %p219
    // Predicated region
    $region29: #{nfnet_forward.18} parent=5 // pred_check
      _
    $region30: #{nfnet_forward.18} parent=5 // pred_check_branch
      %222 = sbr.rel (%p219) target = $region32
    $region31: #{nfnet_forward.18} parent=5 // pred_region
      %s223 = ssub.s32 %s11, 1
      %s224 = smul.u32 8, %s21
      %p225 = scmp.lt.s32.totalorder %s224, 15
      %s226 = scalar_select %p225, %s224, 15
      %p227 = scmp.lt.s32.totalorder %s23, 0
      %s228 = scalar_select %p227, %s23, 0
      %s229 = sadd.s32 %s228, %s226
      %s230 = smul.addr %s229, 4
      %s231 = scalar_lea.vmem %s0, %s230
      %p232 = pneg %p58
      %p233 = pneg %p55
      %s234 = smul.u32 16, %s23
      %p235 = scmp.lt.s32.totalorder %s234, 15
      %s236 = scalar_select %p235, %s234, 15
      %p237 = scmp.lt.s32.totalorder %s22, 0
      %s238 = scalar_select %p237, %s22, 0
      %s239 = sadd.s32 %s238, %s236
      %s240 = smul.addr %s239, 4
      %s241 = scalar_lea.vmem %s1, %s240
      %p242 = pneg %p86
      %p243 = pneg %p83
      %p244 = scmp.lt.s32.totalorder %s22, 0
      %s245 = scalar_select %p244, %s22, 0
      %s246 = scalar_lea.vmem %s2, %s245
      %p247 = pneg %p112
      %p248 = pneg %p109
      %p249 = pneg %p140
      %p250 = pneg %p137
      %s251 = smul.u32 8, %s21
      %p252 = scmp.lt.s32.totalorder %s251, 15
      %s253 = scalar_select %p252, %s251, 15
      %p254 = scmp.lt.s32.totalorder %s22, 0
      %s255 = scalar_select %p254, %s22, 0
      %s256 = sadd.s32 %s255, %s253
      %s257 = smul.addr %s256, 4
      %s258 = scalar_lea.vmem %s3, %s257
      %p259 = pneg %p168
      %p260 = pneg %p165
      %p261 = scmp.lt.s32.totalorder %s21, 1
      %s262 = scalar_select %p261, %s21, 1
      %p263 = scmp.lt.s32.totalorder %s22, 0
      %s264 = scalar_select %p263, %s22, 0
      %s265 = sadd.s32 %s264, %s262
      %s266 = smul.addr %s265, 8
      %s267 = scalar_lea.vmem %s4, %s266
      %s268 = smul.u32 8, %s21
      %p269 = scmp.lt.s32.totalorder %s268, 15
      %s270 = scalar_select %p269, %s268, 15
      %p271 = scmp.lt.s32.totalorder %s23, 0
      %s272 = scalar_select %p271, %s23, 0
      %s273 = sadd.s32 %s272, %s270
      %s274 = smul.addr %s273, 4
      %s275 = scalar_lea.vmem %s0, %s274
      %s276 = smul.u32 8, %s21
      %s277 = smul.u32 16, %s23
      %p278 = scmp.lt.s32.totalorder %s277, 15
      %s279 = scalar_select %p278, %s277, 15
      %p280 = scmp.lt.s32.totalorder %s22, 0
      %s281 = scalar_select %p280, %s22, 0
      %s282 = sadd.s32 %s281, %s279
      %s283 = smul.addr %s282, 4
      %s284 = scalar_lea.vmem %s1, %s283
      %s285 = smul.u32 16, %s23
      %p286 = scmp.lt.s32.totalorder %s22, 0
      %s287 = scalar_select %p286, %s22, 0
      %s288 = scalar_lea.vmem %s2, %s287
      %s289 = smul.u32 8, %s21
      %p290 = scmp.lt.s32.totalorder %s289, 15
      %s291 = scalar_select %p290, %s289, 15
      %p292 = scmp.lt.s32.totalorder %s22, 0
      %s293 = scalar_select %p292, %s22, 0
      %s294 = sadd.s32 %s293, %s291
      %s295 = smul.addr %s294, 4
      %s296 = scalar_lea.vmem %s3, %s295
      %s297 = smul.u32 8, %s21
      %p298 = scmp.lt.s32.totalorder %s21, 1
      %s299 = scalar_select %p298, %s21, 1
      %p300 = scmp.lt.s32.totalorder %s22, 0
      %s301 = scalar_select %p300, %s22, 0
      %s302 = sadd.s32 %s301, %s299
      %s303 = smul.addr %s302, 8
      %s304 = scalar_lea.vmem %s4, %s303
      %p306 = scmp.eq.s32.totalorder %s23, 0
      // Predicated region
      $region33: #{nfnet_forward.18} parent=31 // pred_check
        %p307 = pneg %p306
      $region34: #{nfnet_forward.18} parent=31 // pred_check_branch
        %309 = sbr.rel (%p307) target = $region36
      $region35: #{nfnet_forward.18} parent=31 // pred_region
        %310 = vst [vmem:[#allocation2] sm:$0xff] 0.0
        %311 = vst [vmem:[#allocation2 + $0x8] sm:$0xff] 0.0
        %312 = vst [vmem:[#allocation2 + $0x10] sm:$0xff] 0.0
        %313 = vst [vmem:[#allocation2 + $0x18] sm:$0xff] 0.0
        %314 = vst [vmem:[#allocation2 + $0x20] sm:$0xff] 0.0
        %315 = vst [vmem:[#allocation2 + $0x28] sm:$0xff] 0.0
        %316 = vst [vmem:[#allocation2 + $0x30] sm:$0xff] 0.0
        %317 = vst [vmem:[#allocation2 + $0x38] sm:$0xff] 0.0
      $region36: #{nfnet_forward.18} parent=31 // pred_fallthru
        _
      %v318 = vld [vmem:[%s275] sm:$0xf]
      %v319 = vld [vmem:[%s275 + $0x4] sm:$0xf]
      %v320 = vld [vmem:[%s275 + $0x8] sm:$0xf]
      %v321 = vld [vmem:[%s275 + $0xc] sm:$0xf]
      %v322 = vld [vmem:[%s275 + $0x10] sm:$0xf]
      %v323 = vld [vmem:[%s275 + $0x14] sm:$0xf]
      %v324 = vld [vmem:[%s275 + $0x18] sm:$0xf]
      %v325 = vld [vmem:[%s275 + $0x1c] sm:$0xf]
      %v326 = vld [vmem:[#allocation2] sm:$0xff]
      %v327 = vld [vmem:[#allocation2 + $0x8] sm:$0xff]
      %v328 = vld [vmem:[#allocation2 + $0x10] sm:$0xff]
      %v329 = vld [vmem:[#allocation2 + $0x18] sm:$0xff]
      %v330 = vld [vmem:[#allocation2 + $0x20] sm:$0xff]
      %v331 = vld [vmem:[#allocation2 + $0x28] sm:$0xff]
      %v332 = vld [vmem:[#allocation2 + $0x30] sm:$0xff]
      %v333 = vld [vmem:[#allocation2 + $0x38] sm:$0xff]
      %v334 = vld [vmem:[%s284] sm:$0xf]
      %v335 = vld [vmem:[%s284 + $0x4] sm:$0xf]
      %v336 = vld [vmem:[%s284 + $0x8] sm:$0xf]
      %v337 = vld [vmem:[%s284 + $0xc] sm:$0xf]
      %v338 = vld [vmem:[%s284 + $0x10] sm:$0xf]
      %v339 = vld [vmem:[%s284 + $0x14] sm:$0xf]
      %v340 = vld [vmem:[%s284 + $0x18] sm:$0xf]
      %v341 = vld [vmem:[%s284 + $0x1c] sm:$0xf]
      %v342 = vld [vmem:[%s284 + $0x20] sm:$0xf]
      %v343 = vld [vmem:[%s284 + $0x24] sm:$0xf]
      %v344 = vld [vmem:[%s284 + $0x28] sm:$0xf]
      %v345 = vld [vmem:[%s284 + $0x2c] sm:$0xf]
      %v346 = vld [vmem:[%s284 + $0x30] sm:$0xf]
      %v347 = vld [vmem:[%s284 + $0x34] sm:$0xf]
      %v348 = vld [vmem:[%s284 + $0x38] sm:$0xf]
      %v349 = vld [vmem:[%s284 + $0x3c] sm:$0xf]
      %v358 = vunpack.c.l.b16 %v318
      %v359 = vunpack.c.l.b16 %v319
      %v360 = vunpack.c.l.b16 %v320
      %v361 = vunpack.c.l.b16 %v321
      %v362 = vunpack.c.l.b16 %v322
      %v363 = vunpack.c.l.b16 %v323
      %v364 = vunpack.c.l.b16 %v324
      %v365 = vunpack.c.l.b16 %v325
      %v366 = vpack.c.b16 %v359, %v358
      %v367 = vpack.c.b16 %v361, %v360
      %v368 = vpack.c.b16 %v363, %v362
      %v369 = vpack.c.b16 %v365, %v364
      %v390 = vunpack.c.l.b16 %v334
      %v391 = vunpack.c.l.b16 %v335
      %v392 = vunpack.c.l.b16 %v336
      %v393 = vunpack.c.l.b16 %v337
      %v394 = vunpack.c.l.b16 %v338
      %v395 = vunpack.c.l.b16 %v339
      %v396 = vunpack.c.l.b16 %v340
      %v397 = vunpack.c.l.b16 %v341
      %v398 = vunpack.c.l.b16 %v342
      %v399 = vunpack.c.l.b16 %v343
      %v400 = vunpack.c.l.b16 %v344
      %v401 = vunpack.c.l.b16 %v345
      %v402 = vunpack.c.l.b16 %v346
      %v403 = vunpack.c.l.b16 %v347
      %v404 = vunpack.c.l.b16 %v348
      %v405 = vunpack.c.l.b16 %v349
      %v406 = vpack.c.b16 %v391, %v390
      %v407 = vpack.c.b16 %v393, %v392
      %v408 = vpack.c.b16 %v395, %v394
      %v409 = vpack.c.b16 %v397, %v396
      %v410 = vpack.c.b16 %v399, %v398
      %v411 = vpack.c.b16 %v401, %v400
      %v412 = vpack.c.b16 %v403, %v402
      %v413 = vpack.c.b16 %v405, %v404
      %422 = vmatprep.subr.bf16.mxu0 0
      %423 = vmatpush1.bf16.msra.mxu0 %v406
      %424 = vmatprep.subr.bf16.mxu0 0
      %425 = vmatpush1.bf16.msra.mxu0 %v407
      %426 = vmatprep.subr.bf16.mxu0 0
      %427 = vmatpush1.bf16.msra.mxu0 %v408
      %428 = vmatprep.subr.bf16.mxu0 0
      %429 = vmatpush1.bf16.msra.mxu0 %v409
      %430 = vmatprep.subr.bf16.mxu0 0
      %431 = vmatpush1.bf16.msra.mxu0 %v410
      %432 = vmatprep.subr.bf16.mxu0 0
      %433 = vmatpush1.bf16.msra.mxu0 %v411
      %434 = vmatprep.subr.bf16.mxu0 0
      %435 = vmatpush1.bf16.msra.mxu0 %v412
      %436 = vmatprep.subr.bf16.mxu0 0
      %437 = vmatpush1.bf16.msra.mxu0 %v413
      %438 = vmatprep.subr.bf16.mxu0 0
      %439 = vmatpush1.bf16.msra.mxu0 0
      %440 = vmatprep.subr.bf16.mxu0 0
      %441 = vmatpush1.bf16.msra.mxu0 0
      %442 = vmatprep.subr.bf16.mxu0 0
      %443 = vmatpush1.bf16.msra.mxu0 0
      %444 = vmatprep.subr.bf16.mxu0 0
      %445 = vmatpush1.bf16.msra.mxu0 0
      %446 = vmatprep.subr.bf16.mxu0 0
      %447 = vmatpush1.bf16.msra.mxu0 0
      %448 = vmatprep.subr.bf16.mxu0 0
      %449 = vmatpush1.bf16.msra.mxu0 0
      %450 = vmatprep.subr.bf16.mxu0 0
      %451 = vmatpush1.bf16.msra.mxu0 0
      %452 = vmatprep.subr.bf16.mxu0 0
      %453 = vmatpush1.bf16.msra.mxu0 0
      %454 = vmatprep.mubr.bf16.mxu0 0
      %455 = vmatmul.mubr.bf16.gmra.mrb[0].mxu0 %v366
      %v456 = vpop.f32.mrb[0].mxu0
      %v457 = vadd.f32 0.0, %v456
      %v458 = vpop.f32.mrb[0].mxu0
      %v459 = vpop.f32.mrb[0].mxu0
      %v460 = vadd.f32 0.0, %v459
      %v461 = vpop.f32.mrb[0].mxu0
      %462 = vmatprep.mubr.bf16.mxu0 0
      %463 = vmatmul.mubr.bf16.gmra.mrb[0].mxu0 %v367
      %v464 = vpop.f32.mrb[0].mxu0
      %v465 = vadd.f32 0.0, %v464
      %v466 = vpop.f32.mrb[0].mxu0
      %v467 = vpop.f32.mrb[0].mxu0
      %v468 = vadd.f32 0.0, %v467
      %v469 = vpop.f32.mrb[0].mxu0
      %470 = vmatprep.mubr.bf16.mxu0 0
      %471 = vmatmul.mubr.bf16.gmra.mrb[0].mxu0 %v368
      %v472 = vpop.f32.mrb[0].mxu0
      %v473 = vadd.f32 0.0, %v472
      %v474 = vpop.f32.mrb[0].mxu0
      %v475 = vpop.f32.mrb[0].mxu0
      %v476 = vadd.f32 0.0, %v475
      %v477 = vpop.f32.mrb[0].mxu0
      %478 = vmatprep.mubr.bf16.mxu0 0
      %479 = vmatmul.mubr.bf16.gmra.mrb[0].mxu0 %v369
      %v480 = vpop.f32.mrb[0].mxu0
      %v481 = vadd.f32 0.0, %v480
      %v482 = vpop.f32.mrb[0].mxu0
      %v483 = vpop.f32.mrb[0].mxu0
      %v484 = vadd.f32 0.0, %v483
      %v485 = vpop.f32.mrb[0].mxu0
      %486 = vdwg.mxu0
      %v487 = vadd.f32 %v326, %v457
      %v488 = vadd.f32 %v327, %v460
      %v489 = vadd.f32 %v328, %v465
      %v490 = vadd.f32 %v329, %v468
      %v491 = vadd.f32 %v330, %v473
      %v492 = vadd.f32 %v331, %v476
      %v493 = vadd.f32 %v332, %v481
      %v494 = vadd.f32 %v333, %v484
      %495 = vst [vmem:[#allocation2] sm:$0xff] %v487
      %496 = vst [vmem:[#allocation2 + $0x8] sm:$0xff] %v488
      %497 = vst [vmem:[#allocation2 + $0x10] sm:$0xff] %v489
      %498 = vst [vmem:[#allocation2 + $0x18] sm:$0xff] %v490
      %499 = vst [vmem:[#allocation2 + $0x20] sm:$0xff] %v491
      %500 = vst [vmem:[#allocation2 + $0x28] sm:$0xff] %v492
      %501 = vst [vmem:[#allocation2 + $0x30] sm:$0xff] %v493
      %502 = vst [vmem:[#allocation2 + $0x38] sm:$0xff] %v494
      // Predicated region
      $region37: #{nfnet_forward.18} parent=31 // pred_check
        %p503 = pneg %p306
      $region38: #{nfnet_forward.18} parent=31 // pred_check_branch
        %505 = sbr.rel (%p503) target = $region40
      $region39: #{nfnet_forward.18} parent=31 // pred_region
        %v506 = vld [vmem:[#allocation2] sm:$0xff]
        %v507 = vld [vmem:[#allocation2 + $0x8] sm:$0xff]
        %v508 = vld [vmem:[#allocation2 + $0x10] sm:$0xff]
        %v509 = vld [vmem:[#allocation2 + $0x18] sm:$0xff]
        %v510 = vld [vmem:[#allocation2 + $0x20] sm:$0xff]
        %v511 = vld [vmem:[#allocation2 + $0x28] sm:$0xff]
        %v512 = vld [vmem:[#allocation2 + $0x30] sm:$0xff]
        %v513 = vld [vmem:[#allocation2 + $0x38] sm:$0xff]
        %v514 = vld [vmem:[%s288] sm:$0x1]
        %v516 = vlaneseq
        %v517 = vshrl.u32 %v516, 7
        %v518 = vsub.s32 0, %v517
        %v519 = vrot.slane %v514, %v518
        %v521 = vadd.f32 %v506, %v519
        %v522 = vadd.f32 %v507, %v519
        %v523 = vadd.f32 %v508, %v519
        %v524 = vadd.f32 %v509, %v519
        %v525 = vadd.f32 %v510, %v519
        %v526 = vadd.f32 %v511, %v519
        %v527 = vadd.f32 %v512, %v519
        %v528 = vadd.f32 %v513, %v519
        %v529 = vpack.c.bf16 %v522, %v521
        %v530 = vpack.c.bf16 %v524, %v523
        %v531 = vpack.c.bf16 %v526, %v525
        %v532 = vpack.c.bf16 %v528, %v527
        %v537 = vunpack.c.l.b16 %v529
        %v538 = vunpack.c.h.b16 %v529
        %v539 = vunpack.c.l.b16 %v530
        %v540 = vunpack.c.h.b16 %v530
        %v541 = vunpack.c.l.b16 %v531
        %v542 = vunpack.c.h.b16 %v531
        %v543 = vunpack.c.l.b16 %v532
        %v544 = vunpack.c.h.b16 %v532
        %v545 = vpack.c.b16 %v537, %v537
        %v546 = vpack.c.b16 %v538, %v538
        %v547 = vpack.c.b16 %v539, %v539
        %v548 = vpack.c.b16 %v540, %v540
        %v549 = vpack.c.b16 %v541, %v541
        %v550 = vpack.c.b16 %v542, %v542
        %v551 = vpack.c.b16 %v543, %v543
        %v552 = vpack.c.b16 %v544, %v544
        %561 = vst [vmem:[%s296] sm:$0xf] %v545
        %562 = vst [vmem:[%s296 + $0x4] sm:$0xf] %v546
        %563 = vst [vmem:[%s296 + $0x8] sm:$0xf] %v547
        %564 = vst [vmem:[%s296 + $0xc] sm:$0xf] %v548
        %565 = vst [vmem:[%s296 + $0x10] sm:$0xf] %v549
        %566 = vst [vmem:[%s296 + $0x14] sm:$0xf] %v550
        %567 = vst [vmem:[%s296 + $0x18] sm:$0xf] %v551
        %568 = vst [vmem:[%s296 + $0x1c] sm:$0xf] %v552
        %v569 = vadd.f32 %v521, %v522
        %v570 = vadd.f32 %v569, %v523
        %v571 = vadd.f32 %v570, %v524
        %v572 = vadd.f32 %v571, %v525
        %v573 = vadd.f32 %v572, %v526
        %v574 = vadd.f32 %v573, %v527
        %v575 = vadd.f32 %v574, %v528
        %v576 = vrot.slane %v575, 4
        %v577 = vadd.f32 %v575, %v576
        %v578 = vrot.slane %v577, 2
        %v579 = vadd.f32 %v577, %v578
        %v580 = vrot.slane %v579, 1
        %v581 = vadd.f32 %v579, %v580
        %582 = vst [vmem:[%s304] sm:$0xff] %v581
      $region40: #{nfnet_forward.18} parent=31 // pred_fallthru
        _
      %s583 = smul.u32 8, %s21
      %p584 = scmp.lt.s32.totalorder %s583, 15
      %s585 = scalar_select %p584, %s583, 15
      %p586 = scmp.lt.s32.totalorder %s22, 0
      %s587 = scalar_select %p586, %s22, 0
      %s588 = sadd.s32 %s587, %s585
      %s589 = smul.addr %s588, 4
      %s590 = scalar_lea.vmem %s3, %s589
      %p591 = scmp.lt.s32.totalorder %s21, 1
      %s592 = scalar_select %p591, %s21, 1
      %p593 = scmp.lt.s32.totalorder %s22, 0
      %s594 = scalar_select %p593, %s22, 0
      %s595 = sadd.s32 %s594, %s592
      %s596 = smul.addr %s595, 8
      %s597 = scalar_lea.vmem %s4, %s596
      // Predicated region
      $region41: #{nfnet_forward.18} parent=31 // pred_check
        %p598 = pneg %p137
      $region42: #{nfnet_forward.18} parent=31 // pred_check_branch
        %600 = sbr.rel (%p598) target = $region44
      $region43: #{nfnet_forward.18} parent=31 // pred_region
        %s601 = smul.u32 8, %s21
      $region44: #{nfnet_forward.18} parent=31 // pred_fallthru
        _
      // Predicated region
      $region45: #{nfnet_forward.18} parent=31 // pred_check
        %p602 = pneg %p165
      $region46: #{nfnet_forward.18} parent=31 // pred_check_branch
        %604 = sbr.rel (%p602) target = $region48
      $region47: #{nfnet_forward.18} parent=31 // pred_region
        _
      $region48: #{nfnet_forward.18} parent=31 // pred_fallthru
        _
    $region32: #{nfnet_forward.18} parent=5 // pred_fallthru
      _
    %p605 = scmp.le.s32.totalorder 2, %s11
    // Predicated region
    $region49: #{nfnet_forward.18} parent=5 // pred_check
      %p606 = pneg %p605
    $region50: #{nfnet_forward.18} parent=5 // pred_check_branch
      %608 = sbr.rel (%p606) target = $region52
    $region51: #{nfnet_forward.18} parent=5 // pred_region
      %s609 = ssub.s32 %s11, 2
      // Predicated region
      $region53: #{nfnet_forward.18} parent=51 // pred_check
        %p610 = pneg %p143
      $region54: #{nfnet_forward.18} parent=51 // pred_check_branch
        %612 = sbr.rel (%p610) target = $region56
      $region55: #{nfnet_forward.18} parent=51 // pred_region
        %s613 = smul.u32 8, %s24
        %p614 = scmp.lt.s32.totalorder %s613, 15
        %s615 = scalar_select %p614, %s613, 15
        %p616 = scmp.lt.s32.totalorder %s25, 0
        %s617 = scalar_select %p616, %s25, 0
        %s618 = sadd.s32 %s617, %s615
        %s619 = smul.addr %s618, 4
        %s620 = scalar_lea.vmem %s3, %s619
      $region56: #{nfnet_forward.18} parent=51 // pred_fallthru
        _
      // Predicated region
      $region57: #{nfnet_forward.18} parent=51 // pred_check
        %p621 = pneg %p171
      $region58: #{nfnet_forward.18} parent=51 // pred_check_branch
        %623 = sbr.rel (%p621) target = $region60
      $region59: #{nfnet_forward.18} parent=51 // pred_region
        %p624 = scmp.lt.s32.totalorder %s24, 1
        %s625 = scalar_select %p624, %s24, 1
        %p626 = scmp.lt.s32.totalorder %s25, 0
        %s627 = scalar_select %p626, %s25, 0
        %s628 = sadd.s32 %s627, %s625
        %s629 = smul.addr %s628, 8
        %s630 = scalar_lea.vmem %s4, %s629
      $region60: #{nfnet_forward.18} parent=51 // pred_fallthru
        _
    $region52: #{nfnet_forward.18} parent=5 // pred_fallthru
      _
  $region6: #{nfnet_forward.18} parent=0 // loop_footer
    %s15 = sadd.s32 1, %s11
  $region7: #{nfnet_forward.18} parent=0 // loop_footer_branch
    %10 = sbr.rel target = $region3
  $region8: #{nfnet_forward.18} parent=0 // loop_exit
    _

// kernel: nfnet_forward.14
$region0: #{nfnet_forward.14}
  #allocation0 [shape = 'u32[]', space=smem, size = 0x4, offset = 0x4, fixed_abs, tag = 'smem constant byte address 0x4 - core index']
  #allocation1 [shape = 'u32[144,128]{1,0:T(1,128)}', space=vmem, size = 0x12000, scoped, tag = 'internal scratch']
  #allocation2 [shape = 'f32[128,128]{1,0:T(8,128)}', space=vmem, size = 0x10000, scoped, tag = 'scratch operand']
  %s0 = inlined_call_operand.vmem [shape: bf16[128,128], index: 0, kind: input, shape index: {}]
  %s1 = inlined_call_operand.vmem [shape: bf16[128,128], index: 1, kind: input, shape index: {}]
  %s2 = inlined_call_operand.vmem [shape: f32[1,128], index: 2, kind: input, shape index: {}]
  %s3 = inlined_call_operand.vmem [shape: bf16[128,128], index: 3, kind: output, shape index: {}]
  %s4 = sld [smem:[#allocation0]]
  $region30: #{nfnet_forward.14} parent=0
    _
  %s6 = ssub.s32 1, %s4
  %s7 = scalar_select 0, %s6, %s4
  // Predicated region
  $region2: #{nfnet_forward.14} parent=0 // pred_check
    _
  $region3: #{nfnet_forward.14} parent=0 // pred_check_branch
    %9 = sbr.rel (0) target = $region5
  $region4: #{nfnet_forward.14} parent=0 // pred_region
    _
  $region5: #{nfnet_forward.14} parent=0 // pred_fallthru
    _
  // Predicated region
  $region6: #{nfnet_forward.14} parent=0 // pred_check
    _
  $region7: #{nfnet_forward.14} parent=0 // pred_check_branch
    %11 = sbr.rel (0) target = $region9
  $region8: #{nfnet_forward.14} parent=0 // pred_region
    _
  $region9: #{nfnet_forward.14} parent=0 // pred_fallthru
    _
  // Predicated region
  $region10: #{nfnet_forward.14} parent=0 // pred_check
    _
  $region11: #{nfnet_forward.14} parent=0 // pred_check_branch
    %13 = sbr.rel (0) target = $region13
  $region12: #{nfnet_forward.14} parent=0 // pred_region
    _
  $region13: #{nfnet_forward.14} parent=0 // pred_fallthru
    _
  %p15 = scmp.eq.s32.totalorder 0, 0
  // Predicated region
  $region14: #{nfnet_forward.14} parent=0 // pred_check
    %p16 = pneg %p15
  $region15: #{nfnet_forward.14} parent=0 // pred_check_branch
    %18 = sbr.rel (%p16) target = $region17
  $region16: #{nfnet_forward.14} parent=0 // pred_region
    %19 = vst [vmem:[#allocation2] sm:$0xff] 0.0
    %20 = vst [vmem:[#allocation2 + $0x8] sm:$0xff] 0.0
    %21 = vst [vmem:[#allocation2 + $0x10] sm:$0xff] 0.0
    %22 = vst [vmem:[#allocation2 + $0x18] sm:$0xff] 0.0
    %23 = vst [vmem:[#allocation2 + $0x20] sm:$0xff] 0.0
    %24 = vst [vmem:[#allocation2 + $0x28] sm:$0xff] 0.0
    %25 = vst [vmem:[#allocation2 + $0x30] sm:$0xff] 0.0
    %26 = vst [vmem:[#allocation2 + $0x38] sm:$0xff] 0.0
    %27 = vst [vmem:[#allocation2 + $0x40] sm:$0xff] 0.0
    %28 = vst [vmem:[#allocation2 + $0x48] sm:$0xff] 0.0
    %29 = vst [vmem:[#allocation2 + $0x50] sm:$0xff] 0.0
    %30 = vst [vmem:[#allocation2 + $0x58] sm:$0xff] 0.0
    %31 = vst [vmem:[#allocation2 + $0x60] sm:$0xff] 0.0
    %32 = vst [vmem:[#allocation2 + $0x68] sm:$0xff] 0.0
    %33 = vst [vmem:[#allocation2 + $0x70] sm:$0xff] 0.0
    %34 = vst [vmem:[#allocation2 + $0x78] sm:$0xff] 0.0
  $region17: #{nfnet_forward.14} parent=0 // pred_fallthru
    _
  %v35 = vld [vmem:[%s0] sm:$0xf]
  %v36 = vld [vmem:[%s0 + $0x4] sm:$0xf]
  %v37 = vld [vmem:[%s0 + $0x8] sm:$0xf]
  %v38 = vld [vmem:[%s0 + $0xc] sm:$0xf]
  %v39 = vld [vmem:[%s0 + $0x10] sm:$0xf]
  %v40 = vld [vmem:[%s0 + $0x14] sm:$0xf]
  %v41 = vld [vmem:[%s0 + $0x18] sm:$0xf]
  %v42 = vld [vmem:[%s0 + $0x1c] sm:$0xf]
  %v43 = vld [vmem:[%s0 + $0x20] sm:$0xf]
  %v44 = vld [vmem:[%s0 + $0x24] sm:$0xf]
  %v45 = vld [vmem:[%s0 + $0x28] sm:$0xf]
  %v46 = vld [vmem:[%s0 + $0x2c] sm:$0xf]
  %v47 = vld [vmem:[%s0 + $0x30] sm:$0xf]
  %v48 = vld [vmem:[%s0 + $0x34] sm:$0xf]
  %v49 = vld [vmem:[%s0 + $0x38] sm:$0xf]
  %v50 = vld [vmem:[%s0 + $0x3c] sm:$0xf]
  %v51 = vld [vmem:[#allocation2] sm:$0xff]
  %v52 = vld [vmem:[#allocation2 + $0x8] sm:$0xff]
  %v53 = vld [vmem:[#allocation2 + $0x10] sm:$0xff]
  %v54 = vld [vmem:[#allocation2 + $0x18] sm:$0xff]
  %v55 = vld [vmem:[#allocation2 + $0x20] sm:$0xff]
  %v56 = vld [vmem:[#allocation2 + $0x28] sm:$0xff]
  %v57 = vld [vmem:[#allocation2 + $0x30] sm:$0xff]
  %v58 = vld [vmem:[#allocation2 + $0x38] sm:$0xff]
  %v59 = vld [vmem:[#allocation2 + $0x40] sm:$0xff]
  %v60 = vld [vmem:[#allocation2 + $0x48] sm:$0xff]
  %v61 = vld [vmem:[#allocation2 + $0x50] sm:$0xff]
  %v62 = vld [vmem:[#allocation2 + $0x58] sm:$0xff]
  %v63 = vld [vmem:[#allocation2 + $0x60] sm:$0xff]
  %v64 = vld [vmem:[#allocation2 + $0x68] sm:$0xff]
  %v65 = vld [vmem:[#allocation2 + $0x70] sm:$0xff]
  %v66 = vld [vmem:[#allocation2 + $0x78] sm:$0xff]
  %v67 = vld [vmem:[%s1] sm:$0xf]
  %v68 = vld [vmem:[%s1 + $0x4] sm:$0xf]
  %v69 = vld [vmem:[%s1 + $0x8] sm:$0xf]
  %v70 = vld [vmem:[%s1 + $0xc] sm:$0xf]
  %v71 = vld [vmem:[%s1 + $0x10] sm:$0xf]
  %v72 = vld [vmem:[%s1 + $0x14] sm:$0xf]
  %v73 = vld [vmem:[%s1 + $0x18] sm:$0xf]
  %v74 = vld [vmem:[%s1 + $0x1c] sm:$0xf]
  %v75 = vld [vmem:[%s1 + $0x20] sm:$0xf]
  %v76 = vld [vmem:[%s1 + $0x24] sm:$0xf]
  %v77 = vld [vmem:[%s1 + $0x28] sm:$0xf]
  %v78 = vld [vmem:[%s1 + $0x2c] sm:$0xf]
  %v79 = vld [vmem:[%s1 + $0x30] sm:$0xf]
  %v80 = vld [vmem:[%s1 + $0x34] sm:$0xf]
  %v81 = vld [vmem:[%s1 + $0x38] sm:$0xf]
  %v82 = vld [vmem:[%s1 + $0x3c] sm:$0xf]
  %v99 = vunpack.c.l.b16 %v35
  %v100 = vunpack.c.l.b16 %v36
  %v101 = vunpack.c.l.b16 %v37
  %v102 = vunpack.c.l.b16 %v38
  %v103 = vunpack.c.l.b16 %v39
  %v104 = vunpack.c.l.b16 %v40
  %v105 = vunpack.c.l.b16 %v41
  %v106 = vunpack.c.l.b16 %v42
  %v107 = vunpack.c.l.b16 %v43
  %v108 = vunpack.c.l.b16 %v44
  %v109 = vunpack.c.l.b16 %v45
  %v110 = vunpack.c.l.b16 %v46
  %v111 = vunpack.c.l.b16 %v47
  %v112 = vunpack.c.l.b16 %v48
  %v113 = vunpack.c.l.b16 %v49
  %v114 = vunpack.c.l.b16 %v50
  %v115 = vpack.c.b16 %v100, %v99
  %v116 = vpack.c.b16 %v102, %v101
  %v117 = vpack.c.b16 %v104, %v103
  %v118 = vpack.c.b16 %v106, %v105
  %v119 = vpack.c.b16 %v108, %v107
  %v120 = vpack.c.b16 %v110, %v109
  %v121 = vpack.c.b16 %v112, %v111
  %v122 = vpack.c.b16 %v114, %v113
  %v147 = vunpack.c.l.b16 %v67
  %v148 = vunpack.c.l.b16 %v68
  %v149 = vunpack.c.l.b16 %v69
  %v150 = vunpack.c.l.b16 %v70
  %v151 = vunpack.c.l.b16 %v71
  %v152 = vunpack.c.l.b16 %v72
  %v153 = vunpack.c.l.b16 %v73
  %v154 = vunpack.c.l.b16 %v74
  %v155 = vunpack.c.l.b16 %v75
  %v156 = vunpack.c.l.b16 %v76
  %v157 = vunpack.c.l.b16 %v77
  %v158 = vunpack.c.l.b16 %v78
  %v159 = vunpack.c.l.b16 %v79
  %v160 = vunpack.c.l.b16 %v80
  %v161 = vunpack.c.l.b16 %v81
  %v162 = vunpack.c.l.b16 %v82
  %v163 = vpack.c.b16 %v148, %v147
  %v164 = vpack.c.b16 %v150, %v149
  %v165 = vpack.c.b16 %v152, %v151
  %v166 = vpack.c.b16 %v154, %v153
  %v167 = vpack.c.b16 %v156, %v155
  %v168 = vpack.c.b16 %v158, %v157
  %v169 = vpack.c.b16 %v160, %v159
  %v170 = vpack.c.b16 %v162, %v161
  %179 = vmatprep.subr.bf16.mxu0 0
  %180 = vmatpush1.bf16.msra.mxu0 %v163
  %181 = vmatprep.subr.bf16.mxu0 0
  %182 = vmatpush1.bf16.msra.mxu0 %v164
  %183 = vmatprep.subr.bf16.mxu0 0
  %184 = vmatpush1.bf16.msra.mxu0 %v165
  %185 = vmatprep.subr.bf16.mxu0 0
  %186 = vmatpush1.bf16.msra.mxu0 %v166
  %187 = vmatprep.subr.bf16.mxu0 0
  %188 = vmatpush1.bf16.msra.mxu0 %v167
  %189 = vmatprep.subr.bf16.mxu0 0
  %190 = vmatpush1.bf16.msra.mxu0 %v168
  %191 = vmatprep.subr.bf16.mxu0 0
  %192 = vmatpush1.bf16.msra.mxu0 %v169
  %193 = vmatprep.subr.bf16.mxu0 0
  %194 = vmatpush1.bf16.msra.mxu0 %v170
  %195 = vmatprep.subr.bf16.mxu0 0
  %196 = vmatpush1.bf16.msra.mxu0 0
  %197 = vmatprep.subr.bf16.mxu0 0
  %198 = vmatpush1.bf16.msra.mxu0 0
  %199 = vmatprep.subr.bf16.mxu0 0
  %200 = vmatpush1.bf16.msra.mxu0 0
  %201 = vmatprep.subr.bf16.mxu0 0
  %202 = vmatpush1.bf16.msra.mxu0 0
  %203 = vmatprep.subr.bf16.mxu0 0
  %204 = vmatpush1.bf16.msra.mxu0 0
  %205 = vmatprep.subr.bf16.mxu0 0
  %206 = vmatpush1.bf16.msra.mxu0 0
  %207 = vmatprep.subr.bf16.mxu0 0
  %208 = vmatpush1.bf16.msra.mxu0 0
  %209 = vmatprep.subr.bf16.mxu0 0
  %210 = vmatpush1.bf16.msra.mxu0 0
  %211 = vmatprep.mubr.bf16.mxu0 0
  %212 = vmatmul.mubr.bf16.gmra.mrb[0].mxu0 %v115
  %v213 = vpop.f32.mrb[0].mxu0
  %v214 = vadd.f32 0.0, %v213
  %v215 = vpop.f32.mrb[0].mxu0
  %v216 = vpop.f32.mrb[0].mxu0
  %v217 = vadd.f32 0.0, %v216
  %v218 = vpop.f32.mrb[0].mxu0
  %219 = vmatprep.mubr.bf16.mxu0 0
  %220 = vmatmul.mubr.bf16.gmra.mrb[0].mxu0 %v116
  %v221 = vpop.f32.mrb[0].mxu0
  %v222 = vadd.f32 0.0, %v221
  %v223 = vpop.f32.mrb[0].mxu0
  %v224 = vpop.f32.mrb[0].mxu0
  %v225 = vadd.f32 0.0, %v224
  %v226 = vpop.f32.mrb[0].mxu0
  %227 = vmatprep.mubr.bf16.mxu0 0
  %228 = vmatmul.mubr.bf16.gmra.mrb[0].mxu0 %v117
  %v229 = vpop.f32.mrb[0].mxu0
  %v230 = vadd.f32 0.0, %v229
  %v231 = vpop.f32.mrb[0].mxu0
  %v232 = vpop.f32.mrb[0].mxu0
  %v233 = vadd.f32 0.0, %v232
  %v234 = vpop.f32.mrb[0].mxu0
  %235 = vmatprep.mubr.bf16.mxu0 0
  %236 = vmatmul.mubr.bf16.gmra.mrb[0].mxu0 %v118
  %v237 = vpop.f32.mrb[0].mxu0
  %v238 = vadd.f32 0.0, %v237
  %v239 = vpop.f32.mrb[0].mxu0
  %v240 = vpop.f32.mrb[0].mxu0
  %v241 = vadd.f32 0.0, %v240
  %v242 = vpop.f32.mrb[0].mxu0
  %243 = vmatprep.mubr.bf16.mxu0 0
  %244 = vmatmul.mubr.bf16.gmra.mrb[0].mxu0 %v119
  %v245 = vpop.f32.mrb[0].mxu0
  %v246 = vadd.f32 0.0, %v245
  %v247 = vpop.f32.mrb[0].mxu0
  %v248 = vpop.f32.mrb[0].mxu0
  %v249 = vadd.f32 0.0, %v248
  %v250 = vpop.f32.mrb[0].mxu0
  %251 = vmatprep.mubr.bf16.mxu0 0
  %252 = vmatmul.mubr.bf16.gmra.mrb[0].mxu0 %v120
  %v253 = vpop.f32.mrb[0].mxu0
  %v254 = vadd.f32 0.0, %v253
  %v255 = vpop.f32.mrb[0].mxu0
  %v256 = vpop.f32.mrb[0].mxu0
  %v257 = vadd.f32 0.0, %v256
  %v258 = vpop.f32.mrb[0].mxu0
  %259 = vmatprep.mubr.bf16.mxu0 0
  %260 = vmatmul.mubr.bf16.gmra.mrb[0].mxu0 %v121
  %v261 = vpop.f32.mrb[0].mxu0
  %v262 = vadd.f32 0.0, %v261
  %v263 = vpop.f32.mrb[0].mxu0
  %v264 = vpop.f32.mrb[0].mxu0
  %v265 = vadd.f32 0.0, %v264
  %v266 = vpop.f32.mrb[0].mxu0
  %267 = vmatprep.mubr.bf16.mxu0 0
  %268 = vmatmul.mubr.bf16.gmra.mrb[0].mxu0 %v122
  %v269 = vpop.f32.mrb[0].mxu0
  %v270 = vadd.f32 0.0, %v269
  %v271 = vpop.f32.mrb[0].mxu0
  %v272 = vpop.f32.mrb[0].mxu0
  %v273 = vadd.f32 0.0, %v272
  %v274 = vpop.f32.mrb[0].mxu0
  %275 = vdwg.mxu0
  %v276 = vadd.f32 %v51, %v214
  %v277 = vadd.f32 %v52, %v217
  %v278 = vadd.f32 %v53, %v222
  %v279 = vadd.f32 %v54, %v225
  %v280 = vadd.f32 %v55, %v230
  %v281 = vadd.f32 %v56, %v233
  %v282 = vadd.f32 %v57, %v238
  %v283 = vadd.f32 %v58, %v241
  %v284 = vadd.f32 %v59, %v246
  %v285 = vadd.f32 %v60, %v249
  %v286 = vadd.f32 %v61, %v254
  %v287 = vadd.f32 %v62, %v257
  %v288 = vadd.f32 %v63, %v262
  %v289 = vadd.f32 %v64, %v265
  %v290 = vadd.f32 %v65, %v270
  %v291 = vadd.f32 %v66, %v273
  %292 = vst [vmem:[#allocation2] sm:$0xff] %v276
  %293 = vst [vmem:[#allocation2 + $0x8] sm:$0xff] %v277
  %294 = vst [vmem:[#allocation2 + $0x10] sm:$0xff] %v278
  %295 = vst [vmem:[#allocation2 + $0x18] sm:$0xff] %v279
  %296 = vst [vmem:[#allocation2 + $0x20] sm:$0xff] %v280
  %297 = vst [vmem:[#allocation2 + $0x28] sm:$0xff] %v281
  %298 = vst [vmem:[#allocation2 + $0x30] sm:$0xff] %v282
  %299 = vst [vmem:[#allocation2 + $0x38] sm:$0xff] %v283
  %300 = vst [vmem:[#allocation2 + $0x40] sm:$0xff] %v284
  %301 = vst [vmem:[#allocation2 + $0x48] sm:$0xff] %v285
  %302 = vst [vmem:[#allocation2 + $0x50] sm:$0xff] %v286
  %303 = vst [vmem:[#allocation2 + $0x58] sm:$0xff] %v287
  %304 = vst [vmem:[#allocation2 + $0x60] sm:$0xff] %v288
  %305 = vst [vmem:[#allocation2 + $0x68] sm:$0xff] %v289
  %306 = vst [vmem:[#allocation2 + $0x70] sm:$0xff] %v290
  %307 = vst [vmem:[#allocation2 + $0x78] sm:$0xff] %v291
  // Predicated region
  $region18: #{nfnet_forward.14} parent=0 // pred_check
    %p308 = pneg %p15
  $region19: #{nfnet_forward.14} parent=0 // pred_check_branch
    %310 = sbr.rel (%p308) target = $region21
  $region20: #{nfnet_forward.14} parent=0 // pred_region
    %v311 = vld [vmem:[#allocation2] sm:$0xff]
    %v312 = vld [vmem:[#allocation2 + $0x8] sm:$0xff]
    %v313 = vld [vmem:[#allocation2 + $0x10] sm:$0xff]
    %v314 = vld [vmem:[#allocation2 + $0x18] sm:$0xff]
    %v315 = vld [vmem:[#allocation2 + $0x20] sm:$0xff]
    %v316 = vld [vmem:[#allocation2 + $0x28] sm:$0xff]
    %v317 = vld [vmem:[#allocation2 + $0x30] sm:$0xff]
    %v318 = vld [vmem:[#allocation2 + $0x38] sm:$0xff]
    %v319 = vld [vmem:[#allocation2 + $0x40] sm:$0xff]
    %v320 = vld [vmem:[#allocation2 + $0x48] sm:$0xff]
    %v321 = vld [vmem:[#allocation2 + $0x50] sm:$0xff]
    %v322 = vld [vmem:[#allocation2 + $0x58] sm:$0xff]
    %v323 = vld [vmem:[#allocation2 + $0x60] sm:$0xff]
    %v324 = vld [vmem:[#allocation2 + $0x68] sm:$0xff]
    %v325 = vld [vmem:[#allocation2 + $0x70] sm:$0xff]
    %v326 = vld [vmem:[#allocation2 + $0x78] sm:$0xff]
    %v327 = vld [vmem:[%s2] sm:$0x1]
    %v329 = vlaneseq
    %v330 = vshrl.u32 %v329, 7
    %v331 = vsub.s32 0, %v330
    %v332 = vrot.slane %v327, %v331
    %v334 = vadd.f32 %v311, %v332
    %v335 = vadd.f32 %v312, %v332
    %v336 = vadd.f32 %v313, %v332
    %v337 = vadd.f32 %v314, %v332
    %v338 = vadd.f32 %v315, %v332
    %v339 = vadd.f32 %v316, %v332
    %v340 = vadd.f32 %v317, %v332
    %v341 = vadd.f32 %v318, %v332
    %v342 = vadd.f32 %v319, %v332
    %v343 = vadd.f32 %v320, %v332
    %v344 = vadd.f32 %v321, %v332
    %v345 = vadd.f32 %v322, %v332
    %v346 = vadd.f32 %v323, %v332
    %v347 = vadd.f32 %v324, %v332
    %v348 = vadd.f32 %v325, %v332
    %v349 = vadd.f32 %v326, %v332
    %v350 = vpack.c.bf16 %v335, %v334
    %v351 = vpack.c.bf16 %v337, %v336
    %v352 = vpack.c.bf16 %v339, %v338
    %v353 = vpack.c.bf16 %v341, %v340
    %v354 = vpack.c.bf16 %v343, %v342
    %v355 = vpack.c.bf16 %v345, %v344
    %v356 = vpack.c.bf16 %v347, %v346
    %v357 = vpack.c.bf16 %v349, %v348
    %v366 = vunpack.c.l.b16 %v350
    %v367 = vunpack.c.h.b16 %v350
    %v368 = vunpack.c.l.b16 %v351
    %v369 = vunpack.c.h.b16 %v351
    %v370 = vunpack.c.l.b16 %v352
    %v371 = vunpack.c.h.b16 %v352
    %v372 = vunpack.c.l.b16 %v353
    %v373 = vunpack.c.h.b16 %v353
    %v374 = vunpack.c.l.b16 %v354
    %v375 = vunpack.c.h.b16 %v354
    %v376 = vunpack.c.l.b16 %v355
    %v377 = vunpack.c.h.b16 %v355
    %v378 = vunpack.c.l.b16 %v356
    %v379 = vunpack.c.h.b16 %v356
    %v380 = vunpack.c.l.b16 %v357
    %v381 = vunpack.c.h.b16 %v357
    %v382 = vpack.c.b16 %v366, %v366
    %v383 = vpack.c.b16 %v367, %v367
    %v384 = vpack.c.b16 %v368, %v368
    %v385 = vpack.c.b16 %v369, %v369
    %v386 = vpack.c.b16 %v370, %v370
    %v387 = vpack.c.b16 %v371, %v371
    %v388 = vpack.c.b16 %v372, %v372
    %v389 = vpack.c.b16 %v373, %v373
    %v390 = vpack.c.b16 %v374, %v374
    %v391 = vpack.c.b16 %v375, %v375
    %v392 = vpack.c.b16 %v376, %v376
    %v393 = vpack.c.b16 %v377, %v377
    %v394 = vpack.c.b16 %v378, %v378
    %v395 = vpack.c.b16 %v379, %v379
    %v396 = vpack.c.b16 %v380, %v380
    %v397 = vpack.c.b16 %v381, %v381
    %414 = vst [vmem:[%s3] sm:$0xf] %v382
    %415 = vst [vmem:[%s3 + $0x4] sm:$0xf] %v383
    %416 = vst [vmem:[%s3 + $0x8] sm:$0xf] %v384
    %417 = vst [vmem:[%s3 + $0xc] sm:$0xf] %v385
    %418 = vst [vmem:[%s3 + $0x10] sm:$0xf] %v386
    %419 = vst [vmem:[%s3 + $0x14] sm:$0xf] %v387
    %420 = vst [vmem:[%s3 + $0x18] sm:$0xf] %v388
    %421 = vst [vmem:[%s3 + $0x1c] sm:$0xf] %v389
    %422 = vst [vmem:[%s3 + $0x20] sm:$0xf] %v390
    %423 = vst [vmem:[%s3 + $0x24] sm:$0xf] %v391
    %424 = vst [vmem:[%s3 + $0x28] sm:$0xf] %v392
    %425 = vst [vmem:[%s3 + $0x2c] sm:$0xf] %v393
    %426 = vst [vmem:[%s3 + $0x30] sm:$0xf] %v394
    %427 = vst [vmem:[%s3 + $0x34] sm:$0xf] %v395
    %428 = vst [vmem:[%s3 + $0x38] sm:$0xf] %v396
    %429 = vst [vmem:[%s3 + $0x3c] sm:$0xf] %v397
  $region21: #{nfnet_forward.14} parent=0 // pred_fallthru
    _
  // Predicated region
  $region22: #{nfnet_forward.14} parent=0 // pred_check
    _
  $region23: #{nfnet_forward.14} parent=0 // pred_check_branch
    %431 = sbr.rel (0) target = $region25
  $region24: #{nfnet_forward.14} parent=0 // pred_region
    _
  $region25: #{nfnet_forward.14} parent=0 // pred_fallthru
    _
  // Predicated region
  $region26: #{nfnet_forward.14} parent=0 // pred_check
    _
  $region27: #{nfnet_forward.14} parent=0 // pred_check_branch
    %433 = sbr.rel (0) target = $region29
  $region28: #{nfnet_forward.14} parent=0 // pred_region
    _
  $region29: #{nfnet_forward.14} parent=0 // pred_fallthru
    _

// kernel: nfnet_forward.19
$region0: #{nfnet_forward.19}
  #allocation0 [shape = 'u32[]', space=smem, size = 0x4, offset = 0x4, fixed_abs, tag = 'smem constant byte address 0x4 - core index']
  #allocation1 [shape = 'u32[144,128]{1,0:T(1,128)}', space=vmem, size = 0x12000, scoped, tag = 'internal scratch']
  #allocation2 [shape = 'f32[8,128]{1,0:T(8,128)}', space=vmem, size = 0x1000, scoped, tag = 'scratch operand']
  #allocation3 [shape = 'f32[8,128]{1,0:T(8,128)}', space=vmem, size = 0x1000, scoped, tag = 'scratch operand']
  %s0 = inlined_call_operand.vmem [shape: f32[2,1,128], index: 0, kind: input, shape index: {}]
  %s1 = inlined_call_operand.vmem [shape: f32[128,128], index: 1, kind: input, shape index: {}]
  %s2 = inlined_call_operand.vmem [shape: f32[1,128], index: 2, kind: input, shape index: {}]
  %s3 = inlined_call_operand.vmem [shape: f32[128,128], index: 3, kind: input, shape index: {}]
  %s4 = inlined_call_operand.vmem [shape: f32[1,128], index: 4, kind: input, shape index: {}]
  %s5 = inlined_call_operand.vmem [shape: bf16[2,64,128], index: 5, kind: input, shape index: {}]
  %s6 = inlined_call_operand.vmem [shape: bf16[2,64,128], index: 6, kind: input, shape index: {}]
  %s7 = inlined_call_operand.vmem [shape: f32[128,128], index: 7, kind: input, shape index: {}]
  %s8 = inlined_call_operand.vmem [shape: f32[1,128], index: 8, kind: input, shape index: {}]
  %s9 = inlined_call_operand.hbm [shape: f32[2,1,128], index: 9, kind: output, shape index: {}]
  %s10 = sld [smem:[#allocation0]]
  $region77: #{nfnet_forward.19} parent=0
    _
  %s12 = ssub.s32 1, %s10
  %s13 = scalar_select 0, %s12, %s10
  $region1: #{nfnet_forward.19} parent=0
    #allocation4 [shape = 'u8[1024]{0}', space=vmem, size = 0x400, scoped, tag = 'output window, operand 0']
    #allocation5 [shape = 's32[2]{0}', space=sflag, size = 0x8, scoped, tag = 'scoped memory for nfnet_forward.19']
    %14 = vsyncpa [#allocation5], 0
    %s15 = scalar_lea.sflag [#allocation5], 1
    %16 = vsyncpa %s15, 0
    loop: start=0, step=1, limit=4
    $region2: #{nfnet_forward.19} parent=1 // loop_pre_header
      _
    $region3: #{nfnet_forward.19} parent=1 // loop_header
      %s18 = sphi 0, %s22
      %p19 = scmp.ge.s32.totalorder %s18, 4
      %s25 = sphi 0, %s37
      %s26 = sphi 0, %s33
      %s27 = sphi 0, %s25
      %s28 = sphi 0, %s26
      %s29 = sphi 0, %s27
      %s30 = sphi 0, %s28
      %s40 = sphi 0, %s42
      %s43 = sphi 0, %s40
      %s44 = sphi 0, %s43
      %s60 = sphi 0, %s44
      %s64 = sphi 0, %s64
      %s66 = sphi 0, %s64
      %s67 = sphi 0, %s66
      %s81 = sphi 0, %s67
      %s85 = sphi 0, %s85
      %s87 = sphi 0, %s85
      %s88 = sphi 0, %s87
      %s102 = sphi 0, %s88
      %s106 = sphi 0, %s106
      %s108 = sphi 0, %s106
      %s109 = sphi 0, %s108
      %s123 = sphi 0, %s109
      %s127 = sphi 0, %s127
      %s129 = sphi 0, %s127
      %s130 = sphi 0, %s129
      %s144 = sphi 0, %s130
      %s152 = sphi 0, %s154
      %s155 = sphi 0, %s152
      %s156 = sphi 0, %s155
      %s172 = sphi 0, %s156
      %s180 = sphi 0, %s182
      %s183 = sphi 0, %s180
      %s184 = sphi 0, %s183
      %s200 = sphi 0, %s184
      %s204 = sphi 0, %s204
      %s206 = sphi 0, %s204
      %s207 = sphi 0, %s206
      %s221 = sphi 0, %s207
      %s225 = sphi 0, %s225
      %s227 = sphi 0, %s225
      %s228 = sphi 0, %s227
      %s242 = sphi 0, %s228
      %s248 = sphi 0, %s250
      %s251 = sphi 0, %s248
      %s252 = sphi 0, %s251
      %s268 = sphi 0, %s252
    $region4: #{nfnet_forward.19} parent=1 // loop_header_branch
      %21 = sbr.rel (%p19) target = $region8
    $region5: #{nfnet_forward.19} parent=1 // loop_body
      %s23 = ssub.s32 %s18, 1
      %s24 = ssub.s32 %s18, 2
      %s31 = sadd.s32 1, %s26
      %p32 = scmp.ge.s32.totalorder %s31, 1
      %s33 = scalar_select %p32, 0, %s31
      %s34 = sadd.s32 1, %s25
      %s35 = scalar_select %p32, %s34, %s25
      %p36 = scmp.ge.s32.totalorder %s35, 2
      %s37 = scalar_select %p36, 0, %s35
      %s38 = ssub.s32 %s25, %s37
      %p39 = scmp.eq.s32.totalorder %s38, 0
      %s41 = sadd.s32 %s40, 1
      %s42 = scalar_select %p39, %s40, %s41
      %p45 = pneg %p39
      %p46 = scmp.eq.s32.totalorder %s18, 1
      %p47 = por %p45, %p46
      %p48 = scmp.ne.s32.totalorder %s40, %s43
      %p49 = scmp.eq.s32.totalorder %s18, 0
      %p50 = por %p48, %p49
      %p51 = scmp.ne.s32.totalorder %s40, %s43
      %p52 = scmp.eq.s32.totalorder %s23, 1
      %p53 = por %p51, %p52
      %p54 = scmp.ne.s32.totalorder %s43, %s44
      %p55 = scmp.eq.s32.totalorder %s23, 0
      %p56 = por %p54, %p55
      %p57 = scmp.ne.s32.totalorder %s43, %s44
      %p58 = scmp.eq.s32.totalorder %s24, 1
      %p59 = por %p57, %p58
      %p61 = scmp.ne.s32.totalorder %s44, %s60
      %p62 = scmp.eq.s32.totalorder %s24, 0
      %p63 = por %p61, %p62
      %s65 = sadd.s32 %s64, 1
      %p68 = scmp.eq.s32.totalorder %s18, 1
      %p69 = scmp.ne.s32.totalorder %s64, %s66
      %p70 = scmp.eq.s32.totalorder %s18, 0
      %p71 = por %p69, %p70
      %p72 = scmp.ne.s32.totalorder %s64, %s66
      %p73 = scmp.eq.s32.totalorder %s23, 1
      %p74 = por %p72, %p73
      %p75 = scmp.ne.s32.totalorder %s66, %s67
      %p76 = scmp.eq.s32.totalorder %s23, 0
      %p77 = por %p75, %p76
      %p78 = scmp.ne.s32.totalorder %s66, %s67
      %p79 = scmp.eq.s32.totalorder %s24, 1
      %p80 = por %p78, %p79
      %p82 = scmp.ne.s32.totalorder %s67, %s81
      %p83 = scmp.eq.s32.totalorder %s24, 0
      %p84 = por %p82, %p83
      %s86 = sadd.s32 %s85, 1
      %p89 = scmp.eq.s32.totalorder %s18, 1
      %p90 = scmp.ne.s32.totalorder %s85, %s87
      %p91 = scmp.eq.s32.totalorder %s18, 0
      %p92 = por %p90, %p91
      %p93 = scmp.ne.s32.totalorder %s85, %s87
      %p94 = scmp.eq.s32.totalorder %s23, 1
      %p95 = por %p93, %p94
      %p96 = scmp.ne.s32.totalorder %s87, %s88
      %p97 = scmp.eq.s32.totalorder %s23, 0
      %p98 = por %p96, %p97
      %p99 = scmp.ne.s32.totalorder %s87, %s88
      %p100 = scmp.eq.s32.totalorder %s24, 1
      %p101 = por %p99, %p100
      %p103 = scmp.ne.s32.totalorder %s88, %s102
      %p104 = scmp.eq.s32.totalorder %s24, 0
      %p105 = por %p103, %p104
      %s107 = sadd.s32 %s106, 1
      %p110 = scmp.eq.s32.totalorder %s18, 1
      %p111 = scmp.ne.s32.totalorder %s106, %s108
      %p112 = scmp.eq.s32.totalorder %s18, 0
      %p113 = por %p111, %p112
      %p114 = scmp.ne.s32.totalorder %s106, %s108
      %p115 = scmp.eq.s32.totalorder %s23, 1
      %p116 = por %p114, %p115
      %p117 = scmp.ne.s32.totalorder %s108, %s109
      %p118 = scmp.eq.s32.totalorder %s23, 0
      %p119 = por %p117, %p118
      %p120 = scmp.ne.s32.totalorder %s108, %s109
      %p121 = scmp.eq.s32.totalorder %s24, 1
      %p122 = por %p120, %p121
      %p124 = scmp.ne.s32.totalorder %s109, %s123
      %p125 = scmp.eq.s32.totalorder %s24, 0
      %p126 = por %p124, %p125
      %s128 = sadd.s32 %s127, 1
      %p131 = scmp.eq.s32.totalorder %s18, 1
      %p132 = scmp.ne.s32.totalorder %s127, %s129
      %p133 = scmp.eq.s32.totalorder %s18, 0
      %p134 = por %p132, %p133
      %p135 = scmp.ne.s32.totalorder %s127, %s129
      %p136 = scmp.eq.s32.totalorder %s23, 1
      %p137 = por %p135, %p136
      %p138 = scmp.ne.s32.totalorder %s129, %s130
      %p139 = scmp.eq.s32.totalorder %s23, 0
      %p140 = por %p138, %p139
      %p141 = scmp.ne.s32.totalorder %s129, %s130
      %p142 = scmp.eq.s32.totalorder %s24, 1
      %p143 = por %p141, %p142
      %p145 = scmp.ne.s32.totalorder %s130, %s144
      %p146 = scmp.eq.s32.totalorder %s24, 0
      %p147 = por %p145, %p146
      %s148 = ssub.s32 %s25, %s37
      %s149 = ssub.s32 %s26, %s33
      %s150 = sor.u32 %s148, %s149
      %p151 = scmp.eq.s32.totalorder %s150, 0
      %s153 = sadd.s32 %s152, 1
      %s154 = scalar_select %p151, %s152, %s153
      %p157 = pneg %p151
      %p158 = scmp.eq.s32.totalorder %s18, 1
      %p159 = por %p157, %p158
      %p160 = scmp.ne.s32.totalorder %s152, %s155
      %p161 = scmp.eq.s32.totalorder %s18, 0
      %p162 = por %p160, %p161
      %p163 = scmp.ne.s32.totalorder %s152, %s155
      %p164 = scmp.eq.s32.totalorder %s23, 1
      %p165 = por %p163, %p164
      %p166 = scmp.ne.s32.totalorder %s155, %s156
      %p167 = scmp.eq.s32.totalorder %s23, 0
      %p168 = por %p166, %p167
      %p169 = scmp.ne.s32.totalorder %s155, %s156
      %p170 = scmp.eq.s32.totalorder %s24, 1
      %p171 = por %p169, %p170
      %p173 = scmp.ne.s32.totalorder %s156, %s172
      %p174 = scmp.eq.s32.totalorder %s24, 0
      %p175 = por %p173, %p174
      %s176 = ssub.s32 %s25, %s37
      %s177 = ssub.s32 %s26, %s33
      %s178 = sor.u32 %s176, %s177
      %p179 = scmp.eq.s32.totalorder %s178, 0
      %s181 = sadd.s32 %s180, 1
      %s182 = scalar_select %p179, %s180, %s181
      %p185 = pneg %p179
      %p186 = scmp.eq.s32.totalorder %s18, 1
      %p187 = por %p185, %p186
      %p188 = scmp.ne.s32.totalorder %s180, %s183
      %p189 = scmp.eq.s32.totalorder %s18, 0
      %p190 = por %p188, %p189
      %p191 = scmp.ne.s32.totalorder %s180, %s183
      %p192 = scmp.eq.s32.totalorder %s23, 1
      %p193 = por %p191, %p192
      %p194 = scmp.ne.s32.totalorder %s183, %s184
      %p195 = scmp.eq.s32.totalorder %s23, 0
      %p196 = por %p194, %p195
      %p197 = scmp.ne.s32.totalorder %s183, %s184
      %p198 = scmp.eq.s32.totalorder %s24, 1
      %p199 = por %p197, %p198
      %p201 = scmp.ne.s32.totalorder %s184, %s200
      %p202 = scmp.eq.s32.totalorder %s24, 0
      %p203 = por %p201, %p202
      %s205 = sadd.s32 %s204, 1
      %p208 = scmp.eq.s32.totalorder %s18, 1
      %p209 = scmp.ne.s32.totalorder %s204, %s206
      %p210 = scmp.eq.s32.totalorder %s18, 0
      %p211 = por %p209, %p210
      %p212 = scmp.ne.s32.totalorder %s204, %s206
      %p213 = scmp.eq.s32.totalorder %s23, 1
      %p214 = por %p212, %p213
      %p215 = scmp.ne.s32.totalorder %s206, %s207
      %p216 = scmp.eq.s32.totalorder %s23, 0
      %p217 = por %p215, %p216
      %p218 = scmp.ne.s32.totalorder %s206, %s207
      %p219 = scmp.eq.s32.totalorder %s24, 1
      %p220 = por %p218, %p219
      %p222 = scmp.ne.s32.totalorder %s207, %s221
      %p223 = scmp.eq.s32.totalorder %s24, 0
      %p224 = por %p222, %p223
      %s226 = sadd.s32 %s225, 1
      %p229 = scmp.eq.s32.totalorder %s18, 1
      %p230 = scmp.ne.s32.totalorder %s225, %s227
      %p231 = scmp.eq.s32.totalorder %s18, 0
      %p232 = por %p230, %p231
      %p233 = scmp.ne.s32.totalorder %s225, %s227
      %p234 = scmp.eq.s32.totalorder %s23, 1
      %p235 = por %p233, %p234
      %p236 = scmp.ne.s32.totalorder %s227, %s228
      %p237 = scmp.eq.s32.totalorder %s23, 0
      %p238 = por %p236, %p237
      %p239 = scmp.ne.s32.totalorder %s227, %s228
      %p240 = scmp.eq.s32.totalorder %s24, 1
      %p241 = por %p239, %p240
      %p243 = scmp.ne.s32.totalorder %s228, %s242
      %p244 = scmp.eq.s32.totalorder %s24, 0
      %p245 = por %p243, %p244
      %s246 = ssub.s32 %s25, %s37
      %p247 = scmp.eq.s32.totalorder %s246, 0
      %s249 = sadd.s32 %s248, 1
      %s250 = scalar_select %p247, %s248, %s249
      %p253 = pneg %p247
      %p254 = scmp.eq.s32.totalorder %s18, 1
      %p255 = por %p253, %p254
      %p256 = scmp.ne.s32.totalorder %s248, %s251
      %p257 = scmp.eq.s32.totalorder %s18, 0
      %p258 = por %p256, %p257
      %p259 = scmp.ne.s32.totalorder %s248, %s251
      %p260 = scmp.eq.s32.totalorder %s23, 1
      %p261 = por %p259, %p260
      %p262 = scmp.ne.s32.totalorder %s251, %s252
      %p263 = scmp.eq.s32.totalorder %s23, 0
      %p264 = por %p262, %p263
      %p265 = scmp.ne.s32.totalorder %s251, %s252
      %p266 = scmp.eq.s32.totalorder %s24, 1
      %p267 = por %p265, %p266
      %p269 = scmp.ne.s32.totalorder %s252, %s268
      %p270 = scmp.eq.s32.totalorder %s24, 0
      %p271 = por %p269, %p270
      %p272 = scmp.le.s32.totalorder 1, %s18
      %p273 = scmp.lt.s32.totalorder %s18, 3
      %p274 = pnand %p272, %p273
      %p275 = pneg %p274
      // Predicated region
      $region9: #{nfnet_forward.19} parent=5 // pred_check
        _
      $region10: #{nfnet_forward.19} parent=5 // pred_check_branch
        %277 = sbr.rel (%p274) target = $region12
      $region11: #{nfnet_forward.19} parent=5 // pred_region
        %s278 = ssub.s32 %s18, 1
        // Predicated region
        $region13: #{nfnet_forward.19} parent=11 // pred_check
          %p279 = pneg %p77
        $region14: #{nfnet_forward.19} parent=11 // pred_check_branch
          %281 = sbr.rel (%p279) target = $region16
        $region15: #{nfnet_forward.19} parent=11 // pred_region
          _
        $region16: #{nfnet_forward.19} parent=11 // pred_fallthru
          _
        // Predicated region
        $region17: #{nfnet_forward.19} parent=11 // pred_check
          %p282 = pneg %p98
        $region18: #{nfnet_forward.19} parent=11 // pred_check_branch
          %284 = sbr.rel (%p282) target = $region20
        $region19: #{nfnet_forward.19} parent=11 // pred_region
          _
        $region20: #{nfnet_forward.19} parent=11 // pred_fallthru
          _
        // Predicated region
        $region21: #{nfnet_forward.19} parent=11 // pred_check
          %p285 = pneg %p119
        $region22: #{nfnet_forward.19} parent=11 // pred_check_branch
          %287 = sbr.rel (%p285) target = $region24
        $region23: #{nfnet_forward.19} parent=11 // pred_region
          _
        $region24: #{nfnet_forward.19} parent=11 // pred_fallthru
          _
        // Predicated region
        $region25: #{nfnet_forward.19} parent=11 // pred_check
          %p288 = pneg %p140
        $region26: #{nfnet_forward.19} parent=11 // pred_check_branch
          %290 = sbr.rel (%p288) target = $region28
        $region27: #{nfnet_forward.19} parent=11 // pred_region
          _
        $region28: #{nfnet_forward.19} parent=11 // pred_fallthru
          _
        // Predicated region
        $region29: #{nfnet_forward.19} parent=11 // pred_check
          %p291 = pneg %p217
        $region30: #{nfnet_forward.19} parent=11 // pred_check_branch
          %293 = sbr.rel (%p291) target = $region32
        $region31: #{nfnet_forward.19} parent=11 // pred_region
          _
        $region32: #{nfnet_forward.19} parent=11 // pred_fallthru
          _
        // Predicated region
        $region33: #{nfnet_forward.19} parent=11 // pred_check
          %p294 = pneg %p238
        $region34: #{nfnet_forward.19} parent=11 // pred_check_branch
          %296 = sbr.rel (%p294) target = $region36
        $region35: #{nfnet_forward.19} parent=11 // pred_region
          _
        $region36: #{nfnet_forward.19} parent=11 // pred_fallthru
          _
      $region12: #{nfnet_forward.19} parent=5 // pred_fallthru
        _
      %p297 = scmp.lt.s32.totalorder %s18, 2
      // Predicated region
      $region37: #{nfnet_forward.19} parent=5 // pred_check
        %p298 = pneg %p297
      $region38: #{nfnet_forward.19} parent=5 // pred_check_branch
        %300 = sbr.rel (%p298) target = $region40
      $region39: #{nfnet_forward.19} parent=5 // pred_region
        // Predicated region
        $region41: #{nfnet_forward.19} parent=39 // pred_check
          %p301 = pneg %p50
        $region42: #{nfnet_forward.19} parent=39 // pred_check_branch
          %303 = sbr.rel (%p301) target = $region44
        $region43: #{nfnet_forward.19} parent=39 // pred_region
          %p304 = scmp.lt.s32.totalorder %s25, 1
          %s305 = scalar_select %p304, %s25, 1
          %s306 = scalar_lea.vmem %s0, %s305
        $region44: #{nfnet_forward.19} parent=39 // pred_fallthru
          _
        // Predicated region
        $region45: #{nfnet_forward.19} parent=39 // pred_check
          %p307 = pneg %p162
        $region46: #{nfnet_forward.19} parent=39 // pred_check_branch
          %309 = sbr.rel (%p307) target = $region48
        $region47: #{nfnet_forward.19} parent=39 // pred_region
          %s310 = smul.u32 8, %s26
          %p311 = scmp.lt.s32.totalorder %s25, 1
          %s312 = scalar_select %p311, %s25, 1
          %p313 = scmp.lt.s32.totalorder %s310, 7
          %s314 = scalar_select %p313, %s310, 7
          %s315 = smul.addr %s312, 8
          %s316 = sadd.s32 %s314, %s315
          %s317 = smul.addr %s316, 4
          %s318 = scalar_lea.vmem %s5, %s317
          %s319 = smul.u32 8, %s26
        $region48: #{nfnet_forward.19} parent=39 // pred_fallthru
          _
        // Predicated region
        $region49: #{nfnet_forward.19} parent=39 // pred_check
          %p320 = pneg %p190
        $region50: #{nfnet_forward.19} parent=39 // pred_check_branch
          %322 = sbr.rel (%p320) target = $region52
        $region51: #{nfnet_forward.19} parent=39 // pred_region
          %s323 = smul.u32 8, %s26
          %p324 = scmp.lt.s32.totalorder %s25, 1
          %s325 = scalar_select %p324, %s25, 1
          %p326 = scmp.lt.s32.totalorder %s323, 7
          %s327 = scalar_select %p326, %s323, 7
          %s328 = smul.addr %s325, 8
          %s329 = sadd.s32 %s327, %s328
          %s330 = smul.addr %s329, 4
          %s331 = scalar_lea.vmem %s6, %s330
          %s332 = smul.u32 8, %s26
        $region52: #{nfnet_forward.19} parent=39 // pred_fallthru
          _
      $region40: #{nfnet_forward.19} parent=5 // pred_fallthru
        _
      %p333 = scmp.le.s32.totalorder 1, %s18
      %p334 = scmp.lt.s32.totalorder %s18, 3
      %p335 = pnand %p333, %p334
      %p336 = pneg %p335
      // Predicated region
      $region53: #{nfnet_forward.19} parent=5 // pred_check
        _
      $region54: #{nfnet_forward.19} parent=5 // pred_check_branch
        %338 = sbr.rel (%p335) target = $region56
      $region55: #{nfnet_forward.19} parent=5 // pred_region
        %s339 = ssub.s32 %s18, 1
        %p340 = scmp.lt.s32.totalorder %s27, 1
        %s341 = scalar_select %p340, %s27, 1
        %s342 = scalar_lea.vmem %s0, %s341
        %p343 = pneg %p56
        %p344 = pneg %p53
        %p345 = pneg %p77
        %p346 = pneg %p74
        %p347 = pneg %p98
        %p348 = pneg %p95
        %p349 = pneg %p119
        %p350 = pneg %p116
        %p351 = pneg %p140
        %p352 = pneg %p137
        %s353 = smul.u32 8, %s28
        %p354 = scmp.lt.s32.totalorder %s27, 1
        %s355 = scalar_select %p354, %s27, 1
        %p356 = scmp.lt.s32.totalorder %s353, 7
        %s357 = scalar_select %p356, %s353, 7
        %s358 = smul.addr %s355, 8
        %s359 = sadd.s32 %s357, %s358
        %s360 = smul.addr %s359, 4
        %s361 = scalar_lea.vmem %s5, %s360
        %p362 = pneg %p168
        %p363 = pneg %p165
        %s364 = smul.u32 8, %s28
        %p365 = scmp.lt.s32.totalorder %s27, 1
        %s366 = scalar_select %p365, %s27, 1
        %p367 = scmp.lt.s32.totalorder %s364, 7
        %s368 = scalar_select %p367, %s364, 7
        %s369 = smul.addr %s366, 8
        %s370 = sadd.s32 %s368, %s369
        %s371 = smul.addr %s370, 4
        %s372 = scalar_lea.vmem %s6, %s371
        %p373 = pneg %p196
        %p374 = pneg %p193
        %p375 = pneg %p217
        %p376 = pneg %p214
        %p377 = pneg %p238
        %p378 = pneg %p235
        %p379 = pneg %p264
        %p380 = pneg %p261
        %s381 = sand.u32 %s251, 1
        %s382 = scalar_lea.sflag [#allocation5], %s381
        %s383 = sand.u32 %s251, 1
        %s384 = scalar_lea.vmem [#allocation4], %s383
        %p385 = scmp.lt.s32.totalorder %s27, 1
        %s386 = scalar_select %p385, %s27, 1
        %s387 = scalar_lea.vmem %s0, %s386
        %s388 = smul.u32 8, %s28
        %p389 = scmp.lt.s32.totalorder %s27, 1
        %s390 = scalar_select %p389, %s27, 1
        %p391 = scmp.lt.s32.totalorder %s388, 7
        %s392 = scalar_select %p391, %s388, 7
        %s393 = smul.addr %s390, 8
        %s394 = sadd.s32 %s392, %s393
        %s395 = smul.addr %s394, 4
        %s396 = scalar_lea.vmem %s5, %s395
        %s397 = smul.u32 8, %s28
        %s398 = smul.u32 8, %s28
        %p399 = scmp.lt.s32.totalorder %s27, 1
        %s400 = scalar_select %p399, %s27, 1
        %p401 = scmp.lt.s32.totalorder %s398, 7
        %s402 = scalar_select %p401, %s398, 7
        %s403 = smul.addr %s400, 8
        %s404 = sadd.s32 %s402, %s403
        %s405 = smul.addr %s404, 4
        %s406 = scalar_lea.vmem %s6, %s405
        %s407 = smul.u32 8, %s28
        %p408 = scmp.eq.s32.totalorder %s28, 0
        // Predicated region
        $region57: #{nfnet_forward.19} parent=55 // pred_check
          %p409 = pneg %p408
        $region58: #{nfnet_forward.19} parent=55 // pred_check_branch
          %411 = sbr.rel (%p409) target = $region60
        $region59: #{nfnet_forward.19} parent=55 // pred_region
          %v412 = vld [vmem:[%s387] sm:$0x1]
          %v413 = vmul.f32 %v412, 0.015625
          %v415 = vlaneseq
          %v416 = vshrl.u32 %v415, 7
          %v417 = vsub.s32 0, %v416
          %v418 = vrot.slane %v413, %v417
          %v420 = vld [vmem:[%s1] sm:$0xff]
          %v421 = vld [vmem:[%s1 + $0x8] sm:$0xff]
          %v422 = vld [vmem:[%s1 + $0x10] sm:$0xff]
          %v423 = vld [vmem:[%s1 + $0x18] sm:$0xff]
          %v424 = vld [vmem:[%s1 + $0x20] sm:$0xff]
          %v425 = vld [vmem:[%s1 + $0x28] sm:$0xff]
          %v426 = vld [vmem:[%s1 + $0x30] sm:$0xff]
          %v427 = vld [vmem:[%s1 + $0x38] sm:$0xff]
          %v428 = vld [vmem:[%s1 + $0x40] sm:$0xff]
          %v429 = vld [vmem:[%s1 + $0x48] sm:$0xff]
          %v430 = vld [vmem:[%s1 + $0x50] sm:$0xff]
          %v431 = vld [vmem:[%s1 + $0x58] sm:$0xff]
          %v432 = vld [vmem:[%s1 + $0x60] sm:$0xff]
          %v433 = vld [vmem:[%s1 + $0x68] sm:$0xff]
          %v434 = vld [vmem:[%s1 + $0x70] sm:$0xff]
          %v435 = vld [vmem:[%s1 + $0x78] sm:$0xff]
          %v436 = vld [vmem:[%s2] sm:$0x1]
          %v438 = vlaneseq
          %v439 = vshrl.u32 %v438, 7
          %v440 = vsub.s32 0, %v439
          %v441 = vrot.slane %v436, %v440
          %443 = vmatprep.subr.mxu0 0.0
          %444 = vmatpush1.msra.mxu0 %v420
          %445 = vmatprep.subr.mxu0 0.0
          %446 = vmatpush1.msra.mxu0 %v421
          %447 = vmatprep.subr.mxu0 0.0
          %448 = vmatpush1.msra.mxu0 %v422
          %449 = vmatprep.subr.mxu0 0.0
          %450 = vmatpush1.msra.mxu0 %v423
          %451 = vmatprep.subr.mxu0 0.0
          %452 = vmatpush1.msra.mxu0 %v424
          %453 = vmatprep.subr.mxu0 0.0
          %454 = vmatpush1.msra.mxu0 %v425
          %455 = vmatprep.subr.mxu0 0.0
          %456 = vmatpush1.msra.mxu0 %v426
          %457 = vmatprep.subr.mxu0 0.0
          %458 = vmatpush1.msra.mxu0 %v427
          %459 = vmatprep.subr.mxu0 0.0
          %460 = vmatpush1.msra.mxu0 %v428
          %461 = vmatprep.subr.mxu0 0.0
          %462 = vmatpush1.msra.mxu0 %v429
          %463 = vmatprep.subr.mxu0 0.0
          %464 = vmatpush1.msra.mxu0 %v430
          %465 = vmatprep.subr.mxu0 0.0
          %466 = vmatpush1.msra.mxu0 %v431
          %467 = vmatprep.subr.mxu0 0.0
          %468 = vmatpush1.msra.mxu0 %v432
          %469 = vmatprep.subr.mxu0 0.0
          %470 = vmatpush1.msra.mxu0 %v433
          %471 = vmatprep.subr.mxu0 0.0
          %472 = vmatpush1.msra.mxu0 %v434
          %473 = vmatprep.subr.mxu0 0.0
          %474 = vmatpush1.msra.mxu0 %v435
          %475 = vmatprep.subr.mxu0 0.0
          %476 = vmatpush1.msra.mxu0 0.0
          %477 = vmatprep.subr.mxu0 0.0
          %478 = vmatpush1.msra.mxu0 0.0
          %479 = vmatprep.subr.mxu0 0.0
          %480 = vmatpush1.msra.mxu0 0.0
          %481 = vmatprep.subr.mxu0 0.0
          %482 = vmatpush1.msra.mxu0 0.0
          %483 = vmatprep.subr.mxu0 0.0
          %484 = vmatpush1.msra.mxu0 0.0
          %485 = vmatprep.subr.mxu0 0.0
          %486 = vmatpush1.msra.mxu0 0.0
          %487 = vmatprep.subr.mxu0 0.0
          %488 = vmatpush1.msra.mxu0 0.0
          %489 = vmatprep.subr.mxu0 0.0
          %490 = vmatpush1.msra.mxu0 0.0
          %491 = vmatprep.subr.mxu0 0.0
          %492 = vmatpush1.msra.mxu0 0.0
          %493 = vmatprep.subr.mxu0 0.0
          %494 = vmatpush1.msra.mxu0 0.0
          %495 = vmatprep.subr.mxu0 0.0
          %496 = vmatpush1.msra.mxu0 0.0
          %497 = vmatprep.subr.mxu0 0.0
          %498 = vmatpush1.msra.mxu0 0.0
          %499 = vmatprep.subr.mxu0 0.0
          %500 = vmatpush1.msra.mxu0 0.0
          %501 = vmatprep.subr.mxu0 0.0
          %502 = vmatpush1.msra.mxu0 0.0
          %503 = vmatprep.subr.mxu0 0.0
          %504 = vmatpush1.msra.mxu0 0.0
          %505 = vmatprep.subr.mxu0 0.0
          %506 = vmatpush1.msra.mxu0 0.0
          %507 = vmatprep.mubr.f32.mxu0 0.0
          %508 = vmatmul.mubr.f32.gmra.mrb[0].mxu0 %v418
          %v509 = vpop.f32.mrb[0].mxu0
          %v510 = vadd.f32 %v441, %v509
          %v511 = vpop.f32.mrb[0].mxu0
          %512 = vdwg.mxu0
          %v513 = vmax.f32 %v510, 0.0
          %v514 = vld [vmem:[%s3] sm:$0xff]
          %v515 = vld [vmem:[%s3 + $0x8] sm:$0xff]
          %v516 = vld [vmem:[%s3 + $0x10] sm:$0xff]
          %v517 = vld [vmem:[%s3 + $0x18] sm:$0xff]
          %v518 = vld [vmem:[%s3 + $0x20] sm:$0xff]
          %v519 = vld [vmem:[%s3 + $0x28] sm:$0xff]
          %v520 = vld [vmem:[%s3 + $0x30] sm:$0xff]
          %v521 = vld [vmem:[%s3 + $0x38] sm:$0xff]
          %v522 = vld [vmem:[%s3 + $0x40] sm:$0xff]
          %v523 = vld [vmem:[%s3 + $0x48] sm:$0xff]
          %v524 = vld [vmem:[%s3 + $0x50] sm:$0xff]
          %v525 = vld [vmem:[%s3 + $0x58] sm:$0xff]
          %v526 = vld [vmem:[%s3 + $0x60] sm:$0xff]
          %v527 = vld [vmem:[%s3 + $0x68] sm:$0xff]
          %v528 = vld [vmem:[%s3 + $0x70] sm:$0xff]
          %v529 = vld [vmem:[%s3 + $0x78] sm:$0xff]
          %v530 = vld [vmem:[%s4] sm:$0x1]
          %v532 = vlaneseq
          %v533 = vshrl.u32 %v532, 7
          %v534 = vsub.s32 0, %v533
          %v535 = vrot.slane %v530, %v534
          %537 = vmatprep.subr.mxu0 0.0
          %538 = vmatpush1.msra.mxu0 %v514
          %539 = vmatprep.subr.mxu0 0.0
          %540 = vmatpush1.msra.mxu0 %v515
          %541 = vmatprep.subr.mxu0 0.0
          %542 = vmatpush1.msra.mxu0 %v516
          %543 = vmatprep.subr.mxu0 0.0
          %544 = vmatpush1.msra.mxu0 %v517
          %545 = vmatprep.subr.mxu0 0.0
          %546 = vmatpush1.msra.mxu0 %v518
          %547 = vmatprep.subr.mxu0 0.0
          %548 = vmatpush1.msra.mxu0 %v519
          %549 = vmatprep.subr.mxu0 0.0
          %550 = vmatpush1.msra.mxu0 %v520
          %551 = vmatprep.subr.mxu0 0.0
          %552 = vmatpush1.msra.mxu0 %v521
          %553 = vmatprep.subr.mxu0 0.0
          %554 = vmatpush1.msra.mxu0 %v522
          %555 = vmatprep.subr.mxu0 0.0
          %556 = vmatpush1.msra.mxu0 %v523
          %557 = vmatprep.subr.mxu0 0.0
          %558 = vmatpush1.msra.mxu0 %v524
          %559 = vmatprep.subr.mxu0 0.0
          %560 = vmatpush1.msra.mxu0 %v525
          %561 = vmatprep.subr.mxu0 0.0
          %562 = vmatpush1.msra.mxu0 %v526
          %563 = vmatprep.subr.mxu0 0.0
          %564 = vmatpush1.msra.mxu0 %v527
          %565 = vmatprep.subr.mxu0 0.0
          %566 = vmatpush1.msra.mxu0 %v528
          %567 = vmatprep.subr.mxu0 0.0
          %568 = vmatpush1.msra.mxu0 %v529
          %569 = vmatprep.subr.mxu0 0.0
          %570 = vmatpush1.msra.mxu0 0.0
          %571 = vmatprep.subr.mxu0 0.0
          %572 = vmatpush1.msra.mxu0 0.0
          %573 = vmatprep.subr.mxu0 0.0
          %574 = vmatpush1.msra.mxu0 0.0
          %575 = vmatprep.subr.mxu0 0.0
          %576 = vmatpush1.msra.mxu0 0.0
          %577 = vmatprep.subr.mxu0 0.0
          %578 = vmatpush1.msra.mxu0 0.0
          %579 = vmatprep.subr.mxu0 0.0
          %580 = vmatpush1.msra.mxu0 0.0
          %581 = vmatprep.subr.mxu0 0.0
          %582 = vmatpush1.msra.mxu0 0.0
          %583 = vmatprep.subr.mxu0 0.0
          %584 = vmatpush1.msra.mxu0 0.0
          %585 = vmatprep.subr.mxu0 0.0
          %586 = vmatpush1.msra.mxu0 0.0
          %587 = vmatprep.subr.mxu0 0.0
          %588 = vmatpush1.msra.mxu0 0.0
          %589 = vmatprep.subr.mxu0 0.0
          %590 = vmatpush1.msra.mxu0 0.0
          %591 = vmatprep.subr.mxu0 0.0
          %592 = vmatpush1.msra.mxu0 0.0
          %593 = vmatprep.subr.mxu0 0.0
          %594 = vmatpush1.msra.mxu0 0.0
          %595 = vmatprep.subr.mxu0 0.0
          %596 = vmatpush1.msra.mxu0 0.0
          %597 = vmatprep.subr.mxu0 0.0
          %598 = vmatpush1.msra.mxu0 0.0
          %599 = vmatprep.subr.mxu0 0.0
          %600 = vmatpush1.msra.mxu0 0.0
          %601 = vmatprep.mubr.f32.mxu0 0.0
          %602 = vmatmul.mubr.f32.gmra.mrb[0].mxu0 %v513
          %v603 = vpop.f32.mrb[0].mxu0
          %v604 = vadd.f32 %v535, %v603
          %v605 = vpop.f32.mrb[0].mxu0
          %606 = vdwg.mxu0
          %v607 = vsub.f32 0.0, %v604
          %v608 = vmul.f32 %v607, 1.442695
          %v609 = vpow.pop %v608
          %v610 = vadd.f32 %v609, 1.0
          %v611 = vrcp.pop %v610
          %v612 = vmul.f32 %v611, 0.4
          %613 = vst [vmem:[#allocation2] sm:$0xff] %v612
          %614 = vst [vmem:[#allocation3] sm:$0xff] 0.0
        $region60: #{nfnet_forward.19} parent=55 // pred_fallthru
          _
        %v615 = vld [vmem:[%s396] sm:$0xf]
        %v616 = vld [vmem:[%s396 + $0x4] sm:$0xf]
        %v617 = vld [vmem:[%s396 + $0x8] sm:$0xf]
        %v618 = vld [vmem:[%s396 + $0xc] sm:$0xf]
        %v619 = vld [vmem:[%s396 + $0x10] sm:$0xf]
        %v620 = vld [vmem:[%s396 + $0x14] sm:$0xf]
        %v621 = vld [vmem:[%s396 + $0x18] sm:$0xf]
        %v622 = vld [vmem:[%s396 + $0x1c] sm:$0xf]
        %v623 = vunpack.c.l.bf16 %v615
        %v624 = vunpack.c.l.bf16 %v616
        %v625 = vunpack.c.l.bf16 %v617
        %v626 = vunpack.c.l.bf16 %v618
        %v627 = vunpack.c.l.bf16 %v619
        %v628 = vunpack.c.l.bf16 %v620
        %v629 = vunpack.c.l.bf16 %v621
        %v630 = vunpack.c.l.bf16 %v622
        %v631 = vld [vmem:[#allocation2] sm:$0x1]
        %v632 = vld [vmem:[%s406] sm:$0xf]
        %v633 = vld [vmem:[%s406 + $0x4] sm:$0xf]
        %v634 = vld [vmem:[%s406 + $0x8] sm:$0xf]
        %v635 = vld [vmem:[%s406 + $0xc] sm:$0xf]
        %v636 = vld [vmem:[%s406 + $0x10] sm:$0xf]
        %v637 = vld [vmem:[%s406 + $0x14] sm:$0xf]
        %v638 = vld [vmem:[%s406 + $0x18] sm:$0xf]
        %v639 = vld [vmem:[%s406 + $0x1c] sm:$0xf]
        %v640 = vunpack.c.l.bf16 %v632
        %v641 = vunpack.c.l.bf16 %v633
        %v642 = vunpack.c.l.bf16 %v634
        %v643 = vunpack.c.l.bf16 %v635
        %v644 = vunpack.c.l.bf16 %v636
        %v645 = vunpack.c.l.bf16 %v637
        %v646 = vunpack.c.l.bf16 %v638
        %v647 = vunpack.c.l.bf16 %v639
        %v648 = vlaneseq
        %v649 = vshrl.u32 %v648, 7
        %v650 = vsub.s32 0, %v649
        %v651 = vrot.slane %v631, %v650
        %v652 = vmul.f32 %v651, %v640
        %v653 = vmul.f32 %v651, %v641
        %v654 = vmul.f32 %v651, %v642
        %v655 = vmul.f32 %v651, %v643
        %v656 = vmul.f32 %v651, %v644
        %v657 = vmul.f32 %v651, %v645
        %v658 = vmul.f32 %v651, %v646
        %v659 = vmul.f32 %v651, %v647
        %v660 = vadd.f32 %v623, %v652
        %v661 = vadd.f32 %v624, %v653
        %v662 = vadd.f32 %v625, %v654
        %v663 = vadd.f32 %v626, %v655
        %v664 = vadd.f32 %v627, %v656
        %v665 = vadd.f32 %v628, %v657
        %v666 = vadd.f32 %v629, %v658
        %v667 = vadd.f32 %v630, %v659
        %v668 = vmul.f32 %v660, 0.5
        %v669 = vmul.f32 %v661, 0.5
        %v670 = vmul.f32 %v662, 0.5
        %v671 = vmul.f32 %v663, 0.5
        %v672 = vmul.f32 %v664, 0.5
        %v673 = vmul.f32 %v665, 0.5
        %v674 = vmul.f32 %v666, 0.5
        %v675 = vmul.f32 %v667, 0.5
        %v676 = vmul.f32 %v660, 0.044715
        %v677 = vmul.f32 %v661, 0.044715
        %v678 = vmul.f32 %v662, 0.044715
        %v679 = vmul.f32 %v663, 0.044715
        %v680 = vmul.f32 %v664, 0.044715
        %v681 = vmul.f32 %v665, 0.044715
        %v682 = vmul.f32 %v666, 0.044715
        %v683 = vmul.f32 %v667, 0.044715
        %v684 = vmul.f32 %v676, %v660
        %v685 = vmul.f32 %v677, %v661
        %v686 = vmul.f32 %v678, %v662
        %v687 = vmul.f32 %v679, %v663
        %v688 = vmul.f32 %v680, %v664
        %v689 = vmul.f32 %v681, %v665
        %v690 = vmul.f32 %v682, %v666
        %v691 = vmul.f32 %v683, %v667
        %v692 = vmul.f32 %v684, %v660
        %v693 = vmul.f32 %v685, %v661
        %v694 = vmul.f32 %v686, %v662
        %v695 = vmul.f32 %v687, %v663
        %v696 = vmul.f32 %v688, %v664
        %v697 = vmul.f32 %v689, %v665
        %v698 = vmul.f32 %v690, %v666
        %v699 = vmul.f32 %v691, %v667
        %v700 = vadd.f32 %v660, %v692
        %v701 = vadd.f32 %v661, %v693
        %v702 = vadd.f32 %v662, %v694
        %v703 = vadd.f32 %v663, %v695
        %v704 = vadd.f32 %v664, %v696
        %v705 = vadd.f32 %v665, %v697
        %v706 = vadd.f32 %v666, %v698
        %v707 = vadd.f32 %v667, %v699
        %v708 = vmul.f32 %v700, 0.7978846
        %v709 = vmul.f32 %v701, 0.7978846
        %v710 = vmul.f32 %v702, 0.7978846
        %v711 = vmul.f32 %v703, 0.7978846
        %v712 = vmul.f32 %v704, 0.7978846
        %v713 = vmul.f32 %v705, 0.7978846
        %v714 = vmul.f32 %v706, 0.7978846
        %v715 = vmul.f32 %v707, 0.7978846
        %v716 = vtanh.pop %v708
        %v717 = vtanh.pop %v709
        %v718 = vtanh.pop %v710
        %v719 = vtanh.pop %v711
        %v720 = vtanh.pop %v712
        %v721 = vtanh.pop %v713
        %v722 = vtanh.pop %v714
        %v723 = vtanh.pop %v715
        %v724 = vadd.f32 %v716, 1.0
        %v725 = vadd.f32 %v717, 1.0
        %v726 = vadd.f32 %v718, 1.0
        %v727 = vadd.f32 %v719, 1.0
        %v728 = vadd.f32 %v720, 1.0
        %v729 = vadd.f32 %v721, 1.0
        %v730 = vadd.f32 %v722, 1.0
        %v731 = vadd.f32 %v723, 1.0
        %v732 = vmul.f32 %v668, %v724
        %v733 = vmul.f32 %v669, %v725
        %v734 = vmul.f32 %v670, %v726
        %v735 = vmul.f32 %v671, %v727
        %v736 = vmul.f32 %v672, %v728
        %v737 = vmul.f32 %v673, %v729
        %v738 = vmul.f32 %v674, %v730
        %v739 = vmul.f32 %v675, %v731
        %v740 = vmul.f32 %v732, 1.7015043
        %v741 = vmul.f32 %v733, 1.7015043
        %v742 = vmul.f32 %v734, 1.7015043
        %v743 = vmul.f32 %v735, 1.7015043
        %v744 = vmul.f32 %v736, 1.7015043
        %v745 = vmul.f32 %v737, 1.7015043
        %v746 = vmul.f32 %v738, 1.7015043
        %v747 = vmul.f32 %v739, 1.7015043
        %v748 = vld [vmem:[#allocation3] sm:$0xff]
        %v749 = vadd.f32 %v740, %v741
        %v750 = vadd.f32 %v749, %v742
        %v751 = vadd.f32 %v750, %v743
        %v752 = vadd.f32 %v751, %v744
        %v753 = vadd.f32 %v752, %v745
        %v754 = vadd.f32 %v753, %v746
        %v755 = vadd.f32 %v754, %v747
        %v756 = vrot.slane %v755, 4
        %v757 = vadd.f32 %v755, %v756
        %v758 = vrot.slane %v757, 2
        %v759 = vadd.f32 %v757, %v758
        %v760 = vrot.slane %v759, 1
        %v761 = vadd.f32 %v759, %v760
        %v762 = vadd.f32 %v748, %v761
        %763 = vst [vmem:[#allocation3] sm:$0xff] %v762
        // Predicated region
        $region61: #{nfnet_forward.19} parent=55 // pred_check
          %p764 = pneg %p408
        $region62: #{nfnet_forward.19} parent=55 // pred_check_branch
          %766 = sbr.rel (%p764) target = $region64
        $region63: #{nfnet_forward.19} parent=55 // pred_region
          %v767 = vld [vmem:[#allocation3] sm:$0xff]
          %v768 = vmul.f32 %v767, 0.015625
          %v769 = vld [vmem:[%s7] sm:$0xff]
          %v770 = vld [vmem:[%s7 + $0x8] sm:$0xff]
          %v771 = vld [vmem:[%s7 + $0x10] sm:$0xff]
          %v772 = vld [vmem:[%s7 + $0x18] sm:$0xff]
          %v773 = vld [vmem:[%s7 + $0x20] sm:$0xff]
          %v774 = vld [vmem:[%s7 + $0x28] sm:$0xff]
          %v775 = vld [vmem:[%s7 + $0x30] sm:$0xff]
          %v776 = vld [vmem:[%s7 + $0x38] sm:$0xff]
          %v777 = vld [vmem:[%s7 + $0x40] sm:$0xff]
          %v778 = vld [vmem:[%s7 + $0x48] sm:$0xff]
          %v779 = vld [vmem:[%s7 + $0x50] sm:$0xff]
          %v780 = vld [vmem:[%s7 + $0x58] sm:$0xff]
          %v781 = vld [vmem:[%s7 + $0x60] sm:$0xff]
          %v782 = vld [vmem:[%s7 + $0x68] sm:$0xff]
          %v783 = vld [vmem:[%s7 + $0x70] sm:$0xff]
          %v784 = vld [vmem:[%s7 + $0x78] sm:$0xff]
          %v785 = vld [vmem:[%s8] sm:$0x1]
          %v787 = vlaneseq
          %v788 = vshrl.u32 %v787, 7
          %v789 = vsub.s32 0, %v788
          %v790 = vrot.slane %v785, %v789
          %792 = vmatprep.subr.mxu0 0.0
          %793 = vmatpush1.msra.mxu0 %v769
          %794 = vmatprep.subr.mxu0 0.0
          %795 = vmatpush1.msra.mxu0 %v770
          %796 = vmatprep.subr.mxu0 0.0
          %797 = vmatpush1.msra.mxu0 %v771
          %798 = vmatprep.subr.mxu0 0.0
          %799 = vmatpush1.msra.mxu0 %v772
          %800 = vmatprep.subr.mxu0 0.0
          %801 = vmatpush1.msra.mxu0 %v773
          %802 = vmatprep.subr.mxu0 0.0
          %803 = vmatpush1.msra.mxu0 %v774
          %804 = vmatprep.subr.mxu0 0.0
          %805 = vmatpush1.msra.mxu0 %v775
          %806 = vmatprep.subr.mxu0 0.0
          %807 = vmatpush1.msra.mxu0 %v776
          %808 = vmatprep.subr.mxu0 0.0
          %809 = vmatpush1.msra.mxu0 %v777
          %810 = vmatprep.subr.mxu0 0.0
          %811 = vmatpush1.msra.mxu0 %v778
          %812 = vmatprep.subr.mxu0 0.0
          %813 = vmatpush1.msra.mxu0 %v779
          %814 = vmatprep.subr.mxu0 0.0
          %815 = vmatpush1.msra.mxu0 %v780
          %816 = vmatprep.subr.mxu0 0.0
          %817 = vmatpush1.msra.mxu0 %v781
          %818 = vmatprep.subr.mxu0 0.0
          %819 = vmatpush1.msra.mxu0 %v782
          %820 = vmatprep.subr.mxu0 0.0
          %821 = vmatpush1.msra.mxu0 %v783
          %822 = vmatprep.subr.mxu0 0.0
          %823 = vmatpush1.msra.mxu0 %v784
          %824 = vmatprep.subr.mxu0 0.0
          %825 = vmatpush1.msra.mxu0 0.0
          %826 = vmatprep.subr.mxu0 0.0
          %827 = vmatpush1.msra.mxu0 0.0
          %828 = vmatprep.subr.mxu0 0.0
          %829 = vmatpush1.msra.mxu0 0.0
          %830 = vmatprep.subr.mxu0 0.0
          %831 = vmatpush1.msra.mxu0 0.0
          %832 = vmatprep.subr.mxu0 0.0
          %833 = vmatpush1.msra.mxu0 0.0
          %834 = vmatprep.subr.mxu0 0.0
          %835 = vmatpush1.msra.mxu0 0.0
          %836 = vmatprep.subr.mxu0 0.0
          %837 = vmatpush1.msra.mxu0 0.0
          %838 = vmatprep.subr.mxu0 0.0
          %839 = vmatpush1.msra.mxu0 0.0
          %840 = vmatprep.subr.mxu0 0.0
          %841 = vmatpush1.msra.mxu0 0.0
          %842 = vmatprep.subr.mxu0 0.0
          %843 = vmatpush1.msra.mxu0 0.0
          %844 = vmatprep.subr.mxu0 0.0
          %845 = vmatpush1.msra.mxu0 0.0
          %846 = vmatprep.subr.mxu0 0.0
          %847 = vmatpush1.msra.mxu0 0.0
          %848 = vmatprep.subr.mxu0 0.0
          %849 = vmatpush1.msra.mxu0 0.0
          %850 = vmatprep.subr.mxu0 0.0
          %851 = vmatpush1.msra.mxu0 0.0
          %852 = vmatprep.subr.mxu0 0.0
          %853 = vmatpush1.msra.mxu0 0.0
          %854 = vmatprep.subr.mxu0 0.0
          %855 = vmatpush1.msra.mxu0 0.0
          %856 = vmatprep.mubr.f32.mxu0 0.0
          %857 = vmatmul.mubr.f32.gmra.mrb[0].mxu0 %v768
          %v858 = vpop.f32.mrb[0].mxu0
          %v859 = vadd.f32 %v790, %v858
          %v860 = vpop.f32.mrb[0].mxu0
          %861 = vdwg.mxu0
          %862 = vst [vmem:[%s384] sm:$0x1] %v859
        $region64: #{nfnet_forward.19} parent=55 // pred_fallthru
          _
        %s863 = sand.u32 %s251, 1
        %s864 = scalar_lea.sflag [#allocation5], %s863
        %s865 = sand.u32 %s251, 1
        %s866 = scalar_lea.vmem [#allocation4], %s865
        // Predicated region
        $region65: #{nfnet_forward.19} parent=55 // pred_check
          %p867 = pneg %p261
        $region66: #{nfnet_forward.19} parent=55 // pred_check_branch
          %869 = sbr.rel (%p867) target = $region68
        $region67: #{nfnet_forward.19} parent=55 // pred_region
          %s871 = ssub.s32 16, 16
          %872 = vsyncadd %s864, %s871
          %s873 = smul.addr %s27, 16
          %s874 = scalar_lea.hbm %s9, %s873
          %s876 = sshll.u32 %s866, 4
          %s877 = int_to_ptr.vmem [resolvable:$true] %s876
          %879 = dma.vmem_to_hbm [thread:$0]  %s877, 16, %s874, %s864
        $region68: #{nfnet_forward.19} parent=55 // pred_fallthru
          _
      $region56: #{nfnet_forward.19} parent=5 // pred_fallthru
        _
      %p880 = scmp.le.s32.totalorder 2, %s18
      // Predicated region
      $region69: #{nfnet_forward.19} parent=5 // pred_check
        %p881 = pneg %p880
      $region70: #{nfnet_forward.19} parent=5 // pred_check_branch
        %883 = sbr.rel (%p881) target = $region72
      $region71: #{nfnet_forward.19} parent=5 // pred_region
        %s884 = ssub.s32 %s18, 2
        // Predicated region
        $region73: #{nfnet_forward.19} parent=71 // pred_check
          %p885 = pneg %p267
        $region74: #{nfnet_forward.19} parent=71 // pred_check_branch
          %887 = sbr.rel (%p885) target = $region76
        $region75: #{nfnet_forward.19} parent=71 // pred_region
          %s888 = sand.u32 %s252, 1
          %s889 = scalar_lea.sflag [#allocation5], %s888
          %s890 = sand.u32 %s252, 1
          %s891 = scalar_lea.vmem [#allocation4], %s890
          %892 = dma.done %s889, 16
        $region76: #{nfnet_forward.19} parent=71 // pred_fallthru
          _
      $region72: #{nfnet_forward.19} parent=5 // pred_fallthru
        _
    $region6: #{nfnet_forward.19} parent=1 // loop_footer
      %s22 = sadd.s32 1, %s18
    $region7: #{nfnet_forward.19} parent=1 // loop_footer_branch
      %17 = sbr.rel target = $region3
    $region8: #{nfnet_forward.19} parent=1 // loop_exit
      _
    %893 = vsyncpa [#allocation5], 1
    %s894 = scalar_lea.sflag [#allocation5], 1
    %895 = vsyncpa %s894, 1

</llo_original>
